<compile_context>
chip_gen: v6e
topology: v6e:2x2x1
jax: 0.10.0
libtpu: 0.0.40
codegen_flags: <defaults>
</compile_context>

<pallas_src>
import jax
import jax.numpy as jnp
from jax.experimental import pallas as pl
from jax.experimental.pallas import tpu as pltpu

EPS = 1e-4


def _round_up(x, m):
    return (x + m - 1) // m * m


def ppnet_ensemble_forward(x_nchw, w1_all, proto_all, ll_all,
                           *, mxu_dtype=jnp.bfloat16, p_tile=256):
    """x_nchw: (B, C, H, W); w1_all: (M, C, D); proto_all: (M, P, D);
    ll_all: (M, P, NC).  Returns (summed_logits, [min_distances per model])."""
    B, C, H, W = x_nchw.shape
    M, _, D = w1_all.shape
    P = proto_all.shape[1]
    NC = ll_all.shape[2]
    S = H * W

    # TPU-friendly padding: B -> x8 and S -> x8 (sublane-dense, reshape-safe),
    # P -> x128 and NC -> x128 (lane-dense stores, no masked vst).  Padding is
    # sliced off below; padded prototypes / classes are zeros so they never
    # affect kept outputs.
    B_pad = _round_up(B, 8)
    S_pad = _round_up(S, 8)
    P_pad = _round_up(P, 128)
    NC_pad = _round_up(NC, 128)
    BS = B_pad * S_pad

    # Prototype-tile size (multiple of 128 dividing P_pad).  Streams the
    # (BS, P) distance matrix so it is never fully resident.  Default 256
    # keeps fp/dist intermediates small enough for v7x's 64 MiB VMEM.
    pt = max(128, (min(p_tile, P_pad) // 128) * 128)
    while P_pad % pt:
        pt -= 128
    n_ptiles = P_pad // pt

    # NCHW -> (B*S, C): channels on lanes, one big 2-D MXU operand.
    # NOTE: one fused XLA pass; removable upstream by keeping the backbone
    # activations channel-last.
    z = jnp.transpose(x_nchw, (0, 2, 3, 1)).reshape(B, S, C)
    z = jnp.pad(z, ((0, B_pad - B), (0, S_pad - S), (0, 0)))
    z = z.reshape(BS, C).astype(mxu_dtype)

    w1 = w1_all.astype(mxu_dtype)                                        # (M, C, D)
    # -2 folded into the (transposed) prototype operand; exact in bf16.
    protoT_neg2 = jnp.pad(jnp.transpose(-2.0 * proto_all, (0, 2, 1)),
                          ((0, 0), (0, 0), (0, P_pad - P))
                          ).astype(mxu_dtype)                            # (M, D, P_pad)
    p2 = jnp.pad(jnp.sum(proto_all * proto_all, axis=-1),
                 ((0, 0), (0, P_pad - P)))[:, None, :]                   # (M, 1, P_pad) f32
    ll = jnp.pad(ll_all, ((0, 0), (0, P_pad - P), (0, NC_pad - NC))
                 ).astype(mxu_dtype)                                     # (M, P_pad, NC_pad)

    itemsize = jnp.dtype(mxu_dtype).itemsize
    vmem_est = (BS * C * itemsize              # z (single copy, whole array in VMEM)
                + BS * D * itemsize            # feat scratch
                + BS * 4                       # f2 scratch
                + BS * D * 4                   # conv pre-activation headroom
                + 2 * BS * pt * 4              # fp / dist intermediates headroom
                + 2 * C * D * itemsize         # w1 (double-buffered)
                + 2 * D * pt * itemsize        # proto tile
                + 2 * 1 * pt * 4               # p2 tile
                + 2 * pt * NC_pad * itemsize   # ll tile
                + 2 * B_pad * NC_pad * 4       # logits block
                + 2 * B_pad * pt * 4)          # min_dist block
    vmem_limit = min(max(int(vmem_est * 3 // 2), 32 << 20), 128 << 20)

    def kernel(z_ref, w1_ref, protoT_ref, p2_ref, ll_ref,
               logits_ref, mind_ref, feat_ref, f2_ref):
        """One grid step = (model i, prototype-tile p)."""
        p_idx = pl.program_id(1)

        # --- once per model: add-on layers (1x1 conv + sigmoid), ||feat||^2,
        #     and logits-accumulator init -------------------------------------
        @pl.when(p_idx == 0)
        def _():
            pre = jnp.dot(z_ref[...], w1_ref[...],
                          preferred_element_type=jnp.float32)            # (BS, D) f32
            feat_f32 = jax.nn.sigmoid(pre)
            f2_ref[...] = jnp.sum(feat_f32 * feat_f32, axis=-1,
                                  keepdims=True)                         # (BS, 1) f32
            feat_ref[...] = feat_f32.astype(feat_ref.dtype)              # bf16 scratch
            logits_ref[...] = jnp.zeros_like(logits_ref)

        # --- prototype squared L2 distances: ||f||^2 - 2 f.p + ||p||^2 -------
        # (-2 already folded into protoT in the wrapper.)
        fp = jnp.dot(feat_ref[...], protoT_ref[...],
                     preferred_element_type=jnp.float32)                 # (BS, pt)
        dist = f2_ref[...] + fp + p2_ref[...]                            # (BS, pt) f32

        # --- global min-pool over spatial positions -> min_distances ---------
        dist3 = dist.reshape(B_pad, S_pad, pt)
        if S_pad != S:
            # Padded spatial rows must never win the min (sigmoid(0)=0.5 gives
            # finite distances); mask them to +inf.
            srow = jax.lax.broadcasted_iota(jnp.int32, dist3.shape, 1)
            dist3 = jnp.where(srow < S, dist3, jnp.inf)
        min_d = jnp.maximum(jnp.min(dist3, axis=1), 0.0)                 # (B_pad, pt)
        mind_ref[...] = min_d.astype(mind_ref.dtype)

        # --- prototype activation + classification head (bf16 MXU, f32 acc) --
        act = jnp.log((min_d + 1.0) / (min_d + EPS))                     # (B_pad, pt) f32
        logits_ref[...] += jnp.dot(act.astype(ll_ref.dtype), ll_ref[...],
                                   preferred_element_type=jnp.float32)

    logits_m, mind = pl.pallas_call(
        kernel,
        out_shape=(
            jax.ShapeDtypeStruct((M, B_pad, NC_pad), jnp.float32),
            jax.ShapeDtypeStruct((M, B_pad, P_pad), jnp.float32),
        ),
        grid_spec=pltpu.PrefetchScalarGridSpec(
            num_scalar_prefetch=0,
            grid=(M, n_ptiles),
            in_specs=[
                # Shared activations: whole array resident in VMEM, single
                # copy (never re-fetched, so no double-buffering waste).
                pl.BlockSpec(memory_space=pltpu.MemorySpace.VMEM),
                # Per-model weights; leading model dim squeezed away.
                pl.BlockSpec((None, C, D), lambda i, p: (i, 0, 0)),
                pl.BlockSpec((None, D, pt), lambda i, p: (i, 0, p)),
                pl.BlockSpec((None, 1, pt), lambda i, p: (i, 0, p)),
                pl.BlockSpec((None, pt, NC_pad), lambda i, p: (i, p, 0)),
            ],
            out_specs=[
                # Per-model logits (summed over M in the wrapper): no
                # cross-M state, M stays "parallel".
                pl.BlockSpec((None, B_pad, NC_pad), lambda i, p: (i, 0, 0)),
                pl.BlockSpec((None, B_pad, pt), lambda i, p: (i, 0, p)),
            ],
            scratch_shapes=[
                pltpu.VMEM((BS, D), mxu_dtype),    # feat (reused over P tiles)
                pltpu.VMEM((BS, 1), jnp.float32),  # ||feat||^2
            ],
        ),
        compiler_params=pltpu.CompilerParams(
            dimension_semantics=("parallel", "arbitrary"),
            vmem_limit_bytes=vmem_limit),
    )(z, w1, protoT_neg2, p2, ll)

    logits = jnp.sum(logits_m, axis=0)[:B, :NC]
    min_distances = [mind[i, :B, :P] for i in range(M)]
    return logits, min_distances


def _reference_forward(x_nchw, w1_all, proto_all, ll_all, *, mxu_dtype=jnp.float32):
    """Plain-JAX PPNet-ensemble forward.  `mxu_dtype` mirrors the kernel's
    MXU input dtype (all accumulation / elementwise math stays f32)."""
    B, C, H, W = x_nchw.shape
    M = w1_all.shape[0]
    z = jnp.transpose(x_nchw, (0, 2, 3, 1)).reshape(B, H * W, C).astype(mxu_dtype)
    logits_sum = None
    mins = []
    for i in range(M):
        pre = jnp.einsum("bsc,cd->bsd", z, w1_all[i].astype(mxu_dtype),
                         preferred_element_type=jnp.float32)
        feat = jax.nn.sigmoid(pre)
        f2 = jnp.sum(feat * feat, axis=-1, keepdims=True)
        p2 = jnp.sum(proto_all[i] * proto_all[i], axis=-1)
        fp = jnp.einsum("bsd,pd->bsp", feat.astype(mxu_dtype),
                        proto_all[i].astype(mxu_dtype),
                        preferred_element_type=jnp.float32)
        dist = jnp.maximum(f2 - 2.0 * fp + p2[None, None, :], 0.0)
        min_d = jnp.min(dist, axis=1)
        mins.append(min_d)
        act = jnp.log((min_d + 1.0) / (min_d + EPS))
        li = jnp.dot(act.astype(mxu_dtype), ll_all[i].astype(mxu_dtype),
                     preferred_element_type=jnp.float32)
        logits_sum = li if logits_sum is None else logits_sum + li
    return logits_sum, mins


if __name__ == "__main__":
    # Small deterministic shapes consistent with the ensemble forward.
    B, C, H, W = 2, 4, 16, 16     # input NCHW
    M = 2                         # number of ensembled PPNets
    D = 8                         # prototype channel dim
    P = 8                         # prototypes per model
    NC = 4                        # num classes

    key = jax.random.PRNGKey(0)
    kx, kw, kp, kl = jax.random.split(key, 4)
    x = jax.random.normal(kx, (B, C, H, W), dtype=jnp.float32)
    w1_all = 0.5 * jax.random.normal(kw, (M, C, D), dtype=jnp.float32)
    proto_all = jax.random.uniform(kp, (M, P, D), dtype=jnp.float32)
    ll_all = 0.1 * jax.random.normal(kl, (M, P, NC), dtype=jnp.float32)

    # 1) f32 MXU path: must match the pure-f32 reference tightly.
    logits32, mins32 = ppnet_ensemble_forward(x, w1_all, proto_all, ll_all,
                                              mxu_dtype=jnp.float32)
    jax.block_until_ready(logits32)
    ref32_logits, ref32_mins = _reference_forward(x, w1_all, proto_all, ll_all,
                                                  mxu_dtype=jnp.float32)
    assert jnp.allclose(logits32, ref32_logits, rtol=1e-3, atol=1e-3)
    for a, b in zip(mins32, ref32_mins):
        assert jnp.allclose(a, b, rtol=1e-3, atol=1e-3)

    # 2) bf16 MXU path (default / fast): match a reference mirroring the bf16
    #    matmul inputs (everything else stays f32).
    # TODO(synk): bf16 feat·proto cancellation near d≈0 is amplified by the
    # eps=1e-4 log activation; use mxu_dtype=jnp.float32 if that matters.
    logits, min_distances = ppnet_ensemble_forward(x, w1_all, proto_all, ll_all)
    jax.block_until_ready(logits)
    for md in min_distances:
        jax.block_until_ready(md)
    refb_logits, refb_mins = _reference_forward(x, w1_all, proto_all, ll_all,
                                                mxu_dtype=jnp.bfloat16)
    assert jnp.allclose(logits, refb_logits, rtol=1e-2, atol=1e-2)
    for a, b in zip(min_distances, refb_mins):
        assert jnp.allclose(a, b, rtol=1e-2, atol=1e-2)

    print("KERNEL_OK")
</pallas_src>

<mosaic_0001>
module attributes {stable_mosaic.version = 11 : i64} {
  func.func @kernel(%arg0: i32, %arg1: i32, %arg2: memref<2048x4xf32, #tpu.memory_space<vmem>>, %arg3: memref<1x4x8xf32, #tpu.memory_space<vmem>>, %arg4: memref<1x8x128xf32, #tpu.memory_space<vmem>>, %arg5: memref<1x1x128xf32, #tpu.memory_space<vmem>>, %arg6: memref<1x128x128xf32, #tpu.memory_space<vmem>>, %arg7: memref<1x8x128xf32, #tpu.memory_space<vmem>>, %arg8: memref<1x8x128xf32, #tpu.memory_space<vmem>>, %arg9: memref<2048x8xf32, #tpu.memory_space<vmem>>, %arg10: memref<2048x1xf32, #tpu.memory_space<vmem>>) attributes {dimension_semantics = [#tpu.dimension_semantics<parallel>, #tpu.dimension_semantics<arbitrary>], iteration_bounds = array<i64: 2, 1>, scalar_prefetch = 0 : i64, scratch_operands = 2 : i64, tpu.core_type = #tpu.core_type<tc>, window_params = [{pipeline_mode = #tpu.pipeline_mode<synchronous>, transform_indices = @transform_0, window_bounds = array<i64: 2048, 4>}, {transform_indices = @transform_1, window_bounds = array<i64: 1, 4, 8>}, {transform_indices = @transform_2, window_bounds = array<i64: 1, 8, 128>}, {transform_indices = @transform_3, window_bounds = array<i64: 1, 1, 128>}, {transform_indices = @transform_4, window_bounds = array<i64: 1, 128, 128>}, {transform_indices = @transform_5, window_bounds = array<i64: 1, 8, 128>}, {transform_indices = @transform_6, window_bounds = array<i64: 1, 8, 128>}]} {
    %c0_i32 = arith.constant 0 : i32
    %0 = arith.cmpi eq, %arg1, %c0_i32 : i32
    %1 = arith.extui %0 : i1 to i32
    %c0_i32_0 = arith.constant 0 : i32
    %2 = arith.cmpi ne, %1, %c0_i32_0 : i32
    scf.if %2 {
      %c0_27 = arith.constant 0 : index
      %c0_28 = arith.constant 0 : index
      %36 = vector.load %arg2[%c0_27, %c0_28] : memref<2048x4xf32, #tpu.memory_space<vmem>>, vector<2048x4xf32>
      %c0_29 = arith.constant 0 : index
      %c0_30 = arith.constant 0 : index
      %c0_31 = arith.constant 0 : index
      %37 = vector.load %arg3[%c0_29, %c0_30, %c0_31] : memref<1x4x8xf32, #tpu.memory_space<vmem>>, vector<1x4x8xf32>
      %38 = vector.shape_cast %37 : vector<1x4x8xf32> to vector<4x8xf32>
      %cst_32 = arith.constant dense<0.000000e+00> : vector<2048x8xf32>
      %39 = tpu.matmul %36, %38, %cst_32 {dimension_numbers = #tpu.dot_dimension_numbers<[1], [0], [0], [1], [0, 0, 1, 1], [], []>} : vector<2048x4xf32>, vector<4x8xf32>, vector<2048x8xf32> -> vector<2048x8xf32>
      %40 = arith.negf %39 : vector<2048x8xf32>
      %41 = math.exp %40 : vector<2048x8xf32>
      %cst_33 = arith.constant 1.000000e+00 : f32
      %42 = vector.broadcast %cst_33 : f32 to vector<2048x8xf32>
      %43 = arith.addf %42, %41 : vector<2048x8xf32>
      %44 = arith.divf %42, %43 : vector<2048x8xf32>
      %45 = arith.mulf %44, %44 : vector<2048x8xf32>
      %cst_34 = arith.constant dense<0.000000e+00> : vector<2048xf32>
      %46 = vector.multi_reduction <add>, %45, %cst_34 [1] : vector<2048x8xf32> to vector<2048xf32>
      %47 = vector.shape_cast %46 : vector<2048xf32> to vector<2048x1xf32>
      %c0_35 = arith.constant 0 : index
      %c0_36 = arith.constant 0 : index
      %48 = vector.load %arg10[%c0_35, %c0_36] : memref<2048x1xf32, #tpu.memory_space<vmem>>, vector<2048x1xf32>
      tpu.vector_store %arg10[%c0_35, %c0_36], %47 {strides = array<i32>} : memref<2048x1xf32, #tpu.memory_space<vmem>>, vector<2048x1xf32>,
      %c0_37 = arith.constant 0 : index
      %c0_38 = arith.constant 0 : index
      %49 = vector.load %arg9[%c0_37, %c0_38] : memref<2048x8xf32, #tpu.memory_space<vmem>>, vector<2048x8xf32>
      tpu.vector_store %arg9[%c0_37, %c0_38], %44 {strides = array<i32>} : memref<2048x8xf32, #tpu.memory_space<vmem>>, vector<2048x8xf32>,
      %cst_39 = arith.constant 0.000000e+00 : f32
      %50 = vector.broadcast %cst_39 : f32 to vector<8x128xf32>
      %c0_40 = arith.constant 0 : index
      %c0_41 = arith.constant 0 : index
      %c0_42 = arith.constant 0 : index
      %51 = vector.load %arg7[%c0_40, %c0_41, %c0_42] : memref<1x8x128xf32, #tpu.memory_space<vmem>>, vector<1x8x128xf32>
      %52 = vector.shape_cast %51 : vector<1x8x128xf32> to vector<8x128xf32>
      %53 = vector.shape_cast %50 : vector<8x128xf32> to vector<1x8x128xf32>
      tpu.vector_store %arg7[%c0_40, %c0_41, %c0_42], %53 {strides = array<i32>} : memref<1x8x128xf32, #tpu.memory_space<vmem>>, vector<1x8x128xf32>,
    } else {
    }
    %c0 = arith.constant 0 : index
    %c0_1 = arith.constant 0 : index
    %3 = vector.load %arg9[%c0, %c0_1] : memref<2048x8xf32, #tpu.memory_space<vmem>>, vector<2048x8xf32>
    %c0_2 = arith.constant 0 : index
    %c0_3 = arith.constant 0 : index
    %c0_4 = arith.constant 0 : index
    %4 = vector.load %arg4[%c0_2, %c0_3, %c0_4] : memref<1x8x128xf32, #tpu.memory_space<vmem>>, vector<1x8x128xf32>
    %5 = vector.shape_cast %4 : vector<1x8x128xf32> to vector<8x128xf32>
    %cst = arith.constant dense<0.000000e+00> : vector<2048x128xf32>
    %6 = tpu.matmul %3, %5, %cst {dimension_numbers = #tpu.dot_dimension_numbers<[1], [0], [0], [1], [0, 0, 1, 1], [], []>} : vector<2048x8xf32>, vector<8x128xf32>, vector<2048x128xf32> -> vector<2048x128xf32>
    %c0_5 = arith.constant 0 : index
    %c0_6 = arith.constant 0 : index
    %7 = vector.load %arg10[%c0_5, %c0_6] : memref<2048x1xf32, #tpu.memory_space<vmem>>, vector<2048x1xf32>
    %8 = vector.broadcast %7 : vector<2048x1xf32> to vector<2048x128xf32>
    %9 = arith.addf %8, %6 : vector<2048x128xf32>
    %c0_7 = arith.constant 0 : index
    %c0_8 = arith.constant 0 : index
    %c0_9 = arith.constant 0 : index
    %10 = vector.load %arg5[%c0_7, %c0_8, %c0_9] : memref<1x1x128xf32, #tpu.memory_space<vmem>>, vector<1x1x128xf32>
    %11 = vector.shape_cast %10 : vector<1x1x128xf32> to vector<1x128xf32>
    %12 = vector.broadcast %11 : vector<1x128xf32> to vector<2048x128xf32>
    %13 = arith.addf %9, %12 : vector<2048x128xf32>
    %14 = vector.shape_cast %13 : vector<2048x128xf32> to vector<8x256x128xf32>
    %cst_10 = arith.constant dense<0x7F800000> : vector<8x128xf32>
    %15 = vector.multi_reduction <minimumf>, %14, %cst_10 [1] : vector<8x256x128xf32> to vector<8x128xf32>
    %cst_11 = arith.constant 0.000000e+00 : f32
    %16 = vector.broadcast %cst_11 : f32 to vector<8x128xf32>
    %17 = arith.maximumf %15, %16 : vector<8x128xf32>
    %c0_12 = arith.constant 0 : index
    %c0_13 = arith.constant 0 : index
    %c0_14 = arith.constant 0 : index
    %18 = vector.load %arg8[%c0_12, %c0_13, %c0_14] : memref<1x8x128xf32, #tpu.memory_space<vmem>>, vector<1x8x128xf32>
    %19 = vector.shape_cast %18 : vector<1x8x128xf32> to vector<8x128xf32>
    %20 = vector.shape_cast %17 : vector<8x128xf32> to vector<1x8x128xf32>
    tpu.vector_store %arg8[%c0_12, %c0_13, %c0_14], %20 {strides = array<i32>} : memref<1x8x128xf32, #tpu.memory_space<vmem>>, vector<1x8x128xf32>,
    %cst_15 = arith.constant 1.000000e+00 : f32
    %21 = vector.broadcast %cst_15 : f32 to vector<8x128xf32>
    %22 = arith.addf %17, %21 : vector<8x128xf32>
    %cst_16 = arith.constant 9.99999974E-5 : f32
    %23 = vector.broadcast %cst_16 : f32 to vector<8x128xf32>
    %24 = arith.addf %17, %23 : vector<8x128xf32>
    %25 = arith.divf %22, %24 : vector<8x128xf32>
    %26 = math.log %25 : vector<8x128xf32>
    %c0_17 = arith.constant 0 : index
    %c0_18 = arith.constant 0 : index
    %c0_19 = arith.constant 0 : index
    %27 = vector.load %arg7[%c0_17, %c0_18, %c0_19] : memref<1x8x128xf32, #tpu.memory_space<vmem>>, vector<1x8x128xf32>
    %28 = vector.shape_cast %27 : vector<1x8x128xf32> to vector<8x128xf32>
    %c0_20 = arith.constant 0 : index
    %c0_21 = arith.constant 0 : index
    %c0_22 = arith.constant 0 : index
    %29 = vector.load %arg6[%c0_20, %c0_21, %c0_22] : memref<1x128x128xf32, #tpu.memory_space<vmem>>, vector<1x128x128xf32>
    %30 = vector.shape_cast %29 : vector<1x128x128xf32> to vector<128x128xf32>
    %cst_23 = arith.constant dense<0.000000e+00> : vector<8x128xf32>
    %31 = tpu.matmul %26, %30, %cst_23 {dimension_numbers = #tpu.dot_dimension_numbers<[1], [0], [0], [1], [0, 0, 1, 1], [], []>} : vector<8x128xf32>, vector<128x128xf32>, vector<8x128xf32> -> vector<8x128xf32>
    %32 = arith.addf %28, %31 : vector<8x128xf32>
    %c0_24 = arith.constant 0 : index
    %c0_25 = arith.constant 0 : index
    %c0_26 = arith.constant 0 : index
    %33 = vector.load %arg7[%c0_24, %c0_25, %c0_26] : memref<1x8x128xf32, #tpu.memory_space<vmem>>, vector<1x8x128xf32>
    %34 = vector.shape_cast %33 : vector<1x8x128xf32> to vector<8x128xf32>
    %35 = vector.shape_cast %32 : vector<8x128xf32> to vector<1x8x128xf32>
    tpu.vector_store %arg7[%c0_24, %c0_25, %c0_26], %35 {strides = array<i32>} : memref<1x8x128xf32, #tpu.memory_space<vmem>>, vector<1x8x128xf32>,
    return
  }
  func.func @transform_0(%arg0: i32, %arg1: i32) -> (i32, i32) {
    %c0_i32 = arith.constant 0 : i32
    %c0_i32_0 = arith.constant 0 : i32
    %c0_i32_1 = arith.constant 0 : i32
    return %c0_i32, %c0_i32_0 : i32, i32
  }
  func.func @transform_1(%arg0: i32, %arg1: i32) -> (i32, i32, i32) {
    %c0_i32 = arith.constant 0 : i32
    %c0_i32_0 = arith.constant 0 : i32
    %c0_i32_1 = arith.constant 0 : i32
    return %arg0, %c0_i32, %c0_i32_0 : i32, i32, i32
  }
  func.func @transform_2(%arg0: i32, %arg1: i32) -> (i32, i32, i32) {
    %c0_i32 = arith.constant 0 : i32
    %c0_i32_0 = arith.constant 0 : i32
    return %arg0, %c0_i32, %arg1 : i32, i32, i32
  }
  func.func @transform_3(%arg0: i32, %arg1: i32) -> (i32, i32, i32) {
    %c0_i32 = arith.constant 0 : i32
    %c0_i32_0 = arith.constant 0 : i32
    return %arg0, %c0_i32, %arg1 : i32, i32, i32
  }
  func.func @transform_4(%arg0: i32, %arg1: i32) -> (i32, i32, i32) {
    %c0_i32 = arith.constant 0 : i32
    %c0_i32_0 = arith.constant 0 : i32
    return %arg0, %arg1, %c0_i32 : i32, i32, i32
  }
  func.func @transform_5(%arg0: i32, %arg1: i32) -> (i32, i32, i32) {
    %c0_i32 = arith.constant 0 : i32
    %c0_i32_0 = arith.constant 0 : i32
    %c0_i32_1 = arith.constant 0 : i32
    return %arg0, %c0_i32, %c0_i32_0 : i32, i32, i32
  }
  func.func @transform_6(%arg0: i32, %arg1: i32) -> (i32, i32, i32) {
    %c0_i32 = arith.constant 0 : i32
    %c0_i32_0 = arith.constant 0 : i32
    return %arg0, %c0_i32, %arg1 : i32, i32, i32
  }
}

</mosaic_0001>

<llo_original>
// kernel: tpu_custom_call.1
$region0: #{tpu_custom_call.1}
  #allocation0 [shape = 'u32[]', space=smem, size = 0x4, offset = 0x4, fixed_abs, tag = 'smem constant byte address 0x4 - core index']
  #allocation1 [shape = 'u32[144,128]{1,0:T(1,128)}', space=vmem, size = 0x12000, scoped, tag = 'internal scratch']
  #allocation2 [shape = 'f32[2048,8]{1,0:T(8,128)}', space=vmem, size = 0x100000, scoped, tag = 'scratch operand']
  #allocation3 [shape = 'f32[2048,1]{1,0:T(8,128)}', space=vmem, size = 0x100000, scoped, tag = 'scratch operand']
  %s0 = inlined_call_operand.vmem [shape: f32[2048,4], index: 0, kind: input, shape index: {}]
  %s1 = inlined_call_operand.vmem [shape: f32[2,4,8], index: 1, kind: input, shape index: {}]
  %s2 = inlined_call_operand.vmem [shape: f32[2,8,128], index: 2, kind: input, shape index: {}]
  %s3 = inlined_call_operand.vmem [shape: f32[2,1,128], index: 3, kind: input, shape index: {}]
  %s4 = inlined_call_operand.vmem [shape: f32[2,128,128], index: 4, kind: input, shape index: {}]
  %s5 = inlined_call_operand.hbm [shape: f32[2,8,128], index: 5, kind: output, shape index: {0}]
  %s6 = inlined_call_operand.hbm [shape: f32[2,8,128], index: 6, kind: output, shape index: {1}]
  %7 = xla_tuple %s5, %s6
  %s8 = sld [smem:[#allocation0]]
  $region65: #{tpu_custom_call.1} parent=0
    _
  %s10 = ssub.s32 1, %s8
  %s11 = scalar_select 0, %s10, %s8
  $region1: #{tpu_custom_call.1} parent=0
    #allocation4 [shape = 'u8[8192]{0}', space=vmem, size = 0x2000, scoped, tag = 'output window, operand 0']
    #allocation5 [shape = 's32[2]{0}', space=sflag, size = 0x8, scoped, tag = 'scoped memory for tpu_custom_call.1']
    #allocation6 [shape = 'u8[8192]{0}', space=vmem, size = 0x2000, scoped, tag = 'output window, operand 1']
    #allocation7 [shape = 's32[2]{0}', space=sflag, size = 0x8, scoped, tag = 'scoped memory for tpu_custom_call.1']
    %12 = vsyncpa [#allocation5], 0
    %s13 = scalar_lea.sflag [#allocation5], 1
    %14 = vsyncpa %s13, 0
    %15 = vsyncpa [#allocation7], 0
    %s16 = scalar_lea.sflag [#allocation7], 1
    %17 = vsyncpa %s16, 0
    loop: start=0, step=1, limit=4
    $region2: #{tpu_custom_call.1} parent=1 // loop_pre_header
      _
    $region3: #{tpu_custom_call.1} parent=1 // loop_header
      %s19 = sphi 0, %s23
      %p20 = scmp.ge.s32.totalorder %s19, 4
      %s26 = sphi 0, %s38
      %s27 = sphi 0, %s34
      %s28 = sphi 0, %s26
      %s29 = sphi 0, %s27
      %s30 = sphi 0, %s28
      %s31 = sphi 0, %s29
      %s39 = sphi 0, %s39
      %s41 = sphi 0, %s39
      %s42 = sphi 0, %s41
      %s56 = sphi 0, %s42
      %s62 = sphi 0, %s64
      %s65 = sphi 0, %s62
      %s66 = sphi 0, %s65
      %s82 = sphi 0, %s66
      %s90 = sphi 0, %s92
      %s93 = sphi 0, %s90
      %s94 = sphi 0, %s93
      %s110 = sphi 0, %s94
      %s118 = sphi 0, %s120
      %s121 = sphi 0, %s118
      %s122 = sphi 0, %s121
      %s138 = sphi 0, %s122
      %s146 = sphi 0, %s148
      %s149 = sphi 0, %s146
      %s150 = sphi 0, %s149
      %s166 = sphi 0, %s150
      %s172 = sphi 0, %s174
      %s175 = sphi 0, %s172
      %s176 = sphi 0, %s175
      %s192 = sphi 0, %s176
      %s200 = sphi 0, %s202
      %s203 = sphi 0, %s200
      %s204 = sphi 0, %s203
      %s220 = sphi 0, %s204
    $region4: #{tpu_custom_call.1} parent=1 // loop_header_branch
      %22 = sbr.rel (%p20) target = $region8
    $region5: #{tpu_custom_call.1} parent=1 // loop_body
      %s24 = ssub.s32 %s19, 1
      %s25 = ssub.s32 %s19, 2
      %s32 = sadd.s32 1, %s27
      %p33 = scmp.ge.s32.totalorder %s32, 1
      %s34 = scalar_select %p33, 0, %s32
      %s35 = sadd.s32 1, %s26
      %s36 = scalar_select %p33, %s35, %s26
      %p37 = scmp.ge.s32.totalorder %s36, 2
      %s38 = scalar_select %p37, 0, %s36
      %s40 = sadd.s32 %s39, 1
      %p43 = scmp.eq.s32.totalorder %s19, 1
      %p44 = scmp.ne.s32.totalorder %s39, %s41
      %p45 = scmp.eq.s32.totalorder %s19, 0
      %p46 = por %p44, %p45
      %p47 = scmp.ne.s32.totalorder %s39, %s41
      %p48 = scmp.eq.s32.totalorder %s24, 1
      %p49 = por %p47, %p48
      %p50 = scmp.ne.s32.totalorder %s41, %s42
      %p51 = scmp.eq.s32.totalorder %s24, 0
      %p52 = por %p50, %p51
      %p53 = scmp.ne.s32.totalorder %s41, %s42
      %p54 = scmp.eq.s32.totalorder %s25, 1
      %p55 = por %p53, %p54
      %p57 = scmp.ne.s32.totalorder %s42, %s56
      %p58 = scmp.eq.s32.totalorder %s25, 0
      %p59 = por %p57, %p58
      %s60 = ssub.s32 %s26, %s38
      %p61 = scmp.eq.s32.totalorder %s60, 0
      %s63 = sadd.s32 %s62, 1
      %s64 = scalar_select %p61, %s62, %s63
      %p67 = pneg %p61
      %p68 = scmp.eq.s32.totalorder %s19, 1
      %p69 = por %p67, %p68
      %p70 = scmp.ne.s32.totalorder %s62, %s65
      %p71 = scmp.eq.s32.totalorder %s19, 0
      %p72 = por %p70, %p71
      %p73 = scmp.ne.s32.totalorder %s62, %s65
      %p74 = scmp.eq.s32.totalorder %s24, 1
      %p75 = por %p73, %p74
      %p76 = scmp.ne.s32.totalorder %s65, %s66
      %p77 = scmp.eq.s32.totalorder %s24, 0
      %p78 = por %p76, %p77
      %p79 = scmp.ne.s32.totalorder %s65, %s66
      %p80 = scmp.eq.s32.totalorder %s25, 1
      %p81 = por %p79, %p80
      %p83 = scmp.ne.s32.totalorder %s66, %s82
      %p84 = scmp.eq.s32.totalorder %s25, 0
      %p85 = por %p83, %p84
      %s86 = ssub.s32 %s26, %s38
      %s87 = ssub.s32 %s27, %s34
      %s88 = sor.u32 %s86, %s87
      %p89 = scmp.eq.s32.totalorder %s88, 0
      %s91 = sadd.s32 %s90, 1
      %s92 = scalar_select %p89, %s90, %s91
      %p95 = pneg %p89
      %p96 = scmp.eq.s32.totalorder %s19, 1
      %p97 = por %p95, %p96
      %p98 = scmp.ne.s32.totalorder %s90, %s93
      %p99 = scmp.eq.s32.totalorder %s19, 0
      %p100 = por %p98, %p99
      %p101 = scmp.ne.s32.totalorder %s90, %s93
      %p102 = scmp.eq.s32.totalorder %s24, 1
      %p103 = por %p101, %p102
      %p104 = scmp.ne.s32.totalorder %s93, %s94
      %p105 = scmp.eq.s32.totalorder %s24, 0
      %p106 = por %p104, %p105
      %p107 = scmp.ne.s32.totalorder %s93, %s94
      %p108 = scmp.eq.s32.totalorder %s25, 1
      %p109 = por %p107, %p108
      %p111 = scmp.ne.s32.totalorder %s94, %s110
      %p112 = scmp.eq.s32.totalorder %s25, 0
      %p113 = por %p111, %p112
      %s114 = ssub.s32 %s26, %s38
      %s115 = ssub.s32 %s27, %s34
      %s116 = sor.u32 %s114, %s115
      %p117 = scmp.eq.s32.totalorder %s116, 0
      %s119 = sadd.s32 %s118, 1
      %s120 = scalar_select %p117, %s118, %s119
      %p123 = pneg %p117
      %p124 = scmp.eq.s32.totalorder %s19, 1
      %p125 = por %p123, %p124
      %p126 = scmp.ne.s32.totalorder %s118, %s121
      %p127 = scmp.eq.s32.totalorder %s19, 0
      %p128 = por %p126, %p127
      %p129 = scmp.ne.s32.totalorder %s118, %s121
      %p130 = scmp.eq.s32.totalorder %s24, 1
      %p131 = por %p129, %p130
      %p132 = scmp.ne.s32.totalorder %s121, %s122
      %p133 = scmp.eq.s32.totalorder %s24, 0
      %p134 = por %p132, %p133
      %p135 = scmp.ne.s32.totalorder %s121, %s122
      %p136 = scmp.eq.s32.totalorder %s25, 1
      %p137 = por %p135, %p136
      %p139 = scmp.ne.s32.totalorder %s122, %s138
      %p140 = scmp.eq.s32.totalorder %s25, 0
      %p141 = por %p139, %p140
      %s142 = ssub.s32 %s26, %s38
      %s143 = ssub.s32 %s27, %s34
      %s144 = sor.u32 %s142, %s143
      %p145 = scmp.eq.s32.totalorder %s144, 0
      %s147 = sadd.s32 %s146, 1
      %s148 = scalar_select %p145, %s146, %s147
      %p151 = pneg %p145
      %p152 = scmp.eq.s32.totalorder %s19, 1
      %p153 = por %p151, %p152
      %p154 = scmp.ne.s32.totalorder %s146, %s149
      %p155 = scmp.eq.s32.totalorder %s19, 0
      %p156 = por %p154, %p155
      %p157 = scmp.ne.s32.totalorder %s146, %s149
      %p158 = scmp.eq.s32.totalorder %s24, 1
      %p159 = por %p157, %p158
      %p160 = scmp.ne.s32.totalorder %s149, %s150
      %p161 = scmp.eq.s32.totalorder %s24, 0
      %p162 = por %p160, %p161
      %p163 = scmp.ne.s32.totalorder %s149, %s150
      %p164 = scmp.eq.s32.totalorder %s25, 1
      %p165 = por %p163, %p164
      %p167 = scmp.ne.s32.totalorder %s150, %s166
      %p168 = scmp.eq.s32.totalorder %s25, 0
      %p169 = por %p167, %p168
      %s170 = ssub.s32 %s26, %s38
      %p171 = scmp.eq.s32.totalorder %s170, 0
      %s173 = sadd.s32 %s172, 1
      %s174 = scalar_select %p171, %s172, %s173
      %p177 = pneg %p171
      %p178 = scmp.eq.s32.totalorder %s19, 1
      %p179 = por %p177, %p178
      %p180 = scmp.ne.s32.totalorder %s172, %s175
      %p181 = scmp.eq.s32.totalorder %s19, 0
      %p182 = por %p180, %p181
      %p183 = scmp.ne.s32.totalorder %s172, %s175
      %p184 = scmp.eq.s32.totalorder %s24, 1
      %p185 = por %p183, %p184
      %p186 = scmp.ne.s32.totalorder %s175, %s176
      %p187 = scmp.eq.s32.totalorder %s24, 0
      %p188 = por %p186, %p187
      %p189 = scmp.ne.s32.totalorder %s175, %s176
      %p190 = scmp.eq.s32.totalorder %s25, 1
      %p191 = por %p189, %p190
      %p193 = scmp.ne.s32.totalorder %s176, %s192
      %p194 = scmp.eq.s32.totalorder %s25, 0
      %p195 = por %p193, %p194
      %s196 = ssub.s32 %s26, %s38
      %s197 = ssub.s32 %s27, %s34
      %s198 = sor.u32 %s196, %s197
      %p199 = scmp.eq.s32.totalorder %s198, 0
      %s201 = sadd.s32 %s200, 1
      %s202 = scalar_select %p199, %s200, %s201
      %p205 = pneg %p199
      %p206 = scmp.eq.s32.totalorder %s19, 1
      %p207 = por %p205, %p206
      %p208 = scmp.ne.s32.totalorder %s200, %s203
      %p209 = scmp.eq.s32.totalorder %s19, 0
      %p210 = por %p208, %p209
      %p211 = scmp.ne.s32.totalorder %s200, %s203
      %p212 = scmp.eq.s32.totalorder %s24, 1
      %p213 = por %p211, %p212
      %p214 = scmp.ne.s32.totalorder %s203, %s204
      %p215 = scmp.eq.s32.totalorder %s24, 0
      %p216 = por %p214, %p215
      %p217 = scmp.ne.s32.totalorder %s203, %s204
      %p218 = scmp.eq.s32.totalorder %s25, 1
      %p219 = por %p217, %p218
      %p221 = scmp.ne.s32.totalorder %s204, %s220
      %p222 = scmp.eq.s32.totalorder %s25, 0
      %p223 = por %p221, %p222
      %p224 = scmp.le.s32.totalorder 1, %s19
      %p225 = scmp.lt.s32.totalorder %s19, 3
      %p226 = pnand %p224, %p225
      %p227 = pneg %p226
      // Predicated region
      $region9: #{tpu_custom_call.1} parent=5 // pred_check
        _
      $region10: #{tpu_custom_call.1} parent=5 // pred_check_branch
        %229 = sbr.rel (%p226) target = $region12
      $region11: #{tpu_custom_call.1} parent=5 // pred_region
        %s230 = ssub.s32 %s19, 1
        // Predicated region
        $region13: #{tpu_custom_call.1} parent=11 // pred_check
          %p231 = pneg %p52
        $region14: #{tpu_custom_call.1} parent=11 // pred_check_branch
          %233 = sbr.rel (%p231) target = $region16
        $region15: #{tpu_custom_call.1} parent=11 // pred_region
          _
        $region16: #{tpu_custom_call.1} parent=11 // pred_fallthru
          _
      $region12: #{tpu_custom_call.1} parent=5 // pred_fallthru
        _
      %p234 = scmp.lt.s32.totalorder %s19, 2
      // Predicated region
      $region17: #{tpu_custom_call.1} parent=5 // pred_check
        %p235 = pneg %p234
      $region18: #{tpu_custom_call.1} parent=5 // pred_check_branch
        %237 = sbr.rel (%p235) target = $region20
      $region19: #{tpu_custom_call.1} parent=5 // pred_region
        // Predicated region
        $region21: #{tpu_custom_call.1} parent=19 // pred_check
          %p238 = pneg %p72
        $region22: #{tpu_custom_call.1} parent=19 // pred_check_branch
          %240 = sbr.rel (%p238) target = $region24
        $region23: #{tpu_custom_call.1} parent=19 // pred_region
          %p241 = scmp.lt.s32.totalorder %s26, 1
          %s242 = scalar_select %p241, %s26, 1
          %s243 = smul.addr %s242, 4
          %s244 = scalar_lea.vmem %s1, %s243
        $region24: #{tpu_custom_call.1} parent=19 // pred_fallthru
          _
        // Predicated region
        $region25: #{tpu_custom_call.1} parent=19 // pred_check
          %p245 = pneg %p100
        $region26: #{tpu_custom_call.1} parent=19 // pred_check_branch
          %247 = sbr.rel (%p245) target = $region28
        $region27: #{tpu_custom_call.1} parent=19 // pred_region
          %p248 = scmp.lt.s32.totalorder %s26, 1
          %s249 = scalar_select %p248, %s26, 1
          %p250 = scmp.lt.s32.totalorder %s27, 0
          %s251 = scalar_select %p250, %s27, 0
          %s252 = sadd.s32 %s251, %s249
          %s253 = smul.addr %s252, 8
          %s254 = scalar_lea.vmem %s2, %s253
        $region28: #{tpu_custom_call.1} parent=19 // pred_fallthru
          _
        // Predicated region
        $region29: #{tpu_custom_call.1} parent=19 // pred_check
          %p255 = pneg %p128
        $region30: #{tpu_custom_call.1} parent=19 // pred_check_branch
          %257 = sbr.rel (%p255) target = $region32
        $region31: #{tpu_custom_call.1} parent=19 // pred_region
          %p258 = scmp.lt.s32.totalorder %s26, 1
          %s259 = scalar_select %p258, %s26, 1
          %p260 = scmp.lt.s32.totalorder %s27, 0
          %s261 = scalar_select %p260, %s27, 0
          %s262 = sadd.s32 %s261, %s259
          %s263 = scalar_lea.vmem %s3, %s262
        $region32: #{tpu_custom_call.1} parent=19 // pred_fallthru
          _
        // Predicated region
        $region33: #{tpu_custom_call.1} parent=19 // pred_check
          %p264 = pneg %p156
        $region34: #{tpu_custom_call.1} parent=19 // pred_check_branch
          %266 = sbr.rel (%p264) target = $region36
        $region35: #{tpu_custom_call.1} parent=19 // pred_region
          %s267 = smul.u32 16, %s27
          %p268 = scmp.lt.s32.totalorder %s26, 1
          %s269 = scalar_select %p268, %s26, 1
          %p270 = scmp.lt.s32.totalorder %s267, 15
          %s271 = scalar_select %p270, %s267, 15
          %s272 = smul.addr %s269, 16
          %s273 = sadd.s32 %s271, %s272
          %s274 = smul.addr %s273, 8
          %s275 = scalar_lea.vmem %s4, %s274
          %s276 = smul.u32 16, %s27
        $region36: #{tpu_custom_call.1} parent=19 // pred_fallthru
          _
      $region20: #{tpu_custom_call.1} parent=5 // pred_fallthru
        _
      %p277 = scmp.le.s32.totalorder 1, %s19
      %p278 = scmp.lt.s32.totalorder %s19, 3
      %p279 = pnand %p277, %p278
      %p280 = pneg %p279
      // Predicated region
      $region37: #{tpu_custom_call.1} parent=5 // pred_check
        _
      $region38: #{tpu_custom_call.1} parent=5 // pred_check_branch
        %282 = sbr.rel (%p279) target = $region40
      $region39: #{tpu_custom_call.1} parent=5 // pred_region
        %s283 = ssub.s32 %s19, 1
        %p284 = pneg %p52
        %p285 = pneg %p49
        %p286 = scmp.lt.s32.totalorder %s28, 1
        %s287 = scalar_select %p286, %s28, 1
        %s288 = smul.addr %s287, 4
        %s289 = scalar_lea.vmem %s1, %s288
        %p290 = pneg %p78
        %p291 = pneg %p75
        %p292 = scmp.lt.s32.totalorder %s28, 1
        %s293 = scalar_select %p292, %s28, 1
        %p294 = scmp.lt.s32.totalorder %s29, 0
        %s295 = scalar_select %p294, %s29, 0
        %s296 = sadd.s32 %s295, %s293
        %s297 = smul.addr %s296, 8
        %s298 = scalar_lea.vmem %s2, %s297
        %p299 = pneg %p106
        %p300 = pneg %p103
        %p301 = scmp.lt.s32.totalorder %s28, 1
        %s302 = scalar_select %p301, %s28, 1
        %p303 = scmp.lt.s32.totalorder %s29, 0
        %s304 = scalar_select %p303, %s29, 0
        %s305 = sadd.s32 %s304, %s302
        %s306 = scalar_lea.vmem %s3, %s305
        %p307 = pneg %p134
        %p308 = pneg %p131
        %s309 = smul.u32 16, %s29
        %p310 = scmp.lt.s32.totalorder %s28, 1
        %s311 = scalar_select %p310, %s28, 1
        %p312 = scmp.lt.s32.totalorder %s309, 15
        %s313 = scalar_select %p312, %s309, 15
        %s314 = smul.addr %s311, 16
        %s315 = sadd.s32 %s313, %s314
        %s316 = smul.addr %s315, 8
        %s317 = scalar_lea.vmem %s4, %s316
        %p318 = pneg %p162
        %p319 = pneg %p159
        %p320 = pneg %p188
        %p321 = pneg %p185
        %s322 = sand.u32 %s175, 1
        %s323 = scalar_lea.sflag [#allocation5], %s322
        %s324 = sand.u32 %s175, 1
        %s325 = smul.addr %s324, 8
        %s326 = scalar_lea.vmem [#allocation4], %s325
        %p327 = pneg %p216
        %p328 = pneg %p213
        %s329 = sand.u32 %s203, 1
        %s330 = scalar_lea.sflag [#allocation7], %s329
        %s331 = sand.u32 %s203, 1
        %s332 = smul.addr %s331, 8
        %s333 = scalar_lea.vmem [#allocation6], %s332
        %p334 = scmp.lt.s32.totalorder %s28, 1
        %s335 = scalar_select %p334, %s28, 1
        %s336 = smul.addr %s335, 4
        %s337 = scalar_lea.vmem %s1, %s336
        %p338 = scmp.lt.s32.totalorder %s28, 1
        %s339 = scalar_select %p338, %s28, 1
        %p340 = scmp.lt.s32.totalorder %s29, 0
        %s341 = scalar_select %p340, %s29, 0
        %s342 = sadd.s32 %s341, %s339
        %s343 = smul.addr %s342, 8
        %s344 = scalar_lea.vmem %s2, %s343
        %p345 = scmp.lt.s32.totalorder %s28, 1
        %s346 = scalar_select %p345, %s28, 1
        %p347 = scmp.lt.s32.totalorder %s29, 0
        %s348 = scalar_select %p347, %s29, 0
        %s349 = sadd.s32 %s348, %s346
        %s350 = scalar_lea.vmem %s3, %s349
        %s351 = smul.u32 16, %s29
        %p352 = scmp.lt.s32.totalorder %s28, 1
        %s353 = scalar_select %p352, %s28, 1
        %p354 = scmp.lt.s32.totalorder %s351, 15
        %s355 = scalar_select %p354, %s351, 15
        %s356 = smul.addr %s353, 16
        %s357 = sadd.s32 %s355, %s356
        %s358 = smul.addr %s357, 8
        %s359 = scalar_lea.vmem %s4, %s358
        %s360 = smul.u32 16, %s29
        %p361 = scmp.eq.s32.totalorder %s29, 0
        // Predicated region
        $region41: #{tpu_custom_call.1} parent=39 // pred_check
          %p362 = pneg %p361
        $region42: #{tpu_custom_call.1} parent=39 // pred_check_branch
          %364 = sbr.rel (%p362) target = $region44
        $region43: #{tpu_custom_call.1} parent=39 // pred_region
          %v365 = vld [vmem:[%s0] sm:$0xff]
          %v366 = vld [vmem:[%s0 + $0x8] sm:$0xff]
          %v367 = vld [vmem:[%s0 + $0x10] sm:$0xff]
          %v368 = vld [vmem:[%s0 + $0x18] sm:$0xff]
          %v369 = vld [vmem:[%s0 + $0x20] sm:$0xff]
          %v370 = vld [vmem:[%s0 + $0x28] sm:$0xff]
          %v371 = vld [vmem:[%s0 + $0x30] sm:$0xff]
          %v372 = vld [vmem:[%s0 + $0x38] sm:$0xff]
          %v373 = vld [vmem:[%s0 + $0x40] sm:$0xff]
          %v374 = vld [vmem:[%s0 + $0x48] sm:$0xff]
          %v375 = vld [vmem:[%s0 + $0x50] sm:$0xff]
          %v376 = vld [vmem:[%s0 + $0x58] sm:$0xff]
          %v377 = vld [vmem:[%s0 + $0x60] sm:$0xff]
          %v378 = vld [vmem:[%s0 + $0x68] sm:$0xff]
          %v379 = vld [vmem:[%s0 + $0x70] sm:$0xff]
          %v380 = vld [vmem:[%s0 + $0x78] sm:$0xff]
          %v381 = vld [vmem:[%s0 + $0x80] sm:$0xff]
          %v382 = vld [vmem:[%s0 + $0x88] sm:$0xff]
          %v383 = vld [vmem:[%s0 + $0x90] sm:$0xff]
          %v384 = vld [vmem:[%s0 + $0x98] sm:$0xff]
          %v385 = vld [vmem:[%s0 + $0xa0] sm:$0xff]
          %v386 = vld [vmem:[%s0 + $0xa8] sm:$0xff]
          %v387 = vld [vmem:[%s0 + $0xb0] sm:$0xff]
          %v388 = vld [vmem:[%s0 + $0xb8] sm:$0xff]
          %v389 = vld [vmem:[%s0 + $0xc0] sm:$0xff]
          %v390 = vld [vmem:[%s0 + $0xc8] sm:$0xff]
          %v391 = vld [vmem:[%s0 + $0xd0] sm:$0xff]
          %v392 = vld [vmem:[%s0 + $0xd8] sm:$0xff]
          %v393 = vld [vmem:[%s0 + $0xe0] sm:$0xff]
          %v394 = vld [vmem:[%s0 + $0xe8] sm:$0xff]
          %v395 = vld [vmem:[%s0 + $0xf0] sm:$0xff]
          %v396 = vld [vmem:[%s0 + $0xf8] sm:$0xff]
          %v397 = vld [vmem:[%s0 + $0x100] sm:$0xff]
          %v398 = vld [vmem:[%s0 + $0x108] sm:$0xff]
          %v399 = vld [vmem:[%s0 + $0x110] sm:$0xff]
          %v400 = vld [vmem:[%s0 + $0x118] sm:$0xff]
          %v401 = vld [vmem:[%s0 + $0x120] sm:$0xff]
          %v402 = vld [vmem:[%s0 + $0x128] sm:$0xff]
          %v403 = vld [vmem:[%s0 + $0x130] sm:$0xff]
          %v404 = vld [vmem:[%s0 + $0x138] sm:$0xff]
          %v405 = vld [vmem:[%s0 + $0x140] sm:$0xff]
          %v406 = vld [vmem:[%s0 + $0x148] sm:$0xff]
          %v407 = vld [vmem:[%s0 + $0x150] sm:$0xff]
          %v408 = vld [vmem:[%s0 + $0x158] sm:$0xff]
          %v409 = vld [vmem:[%s0 + $0x160] sm:$0xff]
          %v410 = vld [vmem:[%s0 + $0x168] sm:$0xff]
          %v411 = vld [vmem:[%s0 + $0x170] sm:$0xff]
          %v412 = vld [vmem:[%s0 + $0x178] sm:$0xff]
          %v413 = vld [vmem:[%s0 + $0x180] sm:$0xff]
          %v414 = vld [vmem:[%s0 + $0x188] sm:$0xff]
          %v415 = vld [vmem:[%s0 + $0x190] sm:$0xff]
          %v416 = vld [vmem:[%s0 + $0x198] sm:$0xff]
          %v417 = vld [vmem:[%s0 + $0x1a0] sm:$0xff]
          %v418 = vld [vmem:[%s0 + $0x1a8] sm:$0xff]
          %v419 = vld [vmem:[%s0 + $0x1b0] sm:$0xff]
          %v420 = vld [vmem:[%s0 + $0x1b8] sm:$0xff]
          %v421 = vld [vmem:[%s0 + $0x1c0] sm:$0xff]
          %v422 = vld [vmem:[%s0 + $0x1c8] sm:$0xff]
          %v423 = vld [vmem:[%s0 + $0x1d0] sm:$0xff]
          %v424 = vld [vmem:[%s0 + $0x1d8] sm:$0xff]
          %v425 = vld [vmem:[%s0 + $0x1e0] sm:$0xff]
          %v426 = vld [vmem:[%s0 + $0x1e8] sm:$0xff]
          %v427 = vld [vmem:[%s0 + $0x1f0] sm:$0xff]
          %v428 = vld [vmem:[%s0 + $0x1f8] sm:$0xff]
          %v429 = vld [vmem:[%s0 + $0x200] sm:$0xff]
          %v430 = vld [vmem:[%s0 + $0x208] sm:$0xff]
          %v431 = vld [vmem:[%s0 + $0x210] sm:$0xff]
          %v432 = vld [vmem:[%s0 + $0x218] sm:$0xff]
          %v433 = vld [vmem:[%s0 + $0x220] sm:$0xff]
          %v434 = vld [vmem:[%s0 + $0x228] sm:$0xff]
          %v435 = vld [vmem:[%s0 + $0x230] sm:$0xff]
          %v436 = vld [vmem:[%s0 + $0x238] sm:$0xff]
          %v437 = vld [vmem:[%s0 + $0x240] sm:$0xff]
          %v438 = vld [vmem:[%s0 + $0x248] sm:$0xff]
          %v439 = vld [vmem:[%s0 + $0x250] sm:$0xff]
          %v440 = vld [vmem:[%s0 + $0x258] sm:$0xff]
          %v441 = vld [vmem:[%s0 + $0x260] sm:$0xff]
          %v442 = vld [vmem:[%s0 + $0x268] sm:$0xff]
          %v443 = vld [vmem:[%s0 + $0x270] sm:$0xff]
          %v444 = vld [vmem:[%s0 + $0x278] sm:$0xff]
          %v445 = vld [vmem:[%s0 + $0x280] sm:$0xff]
          %v446 = vld [vmem:[%s0 + $0x288] sm:$0xff]
          %v447 = vld [vmem:[%s0 + $0x290] sm:$0xff]
          %v448 = vld [vmem:[%s0 + $0x298] sm:$0xff]
          %v449 = vld [vmem:[%s0 + $0x2a0] sm:$0xff]
          %v450 = vld [vmem:[%s0 + $0x2a8] sm:$0xff]
          %v451 = vld [vmem:[%s0 + $0x2b0] sm:$0xff]
          %v452 = vld [vmem:[%s0 + $0x2b8] sm:$0xff]
          %v453 = vld [vmem:[%s0 + $0x2c0] sm:$0xff]
          %v454 = vld [vmem:[%s0 + $0x2c8] sm:$0xff]
          %v455 = vld [vmem:[%s0 + $0x2d0] sm:$0xff]
          %v456 = vld [vmem:[%s0 + $0x2d8] sm:$0xff]
          %v457 = vld [vmem:[%s0 + $0x2e0] sm:$0xff]
          %v458 = vld [vmem:[%s0 + $0x2e8] sm:$0xff]
          %v459 = vld [vmem:[%s0 + $0x2f0] sm:$0xff]
          %v460 = vld [vmem:[%s0 + $0x2f8] sm:$0xff]
          %v461 = vld [vmem:[%s0 + $0x300] sm:$0xff]
          %v462 = vld [vmem:[%s0 + $0x308] sm:$0xff]
          %v463 = vld [vmem:[%s0 + $0x310] sm:$0xff]
          %v464 = vld [vmem:[%s0 + $0x318] sm:$0xff]
          %v465 = vld [vmem:[%s0 + $0x320] sm:$0xff]
          %v466 = vld [vmem:[%s0 + $0x328] sm:$0xff]
          %v467 = vld [vmem:[%s0 + $0x330] sm:$0xff]
          %v468 = vld [vmem:[%s0 + $0x338] sm:$0xff]
          %v469 = vld [vmem:[%s0 + $0x340] sm:$0xff]
          %v470 = vld [vmem:[%s0 + $0x348] sm:$0xff]
          %v471 = vld [vmem:[%s0 + $0x350] sm:$0xff]
          %v472 = vld [vmem:[%s0 + $0x358] sm:$0xff]
          %v473 = vld [vmem:[%s0 + $0x360] sm:$0xff]
          %v474 = vld [vmem:[%s0 + $0x368] sm:$0xff]
          %v475 = vld [vmem:[%s0 + $0x370] sm:$0xff]
          %v476 = vld [vmem:[%s0 + $0x378] sm:$0xff]
          %v477 = vld [vmem:[%s0 + $0x380] sm:$0xff]
          %v478 = vld [vmem:[%s0 + $0x388] sm:$0xff]
          %v479 = vld [vmem:[%s0 + $0x390] sm:$0xff]
          %v480 = vld [vmem:[%s0 + $0x398] sm:$0xff]
          %v481 = vld [vmem:[%s0 + $0x3a0] sm:$0xff]
          %v482 = vld [vmem:[%s0 + $0x3a8] sm:$0xff]
          %v483 = vld [vmem:[%s0 + $0x3b0] sm:$0xff]
          %v484 = vld [vmem:[%s0 + $0x3b8] sm:$0xff]
          %v485 = vld [vmem:[%s0 + $0x3c0] sm:$0xff]
          %v486 = vld [vmem:[%s0 + $0x3c8] sm:$0xff]
          %v487 = vld [vmem:[%s0 + $0x3d0] sm:$0xff]
          %v488 = vld [vmem:[%s0 + $0x3d8] sm:$0xff]
          %v489 = vld [vmem:[%s0 + $0x3e0] sm:$0xff]
          %v490 = vld [vmem:[%s0 + $0x3e8] sm:$0xff]
          %v491 = vld [vmem:[%s0 + $0x3f0] sm:$0xff]
          %v492 = vld [vmem:[%s0 + $0x3f8] sm:$0xff]
          %v493 = vld [vmem:[%s0 + $0x400] sm:$0xff]
          %v494 = vld [vmem:[%s0 + $0x408] sm:$0xff]
          %v495 = vld [vmem:[%s0 + $0x410] sm:$0xff]
          %v496 = vld [vmem:[%s0 + $0x418] sm:$0xff]
          %v497 = vld [vmem:[%s0 + $0x420] sm:$0xff]
          %v498 = vld [vmem:[%s0 + $0x428] sm:$0xff]
          %v499 = vld [vmem:[%s0 + $0x430] sm:$0xff]
          %v500 = vld [vmem:[%s0 + $0x438] sm:$0xff]
          %v501 = vld [vmem:[%s0 + $0x440] sm:$0xff]
          %v502 = vld [vmem:[%s0 + $0x448] sm:$0xff]
          %v503 = vld [vmem:[%s0 + $0x450] sm:$0xff]
          %v504 = vld [vmem:[%s0 + $0x458] sm:$0xff]
          %v505 = vld [vmem:[%s0 + $0x460] sm:$0xff]
          %v506 = vld [vmem:[%s0 + $0x468] sm:$0xff]
          %v507 = vld [vmem:[%s0 + $0x470] sm:$0xff]
          %v508 = vld [vmem:[%s0 + $0x478] sm:$0xff]
          %v509 = vld [vmem:[%s0 + $0x480] sm:$0xff]
          %v510 = vld [vmem:[%s0 + $0x488] sm:$0xff]
          %v511 = vld [vmem:[%s0 + $0x490] sm:$0xff]
          %v512 = vld [vmem:[%s0 + $0x498] sm:$0xff]
          %v513 = vld [vmem:[%s0 + $0x4a0] sm:$0xff]
          %v514 = vld [vmem:[%s0 + $0x4a8] sm:$0xff]
          %v515 = vld [vmem:[%s0 + $0x4b0] sm:$0xff]
          %v516 = vld [vmem:[%s0 + $0x4b8] sm:$0xff]
          %v517 = vld [vmem:[%s0 + $0x4c0] sm:$0xff]
          %v518 = vld [vmem:[%s0 + $0x4c8] sm:$0xff]
          %v519 = vld [vmem:[%s0 + $0x4d0] sm:$0xff]
          %v520 = vld [vmem:[%s0 + $0x4d8] sm:$0xff]
          %v521 = vld [vmem:[%s0 + $0x4e0] sm:$0xff]
          %v522 = vld [vmem:[%s0 + $0x4e8] sm:$0xff]
          %v523 = vld [vmem:[%s0 + $0x4f0] sm:$0xff]
          %v524 = vld [vmem:[%s0 + $0x4f8] sm:$0xff]
          %v525 = vld [vmem:[%s0 + $0x500] sm:$0xff]
          %v526 = vld [vmem:[%s0 + $0x508] sm:$0xff]
          %v527 = vld [vmem:[%s0 + $0x510] sm:$0xff]
          %v528 = vld [vmem:[%s0 + $0x518] sm:$0xff]
          %v529 = vld [vmem:[%s0 + $0x520] sm:$0xff]
          %v530 = vld [vmem:[%s0 + $0x528] sm:$0xff]
          %v531 = vld [vmem:[%s0 + $0x530] sm:$0xff]
          %v532 = vld [vmem:[%s0 + $0x538] sm:$0xff]
          %v533 = vld [vmem:[%s0 + $0x540] sm:$0xff]
          %v534 = vld [vmem:[%s0 + $0x548] sm:$0xff]
          %v535 = vld [vmem:[%s0 + $0x550] sm:$0xff]
          %v536 = vld [vmem:[%s0 + $0x558] sm:$0xff]
          %v537 = vld [vmem:[%s0 + $0x560] sm:$0xff]
          %v538 = vld [vmem:[%s0 + $0x568] sm:$0xff]
          %v539 = vld [vmem:[%s0 + $0x570] sm:$0xff]
          %v540 = vld [vmem:[%s0 + $0x578] sm:$0xff]
          %v541 = vld [vmem:[%s0 + $0x580] sm:$0xff]
          %v542 = vld [vmem:[%s0 + $0x588] sm:$0xff]
          %v543 = vld [vmem:[%s0 + $0x590] sm:$0xff]
          %v544 = vld [vmem:[%s0 + $0x598] sm:$0xff]
          %v545 = vld [vmem:[%s0 + $0x5a0] sm:$0xff]
          %v546 = vld [vmem:[%s0 + $0x5a8] sm:$0xff]
          %v547 = vld [vmem:[%s0 + $0x5b0] sm:$0xff]
          %v548 = vld [vmem:[%s0 + $0x5b8] sm:$0xff]
          %v549 = vld [vmem:[%s0 + $0x5c0] sm:$0xff]
          %v550 = vld [vmem:[%s0 + $0x5c8] sm:$0xff]
          %v551 = vld [vmem:[%s0 + $0x5d0] sm:$0xff]
          %v552 = vld [vmem:[%s0 + $0x5d8] sm:$0xff]
          %v553 = vld [vmem:[%s0 + $0x5e0] sm:$0xff]
          %v554 = vld [vmem:[%s0 + $0x5e8] sm:$0xff]
          %v555 = vld [vmem:[%s0 + $0x5f0] sm:$0xff]
          %v556 = vld [vmem:[%s0 + $0x5f8] sm:$0xff]
          %v557 = vld [vmem:[%s0 + $0x600] sm:$0xff]
          %v558 = vld [vmem:[%s0 + $0x608] sm:$0xff]
          %v559 = vld [vmem:[%s0 + $0x610] sm:$0xff]
          %v560 = vld [vmem:[%s0 + $0x618] sm:$0xff]
          %v561 = vld [vmem:[%s0 + $0x620] sm:$0xff]
          %v562 = vld [vmem:[%s0 + $0x628] sm:$0xff]
          %v563 = vld [vmem:[%s0 + $0x630] sm:$0xff]
          %v564 = vld [vmem:[%s0 + $0x638] sm:$0xff]
          %v565 = vld [vmem:[%s0 + $0x640] sm:$0xff]
          %v566 = vld [vmem:[%s0 + $0x648] sm:$0xff]
          %v567 = vld [vmem:[%s0 + $0x650] sm:$0xff]
          %v568 = vld [vmem:[%s0 + $0x658] sm:$0xff]
          %v569 = vld [vmem:[%s0 + $0x660] sm:$0xff]
          %v570 = vld [vmem:[%s0 + $0x668] sm:$0xff]
          %v571 = vld [vmem:[%s0 + $0x670] sm:$0xff]
          %v572 = vld [vmem:[%s0 + $0x678] sm:$0xff]
          %v573 = vld [vmem:[%s0 + $0x680] sm:$0xff]
          %v574 = vld [vmem:[%s0 + $0x688] sm:$0xff]
          %v575 = vld [vmem:[%s0 + $0x690] sm:$0xff]
          %v576 = vld [vmem:[%s0 + $0x698] sm:$0xff]
          %v577 = vld [vmem:[%s0 + $0x6a0] sm:$0xff]
          %v578 = vld [vmem:[%s0 + $0x6a8] sm:$0xff]
          %v579 = vld [vmem:[%s0 + $0x6b0] sm:$0xff]
          %v580 = vld [vmem:[%s0 + $0x6b8] sm:$0xff]
          %v581 = vld [vmem:[%s0 + $0x6c0] sm:$0xff]
          %v582 = vld [vmem:[%s0 + $0x6c8] sm:$0xff]
          %v583 = vld [vmem:[%s0 + $0x6d0] sm:$0xff]
          %v584 = vld [vmem:[%s0 + $0x6d8] sm:$0xff]
          %v585 = vld [vmem:[%s0 + $0x6e0] sm:$0xff]
          %v586 = vld [vmem:[%s0 + $0x6e8] sm:$0xff]
          %v587 = vld [vmem:[%s0 + $0x6f0] sm:$0xff]
          %v588 = vld [vmem:[%s0 + $0x6f8] sm:$0xff]
          %v589 = vld [vmem:[%s0 + $0x700] sm:$0xff]
          %v590 = vld [vmem:[%s0 + $0x708] sm:$0xff]
          %v591 = vld [vmem:[%s0 + $0x710] sm:$0xff]
          %v592 = vld [vmem:[%s0 + $0x718] sm:$0xff]
          %v593 = vld [vmem:[%s0 + $0x720] sm:$0xff]
          %v594 = vld [vmem:[%s0 + $0x728] sm:$0xff]
          %v595 = vld [vmem:[%s0 + $0x730] sm:$0xff]
          %v596 = vld [vmem:[%s0 + $0x738] sm:$0xff]
          %v597 = vld [vmem:[%s0 + $0x740] sm:$0xff]
          %v598 = vld [vmem:[%s0 + $0x748] sm:$0xff]
          %v599 = vld [vmem:[%s0 + $0x750] sm:$0xff]
          %v600 = vld [vmem:[%s0 + $0x758] sm:$0xff]
          %v601 = vld [vmem:[%s0 + $0x760] sm:$0xff]
          %v602 = vld [vmem:[%s0 + $0x768] sm:$0xff]
          %v603 = vld [vmem:[%s0 + $0x770] sm:$0xff]
          %v604 = vld [vmem:[%s0 + $0x778] sm:$0xff]
          %v605 = vld [vmem:[%s0 + $0x780] sm:$0xff]
          %v606 = vld [vmem:[%s0 + $0x788] sm:$0xff]
          %v607 = vld [vmem:[%s0 + $0x790] sm:$0xff]
          %v608 = vld [vmem:[%s0 + $0x798] sm:$0xff]
          %v609 = vld [vmem:[%s0 + $0x7a0] sm:$0xff]
          %v610 = vld [vmem:[%s0 + $0x7a8] sm:$0xff]
          %v611 = vld [vmem:[%s0 + $0x7b0] sm:$0xff]
          %v612 = vld [vmem:[%s0 + $0x7b8] sm:$0xff]
          %v613 = vld [vmem:[%s0 + $0x7c0] sm:$0xff]
          %v614 = vld [vmem:[%s0 + $0x7c8] sm:$0xff]
          %v615 = vld [vmem:[%s0 + $0x7d0] sm:$0xff]
          %v616 = vld [vmem:[%s0 + $0x7d8] sm:$0xff]
          %v617 = vld [vmem:[%s0 + $0x7e0] sm:$0xff]
          %v618 = vld [vmem:[%s0 + $0x7e8] sm:$0xff]
          %v619 = vld [vmem:[%s0 + $0x7f0] sm:$0xff]
          %v620 = vld [vmem:[%s0 + $0x7f8] sm:$0xff]
          %v621 = vld [vmem:[%s337] sm:$0xf]
          %vm622 = vcmask 31744
          %v624 = vsel %vm622, %v365, 0
          %v627 = vsel %vm622, %v366, 0
          %v630 = vsel %vm622, %v367, 0
          %v633 = vsel %vm622, %v368, 0
          %v636 = vsel %vm622, %v369, 0
          %v639 = vsel %vm622, %v370, 0
          %v642 = vsel %vm622, %v371, 0
          %v645 = vsel %vm622, %v372, 0
          %v648 = vsel %vm622, %v373, 0
          %v651 = vsel %vm622, %v374, 0
          %v654 = vsel %vm622, %v375, 0
          %v657 = vsel %vm622, %v376, 0
          %v660 = vsel %vm622, %v377, 0
          %v663 = vsel %vm622, %v378, 0
          %v666 = vsel %vm622, %v379, 0
          %v669 = vsel %vm622, %v380, 0
          %v672 = vsel %vm622, %v381, 0
          %v675 = vsel %vm622, %v382, 0
          %v678 = vsel %vm622, %v383, 0
          %v681 = vsel %vm622, %v384, 0
          %v684 = vsel %vm622, %v385, 0
          %v687 = vsel %vm622, %v386, 0
          %v690 = vsel %vm622, %v387, 0
          %v693 = vsel %vm622, %v388, 0
          %v696 = vsel %vm622, %v389, 0
          %v699 = vsel %vm622, %v390, 0
          %v702 = vsel %vm622, %v391, 0
          %v705 = vsel %vm622, %v392, 0
          %v708 = vsel %vm622, %v393, 0
          %v711 = vsel %vm622, %v394, 0
          %v714 = vsel %vm622, %v395, 0
          %v717 = vsel %vm622, %v396, 0
          %v720 = vsel %vm622, %v397, 0
          %v723 = vsel %vm622, %v398, 0
          %v726 = vsel %vm622, %v399, 0
          %v729 = vsel %vm622, %v400, 0
          %v732 = vsel %vm622, %v401, 0
          %v735 = vsel %vm622, %v402, 0
          %v738 = vsel %vm622, %v403, 0
          %v741 = vsel %vm622, %v404, 0
          %v744 = vsel %vm622, %v405, 0
          %v747 = vsel %vm622, %v406, 0
          %v750 = vsel %vm622, %v407, 0
          %v753 = vsel %vm622, %v408, 0
          %v756 = vsel %vm622, %v409, 0
          %v759 = vsel %vm622, %v410, 0
          %v762 = vsel %vm622, %v411, 0
          %v765 = vsel %vm622, %v412, 0
          %v768 = vsel %vm622, %v413, 0
          %v771 = vsel %vm622, %v414, 0
          %v774 = vsel %vm622, %v415, 0
          %v777 = vsel %vm622, %v416, 0
          %v780 = vsel %vm622, %v417, 0
          %v783 = vsel %vm622, %v418, 0
          %v786 = vsel %vm622, %v419, 0
          %v789 = vsel %vm622, %v420, 0
          %v792 = vsel %vm622, %v421, 0
          %v795 = vsel %vm622, %v422, 0
          %v798 = vsel %vm622, %v423, 0
          %v801 = vsel %vm622, %v424, 0
          %v804 = vsel %vm622, %v425, 0
          %v807 = vsel %vm622, %v426, 0
          %v810 = vsel %vm622, %v427, 0
          %v813 = vsel %vm622, %v428, 0
          %v816 = vsel %vm622, %v429, 0
          %v819 = vsel %vm622, %v430, 0
          %v822 = vsel %vm622, %v431, 0
          %v825 = vsel %vm622, %v432, 0
          %v828 = vsel %vm622, %v433, 0
          %v831 = vsel %vm622, %v434, 0
          %v834 = vsel %vm622, %v435, 0
          %v837 = vsel %vm622, %v436, 0
          %v840 = vsel %vm622, %v437, 0
          %v843 = vsel %vm622, %v438, 0
          %v846 = vsel %vm622, %v439, 0
          %v849 = vsel %vm622, %v440, 0
          %v852 = vsel %vm622, %v441, 0
          %v855 = vsel %vm622, %v442, 0
          %v858 = vsel %vm622, %v443, 0
          %v861 = vsel %vm622, %v444, 0
          %v864 = vsel %vm622, %v445, 0
          %v867 = vsel %vm622, %v446, 0
          %v870 = vsel %vm622, %v447, 0
          %v873 = vsel %vm622, %v448, 0
          %v876 = vsel %vm622, %v449, 0
          %v879 = vsel %vm622, %v450, 0
          %v882 = vsel %vm622, %v451, 0
          %v885 = vsel %vm622, %v452, 0
          %v888 = vsel %vm622, %v453, 0
          %v891 = vsel %vm622, %v454, 0
          %v894 = vsel %vm622, %v455, 0
          %v897 = vsel %vm622, %v456, 0
          %v900 = vsel %vm622, %v457, 0
          %v903 = vsel %vm622, %v458, 0
          %v906 = vsel %vm622, %v459, 0
          %v909 = vsel %vm622, %v460, 0
          %v912 = vsel %vm622, %v461, 0
          %v915 = vsel %vm622, %v462, 0
          %v918 = vsel %vm622, %v463, 0
          %v921 = vsel %vm622, %v464, 0
          %v924 = vsel %vm622, %v465, 0
          %v927 = vsel %vm622, %v466, 0
          %v930 = vsel %vm622, %v467, 0
          %v933 = vsel %vm622, %v468, 0
          %v936 = vsel %vm622, %v469, 0
          %v939 = vsel %vm622, %v470, 0
          %v942 = vsel %vm622, %v471, 0
          %v945 = vsel %vm622, %v472, 0
          %v948 = vsel %vm622, %v473, 0
          %v951 = vsel %vm622, %v474, 0
          %v954 = vsel %vm622, %v475, 0
          %v957 = vsel %vm622, %v476, 0
          %v960 = vsel %vm622, %v477, 0
          %v963 = vsel %vm622, %v478, 0
          %v966 = vsel %vm622, %v479, 0
          %v969 = vsel %vm622, %v480, 0
          %v972 = vsel %vm622, %v481, 0
          %v975 = vsel %vm622, %v482, 0
          %v978 = vsel %vm622, %v483, 0
          %v981 = vsel %vm622, %v484, 0
          %v984 = vsel %vm622, %v485, 0
          %v987 = vsel %vm622, %v486, 0
          %v990 = vsel %vm622, %v487, 0
          %v993 = vsel %vm622, %v488, 0
          %v996 = vsel %vm622, %v489, 0
          %v999 = vsel %vm622, %v490, 0
          %v1002 = vsel %vm622, %v491, 0
          %v1005 = vsel %vm622, %v492, 0
          %v1008 = vsel %vm622, %v493, 0
          %v1011 = vsel %vm622, %v494, 0
          %v1014 = vsel %vm622, %v495, 0
          %v1017 = vsel %vm622, %v496, 0
          %v1020 = vsel %vm622, %v497, 0
          %v1023 = vsel %vm622, %v498, 0
          %v1026 = vsel %vm622, %v499, 0
          %v1029 = vsel %vm622, %v500, 0
          %v1032 = vsel %vm622, %v501, 0
          %v1035 = vsel %vm622, %v502, 0
          %v1038 = vsel %vm622, %v503, 0
          %v1041 = vsel %vm622, %v504, 0
          %v1044 = vsel %vm622, %v505, 0
          %v1047 = vsel %vm622, %v506, 0
          %v1050 = vsel %vm622, %v507, 0
          %v1053 = vsel %vm622, %v508, 0
          %v1056 = vsel %vm622, %v509, 0
          %v1059 = vsel %vm622, %v510, 0
          %v1062 = vsel %vm622, %v511, 0
          %v1065 = vsel %vm622, %v512, 0
          %v1068 = vsel %vm622, %v513, 0
          %v1071 = vsel %vm622, %v514, 0
          %v1074 = vsel %vm622, %v515, 0
          %v1077 = vsel %vm622, %v516, 0
          %v1080 = vsel %vm622, %v517, 0
          %v1083 = vsel %vm622, %v518, 0
          %v1086 = vsel %vm622, %v519, 0
          %v1089 = vsel %vm622, %v520, 0
          %v1092 = vsel %vm622, %v521, 0
          %v1095 = vsel %vm622, %v522, 0
          %v1098 = vsel %vm622, %v523, 0
          %v1101 = vsel %vm622, %v524, 0
          %v1104 = vsel %vm622, %v525, 0
          %v1107 = vsel %vm622, %v526, 0
          %v1110 = vsel %vm622, %v527, 0
          %v1113 = vsel %vm622, %v528, 0
          %v1116 = vsel %vm622, %v529, 0
          %v1119 = vsel %vm622, %v530, 0
          %v1122 = vsel %vm622, %v531, 0
          %v1125 = vsel %vm622, %v532, 0
          %v1128 = vsel %vm622, %v533, 0
          %v1131 = vsel %vm622, %v534, 0
          %v1134 = vsel %vm622, %v535, 0
          %v1137 = vsel %vm622, %v536, 0
          %v1140 = vsel %vm622, %v537, 0
          %v1143 = vsel %vm622, %v538, 0
          %v1146 = vsel %vm622, %v539, 0
          %v1149 = vsel %vm622, %v540, 0
          %v1152 = vsel %vm622, %v541, 0
          %v1155 = vsel %vm622, %v542, 0
          %v1158 = vsel %vm622, %v543, 0
          %v1161 = vsel %vm622, %v544, 0
          %v1164 = vsel %vm622, %v545, 0
          %v1167 = vsel %vm622, %v546, 0
          %v1170 = vsel %vm622, %v547, 0
          %v1173 = vsel %vm622, %v548, 0
          %v1176 = vsel %vm622, %v549, 0
          %v1179 = vsel %vm622, %v550, 0
          %v1182 = vsel %vm622, %v551, 0
          %v1185 = vsel %vm622, %v552, 0
          %v1188 = vsel %vm622, %v553, 0
          %v1191 = vsel %vm622, %v554, 0
          %v1194 = vsel %vm622, %v555, 0
          %v1197 = vsel %vm622, %v556, 0
          %v1200 = vsel %vm622, %v557, 0
          %v1203 = vsel %vm622, %v558, 0
          %v1206 = vsel %vm622, %v559, 0
          %v1209 = vsel %vm622, %v560, 0
          %v1212 = vsel %vm622, %v561, 0
          %v1215 = vsel %vm622, %v562, 0
          %v1218 = vsel %vm622, %v563, 0
          %v1221 = vsel %vm622, %v564, 0
          %v1224 = vsel %vm622, %v565, 0
          %v1227 = vsel %vm622, %v566, 0
          %v1230 = vsel %vm622, %v567, 0
          %v1233 = vsel %vm622, %v568, 0
          %v1236 = vsel %vm622, %v569, 0
          %v1239 = vsel %vm622, %v570, 0
          %v1242 = vsel %vm622, %v571, 0
          %v1245 = vsel %vm622, %v572, 0
          %v1248 = vsel %vm622, %v573, 0
          %v1251 = vsel %vm622, %v574, 0
          %v1254 = vsel %vm622, %v575, 0
          %v1257 = vsel %vm622, %v576, 0
          %v1260 = vsel %vm622, %v577, 0
          %v1263 = vsel %vm622, %v578, 0
          %v1266 = vsel %vm622, %v579, 0
          %v1269 = vsel %vm622, %v580, 0
          %v1272 = vsel %vm622, %v581, 0
          %v1275 = vsel %vm622, %v582, 0
          %v1278 = vsel %vm622, %v583, 0
          %v1281 = vsel %vm622, %v584, 0
          %v1284 = vsel %vm622, %v585, 0
          %v1287 = vsel %vm622, %v586, 0
          %v1290 = vsel %vm622, %v587, 0
          %v1293 = vsel %vm622, %v588, 0
          %v1296 = vsel %vm622, %v589, 0
          %v1299 = vsel %vm622, %v590, 0
          %v1302 = vsel %vm622, %v591, 0
          %v1305 = vsel %vm622, %v592, 0
          %v1308 = vsel %vm622, %v593, 0
          %v1311 = vsel %vm622, %v594, 0
          %v1314 = vsel %vm622, %v595, 0
          %v1317 = vsel %vm622, %v596, 0
          %v1320 = vsel %vm622, %v597, 0
          %v1323 = vsel %vm622, %v598, 0
          %v1326 = vsel %vm622, %v599, 0
          %v1329 = vsel %vm622, %v600, 0
          %v1332 = vsel %vm622, %v601, 0
          %v1335 = vsel %vm622, %v602, 0
          %v1338 = vsel %vm622, %v603, 0
          %v1341 = vsel %vm622, %v604, 0
          %v1344 = vsel %vm622, %v605, 0
          %v1347 = vsel %vm622, %v606, 0
          %v1350 = vsel %vm622, %v607, 0
          %v1353 = vsel %vm622, %v608, 0
          %v1356 = vsel %vm622, %v609, 0
          %v1359 = vsel %vm622, %v610, 0
          %v1362 = vsel %vm622, %v611, 0
          %v1365 = vsel %vm622, %v612, 0
          %v1368 = vsel %vm622, %v613, 0
          %v1371 = vsel %vm622, %v614, 0
          %v1374 = vsel %vm622, %v615, 0
          %v1377 = vsel %vm622, %v616, 0
          %v1380 = vsel %vm622, %v617, 0
          %v1383 = vsel %vm622, %v618, 0
          %v1386 = vsel %vm622, %v619, 0
          %v1389 = vsel %vm622, %v620, 0
          %vm1391 = vcmask 1043456
          %v1393 = vsel %vm1391, %v621, 0
          %1395 = vmatprep.subr.mxu0 0.0
          %1396 = vmatpush1.msra.mxu0 0.0
          %1397 = vmatprep.subr.mxu0 0.0
          %1398 = vmatpush1.msra.mxu0 0.0
          %1399 = vmatprep.subr.mxu0 0.0
          %1400 = vmatpush1.msra.mxu0 0.0
          %1401 = vmatprep.subr.mxu0 0.0
          %1402 = vmatpush1.msra.mxu0 0.0
          %1403 = vmatprep.subr.mxu0 0.0
          %1404 = vmatpush1.msra.mxu0 0.0
          %1405 = vmatprep.subr.mxu0 0.0
          %1406 = vmatpush1.msra.mxu0 0.0
          %1407 = vmatprep.subr.mxu0 0.0
          %1408 = vmatpush1.msra.mxu0 0.0
          %1409 = vmatprep.subr.mxu0 0.0
          %1410 = vmatpush1.msra.mxu0 0.0
          %1411 = vmatprep.subr.mxu0 0.0
          %1412 = vmatpush1.msra.mxu0 0.0
          %1413 = vmatprep.subr.mxu0 0.0
          %1414 = vmatpush1.msra.mxu0 0.0
          %1415 = vmatprep.subr.mxu0 0.0
          %1416 = vmatpush1.msra.mxu0 0.0
          %1417 = vmatprep.subr.mxu0 0.0
          %1418 = vmatpush1.msra.mxu0 0.0
          %1419 = vmatprep.subr.mxu0 0.0
          %1420 = vmatpush1.msra.mxu0 0.0
          %1421 = vmatprep.subr.mxu0 0.0
          %1422 = vmatpush1.msra.mxu0 0.0
          %1423 = vmatprep.subr.mxu0 0.0
          %1424 = vmatpush1.msra.mxu0 0.0
          %1425 = vmatprep.subr.mxu0 0.0
          %1426 = vmatpush1.msra.mxu0 %v1393
          %1427 = vmatprep.subr.mxu0 0.0
          %1428 = vmatpush2.msra.mxu0 0.0
          %1429 = vmatprep.subr.mxu0 0.0
          %1430 = vmatpush2.msra.mxu0 0.0
          %1431 = vmatprep.subr.mxu0 0.0
          %1432 = vmatpush2.msra.mxu0 0.0
          %1433 = vmatprep.subr.mxu0 0.0
          %1434 = vmatpush2.msra.mxu0 0.0
          %1435 = vmatprep.subr.mxu0 0.0
          %1436 = vmatpush2.msra.mxu0 0.0
          %1437 = vmatprep.subr.mxu0 0.0
          %1438 = vmatpush2.msra.mxu0 0.0
          %1439 = vmatprep.subr.mxu0 0.0
          %1440 = vmatpush2.msra.mxu0 0.0
          %1441 = vmatprep.subr.mxu0 0.0
          %1442 = vmatpush2.msra.mxu0 0.0
          %1443 = vmatprep.subr.mxu0 0.0
          %1444 = vmatpush2.msra.mxu0 0.0
          %1445 = vmatprep.subr.mxu0 0.0
          %1446 = vmatpush2.msra.mxu0 0.0
          %1447 = vmatprep.subr.mxu0 0.0
          %1448 = vmatpush2.msra.mxu0 0.0
          %1449 = vmatprep.subr.mxu0 0.0
          %1450 = vmatpush2.msra.mxu0 0.0
          %1451 = vmatprep.subr.mxu0 0.0
          %1452 = vmatpush2.msra.mxu0 0.0
          %1453 = vmatprep.subr.mxu0 0.0
          %1454 = vmatpush2.msra.mxu0 0.0
          %1455 = vmatprep.subr.mxu0 0.0
          %1456 = vmatpush2.msra.mxu0 0.0
          %1457 = vmatprep.subr.mxu0 0.0
          %1458 = vmatpush2.msra.mxu0 0.0
          %1459 = vmatprep.mubr.f32.mxu0 0.0
          %1460 = vmatmul.mubr.f32.gmra.mxu0 %v624
          %v1461 = vpop.f32.mrf.mxu0
          %v1462 = vadd.f32 0.0, %v1461
          %v1463 = vpop.f32.mrf.mxu0
          %1464 = vmatprep.mubr.f32.mxu0 0.0
          %1465 = vmatmul.mubr.f32.gmra.mxu0 %v627
          %v1466 = vpop.f32.mrf.mxu0
          %v1467 = vadd.f32 0.0, %v1466
          %v1468 = vpop.f32.mrf.mxu0
          %1469 = vmatprep.mubr.f32.mxu0 0.0
          %1470 = vmatmul.mubr.f32.gmra.mxu0 %v630
          %v1471 = vpop.f32.mrf.mxu0
          %v1472 = vadd.f32 0.0, %v1471
          %v1473 = vpop.f32.mrf.mxu0
          %1474 = vmatprep.mubr.f32.mxu0 0.0
          %1475 = vmatmul.mubr.f32.gmra.mxu0 %v633
          %v1476 = vpop.f32.mrf.mxu0
          %v1477 = vadd.f32 0.0, %v1476
          %v1478 = vpop.f32.mrf.mxu0
          %1479 = vmatprep.mubr.f32.mxu0 0.0
          %1480 = vmatmul.mubr.f32.gmra.mxu0 %v636
          %v1481 = vpop.f32.mrf.mxu0
          %v1482 = vadd.f32 0.0, %v1481
          %v1483 = vpop.f32.mrf.mxu0
          %1484 = vmatprep.mubr.f32.mxu0 0.0
          %1485 = vmatmul.mubr.f32.gmra.mxu0 %v639
          %v1486 = vpop.f32.mrf.mxu0
          %v1487 = vadd.f32 0.0, %v1486
          %v1488 = vpop.f32.mrf.mxu0
          %1489 = vmatprep.mubr.f32.mxu0 0.0
          %1490 = vmatmul.mubr.f32.gmra.mxu0 %v642
          %v1491 = vpop.f32.mrf.mxu0
          %v1492 = vadd.f32 0.0, %v1491
          %v1493 = vpop.f32.mrf.mxu0
          %1494 = vmatprep.mubr.f32.mxu0 0.0
          %1495 = vmatmul.mubr.f32.gmra.mxu0 %v645
          %v1496 = vpop.f32.mrf.mxu0
          %v1497 = vadd.f32 0.0, %v1496
          %v1498 = vpop.f32.mrf.mxu0
          %1499 = vmatprep.mubr.f32.mxu0 0.0
          %1500 = vmatmul.mubr.f32.gmra.mxu0 %v648
          %v1501 = vpop.f32.mrf.mxu0
          %v1502 = vadd.f32 0.0, %v1501
          %v1503 = vpop.f32.mrf.mxu0
          %1504 = vmatprep.mubr.f32.mxu0 0.0
          %1505 = vmatmul.mubr.f32.gmra.mxu0 %v651
          %v1506 = vpop.f32.mrf.mxu0
          %v1507 = vadd.f32 0.0, %v1506
          %v1508 = vpop.f32.mrf.mxu0
          %1509 = vmatprep.mubr.f32.mxu0 0.0
          %1510 = vmatmul.mubr.f32.gmra.mxu0 %v654
          %v1511 = vpop.f32.mrf.mxu0
          %v1512 = vadd.f32 0.0, %v1511
          %v1513 = vpop.f32.mrf.mxu0
          %1514 = vmatprep.mubr.f32.mxu0 0.0
          %1515 = vmatmul.mubr.f32.gmra.mxu0 %v657
          %v1516 = vpop.f32.mrf.mxu0
          %v1517 = vadd.f32 0.0, %v1516
          %v1518 = vpop.f32.mrf.mxu0
          %1519 = vmatprep.mubr.f32.mxu0 0.0
          %1520 = vmatmul.mubr.f32.gmra.mxu0 %v660
          %v1521 = vpop.f32.mrf.mxu0
          %v1522 = vadd.f32 0.0, %v1521
          %v1523 = vpop.f32.mrf.mxu0
          %1524 = vmatprep.mubr.f32.mxu0 0.0
          %1525 = vmatmul.mubr.f32.gmra.mxu0 %v663
          %v1526 = vpop.f32.mrf.mxu0
          %v1527 = vadd.f32 0.0, %v1526
          %v1528 = vpop.f32.mrf.mxu0
          %1529 = vmatprep.mubr.f32.mxu0 0.0
          %1530 = vmatmul.mubr.f32.gmra.mxu0 %v666
          %v1531 = vpop.f32.mrf.mxu0
          %v1532 = vadd.f32 0.0, %v1531
          %v1533 = vpop.f32.mrf.mxu0
          %1534 = vmatprep.mubr.f32.mxu0 0.0
          %1535 = vmatmul.mubr.f32.gmra.mxu0 %v669
          %v1536 = vpop.f32.mrf.mxu0
          %v1537 = vadd.f32 0.0, %v1536
          %v1538 = vpop.f32.mrf.mxu0
          %1539 = vmatprep.mubr.f32.mxu0 0.0
          %1540 = vmatmul.mubr.f32.gmra.mxu0 %v672
          %v1541 = vpop.f32.mrf.mxu0
          %v1542 = vadd.f32 0.0, %v1541
          %v1543 = vpop.f32.mrf.mxu0
          %1544 = vmatprep.mubr.f32.mxu0 0.0
          %1545 = vmatmul.mubr.f32.gmra.mxu0 %v675
          %v1546 = vpop.f32.mrf.mxu0
          %v1547 = vadd.f32 0.0, %v1546
          %v1548 = vpop.f32.mrf.mxu0
          %1549 = vmatprep.mubr.f32.mxu0 0.0
          %1550 = vmatmul.mubr.f32.gmra.mxu0 %v678
          %v1551 = vpop.f32.mrf.mxu0
          %v1552 = vadd.f32 0.0, %v1551
          %v1553 = vpop.f32.mrf.mxu0
          %1554 = vmatprep.mubr.f32.mxu0 0.0
          %1555 = vmatmul.mubr.f32.gmra.mxu0 %v681
          %v1556 = vpop.f32.mrf.mxu0
          %v1557 = vadd.f32 0.0, %v1556
          %v1558 = vpop.f32.mrf.mxu0
          %1559 = vmatprep.mubr.f32.mxu0 0.0
          %1560 = vmatmul.mubr.f32.gmra.mxu0 %v684
          %v1561 = vpop.f32.mrf.mxu0
          %v1562 = vadd.f32 0.0, %v1561
          %v1563 = vpop.f32.mrf.mxu0
          %1564 = vmatprep.mubr.f32.mxu0 0.0
          %1565 = vmatmul.mubr.f32.gmra.mxu0 %v687
          %v1566 = vpop.f32.mrf.mxu0
          %v1567 = vadd.f32 0.0, %v1566
          %v1568 = vpop.f32.mrf.mxu0
          %1569 = vmatprep.mubr.f32.mxu0 0.0
          %1570 = vmatmul.mubr.f32.gmra.mxu0 %v690
          %v1571 = vpop.f32.mrf.mxu0
          %v1572 = vadd.f32 0.0, %v1571
          %v1573 = vpop.f32.mrf.mxu0
          %1574 = vmatprep.mubr.f32.mxu0 0.0
          %1575 = vmatmul.mubr.f32.gmra.mxu0 %v693
          %v1576 = vpop.f32.mrf.mxu0
          %v1577 = vadd.f32 0.0, %v1576
          %v1578 = vpop.f32.mrf.mxu0
          %1579 = vmatprep.mubr.f32.mxu0 0.0
          %1580 = vmatmul.mubr.f32.gmra.mxu0 %v696
          %v1581 = vpop.f32.mrf.mxu0
          %v1582 = vadd.f32 0.0, %v1581
          %v1583 = vpop.f32.mrf.mxu0
          %1584 = vmatprep.mubr.f32.mxu0 0.0
          %1585 = vmatmul.mubr.f32.gmra.mxu0 %v699
          %v1586 = vpop.f32.mrf.mxu0
          %v1587 = vadd.f32 0.0, %v1586
          %v1588 = vpop.f32.mrf.mxu0
          %1589 = vmatprep.mubr.f32.mxu0 0.0
          %1590 = vmatmul.mubr.f32.gmra.mxu0 %v702
          %v1591 = vpop.f32.mrf.mxu0
          %v1592 = vadd.f32 0.0, %v1591
          %v1593 = vpop.f32.mrf.mxu0
          %1594 = vmatprep.mubr.f32.mxu0 0.0
          %1595 = vmatmul.mubr.f32.gmra.mxu0 %v705
          %v1596 = vpop.f32.mrf.mxu0
          %v1597 = vadd.f32 0.0, %v1596
          %v1598 = vpop.f32.mrf.mxu0
          %1599 = vmatprep.mubr.f32.mxu0 0.0
          %1600 = vmatmul.mubr.f32.gmra.mxu0 %v708
          %v1601 = vpop.f32.mrf.mxu0
          %v1602 = vadd.f32 0.0, %v1601
          %v1603 = vpop.f32.mrf.mxu0
          %1604 = vmatprep.mubr.f32.mxu0 0.0
          %1605 = vmatmul.mubr.f32.gmra.mxu0 %v711
          %v1606 = vpop.f32.mrf.mxu0
          %v1607 = vadd.f32 0.0, %v1606
          %v1608 = vpop.f32.mrf.mxu0
          %1609 = vmatprep.mubr.f32.mxu0 0.0
          %1610 = vmatmul.mubr.f32.gmra.mxu0 %v714
          %v1611 = vpop.f32.mrf.mxu0
          %v1612 = vadd.f32 0.0, %v1611
          %v1613 = vpop.f32.mrf.mxu0
          %1614 = vmatprep.mubr.f32.mxu0 0.0
          %1615 = vmatmul.mubr.f32.gmra.mxu0 %v717
          %v1616 = vpop.f32.mrf.mxu0
          %v1617 = vadd.f32 0.0, %v1616
          %v1618 = vpop.f32.mrf.mxu0
          %1619 = vmatprep.mubr.f32.mxu0 0.0
          %1620 = vmatmul.mubr.f32.gmra.mxu0 %v720
          %v1621 = vpop.f32.mrf.mxu0
          %v1622 = vadd.f32 0.0, %v1621
          %v1623 = vpop.f32.mrf.mxu0
          %1624 = vmatprep.mubr.f32.mxu0 0.0
          %1625 = vmatmul.mubr.f32.gmra.mxu0 %v723
          %v1626 = vpop.f32.mrf.mxu0
          %v1627 = vadd.f32 0.0, %v1626
          %v1628 = vpop.f32.mrf.mxu0
          %1629 = vmatprep.mubr.f32.mxu0 0.0
          %1630 = vmatmul.mubr.f32.gmra.mxu0 %v726
          %v1631 = vpop.f32.mrf.mxu0
          %v1632 = vadd.f32 0.0, %v1631
          %v1633 = vpop.f32.mrf.mxu0
          %1634 = vmatprep.mubr.f32.mxu0 0.0
          %1635 = vmatmul.mubr.f32.gmra.mxu0 %v729
          %v1636 = vpop.f32.mrf.mxu0
          %v1637 = vadd.f32 0.0, %v1636
          %v1638 = vpop.f32.mrf.mxu0
          %1639 = vmatprep.mubr.f32.mxu0 0.0
          %1640 = vmatmul.mubr.f32.gmra.mxu0 %v732
          %v1641 = vpop.f32.mrf.mxu0
          %v1642 = vadd.f32 0.0, %v1641
          %v1643 = vpop.f32.mrf.mxu0
          %1644 = vmatprep.mubr.f32.mxu0 0.0
          %1645 = vmatmul.mubr.f32.gmra.mxu0 %v735
          %v1646 = vpop.f32.mrf.mxu0
          %v1647 = vadd.f32 0.0, %v1646
          %v1648 = vpop.f32.mrf.mxu0
          %1649 = vmatprep.mubr.f32.mxu0 0.0
          %1650 = vmatmul.mubr.f32.gmra.mxu0 %v738
          %v1651 = vpop.f32.mrf.mxu0
          %v1652 = vadd.f32 0.0, %v1651
          %v1653 = vpop.f32.mrf.mxu0
          %1654 = vmatprep.mubr.f32.mxu0 0.0
          %1655 = vmatmul.mubr.f32.gmra.mxu0 %v741
          %v1656 = vpop.f32.mrf.mxu0
          %v1657 = vadd.f32 0.0, %v1656
          %v1658 = vpop.f32.mrf.mxu0
          %1659 = vmatprep.mubr.f32.mxu0 0.0
          %1660 = vmatmul.mubr.f32.gmra.mxu0 %v744
          %v1661 = vpop.f32.mrf.mxu0
          %v1662 = vadd.f32 0.0, %v1661
          %v1663 = vpop.f32.mrf.mxu0
          %1664 = vmatprep.mubr.f32.mxu0 0.0
          %1665 = vmatmul.mubr.f32.gmra.mxu0 %v747
          %v1666 = vpop.f32.mrf.mxu0
          %v1667 = vadd.f32 0.0, %v1666
          %v1668 = vpop.f32.mrf.mxu0
          %1669 = vmatprep.mubr.f32.mxu0 0.0
          %1670 = vmatmul.mubr.f32.gmra.mxu0 %v750
          %v1671 = vpop.f32.mrf.mxu0
          %v1672 = vadd.f32 0.0, %v1671
          %v1673 = vpop.f32.mrf.mxu0
          %1674 = vmatprep.mubr.f32.mxu0 0.0
          %1675 = vmatmul.mubr.f32.gmra.mxu0 %v753
          %v1676 = vpop.f32.mrf.mxu0
          %v1677 = vadd.f32 0.0, %v1676
          %v1678 = vpop.f32.mrf.mxu0
          %1679 = vmatprep.mubr.f32.mxu0 0.0
          %1680 = vmatmul.mubr.f32.gmra.mxu0 %v756
          %v1681 = vpop.f32.mrf.mxu0
          %v1682 = vadd.f32 0.0, %v1681
          %v1683 = vpop.f32.mrf.mxu0
          %1684 = vmatprep.mubr.f32.mxu0 0.0
          %1685 = vmatmul.mubr.f32.gmra.mxu0 %v759
          %v1686 = vpop.f32.mrf.mxu0
          %v1687 = vadd.f32 0.0, %v1686
          %v1688 = vpop.f32.mrf.mxu0
          %1689 = vmatprep.mubr.f32.mxu0 0.0
          %1690 = vmatmul.mubr.f32.gmra.mxu0 %v762
          %v1691 = vpop.f32.mrf.mxu0
          %v1692 = vadd.f32 0.0, %v1691
          %v1693 = vpop.f32.mrf.mxu0
          %1694 = vmatprep.mubr.f32.mxu0 0.0
          %1695 = vmatmul.mubr.f32.gmra.mxu0 %v765
          %v1696 = vpop.f32.mrf.mxu0
          %v1697 = vadd.f32 0.0, %v1696
          %v1698 = vpop.f32.mrf.mxu0
          %1699 = vmatprep.mubr.f32.mxu0 0.0
          %1700 = vmatmul.mubr.f32.gmra.mxu0 %v768
          %v1701 = vpop.f32.mrf.mxu0
          %v1702 = vadd.f32 0.0, %v1701
          %v1703 = vpop.f32.mrf.mxu0
          %1704 = vmatprep.mubr.f32.mxu0 0.0
          %1705 = vmatmul.mubr.f32.gmra.mxu0 %v771
          %v1706 = vpop.f32.mrf.mxu0
          %v1707 = vadd.f32 0.0, %v1706
          %v1708 = vpop.f32.mrf.mxu0
          %1709 = vmatprep.mubr.f32.mxu0 0.0
          %1710 = vmatmul.mubr.f32.gmra.mxu0 %v774
          %v1711 = vpop.f32.mrf.mxu0
          %v1712 = vadd.f32 0.0, %v1711
          %v1713 = vpop.f32.mrf.mxu0
          %1714 = vmatprep.mubr.f32.mxu0 0.0
          %1715 = vmatmul.mubr.f32.gmra.mxu0 %v777
          %v1716 = vpop.f32.mrf.mxu0
          %v1717 = vadd.f32 0.0, %v1716
          %v1718 = vpop.f32.mrf.mxu0
          %1719 = vmatprep.mubr.f32.mxu0 0.0
          %1720 = vmatmul.mubr.f32.gmra.mxu0 %v780
          %v1721 = vpop.f32.mrf.mxu0
          %v1722 = vadd.f32 0.0, %v1721
          %v1723 = vpop.f32.mrf.mxu0
          %1724 = vmatprep.mubr.f32.mxu0 0.0
          %1725 = vmatmul.mubr.f32.gmra.mxu0 %v783
          %v1726 = vpop.f32.mrf.mxu0
          %v1727 = vadd.f32 0.0, %v1726
          %v1728 = vpop.f32.mrf.mxu0
          %1729 = vmatprep.mubr.f32.mxu0 0.0
          %1730 = vmatmul.mubr.f32.gmra.mxu0 %v786
          %v1731 = vpop.f32.mrf.mxu0
          %v1732 = vadd.f32 0.0, %v1731
          %v1733 = vpop.f32.mrf.mxu0
          %1734 = vmatprep.mubr.f32.mxu0 0.0
          %1735 = vmatmul.mubr.f32.gmra.mxu0 %v789
          %v1736 = vpop.f32.mrf.mxu0
          %v1737 = vadd.f32 0.0, %v1736
          %v1738 = vpop.f32.mrf.mxu0
          %1739 = vmatprep.mubr.f32.mxu0 0.0
          %1740 = vmatmul.mubr.f32.gmra.mxu0 %v792
          %v1741 = vpop.f32.mrf.mxu0
          %v1742 = vadd.f32 0.0, %v1741
          %v1743 = vpop.f32.mrf.mxu0
          %1744 = vmatprep.mubr.f32.mxu0 0.0
          %1745 = vmatmul.mubr.f32.gmra.mxu0 %v795
          %v1746 = vpop.f32.mrf.mxu0
          %v1747 = vadd.f32 0.0, %v1746
          %v1748 = vpop.f32.mrf.mxu0
          %1749 = vmatprep.mubr.f32.mxu0 0.0
          %1750 = vmatmul.mubr.f32.gmra.mxu0 %v798
          %v1751 = vpop.f32.mrf.mxu0
          %v1752 = vadd.f32 0.0, %v1751
          %v1753 = vpop.f32.mrf.mxu0
          %1754 = vmatprep.mubr.f32.mxu0 0.0
          %1755 = vmatmul.mubr.f32.gmra.mxu0 %v801
          %v1756 = vpop.f32.mrf.mxu0
          %v1757 = vadd.f32 0.0, %v1756
          %v1758 = vpop.f32.mrf.mxu0
          %1759 = vmatprep.mubr.f32.mxu0 0.0
          %1760 = vmatmul.mubr.f32.gmra.mxu0 %v804
          %v1761 = vpop.f32.mrf.mxu0
          %v1762 = vadd.f32 0.0, %v1761
          %v1763 = vpop.f32.mrf.mxu0
          %1764 = vmatprep.mubr.f32.mxu0 0.0
          %1765 = vmatmul.mubr.f32.gmra.mxu0 %v807
          %v1766 = vpop.f32.mrf.mxu0
          %v1767 = vadd.f32 0.0, %v1766
          %v1768 = vpop.f32.mrf.mxu0
          %1769 = vmatprep.mubr.f32.mxu0 0.0
          %1770 = vmatmul.mubr.f32.gmra.mxu0 %v810
          %v1771 = vpop.f32.mrf.mxu0
          %v1772 = vadd.f32 0.0, %v1771
          %v1773 = vpop.f32.mrf.mxu0
          %1774 = vmatprep.mubr.f32.mxu0 0.0
          %1775 = vmatmul.mubr.f32.gmra.mxu0 %v813
          %v1776 = vpop.f32.mrf.mxu0
          %v1777 = vadd.f32 0.0, %v1776
          %v1778 = vpop.f32.mrf.mxu0
          %1779 = vmatprep.mubr.f32.mxu0 0.0
          %1780 = vmatmul.mubr.f32.gmra.mxu0 %v816
          %v1781 = vpop.f32.mrf.mxu0
          %v1782 = vadd.f32 0.0, %v1781
          %v1783 = vpop.f32.mrf.mxu0
          %1784 = vmatprep.mubr.f32.mxu0 0.0
          %1785 = vmatmul.mubr.f32.gmra.mxu0 %v819
          %v1786 = vpop.f32.mrf.mxu0
          %v1787 = vadd.f32 0.0, %v1786
          %v1788 = vpop.f32.mrf.mxu0
          %1789 = vmatprep.mubr.f32.mxu0 0.0
          %1790 = vmatmul.mubr.f32.gmra.mxu0 %v822
          %v1791 = vpop.f32.mrf.mxu0
          %v1792 = vadd.f32 0.0, %v1791
          %v1793 = vpop.f32.mrf.mxu0
          %1794 = vmatprep.mubr.f32.mxu0 0.0
          %1795 = vmatmul.mubr.f32.gmra.mxu0 %v825
          %v1796 = vpop.f32.mrf.mxu0
          %v1797 = vadd.f32 0.0, %v1796
          %v1798 = vpop.f32.mrf.mxu0
          %1799 = vmatprep.mubr.f32.mxu0 0.0
          %1800 = vmatmul.mubr.f32.gmra.mxu0 %v828
          %v1801 = vpop.f32.mrf.mxu0
          %v1802 = vadd.f32 0.0, %v1801
          %v1803 = vpop.f32.mrf.mxu0
          %1804 = vmatprep.mubr.f32.mxu0 0.0
          %1805 = vmatmul.mubr.f32.gmra.mxu0 %v831
          %v1806 = vpop.f32.mrf.mxu0
          %v1807 = vadd.f32 0.0, %v1806
          %v1808 = vpop.f32.mrf.mxu0
          %1809 = vmatprep.mubr.f32.mxu0 0.0
          %1810 = vmatmul.mubr.f32.gmra.mxu0 %v834
          %v1811 = vpop.f32.mrf.mxu0
          %v1812 = vadd.f32 0.0, %v1811
          %v1813 = vpop.f32.mrf.mxu0
          %1814 = vmatprep.mubr.f32.mxu0 0.0
          %1815 = vmatmul.mubr.f32.gmra.mxu0 %v837
          %v1816 = vpop.f32.mrf.mxu0
          %v1817 = vadd.f32 0.0, %v1816
          %v1818 = vpop.f32.mrf.mxu0
          %1819 = vmatprep.mubr.f32.mxu0 0.0
          %1820 = vmatmul.mubr.f32.gmra.mxu0 %v840
          %v1821 = vpop.f32.mrf.mxu0
          %v1822 = vadd.f32 0.0, %v1821
          %v1823 = vpop.f32.mrf.mxu0
          %1824 = vmatprep.mubr.f32.mxu0 0.0
          %1825 = vmatmul.mubr.f32.gmra.mxu0 %v843
          %v1826 = vpop.f32.mrf.mxu0
          %v1827 = vadd.f32 0.0, %v1826
          %v1828 = vpop.f32.mrf.mxu0
          %1829 = vmatprep.mubr.f32.mxu0 0.0
          %1830 = vmatmul.mubr.f32.gmra.mxu0 %v846
          %v1831 = vpop.f32.mrf.mxu0
          %v1832 = vadd.f32 0.0, %v1831
          %v1833 = vpop.f32.mrf.mxu0
          %1834 = vmatprep.mubr.f32.mxu0 0.0
          %1835 = vmatmul.mubr.f32.gmra.mxu0 %v849
          %v1836 = vpop.f32.mrf.mxu0
          %v1837 = vadd.f32 0.0, %v1836
          %v1838 = vpop.f32.mrf.mxu0
          %1839 = vmatprep.mubr.f32.mxu0 0.0
          %1840 = vmatmul.mubr.f32.gmra.mxu0 %v852
          %v1841 = vpop.f32.mrf.mxu0
          %v1842 = vadd.f32 0.0, %v1841
          %v1843 = vpop.f32.mrf.mxu0
          %1844 = vmatprep.mubr.f32.mxu0 0.0
          %1845 = vmatmul.mubr.f32.gmra.mxu0 %v855
          %v1846 = vpop.f32.mrf.mxu0
          %v1847 = vadd.f32 0.0, %v1846
          %v1848 = vpop.f32.mrf.mxu0
          %1849 = vmatprep.mubr.f32.mxu0 0.0
          %1850 = vmatmul.mubr.f32.gmra.mxu0 %v858
          %v1851 = vpop.f32.mrf.mxu0
          %v1852 = vadd.f32 0.0, %v1851
          %v1853 = vpop.f32.mrf.mxu0
          %1854 = vmatprep.mubr.f32.mxu0 0.0
          %1855 = vmatmul.mubr.f32.gmra.mxu0 %v861
          %v1856 = vpop.f32.mrf.mxu0
          %v1857 = vadd.f32 0.0, %v1856
          %v1858 = vpop.f32.mrf.mxu0
          %1859 = vmatprep.mubr.f32.mxu0 0.0
          %1860 = vmatmul.mubr.f32.gmra.mxu0 %v864
          %v1861 = vpop.f32.mrf.mxu0
          %v1862 = vadd.f32 0.0, %v1861
          %v1863 = vpop.f32.mrf.mxu0
          %1864 = vmatprep.mubr.f32.mxu0 0.0
          %1865 = vmatmul.mubr.f32.gmra.mxu0 %v867
          %v1866 = vpop.f32.mrf.mxu0
          %v1867 = vadd.f32 0.0, %v1866
          %v1868 = vpop.f32.mrf.mxu0
          %1869 = vmatprep.mubr.f32.mxu0 0.0
          %1870 = vmatmul.mubr.f32.gmra.mxu0 %v870
          %v1871 = vpop.f32.mrf.mxu0
          %v1872 = vadd.f32 0.0, %v1871
          %v1873 = vpop.f32.mrf.mxu0
          %1874 = vmatprep.mubr.f32.mxu0 0.0
          %1875 = vmatmul.mubr.f32.gmra.mxu0 %v873
          %v1876 = vpop.f32.mrf.mxu0
          %v1877 = vadd.f32 0.0, %v1876
          %v1878 = vpop.f32.mrf.mxu0
          %1879 = vmatprep.mubr.f32.mxu0 0.0
          %1880 = vmatmul.mubr.f32.gmra.mxu0 %v876
          %v1881 = vpop.f32.mrf.mxu0
          %v1882 = vadd.f32 0.0, %v1881
          %v1883 = vpop.f32.mrf.mxu0
          %1884 = vmatprep.mubr.f32.mxu0 0.0
          %1885 = vmatmul.mubr.f32.gmra.mxu0 %v879
          %v1886 = vpop.f32.mrf.mxu0
          %v1887 = vadd.f32 0.0, %v1886
          %v1888 = vpop.f32.mrf.mxu0
          %1889 = vmatprep.mubr.f32.mxu0 0.0
          %1890 = vmatmul.mubr.f32.gmra.mxu0 %v882
          %v1891 = vpop.f32.mrf.mxu0
          %v1892 = vadd.f32 0.0, %v1891
          %v1893 = vpop.f32.mrf.mxu0
          %1894 = vmatprep.mubr.f32.mxu0 0.0
          %1895 = vmatmul.mubr.f32.gmra.mxu0 %v885
          %v1896 = vpop.f32.mrf.mxu0
          %v1897 = vadd.f32 0.0, %v1896
          %v1898 = vpop.f32.mrf.mxu0
          %1899 = vmatprep.mubr.f32.mxu0 0.0
          %1900 = vmatmul.mubr.f32.gmra.mxu0 %v888
          %v1901 = vpop.f32.mrf.mxu0
          %v1902 = vadd.f32 0.0, %v1901
          %v1903 = vpop.f32.mrf.mxu0
          %1904 = vmatprep.mubr.f32.mxu0 0.0
          %1905 = vmatmul.mubr.f32.gmra.mxu0 %v891
          %v1906 = vpop.f32.mrf.mxu0
          %v1907 = vadd.f32 0.0, %v1906
          %v1908 = vpop.f32.mrf.mxu0
          %1909 = vmatprep.mubr.f32.mxu0 0.0
          %1910 = vmatmul.mubr.f32.gmra.mxu0 %v894
          %v1911 = vpop.f32.mrf.mxu0
          %v1912 = vadd.f32 0.0, %v1911
          %v1913 = vpop.f32.mrf.mxu0
          %1914 = vmatprep.mubr.f32.mxu0 0.0
          %1915 = vmatmul.mubr.f32.gmra.mxu0 %v897
          %v1916 = vpop.f32.mrf.mxu0
          %v1917 = vadd.f32 0.0, %v1916
          %v1918 = vpop.f32.mrf.mxu0
          %1919 = vmatprep.mubr.f32.mxu0 0.0
          %1920 = vmatmul.mubr.f32.gmra.mxu0 %v900
          %v1921 = vpop.f32.mrf.mxu0
          %v1922 = vadd.f32 0.0, %v1921
          %v1923 = vpop.f32.mrf.mxu0
          %1924 = vmatprep.mubr.f32.mxu0 0.0
          %1925 = vmatmul.mubr.f32.gmra.mxu0 %v903
          %v1926 = vpop.f32.mrf.mxu0
          %v1927 = vadd.f32 0.0, %v1926
          %v1928 = vpop.f32.mrf.mxu0
          %1929 = vmatprep.mubr.f32.mxu0 0.0
          %1930 = vmatmul.mubr.f32.gmra.mxu0 %v906
          %v1931 = vpop.f32.mrf.mxu0
          %v1932 = vadd.f32 0.0, %v1931
          %v1933 = vpop.f32.mrf.mxu0
          %1934 = vmatprep.mubr.f32.mxu0 0.0
          %1935 = vmatmul.mubr.f32.gmra.mxu0 %v909
          %v1936 = vpop.f32.mrf.mxu0
          %v1937 = vadd.f32 0.0, %v1936
          %v1938 = vpop.f32.mrf.mxu0
          %1939 = vmatprep.mubr.f32.mxu0 0.0
          %1940 = vmatmul.mubr.f32.gmra.mxu0 %v912
          %v1941 = vpop.f32.mrf.mxu0
          %v1942 = vadd.f32 0.0, %v1941
          %v1943 = vpop.f32.mrf.mxu0
          %1944 = vmatprep.mubr.f32.mxu0 0.0
          %1945 = vmatmul.mubr.f32.gmra.mxu0 %v915
          %v1946 = vpop.f32.mrf.mxu0
          %v1947 = vadd.f32 0.0, %v1946
          %v1948 = vpop.f32.mrf.mxu0
          %1949 = vmatprep.mubr.f32.mxu0 0.0
          %1950 = vmatmul.mubr.f32.gmra.mxu0 %v918
          %v1951 = vpop.f32.mrf.mxu0
          %v1952 = vadd.f32 0.0, %v1951
          %v1953 = vpop.f32.mrf.mxu0
          %1954 = vmatprep.mubr.f32.mxu0 0.0
          %1955 = vmatmul.mubr.f32.gmra.mxu0 %v921
          %v1956 = vpop.f32.mrf.mxu0
          %v1957 = vadd.f32 0.0, %v1956
          %v1958 = vpop.f32.mrf.mxu0
          %1959 = vmatprep.mubr.f32.mxu0 0.0
          %1960 = vmatmul.mubr.f32.gmra.mxu0 %v924
          %v1961 = vpop.f32.mrf.mxu0
          %v1962 = vadd.f32 0.0, %v1961
          %v1963 = vpop.f32.mrf.mxu0
          %1964 = vmatprep.mubr.f32.mxu0 0.0
          %1965 = vmatmul.mubr.f32.gmra.mxu0 %v927
          %v1966 = vpop.f32.mrf.mxu0
          %v1967 = vadd.f32 0.0, %v1966
          %v1968 = vpop.f32.mrf.mxu0
          %1969 = vmatprep.mubr.f32.mxu0 0.0
          %1970 = vmatmul.mubr.f32.gmra.mxu0 %v930
          %v1971 = vpop.f32.mrf.mxu0
          %v1972 = vadd.f32 0.0, %v1971
          %v1973 = vpop.f32.mrf.mxu0
          %1974 = vmatprep.mubr.f32.mxu0 0.0
          %1975 = vmatmul.mubr.f32.gmra.mxu0 %v933
          %v1976 = vpop.f32.mrf.mxu0
          %v1977 = vadd.f32 0.0, %v1976
          %v1978 = vpop.f32.mrf.mxu0
          %1979 = vmatprep.mubr.f32.mxu0 0.0
          %1980 = vmatmul.mubr.f32.gmra.mxu0 %v936
          %v1981 = vpop.f32.mrf.mxu0
          %v1982 = vadd.f32 0.0, %v1981
          %v1983 = vpop.f32.mrf.mxu0
          %1984 = vmatprep.mubr.f32.mxu0 0.0
          %1985 = vmatmul.mubr.f32.gmra.mxu0 %v939
          %v1986 = vpop.f32.mrf.mxu0
          %v1987 = vadd.f32 0.0, %v1986
          %v1988 = vpop.f32.mrf.mxu0
          %1989 = vmatprep.mubr.f32.mxu0 0.0
          %1990 = vmatmul.mubr.f32.gmra.mxu0 %v942
          %v1991 = vpop.f32.mrf.mxu0
          %v1992 = vadd.f32 0.0, %v1991
          %v1993 = vpop.f32.mrf.mxu0
          %1994 = vmatprep.mubr.f32.mxu0 0.0
          %1995 = vmatmul.mubr.f32.gmra.mxu0 %v945
          %v1996 = vpop.f32.mrf.mxu0
          %v1997 = vadd.f32 0.0, %v1996
          %v1998 = vpop.f32.mrf.mxu0
          %1999 = vmatprep.mubr.f32.mxu0 0.0
          %2000 = vmatmul.mubr.f32.gmra.mxu0 %v948
          %v2001 = vpop.f32.mrf.mxu0
          %v2002 = vadd.f32 0.0, %v2001
          %v2003 = vpop.f32.mrf.mxu0
          %2004 = vmatprep.mubr.f32.mxu0 0.0
          %2005 = vmatmul.mubr.f32.gmra.mxu0 %v951
          %v2006 = vpop.f32.mrf.mxu0
          %v2007 = vadd.f32 0.0, %v2006
          %v2008 = vpop.f32.mrf.mxu0
          %2009 = vmatprep.mubr.f32.mxu0 0.0
          %2010 = vmatmul.mubr.f32.gmra.mxu0 %v954
          %v2011 = vpop.f32.mrf.mxu0
          %v2012 = vadd.f32 0.0, %v2011
          %v2013 = vpop.f32.mrf.mxu0
          %2014 = vmatprep.mubr.f32.mxu0 0.0
          %2015 = vmatmul.mubr.f32.gmra.mxu0 %v957
          %v2016 = vpop.f32.mrf.mxu0
          %v2017 = vadd.f32 0.0, %v2016
          %v2018 = vpop.f32.mrf.mxu0
          %2019 = vmatprep.mubr.f32.mxu0 0.0
          %2020 = vmatmul.mubr.f32.gmra.mxu0 %v960
          %v2021 = vpop.f32.mrf.mxu0
          %v2022 = vadd.f32 0.0, %v2021
          %v2023 = vpop.f32.mrf.mxu0
          %2024 = vmatprep.mubr.f32.mxu0 0.0
          %2025 = vmatmul.mubr.f32.gmra.mxu0 %v963
          %v2026 = vpop.f32.mrf.mxu0
          %v2027 = vadd.f32 0.0, %v2026
          %v2028 = vpop.f32.mrf.mxu0
          %2029 = vmatprep.mubr.f32.mxu0 0.0
          %2030 = vmatmul.mubr.f32.gmra.mxu0 %v966
          %v2031 = vpop.f32.mrf.mxu0
          %v2032 = vadd.f32 0.0, %v2031
          %v2033 = vpop.f32.mrf.mxu0
          %2034 = vmatprep.mubr.f32.mxu0 0.0
          %2035 = vmatmul.mubr.f32.gmra.mxu0 %v969
          %v2036 = vpop.f32.mrf.mxu0
          %v2037 = vadd.f32 0.0, %v2036
          %v2038 = vpop.f32.mrf.mxu0
          %2039 = vmatprep.mubr.f32.mxu0 0.0
          %2040 = vmatmul.mubr.f32.gmra.mxu0 %v972
          %v2041 = vpop.f32.mrf.mxu0
          %v2042 = vadd.f32 0.0, %v2041
          %v2043 = vpop.f32.mrf.mxu0
          %2044 = vmatprep.mubr.f32.mxu0 0.0
          %2045 = vmatmul.mubr.f32.gmra.mxu0 %v975
          %v2046 = vpop.f32.mrf.mxu0
          %v2047 = vadd.f32 0.0, %v2046
          %v2048 = vpop.f32.mrf.mxu0
          %2049 = vmatprep.mubr.f32.mxu0 0.0
          %2050 = vmatmul.mubr.f32.gmra.mxu0 %v978
          %v2051 = vpop.f32.mrf.mxu0
          %v2052 = vadd.f32 0.0, %v2051
          %v2053 = vpop.f32.mrf.mxu0
          %2054 = vmatprep.mubr.f32.mxu0 0.0
          %2055 = vmatmul.mubr.f32.gmra.mxu0 %v981
          %v2056 = vpop.f32.mrf.mxu0
          %v2057 = vadd.f32 0.0, %v2056
          %v2058 = vpop.f32.mrf.mxu0
          %2059 = vmatprep.mubr.f32.mxu0 0.0
          %2060 = vmatmul.mubr.f32.gmra.mxu0 %v984
          %v2061 = vpop.f32.mrf.mxu0
          %v2062 = vadd.f32 0.0, %v2061
          %v2063 = vpop.f32.mrf.mxu0
          %2064 = vmatprep.mubr.f32.mxu0 0.0
          %2065 = vmatmul.mubr.f32.gmra.mxu0 %v987
          %v2066 = vpop.f32.mrf.mxu0
          %v2067 = vadd.f32 0.0, %v2066
          %v2068 = vpop.f32.mrf.mxu0
          %2069 = vmatprep.mubr.f32.mxu0 0.0
          %2070 = vmatmul.mubr.f32.gmra.mxu0 %v990
          %v2071 = vpop.f32.mrf.mxu0
          %v2072 = vadd.f32 0.0, %v2071
          %v2073 = vpop.f32.mrf.mxu0
          %2074 = vmatprep.mubr.f32.mxu0 0.0
          %2075 = vmatmul.mubr.f32.gmra.mxu0 %v993
          %v2076 = vpop.f32.mrf.mxu0
          %v2077 = vadd.f32 0.0, %v2076
          %v2078 = vpop.f32.mrf.mxu0
          %2079 = vmatprep.mubr.f32.mxu0 0.0
          %2080 = vmatmul.mubr.f32.gmra.mxu0 %v996
          %v2081 = vpop.f32.mrf.mxu0
          %v2082 = vadd.f32 0.0, %v2081
          %v2083 = vpop.f32.mrf.mxu0
          %2084 = vmatprep.mubr.f32.mxu0 0.0
          %2085 = vmatmul.mubr.f32.gmra.mxu0 %v999
          %v2086 = vpop.f32.mrf.mxu0
          %v2087 = vadd.f32 0.0, %v2086
          %v2088 = vpop.f32.mrf.mxu0
          %2089 = vmatprep.mubr.f32.mxu0 0.0
          %2090 = vmatmul.mubr.f32.gmra.mxu0 %v1002
          %v2091 = vpop.f32.mrf.mxu0
          %v2092 = vadd.f32 0.0, %v2091
          %v2093 = vpop.f32.mrf.mxu0
          %2094 = vmatprep.mubr.f32.mxu0 0.0
          %2095 = vmatmul.mubr.f32.gmra.mxu0 %v1005
          %v2096 = vpop.f32.mrf.mxu0
          %v2097 = vadd.f32 0.0, %v2096
          %v2098 = vpop.f32.mrf.mxu0
          %2099 = vmatprep.mubr.f32.mxu0 0.0
          %2100 = vmatmul.mubr.f32.gmra.mxu0 %v1008
          %v2101 = vpop.f32.mrf.mxu0
          %v2102 = vadd.f32 0.0, %v2101
          %v2103 = vpop.f32.mrf.mxu0
          %2104 = vmatprep.mubr.f32.mxu0 0.0
          %2105 = vmatmul.mubr.f32.gmra.mxu0 %v1011
          %v2106 = vpop.f32.mrf.mxu0
          %v2107 = vadd.f32 0.0, %v2106
          %v2108 = vpop.f32.mrf.mxu0
          %2109 = vmatprep.mubr.f32.mxu0 0.0
          %2110 = vmatmul.mubr.f32.gmra.mxu0 %v1014
          %v2111 = vpop.f32.mrf.mxu0
          %v2112 = vadd.f32 0.0, %v2111
          %v2113 = vpop.f32.mrf.mxu0
          %2114 = vmatprep.mubr.f32.mxu0 0.0
          %2115 = vmatmul.mubr.f32.gmra.mxu0 %v1017
          %v2116 = vpop.f32.mrf.mxu0
          %v2117 = vadd.f32 0.0, %v2116
          %v2118 = vpop.f32.mrf.mxu0
          %2119 = vmatprep.mubr.f32.mxu0 0.0
          %2120 = vmatmul.mubr.f32.gmra.mxu0 %v1020
          %v2121 = vpop.f32.mrf.mxu0
          %v2122 = vadd.f32 0.0, %v2121
          %v2123 = vpop.f32.mrf.mxu0
          %2124 = vmatprep.mubr.f32.mxu0 0.0
          %2125 = vmatmul.mubr.f32.gmra.mxu0 %v1023
          %v2126 = vpop.f32.mrf.mxu0
          %v2127 = vadd.f32 0.0, %v2126
          %v2128 = vpop.f32.mrf.mxu0
          %2129 = vmatprep.mubr.f32.mxu0 0.0
          %2130 = vmatmul.mubr.f32.gmra.mxu0 %v1026
          %v2131 = vpop.f32.mrf.mxu0
          %v2132 = vadd.f32 0.0, %v2131
          %v2133 = vpop.f32.mrf.mxu0
          %2134 = vmatprep.mubr.f32.mxu0 0.0
          %2135 = vmatmul.mubr.f32.gmra.mxu0 %v1029
          %v2136 = vpop.f32.mrf.mxu0
          %v2137 = vadd.f32 0.0, %v2136
          %v2138 = vpop.f32.mrf.mxu0
          %2139 = vmatprep.mubr.f32.mxu0 0.0
          %2140 = vmatmul.mubr.f32.gmra.mxu0 %v1032
          %v2141 = vpop.f32.mrf.mxu0
          %v2142 = vadd.f32 0.0, %v2141
          %v2143 = vpop.f32.mrf.mxu0
          %2144 = vmatprep.mubr.f32.mxu0 0.0
          %2145 = vmatmul.mubr.f32.gmra.mxu0 %v1035
          %v2146 = vpop.f32.mrf.mxu0
          %v2147 = vadd.f32 0.0, %v2146
          %v2148 = vpop.f32.mrf.mxu0
          %2149 = vmatprep.mubr.f32.mxu0 0.0
          %2150 = vmatmul.mubr.f32.gmra.mxu0 %v1038
          %v2151 = vpop.f32.mrf.mxu0
          %v2152 = vadd.f32 0.0, %v2151
          %v2153 = vpop.f32.mrf.mxu0
          %2154 = vmatprep.mubr.f32.mxu0 0.0
          %2155 = vmatmul.mubr.f32.gmra.mxu0 %v1041
          %v2156 = vpop.f32.mrf.mxu0
          %v2157 = vadd.f32 0.0, %v2156
          %v2158 = vpop.f32.mrf.mxu0
          %2159 = vmatprep.mubr.f32.mxu0 0.0
          %2160 = vmatmul.mubr.f32.gmra.mxu0 %v1044
          %v2161 = vpop.f32.mrf.mxu0
          %v2162 = vadd.f32 0.0, %v2161
          %v2163 = vpop.f32.mrf.mxu0
          %2164 = vmatprep.mubr.f32.mxu0 0.0
          %2165 = vmatmul.mubr.f32.gmra.mxu0 %v1047
          %v2166 = vpop.f32.mrf.mxu0
          %v2167 = vadd.f32 0.0, %v2166
          %v2168 = vpop.f32.mrf.mxu0
          %2169 = vmatprep.mubr.f32.mxu0 0.0
          %2170 = vmatmul.mubr.f32.gmra.mxu0 %v1050
          %v2171 = vpop.f32.mrf.mxu0
          %v2172 = vadd.f32 0.0, %v2171
          %v2173 = vpop.f32.mrf.mxu0
          %2174 = vmatprep.mubr.f32.mxu0 0.0
          %2175 = vmatmul.mubr.f32.gmra.mxu0 %v1053
          %v2176 = vpop.f32.mrf.mxu0
          %v2177 = vadd.f32 0.0, %v2176
          %v2178 = vpop.f32.mrf.mxu0
          %2179 = vmatprep.mubr.f32.mxu0 0.0
          %2180 = vmatmul.mubr.f32.gmra.mxu0 %v1056
          %v2181 = vpop.f32.mrf.mxu0
          %v2182 = vadd.f32 0.0, %v2181
          %v2183 = vpop.f32.mrf.mxu0
          %2184 = vmatprep.mubr.f32.mxu0 0.0
          %2185 = vmatmul.mubr.f32.gmra.mxu0 %v1059
          %v2186 = vpop.f32.mrf.mxu0
          %v2187 = vadd.f32 0.0, %v2186
          %v2188 = vpop.f32.mrf.mxu0
          %2189 = vmatprep.mubr.f32.mxu0 0.0
          %2190 = vmatmul.mubr.f32.gmra.mxu0 %v1062
          %v2191 = vpop.f32.mrf.mxu0
          %v2192 = vadd.f32 0.0, %v2191
          %v2193 = vpop.f32.mrf.mxu0
          %2194 = vmatprep.mubr.f32.mxu0 0.0
          %2195 = vmatmul.mubr.f32.gmra.mxu0 %v1065
          %v2196 = vpop.f32.mrf.mxu0
          %v2197 = vadd.f32 0.0, %v2196
          %v2198 = vpop.f32.mrf.mxu0
          %2199 = vmatprep.mubr.f32.mxu0 0.0
          %2200 = vmatmul.mubr.f32.gmra.mxu0 %v1068
          %v2201 = vpop.f32.mrf.mxu0
          %v2202 = vadd.f32 0.0, %v2201
          %v2203 = vpop.f32.mrf.mxu0
          %2204 = vmatprep.mubr.f32.mxu0 0.0
          %2205 = vmatmul.mubr.f32.gmra.mxu0 %v1071
          %v2206 = vpop.f32.mrf.mxu0
          %v2207 = vadd.f32 0.0, %v2206
          %v2208 = vpop.f32.mrf.mxu0
          %2209 = vmatprep.mubr.f32.mxu0 0.0
          %2210 = vmatmul.mubr.f32.gmra.mxu0 %v1074
          %v2211 = vpop.f32.mrf.mxu0
          %v2212 = vadd.f32 0.0, %v2211
          %v2213 = vpop.f32.mrf.mxu0
          %2214 = vmatprep.mubr.f32.mxu0 0.0
          %2215 = vmatmul.mubr.f32.gmra.mxu0 %v1077
          %v2216 = vpop.f32.mrf.mxu0
          %v2217 = vadd.f32 0.0, %v2216
          %v2218 = vpop.f32.mrf.mxu0
          %2219 = vmatprep.mubr.f32.mxu0 0.0
          %2220 = vmatmul.mubr.f32.gmra.mxu0 %v1080
          %v2221 = vpop.f32.mrf.mxu0
          %v2222 = vadd.f32 0.0, %v2221
          %v2223 = vpop.f32.mrf.mxu0
          %2224 = vmatprep.mubr.f32.mxu0 0.0
          %2225 = vmatmul.mubr.f32.gmra.mxu0 %v1083
          %v2226 = vpop.f32.mrf.mxu0
          %v2227 = vadd.f32 0.0, %v2226
          %v2228 = vpop.f32.mrf.mxu0
          %2229 = vmatprep.mubr.f32.mxu0 0.0
          %2230 = vmatmul.mubr.f32.gmra.mxu0 %v1086
          %v2231 = vpop.f32.mrf.mxu0
          %v2232 = vadd.f32 0.0, %v2231
          %v2233 = vpop.f32.mrf.mxu0
          %2234 = vmatprep.mubr.f32.mxu0 0.0
          %2235 = vmatmul.mubr.f32.gmra.mxu0 %v1089
          %v2236 = vpop.f32.mrf.mxu0
          %v2237 = vadd.f32 0.0, %v2236
          %v2238 = vpop.f32.mrf.mxu0
          %2239 = vmatprep.mubr.f32.mxu0 0.0
          %2240 = vmatmul.mubr.f32.gmra.mxu0 %v1092
          %v2241 = vpop.f32.mrf.mxu0
          %v2242 = vadd.f32 0.0, %v2241
          %v2243 = vpop.f32.mrf.mxu0
          %2244 = vmatprep.mubr.f32.mxu0 0.0
          %2245 = vmatmul.mubr.f32.gmra.mxu0 %v1095
          %v2246 = vpop.f32.mrf.mxu0
          %v2247 = vadd.f32 0.0, %v2246
          %v2248 = vpop.f32.mrf.mxu0
          %2249 = vmatprep.mubr.f32.mxu0 0.0
          %2250 = vmatmul.mubr.f32.gmra.mxu0 %v1098
          %v2251 = vpop.f32.mrf.mxu0
          %v2252 = vadd.f32 0.0, %v2251
          %v2253 = vpop.f32.mrf.mxu0
          %2254 = vmatprep.mubr.f32.mxu0 0.0
          %2255 = vmatmul.mubr.f32.gmra.mxu0 %v1101
          %v2256 = vpop.f32.mrf.mxu0
          %v2257 = vadd.f32 0.0, %v2256
          %v2258 = vpop.f32.mrf.mxu0
          %2259 = vmatprep.mubr.f32.mxu0 0.0
          %2260 = vmatmul.mubr.f32.gmra.mxu0 %v1104
          %v2261 = vpop.f32.mrf.mxu0
          %v2262 = vadd.f32 0.0, %v2261
          %v2263 = vpop.f32.mrf.mxu0
          %2264 = vmatprep.mubr.f32.mxu0 0.0
          %2265 = vmatmul.mubr.f32.gmra.mxu0 %v1107
          %v2266 = vpop.f32.mrf.mxu0
          %v2267 = vadd.f32 0.0, %v2266
          %v2268 = vpop.f32.mrf.mxu0
          %2269 = vmatprep.mubr.f32.mxu0 0.0
          %2270 = vmatmul.mubr.f32.gmra.mxu0 %v1110
          %v2271 = vpop.f32.mrf.mxu0
          %v2272 = vadd.f32 0.0, %v2271
          %v2273 = vpop.f32.mrf.mxu0
          %2274 = vmatprep.mubr.f32.mxu0 0.0
          %2275 = vmatmul.mubr.f32.gmra.mxu0 %v1113
          %v2276 = vpop.f32.mrf.mxu0
          %v2277 = vadd.f32 0.0, %v2276
          %v2278 = vpop.f32.mrf.mxu0
          %2279 = vmatprep.mubr.f32.mxu0 0.0
          %2280 = vmatmul.mubr.f32.gmra.mxu0 %v1116
          %v2281 = vpop.f32.mrf.mxu0
          %v2282 = vadd.f32 0.0, %v2281
          %v2283 = vpop.f32.mrf.mxu0
          %2284 = vmatprep.mubr.f32.mxu0 0.0
          %2285 = vmatmul.mubr.f32.gmra.mxu0 %v1119
          %v2286 = vpop.f32.mrf.mxu0
          %v2287 = vadd.f32 0.0, %v2286
          %v2288 = vpop.f32.mrf.mxu0
          %2289 = vmatprep.mubr.f32.mxu0 0.0
          %2290 = vmatmul.mubr.f32.gmra.mxu0 %v1122
          %v2291 = vpop.f32.mrf.mxu0
          %v2292 = vadd.f32 0.0, %v2291
          %v2293 = vpop.f32.mrf.mxu0
          %2294 = vmatprep.mubr.f32.mxu0 0.0
          %2295 = vmatmul.mubr.f32.gmra.mxu0 %v1125
          %v2296 = vpop.f32.mrf.mxu0
          %v2297 = vadd.f32 0.0, %v2296
          %v2298 = vpop.f32.mrf.mxu0
          %2299 = vmatprep.mubr.f32.mxu0 0.0
          %2300 = vmatmul.mubr.f32.gmra.mxu0 %v1128
          %v2301 = vpop.f32.mrf.mxu0
          %v2302 = vadd.f32 0.0, %v2301
          %v2303 = vpop.f32.mrf.mxu0
          %2304 = vmatprep.mubr.f32.mxu0 0.0
          %2305 = vmatmul.mubr.f32.gmra.mxu0 %v1131
          %v2306 = vpop.f32.mrf.mxu0
          %v2307 = vadd.f32 0.0, %v2306
          %v2308 = vpop.f32.mrf.mxu0
          %2309 = vmatprep.mubr.f32.mxu0 0.0
          %2310 = vmatmul.mubr.f32.gmra.mxu0 %v1134
          %v2311 = vpop.f32.mrf.mxu0
          %v2312 = vadd.f32 0.0, %v2311
          %v2313 = vpop.f32.mrf.mxu0
          %2314 = vmatprep.mubr.f32.mxu0 0.0
          %2315 = vmatmul.mubr.f32.gmra.mxu0 %v1137
          %v2316 = vpop.f32.mrf.mxu0
          %v2317 = vadd.f32 0.0, %v2316
          %v2318 = vpop.f32.mrf.mxu0
          %2319 = vmatprep.mubr.f32.mxu0 0.0
          %2320 = vmatmul.mubr.f32.gmra.mxu0 %v1140
          %v2321 = vpop.f32.mrf.mxu0
          %v2322 = vadd.f32 0.0, %v2321
          %v2323 = vpop.f32.mrf.mxu0
          %2324 = vmatprep.mubr.f32.mxu0 0.0
          %2325 = vmatmul.mubr.f32.gmra.mxu0 %v1143
          %v2326 = vpop.f32.mrf.mxu0
          %v2327 = vadd.f32 0.0, %v2326
          %v2328 = vpop.f32.mrf.mxu0
          %2329 = vmatprep.mubr.f32.mxu0 0.0
          %2330 = vmatmul.mubr.f32.gmra.mxu0 %v1146
          %v2331 = vpop.f32.mrf.mxu0
          %v2332 = vadd.f32 0.0, %v2331
          %v2333 = vpop.f32.mrf.mxu0
          %2334 = vmatprep.mubr.f32.mxu0 0.0
          %2335 = vmatmul.mubr.f32.gmra.mxu0 %v1149
          %v2336 = vpop.f32.mrf.mxu0
          %v2337 = vadd.f32 0.0, %v2336
          %v2338 = vpop.f32.mrf.mxu0
          %2339 = vmatprep.mubr.f32.mxu0 0.0
          %2340 = vmatmul.mubr.f32.gmra.mxu0 %v1152
          %v2341 = vpop.f32.mrf.mxu0
          %v2342 = vadd.f32 0.0, %v2341
          %v2343 = vpop.f32.mrf.mxu0
          %2344 = vmatprep.mubr.f32.mxu0 0.0
          %2345 = vmatmul.mubr.f32.gmra.mxu0 %v1155
          %v2346 = vpop.f32.mrf.mxu0
          %v2347 = vadd.f32 0.0, %v2346
          %v2348 = vpop.f32.mrf.mxu0
          %2349 = vmatprep.mubr.f32.mxu0 0.0
          %2350 = vmatmul.mubr.f32.gmra.mxu0 %v1158
          %v2351 = vpop.f32.mrf.mxu0
          %v2352 = vadd.f32 0.0, %v2351
          %v2353 = vpop.f32.mrf.mxu0
          %2354 = vmatprep.mubr.f32.mxu0 0.0
          %2355 = vmatmul.mubr.f32.gmra.mxu0 %v1161
          %v2356 = vpop.f32.mrf.mxu0
          %v2357 = vadd.f32 0.0, %v2356
          %v2358 = vpop.f32.mrf.mxu0
          %2359 = vmatprep.mubr.f32.mxu0 0.0
          %2360 = vmatmul.mubr.f32.gmra.mxu0 %v1164
          %v2361 = vpop.f32.mrf.mxu0
          %v2362 = vadd.f32 0.0, %v2361
          %v2363 = vpop.f32.mrf.mxu0
          %2364 = vmatprep.mubr.f32.mxu0 0.0
          %2365 = vmatmul.mubr.f32.gmra.mxu0 %v1167
          %v2366 = vpop.f32.mrf.mxu0
          %v2367 = vadd.f32 0.0, %v2366
          %v2368 = vpop.f32.mrf.mxu0
          %2369 = vmatprep.mubr.f32.mxu0 0.0
          %2370 = vmatmul.mubr.f32.gmra.mxu0 %v1170
          %v2371 = vpop.f32.mrf.mxu0
          %v2372 = vadd.f32 0.0, %v2371
          %v2373 = vpop.f32.mrf.mxu0
          %2374 = vmatprep.mubr.f32.mxu0 0.0
          %2375 = vmatmul.mubr.f32.gmra.mxu0 %v1173
          %v2376 = vpop.f32.mrf.mxu0
          %v2377 = vadd.f32 0.0, %v2376
          %v2378 = vpop.f32.mrf.mxu0
          %2379 = vmatprep.mubr.f32.mxu0 0.0
          %2380 = vmatmul.mubr.f32.gmra.mxu0 %v1176
          %v2381 = vpop.f32.mrf.mxu0
          %v2382 = vadd.f32 0.0, %v2381
          %v2383 = vpop.f32.mrf.mxu0
          %2384 = vmatprep.mubr.f32.mxu0 0.0
          %2385 = vmatmul.mubr.f32.gmra.mxu0 %v1179
          %v2386 = vpop.f32.mrf.mxu0
          %v2387 = vadd.f32 0.0, %v2386
          %v2388 = vpop.f32.mrf.mxu0
          %2389 = vmatprep.mubr.f32.mxu0 0.0
          %2390 = vmatmul.mubr.f32.gmra.mxu0 %v1182
          %v2391 = vpop.f32.mrf.mxu0
          %v2392 = vadd.f32 0.0, %v2391
          %v2393 = vpop.f32.mrf.mxu0
          %2394 = vmatprep.mubr.f32.mxu0 0.0
          %2395 = vmatmul.mubr.f32.gmra.mxu0 %v1185
          %v2396 = vpop.f32.mrf.mxu0
          %v2397 = vadd.f32 0.0, %v2396
          %v2398 = vpop.f32.mrf.mxu0
          %2399 = vmatprep.mubr.f32.mxu0 0.0
          %2400 = vmatmul.mubr.f32.gmra.mxu0 %v1188
          %v2401 = vpop.f32.mrf.mxu0
          %v2402 = vadd.f32 0.0, %v2401
          %v2403 = vpop.f32.mrf.mxu0
          %2404 = vmatprep.mubr.f32.mxu0 0.0
          %2405 = vmatmul.mubr.f32.gmra.mxu0 %v1191
          %v2406 = vpop.f32.mrf.mxu0
          %v2407 = vadd.f32 0.0, %v2406
          %v2408 = vpop.f32.mrf.mxu0
          %2409 = vmatprep.mubr.f32.mxu0 0.0
          %2410 = vmatmul.mubr.f32.gmra.mxu0 %v1194
          %v2411 = vpop.f32.mrf.mxu0
          %v2412 = vadd.f32 0.0, %v2411
          %v2413 = vpop.f32.mrf.mxu0
          %2414 = vmatprep.mubr.f32.mxu0 0.0
          %2415 = vmatmul.mubr.f32.gmra.mxu0 %v1197
          %v2416 = vpop.f32.mrf.mxu0
          %v2417 = vadd.f32 0.0, %v2416
          %v2418 = vpop.f32.mrf.mxu0
          %2419 = vmatprep.mubr.f32.mxu0 0.0
          %2420 = vmatmul.mubr.f32.gmra.mxu0 %v1200
          %v2421 = vpop.f32.mrf.mxu0
          %v2422 = vadd.f32 0.0, %v2421
          %v2423 = vpop.f32.mrf.mxu0
          %2424 = vmatprep.mubr.f32.mxu0 0.0
          %2425 = vmatmul.mubr.f32.gmra.mxu0 %v1203
          %v2426 = vpop.f32.mrf.mxu0
          %v2427 = vadd.f32 0.0, %v2426
          %v2428 = vpop.f32.mrf.mxu0
          %2429 = vmatprep.mubr.f32.mxu0 0.0
          %2430 = vmatmul.mubr.f32.gmra.mxu0 %v1206
          %v2431 = vpop.f32.mrf.mxu0
          %v2432 = vadd.f32 0.0, %v2431
          %v2433 = vpop.f32.mrf.mxu0
          %2434 = vmatprep.mubr.f32.mxu0 0.0
          %2435 = vmatmul.mubr.f32.gmra.mxu0 %v1209
          %v2436 = vpop.f32.mrf.mxu0
          %v2437 = vadd.f32 0.0, %v2436
          %v2438 = vpop.f32.mrf.mxu0
          %2439 = vmatprep.mubr.f32.mxu0 0.0
          %2440 = vmatmul.mubr.f32.gmra.mxu0 %v1212
          %v2441 = vpop.f32.mrf.mxu0
          %v2442 = vadd.f32 0.0, %v2441
          %v2443 = vpop.f32.mrf.mxu0
          %2444 = vmatprep.mubr.f32.mxu0 0.0
          %2445 = vmatmul.mubr.f32.gmra.mxu0 %v1215
          %v2446 = vpop.f32.mrf.mxu0
          %v2447 = vadd.f32 0.0, %v2446
          %v2448 = vpop.f32.mrf.mxu0
          %2449 = vmatprep.mubr.f32.mxu0 0.0
          %2450 = vmatmul.mubr.f32.gmra.mxu0 %v1218
          %v2451 = vpop.f32.mrf.mxu0
          %v2452 = vadd.f32 0.0, %v2451
          %v2453 = vpop.f32.mrf.mxu0
          %2454 = vmatprep.mubr.f32.mxu0 0.0
          %2455 = vmatmul.mubr.f32.gmra.mxu0 %v1221
          %v2456 = vpop.f32.mrf.mxu0
          %v2457 = vadd.f32 0.0, %v2456
          %v2458 = vpop.f32.mrf.mxu0
          %2459 = vmatprep.mubr.f32.mxu0 0.0
          %2460 = vmatmul.mubr.f32.gmra.mxu0 %v1224
          %v2461 = vpop.f32.mrf.mxu0
          %v2462 = vadd.f32 0.0, %v2461
          %v2463 = vpop.f32.mrf.mxu0
          %2464 = vmatprep.mubr.f32.mxu0 0.0
          %2465 = vmatmul.mubr.f32.gmra.mxu0 %v1227
          %v2466 = vpop.f32.mrf.mxu0
          %v2467 = vadd.f32 0.0, %v2466
          %v2468 = vpop.f32.mrf.mxu0
          %2469 = vmatprep.mubr.f32.mxu0 0.0
          %2470 = vmatmul.mubr.f32.gmra.mxu0 %v1230
          %v2471 = vpop.f32.mrf.mxu0
          %v2472 = vadd.f32 0.0, %v2471
          %v2473 = vpop.f32.mrf.mxu0
          %2474 = vmatprep.mubr.f32.mxu0 0.0
          %2475 = vmatmul.mubr.f32.gmra.mxu0 %v1233
          %v2476 = vpop.f32.mrf.mxu0
          %v2477 = vadd.f32 0.0, %v2476
          %v2478 = vpop.f32.mrf.mxu0
          %2479 = vmatprep.mubr.f32.mxu0 0.0
          %2480 = vmatmul.mubr.f32.gmra.mxu0 %v1236
          %v2481 = vpop.f32.mrf.mxu0
          %v2482 = vadd.f32 0.0, %v2481
          %v2483 = vpop.f32.mrf.mxu0
          %2484 = vmatprep.mubr.f32.mxu0 0.0
          %2485 = vmatmul.mubr.f32.gmra.mxu0 %v1239
          %v2486 = vpop.f32.mrf.mxu0
          %v2487 = vadd.f32 0.0, %v2486
          %v2488 = vpop.f32.mrf.mxu0
          %2489 = vmatprep.mubr.f32.mxu0 0.0
          %2490 = vmatmul.mubr.f32.gmra.mxu0 %v1242
          %v2491 = vpop.f32.mrf.mxu0
          %v2492 = vadd.f32 0.0, %v2491
          %v2493 = vpop.f32.mrf.mxu0
          %2494 = vmatprep.mubr.f32.mxu0 0.0
          %2495 = vmatmul.mubr.f32.gmra.mxu0 %v1245
          %v2496 = vpop.f32.mrf.mxu0
          %v2497 = vadd.f32 0.0, %v2496
          %v2498 = vpop.f32.mrf.mxu0
          %2499 = vmatprep.mubr.f32.mxu0 0.0
          %2500 = vmatmul.mubr.f32.gmra.mxu0 %v1248
          %v2501 = vpop.f32.mrf.mxu0
          %v2502 = vadd.f32 0.0, %v2501
          %v2503 = vpop.f32.mrf.mxu0
          %2504 = vmatprep.mubr.f32.mxu0 0.0
          %2505 = vmatmul.mubr.f32.gmra.mxu0 %v1251
          %v2506 = vpop.f32.mrf.mxu0
          %v2507 = vadd.f32 0.0, %v2506
          %v2508 = vpop.f32.mrf.mxu0
          %2509 = vmatprep.mubr.f32.mxu0 0.0
          %2510 = vmatmul.mubr.f32.gmra.mxu0 %v1254
          %v2511 = vpop.f32.mrf.mxu0
          %v2512 = vadd.f32 0.0, %v2511
          %v2513 = vpop.f32.mrf.mxu0
          %2514 = vmatprep.mubr.f32.mxu0 0.0
          %2515 = vmatmul.mubr.f32.gmra.mxu0 %v1257
          %v2516 = vpop.f32.mrf.mxu0
          %v2517 = vadd.f32 0.0, %v2516
          %v2518 = vpop.f32.mrf.mxu0
          %2519 = vmatprep.mubr.f32.mxu0 0.0
          %2520 = vmatmul.mubr.f32.gmra.mxu0 %v1260
          %v2521 = vpop.f32.mrf.mxu0
          %v2522 = vadd.f32 0.0, %v2521
          %v2523 = vpop.f32.mrf.mxu0
          %2524 = vmatprep.mubr.f32.mxu0 0.0
          %2525 = vmatmul.mubr.f32.gmra.mxu0 %v1263
          %v2526 = vpop.f32.mrf.mxu0
          %v2527 = vadd.f32 0.0, %v2526
          %v2528 = vpop.f32.mrf.mxu0
          %2529 = vmatprep.mubr.f32.mxu0 0.0
          %2530 = vmatmul.mubr.f32.gmra.mxu0 %v1266
          %v2531 = vpop.f32.mrf.mxu0
          %v2532 = vadd.f32 0.0, %v2531
          %v2533 = vpop.f32.mrf.mxu0
          %2534 = vmatprep.mubr.f32.mxu0 0.0
          %2535 = vmatmul.mubr.f32.gmra.mxu0 %v1269
          %v2536 = vpop.f32.mrf.mxu0
          %v2537 = vadd.f32 0.0, %v2536
          %v2538 = vpop.f32.mrf.mxu0
          %2539 = vmatprep.mubr.f32.mxu0 0.0
          %2540 = vmatmul.mubr.f32.gmra.mxu0 %v1272
          %v2541 = vpop.f32.mrf.mxu0
          %v2542 = vadd.f32 0.0, %v2541
          %v2543 = vpop.f32.mrf.mxu0
          %2544 = vmatprep.mubr.f32.mxu0 0.0
          %2545 = vmatmul.mubr.f32.gmra.mxu0 %v1275
          %v2546 = vpop.f32.mrf.mxu0
          %v2547 = vadd.f32 0.0, %v2546
          %v2548 = vpop.f32.mrf.mxu0
          %2549 = vmatprep.mubr.f32.mxu0 0.0
          %2550 = vmatmul.mubr.f32.gmra.mxu0 %v1278
          %v2551 = vpop.f32.mrf.mxu0
          %v2552 = vadd.f32 0.0, %v2551
          %v2553 = vpop.f32.mrf.mxu0
          %2554 = vmatprep.mubr.f32.mxu0 0.0
          %2555 = vmatmul.mubr.f32.gmra.mxu0 %v1281
          %v2556 = vpop.f32.mrf.mxu0
          %v2557 = vadd.f32 0.0, %v2556
          %v2558 = vpop.f32.mrf.mxu0
          %2559 = vmatprep.mubr.f32.mxu0 0.0
          %2560 = vmatmul.mubr.f32.gmra.mxu0 %v1284
          %v2561 = vpop.f32.mrf.mxu0
          %v2562 = vadd.f32 0.0, %v2561
          %v2563 = vpop.f32.mrf.mxu0
          %2564 = vmatprep.mubr.f32.mxu0 0.0
          %2565 = vmatmul.mubr.f32.gmra.mxu0 %v1287
          %v2566 = vpop.f32.mrf.mxu0
          %v2567 = vadd.f32 0.0, %v2566
          %v2568 = vpop.f32.mrf.mxu0
          %2569 = vmatprep.mubr.f32.mxu0 0.0
          %2570 = vmatmul.mubr.f32.gmra.mxu0 %v1290
          %v2571 = vpop.f32.mrf.mxu0
          %v2572 = vadd.f32 0.0, %v2571
          %v2573 = vpop.f32.mrf.mxu0
          %2574 = vmatprep.mubr.f32.mxu0 0.0
          %2575 = vmatmul.mubr.f32.gmra.mxu0 %v1293
          %v2576 = vpop.f32.mrf.mxu0
          %v2577 = vadd.f32 0.0, %v2576
          %v2578 = vpop.f32.mrf.mxu0
          %2579 = vmatprep.mubr.f32.mxu0 0.0
          %2580 = vmatmul.mubr.f32.gmra.mxu0 %v1296
          %v2581 = vpop.f32.mrf.mxu0
          %v2582 = vadd.f32 0.0, %v2581
          %v2583 = vpop.f32.mrf.mxu0
          %2584 = vmatprep.mubr.f32.mxu0 0.0
          %2585 = vmatmul.mubr.f32.gmra.mxu0 %v1299
          %v2586 = vpop.f32.mrf.mxu0
          %v2587 = vadd.f32 0.0, %v2586
          %v2588 = vpop.f32.mrf.mxu0
          %2589 = vmatprep.mubr.f32.mxu0 0.0
          %2590 = vmatmul.mubr.f32.gmra.mxu0 %v1302
          %v2591 = vpop.f32.mrf.mxu0
          %v2592 = vadd.f32 0.0, %v2591
          %v2593 = vpop.f32.mrf.mxu0
          %2594 = vmatprep.mubr.f32.mxu0 0.0
          %2595 = vmatmul.mubr.f32.gmra.mxu0 %v1305
          %v2596 = vpop.f32.mrf.mxu0
          %v2597 = vadd.f32 0.0, %v2596
          %v2598 = vpop.f32.mrf.mxu0
          %2599 = vmatprep.mubr.f32.mxu0 0.0
          %2600 = vmatmul.mubr.f32.gmra.mxu0 %v1308
          %v2601 = vpop.f32.mrf.mxu0
          %v2602 = vadd.f32 0.0, %v2601
          %v2603 = vpop.f32.mrf.mxu0
          %2604 = vmatprep.mubr.f32.mxu0 0.0
          %2605 = vmatmul.mubr.f32.gmra.mxu0 %v1311
          %v2606 = vpop.f32.mrf.mxu0
          %v2607 = vadd.f32 0.0, %v2606
          %v2608 = vpop.f32.mrf.mxu0
          %2609 = vmatprep.mubr.f32.mxu0 0.0
          %2610 = vmatmul.mubr.f32.gmra.mxu0 %v1314
          %v2611 = vpop.f32.mrf.mxu0
          %v2612 = vadd.f32 0.0, %v2611
          %v2613 = vpop.f32.mrf.mxu0
          %2614 = vmatprep.mubr.f32.mxu0 0.0
          %2615 = vmatmul.mubr.f32.gmra.mxu0 %v1317
          %v2616 = vpop.f32.mrf.mxu0
          %v2617 = vadd.f32 0.0, %v2616
          %v2618 = vpop.f32.mrf.mxu0
          %2619 = vmatprep.mubr.f32.mxu0 0.0
          %2620 = vmatmul.mubr.f32.gmra.mxu0 %v1320
          %v2621 = vpop.f32.mrf.mxu0
          %v2622 = vadd.f32 0.0, %v2621
          %v2623 = vpop.f32.mrf.mxu0
          %2624 = vmatprep.mubr.f32.mxu0 0.0
          %2625 = vmatmul.mubr.f32.gmra.mxu0 %v1323
          %v2626 = vpop.f32.mrf.mxu0
          %v2627 = vadd.f32 0.0, %v2626
          %v2628 = vpop.f32.mrf.mxu0
          %2629 = vmatprep.mubr.f32.mxu0 0.0
          %2630 = vmatmul.mubr.f32.gmra.mxu0 %v1326
          %v2631 = vpop.f32.mrf.mxu0
          %v2632 = vadd.f32 0.0, %v2631
          %v2633 = vpop.f32.mrf.mxu0
          %2634 = vmatprep.mubr.f32.mxu0 0.0
          %2635 = vmatmul.mubr.f32.gmra.mxu0 %v1329
          %v2636 = vpop.f32.mrf.mxu0
          %v2637 = vadd.f32 0.0, %v2636
          %v2638 = vpop.f32.mrf.mxu0
          %2639 = vmatprep.mubr.f32.mxu0 0.0
          %2640 = vmatmul.mubr.f32.gmra.mxu0 %v1332
          %v2641 = vpop.f32.mrf.mxu0
          %v2642 = vadd.f32 0.0, %v2641
          %v2643 = vpop.f32.mrf.mxu0
          %2644 = vmatprep.mubr.f32.mxu0 0.0
          %2645 = vmatmul.mubr.f32.gmra.mxu0 %v1335
          %v2646 = vpop.f32.mrf.mxu0
          %v2647 = vadd.f32 0.0, %v2646
          %v2648 = vpop.f32.mrf.mxu0
          %2649 = vmatprep.mubr.f32.mxu0 0.0
          %2650 = vmatmul.mubr.f32.gmra.mxu0 %v1338
          %v2651 = vpop.f32.mrf.mxu0
          %v2652 = vadd.f32 0.0, %v2651
          %v2653 = vpop.f32.mrf.mxu0
          %2654 = vmatprep.mubr.f32.mxu0 0.0
          %2655 = vmatmul.mubr.f32.gmra.mxu0 %v1341
          %v2656 = vpop.f32.mrf.mxu0
          %v2657 = vadd.f32 0.0, %v2656
          %v2658 = vpop.f32.mrf.mxu0
          %2659 = vmatprep.mubr.f32.mxu0 0.0
          %2660 = vmatmul.mubr.f32.gmra.mxu0 %v1344
          %v2661 = vpop.f32.mrf.mxu0
          %v2662 = vadd.f32 0.0, %v2661
          %v2663 = vpop.f32.mrf.mxu0
          %2664 = vmatprep.mubr.f32.mxu0 0.0
          %2665 = vmatmul.mubr.f32.gmra.mxu0 %v1347
          %v2666 = vpop.f32.mrf.mxu0
          %v2667 = vadd.f32 0.0, %v2666
          %v2668 = vpop.f32.mrf.mxu0
          %2669 = vmatprep.mubr.f32.mxu0 0.0
          %2670 = vmatmul.mubr.f32.gmra.mxu0 %v1350
          %v2671 = vpop.f32.mrf.mxu0
          %v2672 = vadd.f32 0.0, %v2671
          %v2673 = vpop.f32.mrf.mxu0
          %2674 = vmatprep.mubr.f32.mxu0 0.0
          %2675 = vmatmul.mubr.f32.gmra.mxu0 %v1353
          %v2676 = vpop.f32.mrf.mxu0
          %v2677 = vadd.f32 0.0, %v2676
          %v2678 = vpop.f32.mrf.mxu0
          %2679 = vmatprep.mubr.f32.mxu0 0.0
          %2680 = vmatmul.mubr.f32.gmra.mxu0 %v1356
          %v2681 = vpop.f32.mrf.mxu0
          %v2682 = vadd.f32 0.0, %v2681
          %v2683 = vpop.f32.mrf.mxu0
          %2684 = vmatprep.mubr.f32.mxu0 0.0
          %2685 = vmatmul.mubr.f32.gmra.mxu0 %v1359
          %v2686 = vpop.f32.mrf.mxu0
          %v2687 = vadd.f32 0.0, %v2686
          %v2688 = vpop.f32.mrf.mxu0
          %2689 = vmatprep.mubr.f32.mxu0 0.0
          %2690 = vmatmul.mubr.f32.gmra.mxu0 %v1362
          %v2691 = vpop.f32.mrf.mxu0
          %v2692 = vadd.f32 0.0, %v2691
          %v2693 = vpop.f32.mrf.mxu0
          %2694 = vmatprep.mubr.f32.mxu0 0.0
          %2695 = vmatmul.mubr.f32.gmra.mxu0 %v1365
          %v2696 = vpop.f32.mrf.mxu0
          %v2697 = vadd.f32 0.0, %v2696
          %v2698 = vpop.f32.mrf.mxu0
          %2699 = vmatprep.mubr.f32.mxu0 0.0
          %2700 = vmatmul.mubr.f32.gmra.mxu0 %v1368
          %v2701 = vpop.f32.mrf.mxu0
          %v2702 = vadd.f32 0.0, %v2701
          %v2703 = vpop.f32.mrf.mxu0
          %2704 = vmatprep.mubr.f32.mxu0 0.0
          %2705 = vmatmul.mubr.f32.gmra.mxu0 %v1371
          %v2706 = vpop.f32.mrf.mxu0
          %v2707 = vadd.f32 0.0, %v2706
          %v2708 = vpop.f32.mrf.mxu0
          %2709 = vmatprep.mubr.f32.mxu0 0.0
          %2710 = vmatmul.mubr.f32.gmra.mxu0 %v1374
          %v2711 = vpop.f32.mrf.mxu0
          %v2712 = vadd.f32 0.0, %v2711
          %v2713 = vpop.f32.mrf.mxu0
          %2714 = vmatprep.mubr.f32.mxu0 0.0
          %2715 = vmatmul.mubr.f32.gmra.mxu0 %v1377
          %v2716 = vpop.f32.mrf.mxu0
          %v2717 = vadd.f32 0.0, %v2716
          %v2718 = vpop.f32.mrf.mxu0
          %2719 = vmatprep.mubr.f32.mxu0 0.0
          %2720 = vmatmul.mubr.f32.gmra.mxu0 %v1380
          %v2721 = vpop.f32.mrf.mxu0
          %v2722 = vadd.f32 0.0, %v2721
          %v2723 = vpop.f32.mrf.mxu0
          %2724 = vmatprep.mubr.f32.mxu0 0.0
          %2725 = vmatmul.mubr.f32.gmra.mxu0 %v1383
          %v2726 = vpop.f32.mrf.mxu0
          %v2727 = vadd.f32 0.0, %v2726
          %v2728 = vpop.f32.mrf.mxu0
          %2729 = vmatprep.mubr.f32.mxu0 0.0
          %2730 = vmatmul.mubr.f32.gmra.mxu0 %v1386
          %v2731 = vpop.f32.mrf.mxu0
          %v2732 = vadd.f32 0.0, %v2731
          %v2733 = vpop.f32.mrf.mxu0
          %2734 = vmatprep.mubr.f32.mxu0 0.0
          %2735 = vmatmul.mubr.f32.gmra.mxu0 %v1389
          %v2736 = vpop.f32.mrf.mxu0
          %v2737 = vadd.f32 0.0, %v2736
          %v2738 = vpop.f32.mrf.mxu0
          %2739 = vdwg.mxu0
          %v2740 = vxor.u32 %v1462, 2147483648
          %v2741 = vxor.u32 %v1467, 2147483648
          %v2742 = vxor.u32 %v1472, 2147483648
          %v2743 = vxor.u32 %v1477, 2147483648
          %v2744 = vxor.u32 %v1482, 2147483648
          %v2745 = vxor.u32 %v1487, 2147483648
          %v2746 = vxor.u32 %v1492, 2147483648
          %v2747 = vxor.u32 %v1497, 2147483648
          %v2748 = vxor.u32 %v1502, 2147483648
          %v2749 = vxor.u32 %v1507, 2147483648
          %v2750 = vxor.u32 %v1512, 2147483648
          %v2751 = vxor.u32 %v1517, 2147483648
          %v2752 = vxor.u32 %v1522, 2147483648
          %v2753 = vxor.u32 %v1527, 2147483648
          %v2754 = vxor.u32 %v1532, 2147483648
          %v2755 = vxor.u32 %v1537, 2147483648
          %v2756 = vxor.u32 %v1542, 2147483648
          %v2757 = vxor.u32 %v1547, 2147483648
          %v2758 = vxor.u32 %v1552, 2147483648
          %v2759 = vxor.u32 %v1557, 2147483648
          %v2760 = vxor.u32 %v1562, 2147483648
          %v2761 = vxor.u32 %v1567, 2147483648
          %v2762 = vxor.u32 %v1572, 2147483648
          %v2763 = vxor.u32 %v1577, 2147483648
          %v2764 = vxor.u32 %v1582, 2147483648
          %v2765 = vxor.u32 %v1587, 2147483648
          %v2766 = vxor.u32 %v1592, 2147483648
          %v2767 = vxor.u32 %v1597, 2147483648
          %v2768 = vxor.u32 %v1602, 2147483648
          %v2769 = vxor.u32 %v1607, 2147483648
          %v2770 = vxor.u32 %v1612, 2147483648
          %v2771 = vxor.u32 %v1617, 2147483648
          %v2772 = vxor.u32 %v1622, 2147483648
          %v2773 = vxor.u32 %v1627, 2147483648
          %v2774 = vxor.u32 %v1632, 2147483648
          %v2775 = vxor.u32 %v1637, 2147483648
          %v2776 = vxor.u32 %v1642, 2147483648
          %v2777 = vxor.u32 %v1647, 2147483648
          %v2778 = vxor.u32 %v1652, 2147483648
          %v2779 = vxor.u32 %v1657, 2147483648
          %v2780 = vxor.u32 %v1662, 2147483648
          %v2781 = vxor.u32 %v1667, 2147483648
          %v2782 = vxor.u32 %v1672, 2147483648
          %v2783 = vxor.u32 %v1677, 2147483648
          %v2784 = vxor.u32 %v1682, 2147483648
          %v2785 = vxor.u32 %v1687, 2147483648
          %v2786 = vxor.u32 %v1692, 2147483648
          %v2787 = vxor.u32 %v1697, 2147483648
          %v2788 = vxor.u32 %v1702, 2147483648
          %v2789 = vxor.u32 %v1707, 2147483648
          %v2790 = vxor.u32 %v1712, 2147483648
          %v2791 = vxor.u32 %v1717, 2147483648
          %v2792 = vxor.u32 %v1722, 2147483648
          %v2793 = vxor.u32 %v1727, 2147483648
          %v2794 = vxor.u32 %v1732, 2147483648
          %v2795 = vxor.u32 %v1737, 2147483648
          %v2796 = vxor.u32 %v1742, 2147483648
          %v2797 = vxor.u32 %v1747, 2147483648
          %v2798 = vxor.u32 %v1752, 2147483648
          %v2799 = vxor.u32 %v1757, 2147483648
          %v2800 = vxor.u32 %v1762, 2147483648
          %v2801 = vxor.u32 %v1767, 2147483648
          %v2802 = vxor.u32 %v1772, 2147483648
          %v2803 = vxor.u32 %v1777, 2147483648
          %v2804 = vxor.u32 %v1782, 2147483648
          %v2805 = vxor.u32 %v1787, 2147483648
          %v2806 = vxor.u32 %v1792, 2147483648
          %v2807 = vxor.u32 %v1797, 2147483648
          %v2808 = vxor.u32 %v1802, 2147483648
          %v2809 = vxor.u32 %v1807, 2147483648
          %v2810 = vxor.u32 %v1812, 2147483648
          %v2811 = vxor.u32 %v1817, 2147483648
          %v2812 = vxor.u32 %v1822, 2147483648
          %v2813 = vxor.u32 %v1827, 2147483648
          %v2814 = vxor.u32 %v1832, 2147483648
          %v2815 = vxor.u32 %v1837, 2147483648
          %v2816 = vxor.u32 %v1842, 2147483648
          %v2817 = vxor.u32 %v1847, 2147483648
          %v2818 = vxor.u32 %v1852, 2147483648
          %v2819 = vxor.u32 %v1857, 2147483648
          %v2820 = vxor.u32 %v1862, 2147483648
          %v2821 = vxor.u32 %v1867, 2147483648
          %v2822 = vxor.u32 %v1872, 2147483648
          %v2823 = vxor.u32 %v1877, 2147483648
          %v2824 = vxor.u32 %v1882, 2147483648
          %v2825 = vxor.u32 %v1887, 2147483648
          %v2826 = vxor.u32 %v1892, 2147483648
          %v2827 = vxor.u32 %v1897, 2147483648
          %v2828 = vxor.u32 %v1902, 2147483648
          %v2829 = vxor.u32 %v1907, 2147483648
          %v2830 = vxor.u32 %v1912, 2147483648
          %v2831 = vxor.u32 %v1917, 2147483648
          %v2832 = vxor.u32 %v1922, 2147483648
          %v2833 = vxor.u32 %v1927, 2147483648
          %v2834 = vxor.u32 %v1932, 2147483648
          %v2835 = vxor.u32 %v1937, 2147483648
          %v2836 = vxor.u32 %v1942, 2147483648
          %v2837 = vxor.u32 %v1947, 2147483648
          %v2838 = vxor.u32 %v1952, 2147483648
          %v2839 = vxor.u32 %v1957, 2147483648
          %v2840 = vxor.u32 %v1962, 2147483648
          %v2841 = vxor.u32 %v1967, 2147483648
          %v2842 = vxor.u32 %v1972, 2147483648
          %v2843 = vxor.u32 %v1977, 2147483648
          %v2844 = vxor.u32 %v1982, 2147483648
          %v2845 = vxor.u32 %v1987, 2147483648
          %v2846 = vxor.u32 %v1992, 2147483648
          %v2847 = vxor.u32 %v1997, 2147483648
          %v2848 = vxor.u32 %v2002, 2147483648
          %v2849 = vxor.u32 %v2007, 2147483648
          %v2850 = vxor.u32 %v2012, 2147483648
          %v2851 = vxor.u32 %v2017, 2147483648
          %v2852 = vxor.u32 %v2022, 2147483648
          %v2853 = vxor.u32 %v2027, 2147483648
          %v2854 = vxor.u32 %v2032, 2147483648
          %v2855 = vxor.u32 %v2037, 2147483648
          %v2856 = vxor.u32 %v2042, 2147483648
          %v2857 = vxor.u32 %v2047, 2147483648
          %v2858 = vxor.u32 %v2052, 2147483648
          %v2859 = vxor.u32 %v2057, 2147483648
          %v2860 = vxor.u32 %v2062, 2147483648
          %v2861 = vxor.u32 %v2067, 2147483648
          %v2862 = vxor.u32 %v2072, 2147483648
          %v2863 = vxor.u32 %v2077, 2147483648
          %v2864 = vxor.u32 %v2082, 2147483648
          %v2865 = vxor.u32 %v2087, 2147483648
          %v2866 = vxor.u32 %v2092, 2147483648
          %v2867 = vxor.u32 %v2097, 2147483648
          %v2868 = vxor.u32 %v2102, 2147483648
          %v2869 = vxor.u32 %v2107, 2147483648
          %v2870 = vxor.u32 %v2112, 2147483648
          %v2871 = vxor.u32 %v2117, 2147483648
          %v2872 = vxor.u32 %v2122, 2147483648
          %v2873 = vxor.u32 %v2127, 2147483648
          %v2874 = vxor.u32 %v2132, 2147483648
          %v2875 = vxor.u32 %v2137, 2147483648
          %v2876 = vxor.u32 %v2142, 2147483648
          %v2877 = vxor.u32 %v2147, 2147483648
          %v2878 = vxor.u32 %v2152, 2147483648
          %v2879 = vxor.u32 %v2157, 2147483648
          %v2880 = vxor.u32 %v2162, 2147483648
          %v2881 = vxor.u32 %v2167, 2147483648
          %v2882 = vxor.u32 %v2172, 2147483648
          %v2883 = vxor.u32 %v2177, 2147483648
          %v2884 = vxor.u32 %v2182, 2147483648
          %v2885 = vxor.u32 %v2187, 2147483648
          %v2886 = vxor.u32 %v2192, 2147483648
          %v2887 = vxor.u32 %v2197, 2147483648
          %v2888 = vxor.u32 %v2202, 2147483648
          %v2889 = vxor.u32 %v2207, 2147483648
          %v2890 = vxor.u32 %v2212, 2147483648
          %v2891 = vxor.u32 %v2217, 2147483648
          %v2892 = vxor.u32 %v2222, 2147483648
          %v2893 = vxor.u32 %v2227, 2147483648
          %v2894 = vxor.u32 %v2232, 2147483648
          %v2895 = vxor.u32 %v2237, 2147483648
          %v2896 = vxor.u32 %v2242, 2147483648
          %v2897 = vxor.u32 %v2247, 2147483648
          %v2898 = vxor.u32 %v2252, 2147483648
          %v2899 = vxor.u32 %v2257, 2147483648
          %v2900 = vxor.u32 %v2262, 2147483648
          %v2901 = vxor.u32 %v2267, 2147483648
          %v2902 = vxor.u32 %v2272, 2147483648
          %v2903 = vxor.u32 %v2277, 2147483648
          %v2904 = vxor.u32 %v2282, 2147483648
          %v2905 = vxor.u32 %v2287, 2147483648
          %v2906 = vxor.u32 %v2292, 2147483648
          %v2907 = vxor.u32 %v2297, 2147483648
          %v2908 = vxor.u32 %v2302, 2147483648
          %v2909 = vxor.u32 %v2307, 2147483648
          %v2910 = vxor.u32 %v2312, 2147483648
          %v2911 = vxor.u32 %v2317, 2147483648
          %v2912 = vxor.u32 %v2322, 2147483648
          %v2913 = vxor.u32 %v2327, 2147483648
          %v2914 = vxor.u32 %v2332, 2147483648
          %v2915 = vxor.u32 %v2337, 2147483648
          %v2916 = vxor.u32 %v2342, 2147483648
          %v2917 = vxor.u32 %v2347, 2147483648
          %v2918 = vxor.u32 %v2352, 2147483648
          %v2919 = vxor.u32 %v2357, 2147483648
          %v2920 = vxor.u32 %v2362, 2147483648
          %v2921 = vxor.u32 %v2367, 2147483648
          %v2922 = vxor.u32 %v2372, 2147483648
          %v2923 = vxor.u32 %v2377, 2147483648
          %v2924 = vxor.u32 %v2382, 2147483648
          %v2925 = vxor.u32 %v2387, 2147483648
          %v2926 = vxor.u32 %v2392, 2147483648
          %v2927 = vxor.u32 %v2397, 2147483648
          %v2928 = vxor.u32 %v2402, 2147483648
          %v2929 = vxor.u32 %v2407, 2147483648
          %v2930 = vxor.u32 %v2412, 2147483648
          %v2931 = vxor.u32 %v2417, 2147483648
          %v2932 = vxor.u32 %v2422, 2147483648
          %v2933 = vxor.u32 %v2427, 2147483648
          %v2934 = vxor.u32 %v2432, 2147483648
          %v2935 = vxor.u32 %v2437, 2147483648
          %v2936 = vxor.u32 %v2442, 2147483648
          %v2937 = vxor.u32 %v2447, 2147483648
          %v2938 = vxor.u32 %v2452, 2147483648
          %v2939 = vxor.u32 %v2457, 2147483648
          %v2940 = vxor.u32 %v2462, 2147483648
          %v2941 = vxor.u32 %v2467, 2147483648
          %v2942 = vxor.u32 %v2472, 2147483648
          %v2943 = vxor.u32 %v2477, 2147483648
          %v2944 = vxor.u32 %v2482, 2147483648
          %v2945 = vxor.u32 %v2487, 2147483648
          %v2946 = vxor.u32 %v2492, 2147483648
          %v2947 = vxor.u32 %v2497, 2147483648
          %v2948 = vxor.u32 %v2502, 2147483648
          %v2949 = vxor.u32 %v2507, 2147483648
          %v2950 = vxor.u32 %v2512, 2147483648
          %v2951 = vxor.u32 %v2517, 2147483648
          %v2952 = vxor.u32 %v2522, 2147483648
          %v2953 = vxor.u32 %v2527, 2147483648
          %v2954 = vxor.u32 %v2532, 2147483648
          %v2955 = vxor.u32 %v2537, 2147483648
          %v2956 = vxor.u32 %v2542, 2147483648
          %v2957 = vxor.u32 %v2547, 2147483648
          %v2958 = vxor.u32 %v2552, 2147483648
          %v2959 = vxor.u32 %v2557, 2147483648
          %v2960 = vxor.u32 %v2562, 2147483648
          %v2961 = vxor.u32 %v2567, 2147483648
          %v2962 = vxor.u32 %v2572, 2147483648
          %v2963 = vxor.u32 %v2577, 2147483648
          %v2964 = vxor.u32 %v2582, 2147483648
          %v2965 = vxor.u32 %v2587, 2147483648
          %v2966 = vxor.u32 %v2592, 2147483648
          %v2967 = vxor.u32 %v2597, 2147483648
          %v2968 = vxor.u32 %v2602, 2147483648
          %v2969 = vxor.u32 %v2607, 2147483648
          %v2970 = vxor.u32 %v2612, 2147483648
          %v2971 = vxor.u32 %v2617, 2147483648
          %v2972 = vxor.u32 %v2622, 2147483648
          %v2973 = vxor.u32 %v2627, 2147483648
          %v2974 = vxor.u32 %v2632, 2147483648
          %v2975 = vxor.u32 %v2637, 2147483648
          %v2976 = vxor.u32 %v2642, 2147483648
          %v2977 = vxor.u32 %v2647, 2147483648
          %v2978 = vxor.u32 %v2652, 2147483648
          %v2979 = vxor.u32 %v2657, 2147483648
          %v2980 = vxor.u32 %v2662, 2147483648
          %v2981 = vxor.u32 %v2667, 2147483648
          %v2982 = vxor.u32 %v2672, 2147483648
          %v2983 = vxor.u32 %v2677, 2147483648
          %v2984 = vxor.u32 %v2682, 2147483648
          %v2985 = vxor.u32 %v2687, 2147483648
          %v2986 = vxor.u32 %v2692, 2147483648
          %v2987 = vxor.u32 %v2697, 2147483648
          %v2988 = vxor.u32 %v2702, 2147483648
          %v2989 = vxor.u32 %v2707, 2147483648
          %v2990 = vxor.u32 %v2712, 2147483648
          %v2991 = vxor.u32 %v2717, 2147483648
          %v2992 = vxor.u32 %v2722, 2147483648
          %v2993 = vxor.u32 %v2727, 2147483648
          %v2994 = vxor.u32 %v2732, 2147483648
          %v2995 = vxor.u32 %v2737, 2147483648
          %v2996 = vmul.f32 %v2740, 1.442695
          %v2997 = vpow.pop %v2996
          %v2998 = vmul.f32 %v2741, 1.442695
          %v2999 = vpow.pop %v2998
          %v3000 = vmul.f32 %v2742, 1.442695
          %v3001 = vpow.pop %v3000
          %v3002 = vmul.f32 %v2743, 1.442695
          %v3003 = vpow.pop %v3002
          %v3004 = vmul.f32 %v2744, 1.442695
          %v3005 = vpow.pop %v3004
          %v3006 = vmul.f32 %v2745, 1.442695
          %v3007 = vpow.pop %v3006
          %v3008 = vmul.f32 %v2746, 1.442695
          %v3009 = vpow.pop %v3008
          %v3010 = vmul.f32 %v2747, 1.442695
          %v3011 = vpow.pop %v3010
          %v3012 = vmul.f32 %v2748, 1.442695
          %v3013 = vpow.pop %v3012
          %v3014 = vmul.f32 %v2749, 1.442695
          %v3015 = vpow.pop %v3014
          %v3016 = vmul.f32 %v2750, 1.442695
          %v3017 = vpow.pop %v3016
          %v3018 = vmul.f32 %v2751, 1.442695
          %v3019 = vpow.pop %v3018
          %v3020 = vmul.f32 %v2752, 1.442695
          %v3021 = vpow.pop %v3020
          %v3022 = vmul.f32 %v2753, 1.442695
          %v3023 = vpow.pop %v3022
          %v3024 = vmul.f32 %v2754, 1.442695
          %v3025 = vpow.pop %v3024
          %v3026 = vmul.f32 %v2755, 1.442695
          %v3027 = vpow.pop %v3026
          %v3028 = vmul.f32 %v2756, 1.442695
          %v3029 = vpow.pop %v3028
          %v3030 = vmul.f32 %v2757, 1.442695
          %v3031 = vpow.pop %v3030
          %v3032 = vmul.f32 %v2758, 1.442695
          %v3033 = vpow.pop %v3032
          %v3034 = vmul.f32 %v2759, 1.442695
          %v3035 = vpow.pop %v3034
          %v3036 = vmul.f32 %v2760, 1.442695
          %v3037 = vpow.pop %v3036
          %v3038 = vmul.f32 %v2761, 1.442695
          %v3039 = vpow.pop %v3038
          %v3040 = vmul.f32 %v2762, 1.442695
          %v3041 = vpow.pop %v3040
          %v3042 = vmul.f32 %v2763, 1.442695
          %v3043 = vpow.pop %v3042
          %v3044 = vmul.f32 %v2764, 1.442695
          %v3045 = vpow.pop %v3044
          %v3046 = vmul.f32 %v2765, 1.442695
          %v3047 = vpow.pop %v3046
          %v3048 = vmul.f32 %v2766, 1.442695
          %v3049 = vpow.pop %v3048
          %v3050 = vmul.f32 %v2767, 1.442695
          %v3051 = vpow.pop %v3050
          %v3052 = vmul.f32 %v2768, 1.442695
          %v3053 = vpow.pop %v3052
          %v3054 = vmul.f32 %v2769, 1.442695
          %v3055 = vpow.pop %v3054
          %v3056 = vmul.f32 %v2770, 1.442695
          %v3057 = vpow.pop %v3056
          %v3058 = vmul.f32 %v2771, 1.442695
          %v3059 = vpow.pop %v3058
          %v3060 = vmul.f32 %v2772, 1.442695
          %v3061 = vpow.pop %v3060
          %v3062 = vmul.f32 %v2773, 1.442695
          %v3063 = vpow.pop %v3062
          %v3064 = vmul.f32 %v2774, 1.442695
          %v3065 = vpow.pop %v3064
          %v3066 = vmul.f32 %v2775, 1.442695
          %v3067 = vpow.pop %v3066
          %v3068 = vmul.f32 %v2776, 1.442695
          %v3069 = vpow.pop %v3068
          %v3070 = vmul.f32 %v2777, 1.442695
          %v3071 = vpow.pop %v3070
          %v3072 = vmul.f32 %v2778, 1.442695
          %v3073 = vpow.pop %v3072
          %v3074 = vmul.f32 %v2779, 1.442695
          %v3075 = vpow.pop %v3074
          %v3076 = vmul.f32 %v2780, 1.442695
          %v3077 = vpow.pop %v3076
          %v3078 = vmul.f32 %v2781, 1.442695
          %v3079 = vpow.pop %v3078
          %v3080 = vmul.f32 %v2782, 1.442695
          %v3081 = vpow.pop %v3080
          %v3082 = vmul.f32 %v2783, 1.442695
          %v3083 = vpow.pop %v3082
          %v3084 = vmul.f32 %v2784, 1.442695
          %v3085 = vpow.pop %v3084
          %v3086 = vmul.f32 %v2785, 1.442695
          %v3087 = vpow.pop %v3086
          %v3088 = vmul.f32 %v2786, 1.442695
          %v3089 = vpow.pop %v3088
          %v3090 = vmul.f32 %v2787, 1.442695
          %v3091 = vpow.pop %v3090
          %v3092 = vmul.f32 %v2788, 1.442695
          %v3093 = vpow.pop %v3092
          %v3094 = vmul.f32 %v2789, 1.442695
          %v3095 = vpow.pop %v3094
          %v3096 = vmul.f32 %v2790, 1.442695
          %v3097 = vpow.pop %v3096
          %v3098 = vmul.f32 %v2791, 1.442695
          %v3099 = vpow.pop %v3098
          %v3100 = vmul.f32 %v2792, 1.442695
          %v3101 = vpow.pop %v3100
          %v3102 = vmul.f32 %v2793, 1.442695
          %v3103 = vpow.pop %v3102
          %v3104 = vmul.f32 %v2794, 1.442695
          %v3105 = vpow.pop %v3104
          %v3106 = vmul.f32 %v2795, 1.442695
          %v3107 = vpow.pop %v3106
          %v3108 = vmul.f32 %v2796, 1.442695
          %v3109 = vpow.pop %v3108
          %v3110 = vmul.f32 %v2797, 1.442695
          %v3111 = vpow.pop %v3110
          %v3112 = vmul.f32 %v2798, 1.442695
          %v3113 = vpow.pop %v3112
          %v3114 = vmul.f32 %v2799, 1.442695
          %v3115 = vpow.pop %v3114
          %v3116 = vmul.f32 %v2800, 1.442695
          %v3117 = vpow.pop %v3116
          %v3118 = vmul.f32 %v2801, 1.442695
          %v3119 = vpow.pop %v3118
          %v3120 = vmul.f32 %v2802, 1.442695
          %v3121 = vpow.pop %v3120
          %v3122 = vmul.f32 %v2803, 1.442695
          %v3123 = vpow.pop %v3122
          %v3124 = vmul.f32 %v2804, 1.442695
          %v3125 = vpow.pop %v3124
          %v3126 = vmul.f32 %v2805, 1.442695
          %v3127 = vpow.pop %v3126
          %v3128 = vmul.f32 %v2806, 1.442695
          %v3129 = vpow.pop %v3128
          %v3130 = vmul.f32 %v2807, 1.442695
          %v3131 = vpow.pop %v3130
          %v3132 = vmul.f32 %v2808, 1.442695
          %v3133 = vpow.pop %v3132
          %v3134 = vmul.f32 %v2809, 1.442695
          %v3135 = vpow.pop %v3134
          %v3136 = vmul.f32 %v2810, 1.442695
          %v3137 = vpow.pop %v3136
          %v3138 = vmul.f32 %v2811, 1.442695
          %v3139 = vpow.pop %v3138
          %v3140 = vmul.f32 %v2812, 1.442695
          %v3141 = vpow.pop %v3140
          %v3142 = vmul.f32 %v2813, 1.442695
          %v3143 = vpow.pop %v3142
          %v3144 = vmul.f32 %v2814, 1.442695
          %v3145 = vpow.pop %v3144
          %v3146 = vmul.f32 %v2815, 1.442695
          %v3147 = vpow.pop %v3146
          %v3148 = vmul.f32 %v2816, 1.442695
          %v3149 = vpow.pop %v3148
          %v3150 = vmul.f32 %v2817, 1.442695
          %v3151 = vpow.pop %v3150
          %v3152 = vmul.f32 %v2818, 1.442695
          %v3153 = vpow.pop %v3152
          %v3154 = vmul.f32 %v2819, 1.442695
          %v3155 = vpow.pop %v3154
          %v3156 = vmul.f32 %v2820, 1.442695
          %v3157 = vpow.pop %v3156
          %v3158 = vmul.f32 %v2821, 1.442695
          %v3159 = vpow.pop %v3158
          %v3160 = vmul.f32 %v2822, 1.442695
          %v3161 = vpow.pop %v3160
          %v3162 = vmul.f32 %v2823, 1.442695
          %v3163 = vpow.pop %v3162
          %v3164 = vmul.f32 %v2824, 1.442695
          %v3165 = vpow.pop %v3164
          %v3166 = vmul.f32 %v2825, 1.442695
          %v3167 = vpow.pop %v3166
          %v3168 = vmul.f32 %v2826, 1.442695
          %v3169 = vpow.pop %v3168
          %v3170 = vmul.f32 %v2827, 1.442695
          %v3171 = vpow.pop %v3170
          %v3172 = vmul.f32 %v2828, 1.442695
          %v3173 = vpow.pop %v3172
          %v3174 = vmul.f32 %v2829, 1.442695
          %v3175 = vpow.pop %v3174
          %v3176 = vmul.f32 %v2830, 1.442695
          %v3177 = vpow.pop %v3176
          %v3178 = vmul.f32 %v2831, 1.442695
          %v3179 = vpow.pop %v3178
          %v3180 = vmul.f32 %v2832, 1.442695
          %v3181 = vpow.pop %v3180
          %v3182 = vmul.f32 %v2833, 1.442695
          %v3183 = vpow.pop %v3182
          %v3184 = vmul.f32 %v2834, 1.442695
          %v3185 = vpow.pop %v3184
          %v3186 = vmul.f32 %v2835, 1.442695
          %v3187 = vpow.pop %v3186
          %v3188 = vmul.f32 %v2836, 1.442695
          %v3189 = vpow.pop %v3188
          %v3190 = vmul.f32 %v2837, 1.442695
          %v3191 = vpow.pop %v3190
          %v3192 = vmul.f32 %v2838, 1.442695
          %v3193 = vpow.pop %v3192
          %v3194 = vmul.f32 %v2839, 1.442695
          %v3195 = vpow.pop %v3194
          %v3196 = vmul.f32 %v2840, 1.442695
          %v3197 = vpow.pop %v3196
          %v3198 = vmul.f32 %v2841, 1.442695
          %v3199 = vpow.pop %v3198
          %v3200 = vmul.f32 %v2842, 1.442695
          %v3201 = vpow.pop %v3200
          %v3202 = vmul.f32 %v2843, 1.442695
          %v3203 = vpow.pop %v3202
          %v3204 = vmul.f32 %v2844, 1.442695
          %v3205 = vpow.pop %v3204
          %v3206 = vmul.f32 %v2845, 1.442695
          %v3207 = vpow.pop %v3206
          %v3208 = vmul.f32 %v2846, 1.442695
          %v3209 = vpow.pop %v3208
          %v3210 = vmul.f32 %v2847, 1.442695
          %v3211 = vpow.pop %v3210
          %v3212 = vmul.f32 %v2848, 1.442695
          %v3213 = vpow.pop %v3212
          %v3214 = vmul.f32 %v2849, 1.442695
          %v3215 = vpow.pop %v3214
          %v3216 = vmul.f32 %v2850, 1.442695
          %v3217 = vpow.pop %v3216
          %v3218 = vmul.f32 %v2851, 1.442695
          %v3219 = vpow.pop %v3218
          %v3220 = vmul.f32 %v2852, 1.442695
          %v3221 = vpow.pop %v3220
          %v3222 = vmul.f32 %v2853, 1.442695
          %v3223 = vpow.pop %v3222
          %v3224 = vmul.f32 %v2854, 1.442695
          %v3225 = vpow.pop %v3224
          %v3226 = vmul.f32 %v2855, 1.442695
          %v3227 = vpow.pop %v3226
          %v3228 = vmul.f32 %v2856, 1.442695
          %v3229 = vpow.pop %v3228
          %v3230 = vmul.f32 %v2857, 1.442695
          %v3231 = vpow.pop %v3230
          %v3232 = vmul.f32 %v2858, 1.442695
          %v3233 = vpow.pop %v3232
          %v3234 = vmul.f32 %v2859, 1.442695
          %v3235 = vpow.pop %v3234
          %v3236 = vmul.f32 %v2860, 1.442695
          %v3237 = vpow.pop %v3236
          %v3238 = vmul.f32 %v2861, 1.442695
          %v3239 = vpow.pop %v3238
          %v3240 = vmul.f32 %v2862, 1.442695
          %v3241 = vpow.pop %v3240
          %v3242 = vmul.f32 %v2863, 1.442695
          %v3243 = vpow.pop %v3242
          %v3244 = vmul.f32 %v2864, 1.442695
          %v3245 = vpow.pop %v3244
          %v3246 = vmul.f32 %v2865, 1.442695
          %v3247 = vpow.pop %v3246
          %v3248 = vmul.f32 %v2866, 1.442695
          %v3249 = vpow.pop %v3248
          %v3250 = vmul.f32 %v2867, 1.442695
          %v3251 = vpow.pop %v3250
          %v3252 = vmul.f32 %v2868, 1.442695
          %v3253 = vpow.pop %v3252
          %v3254 = vmul.f32 %v2869, 1.442695
          %v3255 = vpow.pop %v3254
          %v3256 = vmul.f32 %v2870, 1.442695
          %v3257 = vpow.pop %v3256
          %v3258 = vmul.f32 %v2871, 1.442695
          %v3259 = vpow.pop %v3258
          %v3260 = vmul.f32 %v2872, 1.442695
          %v3261 = vpow.pop %v3260
          %v3262 = vmul.f32 %v2873, 1.442695
          %v3263 = vpow.pop %v3262
          %v3264 = vmul.f32 %v2874, 1.442695
          %v3265 = vpow.pop %v3264
          %v3266 = vmul.f32 %v2875, 1.442695
          %v3267 = vpow.pop %v3266
          %v3268 = vmul.f32 %v2876, 1.442695
          %v3269 = vpow.pop %v3268
          %v3270 = vmul.f32 %v2877, 1.442695
          %v3271 = vpow.pop %v3270
          %v3272 = vmul.f32 %v2878, 1.442695
          %v3273 = vpow.pop %v3272
          %v3274 = vmul.f32 %v2879, 1.442695
          %v3275 = vpow.pop %v3274
          %v3276 = vmul.f32 %v2880, 1.442695
          %v3277 = vpow.pop %v3276
          %v3278 = vmul.f32 %v2881, 1.442695
          %v3279 = vpow.pop %v3278
          %v3280 = vmul.f32 %v2882, 1.442695
          %v3281 = vpow.pop %v3280
          %v3282 = vmul.f32 %v2883, 1.442695
          %v3283 = vpow.pop %v3282
          %v3284 = vmul.f32 %v2884, 1.442695
          %v3285 = vpow.pop %v3284
          %v3286 = vmul.f32 %v2885, 1.442695
          %v3287 = vpow.pop %v3286
          %v3288 = vmul.f32 %v2886, 1.442695
          %v3289 = vpow.pop %v3288
          %v3290 = vmul.f32 %v2887, 1.442695
          %v3291 = vpow.pop %v3290
          %v3292 = vmul.f32 %v2888, 1.442695
          %v3293 = vpow.pop %v3292
          %v3294 = vmul.f32 %v2889, 1.442695
          %v3295 = vpow.pop %v3294
          %v3296 = vmul.f32 %v2890, 1.442695
          %v3297 = vpow.pop %v3296
          %v3298 = vmul.f32 %v2891, 1.442695
          %v3299 = vpow.pop %v3298
          %v3300 = vmul.f32 %v2892, 1.442695
          %v3301 = vpow.pop %v3300
          %v3302 = vmul.f32 %v2893, 1.442695
          %v3303 = vpow.pop %v3302
          %v3304 = vmul.f32 %v2894, 1.442695
          %v3305 = vpow.pop %v3304
          %v3306 = vmul.f32 %v2895, 1.442695
          %v3307 = vpow.pop %v3306
          %v3308 = vmul.f32 %v2896, 1.442695
          %v3309 = vpow.pop %v3308
          %v3310 = vmul.f32 %v2897, 1.442695
          %v3311 = vpow.pop %v3310
          %v3312 = vmul.f32 %v2898, 1.442695
          %v3313 = vpow.pop %v3312
          %v3314 = vmul.f32 %v2899, 1.442695
          %v3315 = vpow.pop %v3314
          %v3316 = vmul.f32 %v2900, 1.442695
          %v3317 = vpow.pop %v3316
          %v3318 = vmul.f32 %v2901, 1.442695
          %v3319 = vpow.pop %v3318
          %v3320 = vmul.f32 %v2902, 1.442695
          %v3321 = vpow.pop %v3320
          %v3322 = vmul.f32 %v2903, 1.442695
          %v3323 = vpow.pop %v3322
          %v3324 = vmul.f32 %v2904, 1.442695
          %v3325 = vpow.pop %v3324
          %v3326 = vmul.f32 %v2905, 1.442695
          %v3327 = vpow.pop %v3326
          %v3328 = vmul.f32 %v2906, 1.442695
          %v3329 = vpow.pop %v3328
          %v3330 = vmul.f32 %v2907, 1.442695
          %v3331 = vpow.pop %v3330
          %v3332 = vmul.f32 %v2908, 1.442695
          %v3333 = vpow.pop %v3332
          %v3334 = vmul.f32 %v2909, 1.442695
          %v3335 = vpow.pop %v3334
          %v3336 = vmul.f32 %v2910, 1.442695
          %v3337 = vpow.pop %v3336
          %v3338 = vmul.f32 %v2911, 1.442695
          %v3339 = vpow.pop %v3338
          %v3340 = vmul.f32 %v2912, 1.442695
          %v3341 = vpow.pop %v3340
          %v3342 = vmul.f32 %v2913, 1.442695
          %v3343 = vpow.pop %v3342
          %v3344 = vmul.f32 %v2914, 1.442695
          %v3345 = vpow.pop %v3344
          %v3346 = vmul.f32 %v2915, 1.442695
          %v3347 = vpow.pop %v3346
          %v3348 = vmul.f32 %v2916, 1.442695
          %v3349 = vpow.pop %v3348
          %v3350 = vmul.f32 %v2917, 1.442695
          %v3351 = vpow.pop %v3350
          %v3352 = vmul.f32 %v2918, 1.442695
          %v3353 = vpow.pop %v3352
          %v3354 = vmul.f32 %v2919, 1.442695
          %v3355 = vpow.pop %v3354
          %v3356 = vmul.f32 %v2920, 1.442695
          %v3357 = vpow.pop %v3356
          %v3358 = vmul.f32 %v2921, 1.442695
          %v3359 = vpow.pop %v3358
          %v3360 = vmul.f32 %v2922, 1.442695
          %v3361 = vpow.pop %v3360
          %v3362 = vmul.f32 %v2923, 1.442695
          %v3363 = vpow.pop %v3362
          %v3364 = vmul.f32 %v2924, 1.442695
          %v3365 = vpow.pop %v3364
          %v3366 = vmul.f32 %v2925, 1.442695
          %v3367 = vpow.pop %v3366
          %v3368 = vmul.f32 %v2926, 1.442695
          %v3369 = vpow.pop %v3368
          %v3370 = vmul.f32 %v2927, 1.442695
          %v3371 = vpow.pop %v3370
          %v3372 = vmul.f32 %v2928, 1.442695
          %v3373 = vpow.pop %v3372
          %v3374 = vmul.f32 %v2929, 1.442695
          %v3375 = vpow.pop %v3374
          %v3376 = vmul.f32 %v2930, 1.442695
          %v3377 = vpow.pop %v3376
          %v3378 = vmul.f32 %v2931, 1.442695
          %v3379 = vpow.pop %v3378
          %v3380 = vmul.f32 %v2932, 1.442695
          %v3381 = vpow.pop %v3380
          %v3382 = vmul.f32 %v2933, 1.442695
          %v3383 = vpow.pop %v3382
          %v3384 = vmul.f32 %v2934, 1.442695
          %v3385 = vpow.pop %v3384
          %v3386 = vmul.f32 %v2935, 1.442695
          %v3387 = vpow.pop %v3386
          %v3388 = vmul.f32 %v2936, 1.442695
          %v3389 = vpow.pop %v3388
          %v3390 = vmul.f32 %v2937, 1.442695
          %v3391 = vpow.pop %v3390
          %v3392 = vmul.f32 %v2938, 1.442695
          %v3393 = vpow.pop %v3392
          %v3394 = vmul.f32 %v2939, 1.442695
          %v3395 = vpow.pop %v3394
          %v3396 = vmul.f32 %v2940, 1.442695
          %v3397 = vpow.pop %v3396
          %v3398 = vmul.f32 %v2941, 1.442695
          %v3399 = vpow.pop %v3398
          %v3400 = vmul.f32 %v2942, 1.442695
          %v3401 = vpow.pop %v3400
          %v3402 = vmul.f32 %v2943, 1.442695
          %v3403 = vpow.pop %v3402
          %v3404 = vmul.f32 %v2944, 1.442695
          %v3405 = vpow.pop %v3404
          %v3406 = vmul.f32 %v2945, 1.442695
          %v3407 = vpow.pop %v3406
          %v3408 = vmul.f32 %v2946, 1.442695
          %v3409 = vpow.pop %v3408
          %v3410 = vmul.f32 %v2947, 1.442695
          %v3411 = vpow.pop %v3410
          %v3412 = vmul.f32 %v2948, 1.442695
          %v3413 = vpow.pop %v3412
          %v3414 = vmul.f32 %v2949, 1.442695
          %v3415 = vpow.pop %v3414
          %v3416 = vmul.f32 %v2950, 1.442695
          %v3417 = vpow.pop %v3416
          %v3418 = vmul.f32 %v2951, 1.442695
          %v3419 = vpow.pop %v3418
          %v3420 = vmul.f32 %v2952, 1.442695
          %v3421 = vpow.pop %v3420
          %v3422 = vmul.f32 %v2953, 1.442695
          %v3423 = vpow.pop %v3422
          %v3424 = vmul.f32 %v2954, 1.442695
          %v3425 = vpow.pop %v3424
          %v3426 = vmul.f32 %v2955, 1.442695
          %v3427 = vpow.pop %v3426
          %v3428 = vmul.f32 %v2956, 1.442695
          %v3429 = vpow.pop %v3428
          %v3430 = vmul.f32 %v2957, 1.442695
          %v3431 = vpow.pop %v3430
          %v3432 = vmul.f32 %v2958, 1.442695
          %v3433 = vpow.pop %v3432
          %v3434 = vmul.f32 %v2959, 1.442695
          %v3435 = vpow.pop %v3434
          %v3436 = vmul.f32 %v2960, 1.442695
          %v3437 = vpow.pop %v3436
          %v3438 = vmul.f32 %v2961, 1.442695
          %v3439 = vpow.pop %v3438
          %v3440 = vmul.f32 %v2962, 1.442695
          %v3441 = vpow.pop %v3440
          %v3442 = vmul.f32 %v2963, 1.442695
          %v3443 = vpow.pop %v3442
          %v3444 = vmul.f32 %v2964, 1.442695
          %v3445 = vpow.pop %v3444
          %v3446 = vmul.f32 %v2965, 1.442695
          %v3447 = vpow.pop %v3446
          %v3448 = vmul.f32 %v2966, 1.442695
          %v3449 = vpow.pop %v3448
          %v3450 = vmul.f32 %v2967, 1.442695
          %v3451 = vpow.pop %v3450
          %v3452 = vmul.f32 %v2968, 1.442695
          %v3453 = vpow.pop %v3452
          %v3454 = vmul.f32 %v2969, 1.442695
          %v3455 = vpow.pop %v3454
          %v3456 = vmul.f32 %v2970, 1.442695
          %v3457 = vpow.pop %v3456
          %v3458 = vmul.f32 %v2971, 1.442695
          %v3459 = vpow.pop %v3458
          %v3460 = vmul.f32 %v2972, 1.442695
          %v3461 = vpow.pop %v3460
          %v3462 = vmul.f32 %v2973, 1.442695
          %v3463 = vpow.pop %v3462
          %v3464 = vmul.f32 %v2974, 1.442695
          %v3465 = vpow.pop %v3464
          %v3466 = vmul.f32 %v2975, 1.442695
          %v3467 = vpow.pop %v3466
          %v3468 = vmul.f32 %v2976, 1.442695
          %v3469 = vpow.pop %v3468
          %v3470 = vmul.f32 %v2977, 1.442695
          %v3471 = vpow.pop %v3470
          %v3472 = vmul.f32 %v2978, 1.442695
          %v3473 = vpow.pop %v3472
          %v3474 = vmul.f32 %v2979, 1.442695
          %v3475 = vpow.pop %v3474
          %v3476 = vmul.f32 %v2980, 1.442695
          %v3477 = vpow.pop %v3476
          %v3478 = vmul.f32 %v2981, 1.442695
          %v3479 = vpow.pop %v3478
          %v3480 = vmul.f32 %v2982, 1.442695
          %v3481 = vpow.pop %v3480
          %v3482 = vmul.f32 %v2983, 1.442695
          %v3483 = vpow.pop %v3482
          %v3484 = vmul.f32 %v2984, 1.442695
          %v3485 = vpow.pop %v3484
          %v3486 = vmul.f32 %v2985, 1.442695
          %v3487 = vpow.pop %v3486
          %v3488 = vmul.f32 %v2986, 1.442695
          %v3489 = vpow.pop %v3488
          %v3490 = vmul.f32 %v2987, 1.442695
          %v3491 = vpow.pop %v3490
          %v3492 = vmul.f32 %v2988, 1.442695
          %v3493 = vpow.pop %v3492
          %v3494 = vmul.f32 %v2989, 1.442695
          %v3495 = vpow.pop %v3494
          %v3496 = vmul.f32 %v2990, 1.442695
          %v3497 = vpow.pop %v3496
          %v3498 = vmul.f32 %v2991, 1.442695
          %v3499 = vpow.pop %v3498
          %v3500 = vmul.f32 %v2992, 1.442695
          %v3501 = vpow.pop %v3500
          %v3502 = vmul.f32 %v2993, 1.442695
          %v3503 = vpow.pop %v3502
          %v3504 = vmul.f32 %v2994, 1.442695
          %v3505 = vpow.pop %v3504
          %v3506 = vmul.f32 %v2995, 1.442695
          %v3507 = vpow.pop %v3506
          %v3508 = vadd.f32 %v2997, 1.0
          %v3509 = vadd.f32 %v2999, 1.0
          %v3510 = vadd.f32 %v3001, 1.0
          %v3511 = vadd.f32 %v3003, 1.0
          %v3512 = vadd.f32 %v3005, 1.0
          %v3513 = vadd.f32 %v3007, 1.0
          %v3514 = vadd.f32 %v3009, 1.0
          %v3515 = vadd.f32 %v3011, 1.0
          %v3516 = vadd.f32 %v3013, 1.0
          %v3517 = vadd.f32 %v3015, 1.0
          %v3518 = vadd.f32 %v3017, 1.0
          %v3519 = vadd.f32 %v3019, 1.0
          %v3520 = vadd.f32 %v3021, 1.0
          %v3521 = vadd.f32 %v3023, 1.0
          %v3522 = vadd.f32 %v3025, 1.0
          %v3523 = vadd.f32 %v3027, 1.0
          %v3524 = vadd.f32 %v3029, 1.0
          %v3525 = vadd.f32 %v3031, 1.0
          %v3526 = vadd.f32 %v3033, 1.0
          %v3527 = vadd.f32 %v3035, 1.0
          %v3528 = vadd.f32 %v3037, 1.0
          %v3529 = vadd.f32 %v3039, 1.0
          %v3530 = vadd.f32 %v3041, 1.0
          %v3531 = vadd.f32 %v3043, 1.0
          %v3532 = vadd.f32 %v3045, 1.0
          %v3533 = vadd.f32 %v3047, 1.0
          %v3534 = vadd.f32 %v3049, 1.0
          %v3535 = vadd.f32 %v3051, 1.0
          %v3536 = vadd.f32 %v3053, 1.0
          %v3537 = vadd.f32 %v3055, 1.0
          %v3538 = vadd.f32 %v3057, 1.0
          %v3539 = vadd.f32 %v3059, 1.0
          %v3540 = vadd.f32 %v3061, 1.0
          %v3541 = vadd.f32 %v3063, 1.0
          %v3542 = vadd.f32 %v3065, 1.0
          %v3543 = vadd.f32 %v3067, 1.0
          %v3544 = vadd.f32 %v3069, 1.0
          %v3545 = vadd.f32 %v3071, 1.0
          %v3546 = vadd.f32 %v3073, 1.0
          %v3547 = vadd.f32 %v3075, 1.0
          %v3548 = vadd.f32 %v3077, 1.0
          %v3549 = vadd.f32 %v3079, 1.0
          %v3550 = vadd.f32 %v3081, 1.0
          %v3551 = vadd.f32 %v3083, 1.0
          %v3552 = vadd.f32 %v3085, 1.0
          %v3553 = vadd.f32 %v3087, 1.0
          %v3554 = vadd.f32 %v3089, 1.0
          %v3555 = vadd.f32 %v3091, 1.0
          %v3556 = vadd.f32 %v3093, 1.0
          %v3557 = vadd.f32 %v3095, 1.0
          %v3558 = vadd.f32 %v3097, 1.0
          %v3559 = vadd.f32 %v3099, 1.0
          %v3560 = vadd.f32 %v3101, 1.0
          %v3561 = vadd.f32 %v3103, 1.0
          %v3562 = vadd.f32 %v3105, 1.0
          %v3563 = vadd.f32 %v3107, 1.0
          %v3564 = vadd.f32 %v3109, 1.0
          %v3565 = vadd.f32 %v3111, 1.0
          %v3566 = vadd.f32 %v3113, 1.0
          %v3567 = vadd.f32 %v3115, 1.0
          %v3568 = vadd.f32 %v3117, 1.0
          %v3569 = vadd.f32 %v3119, 1.0
          %v3570 = vadd.f32 %v3121, 1.0
          %v3571 = vadd.f32 %v3123, 1.0
          %v3572 = vadd.f32 %v3125, 1.0
          %v3573 = vadd.f32 %v3127, 1.0
          %v3574 = vadd.f32 %v3129, 1.0
          %v3575 = vadd.f32 %v3131, 1.0
          %v3576 = vadd.f32 %v3133, 1.0
          %v3577 = vadd.f32 %v3135, 1.0
          %v3578 = vadd.f32 %v3137, 1.0
          %v3579 = vadd.f32 %v3139, 1.0
          %v3580 = vadd.f32 %v3141, 1.0
          %v3581 = vadd.f32 %v3143, 1.0
          %v3582 = vadd.f32 %v3145, 1.0
          %v3583 = vadd.f32 %v3147, 1.0
          %v3584 = vadd.f32 %v3149, 1.0
          %v3585 = vadd.f32 %v3151, 1.0
          %v3586 = vadd.f32 %v3153, 1.0
          %v3587 = vadd.f32 %v3155, 1.0
          %v3588 = vadd.f32 %v3157, 1.0
          %v3589 = vadd.f32 %v3159, 1.0
          %v3590 = vadd.f32 %v3161, 1.0
          %v3591 = vadd.f32 %v3163, 1.0
          %v3592 = vadd.f32 %v3165, 1.0
          %v3593 = vadd.f32 %v3167, 1.0
          %v3594 = vadd.f32 %v3169, 1.0
          %v3595 = vadd.f32 %v3171, 1.0
          %v3596 = vadd.f32 %v3173, 1.0
          %v3597 = vadd.f32 %v3175, 1.0
          %v3598 = vadd.f32 %v3177, 1.0
          %v3599 = vadd.f32 %v3179, 1.0
          %v3600 = vadd.f32 %v3181, 1.0
          %v3601 = vadd.f32 %v3183, 1.0
          %v3602 = vadd.f32 %v3185, 1.0
          %v3603 = vadd.f32 %v3187, 1.0
          %v3604 = vadd.f32 %v3189, 1.0
          %v3605 = vadd.f32 %v3191, 1.0
          %v3606 = vadd.f32 %v3193, 1.0
          %v3607 = vadd.f32 %v3195, 1.0
          %v3608 = vadd.f32 %v3197, 1.0
          %v3609 = vadd.f32 %v3199, 1.0
          %v3610 = vadd.f32 %v3201, 1.0
          %v3611 = vadd.f32 %v3203, 1.0
          %v3612 = vadd.f32 %v3205, 1.0
          %v3613 = vadd.f32 %v3207, 1.0
          %v3614 = vadd.f32 %v3209, 1.0
          %v3615 = vadd.f32 %v3211, 1.0
          %v3616 = vadd.f32 %v3213, 1.0
          %v3617 = vadd.f32 %v3215, 1.0
          %v3618 = vadd.f32 %v3217, 1.0
          %v3619 = vadd.f32 %v3219, 1.0
          %v3620 = vadd.f32 %v3221, 1.0
          %v3621 = vadd.f32 %v3223, 1.0
          %v3622 = vadd.f32 %v3225, 1.0
          %v3623 = vadd.f32 %v3227, 1.0
          %v3624 = vadd.f32 %v3229, 1.0
          %v3625 = vadd.f32 %v3231, 1.0
          %v3626 = vadd.f32 %v3233, 1.0
          %v3627 = vadd.f32 %v3235, 1.0
          %v3628 = vadd.f32 %v3237, 1.0
          %v3629 = vadd.f32 %v3239, 1.0
          %v3630 = vadd.f32 %v3241, 1.0
          %v3631 = vadd.f32 %v3243, 1.0
          %v3632 = vadd.f32 %v3245, 1.0
          %v3633 = vadd.f32 %v3247, 1.0
          %v3634 = vadd.f32 %v3249, 1.0
          %v3635 = vadd.f32 %v3251, 1.0
          %v3636 = vadd.f32 %v3253, 1.0
          %v3637 = vadd.f32 %v3255, 1.0
          %v3638 = vadd.f32 %v3257, 1.0
          %v3639 = vadd.f32 %v3259, 1.0
          %v3640 = vadd.f32 %v3261, 1.0
          %v3641 = vadd.f32 %v3263, 1.0
          %v3642 = vadd.f32 %v3265, 1.0
          %v3643 = vadd.f32 %v3267, 1.0
          %v3644 = vadd.f32 %v3269, 1.0
          %v3645 = vadd.f32 %v3271, 1.0
          %v3646 = vadd.f32 %v3273, 1.0
          %v3647 = vadd.f32 %v3275, 1.0
          %v3648 = vadd.f32 %v3277, 1.0
          %v3649 = vadd.f32 %v3279, 1.0
          %v3650 = vadd.f32 %v3281, 1.0
          %v3651 = vadd.f32 %v3283, 1.0
          %v3652 = vadd.f32 %v3285, 1.0
          %v3653 = vadd.f32 %v3287, 1.0
          %v3654 = vadd.f32 %v3289, 1.0
          %v3655 = vadd.f32 %v3291, 1.0
          %v3656 = vadd.f32 %v3293, 1.0
          %v3657 = vadd.f32 %v3295, 1.0
          %v3658 = vadd.f32 %v3297, 1.0
          %v3659 = vadd.f32 %v3299, 1.0
          %v3660 = vadd.f32 %v3301, 1.0
          %v3661 = vadd.f32 %v3303, 1.0
          %v3662 = vadd.f32 %v3305, 1.0
          %v3663 = vadd.f32 %v3307, 1.0
          %v3664 = vadd.f32 %v3309, 1.0
          %v3665 = vadd.f32 %v3311, 1.0
          %v3666 = vadd.f32 %v3313, 1.0
          %v3667 = vadd.f32 %v3315, 1.0
          %v3668 = vadd.f32 %v3317, 1.0
          %v3669 = vadd.f32 %v3319, 1.0
          %v3670 = vadd.f32 %v3321, 1.0
          %v3671 = vadd.f32 %v3323, 1.0
          %v3672 = vadd.f32 %v3325, 1.0
          %v3673 = vadd.f32 %v3327, 1.0
          %v3674 = vadd.f32 %v3329, 1.0
          %v3675 = vadd.f32 %v3331, 1.0
          %v3676 = vadd.f32 %v3333, 1.0
          %v3677 = vadd.f32 %v3335, 1.0
          %v3678 = vadd.f32 %v3337, 1.0
          %v3679 = vadd.f32 %v3339, 1.0
          %v3680 = vadd.f32 %v3341, 1.0
          %v3681 = vadd.f32 %v3343, 1.0
          %v3682 = vadd.f32 %v3345, 1.0
          %v3683 = vadd.f32 %v3347, 1.0
          %v3684 = vadd.f32 %v3349, 1.0
          %v3685 = vadd.f32 %v3351, 1.0
          %v3686 = vadd.f32 %v3353, 1.0
          %v3687 = vadd.f32 %v3355, 1.0
          %v3688 = vadd.f32 %v3357, 1.0
          %v3689 = vadd.f32 %v3359, 1.0
          %v3690 = vadd.f32 %v3361, 1.0
          %v3691 = vadd.f32 %v3363, 1.0
          %v3692 = vadd.f32 %v3365, 1.0
          %v3693 = vadd.f32 %v3367, 1.0
          %v3694 = vadd.f32 %v3369, 1.0
          %v3695 = vadd.f32 %v3371, 1.0
          %v3696 = vadd.f32 %v3373, 1.0
          %v3697 = vadd.f32 %v3375, 1.0
          %v3698 = vadd.f32 %v3377, 1.0
          %v3699 = vadd.f32 %v3379, 1.0
          %v3700 = vadd.f32 %v3381, 1.0
          %v3701 = vadd.f32 %v3383, 1.0
          %v3702 = vadd.f32 %v3385, 1.0
          %v3703 = vadd.f32 %v3387, 1.0
          %v3704 = vadd.f32 %v3389, 1.0
          %v3705 = vadd.f32 %v3391, 1.0
          %v3706 = vadd.f32 %v3393, 1.0
          %v3707 = vadd.f32 %v3395, 1.0
          %v3708 = vadd.f32 %v3397, 1.0
          %v3709 = vadd.f32 %v3399, 1.0
          %v3710 = vadd.f32 %v3401, 1.0
          %v3711 = vadd.f32 %v3403, 1.0
          %v3712 = vadd.f32 %v3405, 1.0
          %v3713 = vadd.f32 %v3407, 1.0
          %v3714 = vadd.f32 %v3409, 1.0
          %v3715 = vadd.f32 %v3411, 1.0
          %v3716 = vadd.f32 %v3413, 1.0
          %v3717 = vadd.f32 %v3415, 1.0
          %v3718 = vadd.f32 %v3417, 1.0
          %v3719 = vadd.f32 %v3419, 1.0
          %v3720 = vadd.f32 %v3421, 1.0
          %v3721 = vadd.f32 %v3423, 1.0
          %v3722 = vadd.f32 %v3425, 1.0
          %v3723 = vadd.f32 %v3427, 1.0
          %v3724 = vadd.f32 %v3429, 1.0
          %v3725 = vadd.f32 %v3431, 1.0
          %v3726 = vadd.f32 %v3433, 1.0
          %v3727 = vadd.f32 %v3435, 1.0
          %v3728 = vadd.f32 %v3437, 1.0
          %v3729 = vadd.f32 %v3439, 1.0
          %v3730 = vadd.f32 %v3441, 1.0
          %v3731 = vadd.f32 %v3443, 1.0
          %v3732 = vadd.f32 %v3445, 1.0
          %v3733 = vadd.f32 %v3447, 1.0
          %v3734 = vadd.f32 %v3449, 1.0
          %v3735 = vadd.f32 %v3451, 1.0
          %v3736 = vadd.f32 %v3453, 1.0
          %v3737 = vadd.f32 %v3455, 1.0
          %v3738 = vadd.f32 %v3457, 1.0
          %v3739 = vadd.f32 %v3459, 1.0
          %v3740 = vadd.f32 %v3461, 1.0
          %v3741 = vadd.f32 %v3463, 1.0
          %v3742 = vadd.f32 %v3465, 1.0
          %v3743 = vadd.f32 %v3467, 1.0
          %v3744 = vadd.f32 %v3469, 1.0
          %v3745 = vadd.f32 %v3471, 1.0
          %v3746 = vadd.f32 %v3473, 1.0
          %v3747 = vadd.f32 %v3475, 1.0
          %v3748 = vadd.f32 %v3477, 1.0
          %v3749 = vadd.f32 %v3479, 1.0
          %v3750 = vadd.f32 %v3481, 1.0
          %v3751 = vadd.f32 %v3483, 1.0
          %v3752 = vadd.f32 %v3485, 1.0
          %v3753 = vadd.f32 %v3487, 1.0
          %v3754 = vadd.f32 %v3489, 1.0
          %v3755 = vadd.f32 %v3491, 1.0
          %v3756 = vadd.f32 %v3493, 1.0
          %v3757 = vadd.f32 %v3495, 1.0
          %v3758 = vadd.f32 %v3497, 1.0
          %v3759 = vadd.f32 %v3499, 1.0
          %v3760 = vadd.f32 %v3501, 1.0
          %v3761 = vadd.f32 %v3503, 1.0
          %v3762 = vadd.f32 %v3505, 1.0
          %v3763 = vadd.f32 %v3507, 1.0
          %v3764 = vrcp.pop %v3508
          %v3765 = vmul.f32 1.0, %v3764
          %v3766 = vrcp.pop %v3509
          %v3767 = vmul.f32 1.0, %v3766
          %v3768 = vrcp.pop %v3510
          %v3769 = vmul.f32 1.0, %v3768
          %v3770 = vrcp.pop %v3511
          %v3771 = vmul.f32 1.0, %v3770
          %v3772 = vrcp.pop %v3512
          %v3773 = vmul.f32 1.0, %v3772
          %v3774 = vrcp.pop %v3513
          %v3775 = vmul.f32 1.0, %v3774
          %v3776 = vrcp.pop %v3514
          %v3777 = vmul.f32 1.0, %v3776
          %v3778 = vrcp.pop %v3515
          %v3779 = vmul.f32 1.0, %v3778
          %v3780 = vrcp.pop %v3516
          %v3781 = vmul.f32 1.0, %v3780
          %v3782 = vrcp.pop %v3517
          %v3783 = vmul.f32 1.0, %v3782
          %v3784 = vrcp.pop %v3518
          %v3785 = vmul.f32 1.0, %v3784
          %v3786 = vrcp.pop %v3519
          %v3787 = vmul.f32 1.0, %v3786
          %v3788 = vrcp.pop %v3520
          %v3789 = vmul.f32 1.0, %v3788
          %v3790 = vrcp.pop %v3521
          %v3791 = vmul.f32 1.0, %v3790
          %v3792 = vrcp.pop %v3522
          %v3793 = vmul.f32 1.0, %v3792
          %v3794 = vrcp.pop %v3523
          %v3795 = vmul.f32 1.0, %v3794
          %v3796 = vrcp.pop %v3524
          %v3797 = vmul.f32 1.0, %v3796
          %v3798 = vrcp.pop %v3525
          %v3799 = vmul.f32 1.0, %v3798
          %v3800 = vrcp.pop %v3526
          %v3801 = vmul.f32 1.0, %v3800
          %v3802 = vrcp.pop %v3527
          %v3803 = vmul.f32 1.0, %v3802
          %v3804 = vrcp.pop %v3528
          %v3805 = vmul.f32 1.0, %v3804
          %v3806 = vrcp.pop %v3529
          %v3807 = vmul.f32 1.0, %v3806
          %v3808 = vrcp.pop %v3530
          %v3809 = vmul.f32 1.0, %v3808
          %v3810 = vrcp.pop %v3531
          %v3811 = vmul.f32 1.0, %v3810
          %v3812 = vrcp.pop %v3532
          %v3813 = vmul.f32 1.0, %v3812
          %v3814 = vrcp.pop %v3533
          %v3815 = vmul.f32 1.0, %v3814
          %v3816 = vrcp.pop %v3534
          %v3817 = vmul.f32 1.0, %v3816
          %v3818 = vrcp.pop %v3535
          %v3819 = vmul.f32 1.0, %v3818
          %v3820 = vrcp.pop %v3536
          %v3821 = vmul.f32 1.0, %v3820
          %v3822 = vrcp.pop %v3537
          %v3823 = vmul.f32 1.0, %v3822
          %v3824 = vrcp.pop %v3538
          %v3825 = vmul.f32 1.0, %v3824
          %v3826 = vrcp.pop %v3539
          %v3827 = vmul.f32 1.0, %v3826
          %v3828 = vrcp.pop %v3540
          %v3829 = vmul.f32 1.0, %v3828
          %v3830 = vrcp.pop %v3541
          %v3831 = vmul.f32 1.0, %v3830
          %v3832 = vrcp.pop %v3542
          %v3833 = vmul.f32 1.0, %v3832
          %v3834 = vrcp.pop %v3543
          %v3835 = vmul.f32 1.0, %v3834
          %v3836 = vrcp.pop %v3544
          %v3837 = vmul.f32 1.0, %v3836
          %v3838 = vrcp.pop %v3545
          %v3839 = vmul.f32 1.0, %v3838
          %v3840 = vrcp.pop %v3546
          %v3841 = vmul.f32 1.0, %v3840
          %v3842 = vrcp.pop %v3547
          %v3843 = vmul.f32 1.0, %v3842
          %v3844 = vrcp.pop %v3548
          %v3845 = vmul.f32 1.0, %v3844
          %v3846 = vrcp.pop %v3549
          %v3847 = vmul.f32 1.0, %v3846
          %v3848 = vrcp.pop %v3550
          %v3849 = vmul.f32 1.0, %v3848
          %v3850 = vrcp.pop %v3551
          %v3851 = vmul.f32 1.0, %v3850
          %v3852 = vrcp.pop %v3552
          %v3853 = vmul.f32 1.0, %v3852
          %v3854 = vrcp.pop %v3553
          %v3855 = vmul.f32 1.0, %v3854
          %v3856 = vrcp.pop %v3554
          %v3857 = vmul.f32 1.0, %v3856
          %v3858 = vrcp.pop %v3555
          %v3859 = vmul.f32 1.0, %v3858
          %v3860 = vrcp.pop %v3556
          %v3861 = vmul.f32 1.0, %v3860
          %v3862 = vrcp.pop %v3557
          %v3863 = vmul.f32 1.0, %v3862
          %v3864 = vrcp.pop %v3558
          %v3865 = vmul.f32 1.0, %v3864
          %v3866 = vrcp.pop %v3559
          %v3867 = vmul.f32 1.0, %v3866
          %v3868 = vrcp.pop %v3560
          %v3869 = vmul.f32 1.0, %v3868
          %v3870 = vrcp.pop %v3561
          %v3871 = vmul.f32 1.0, %v3870
          %v3872 = vrcp.pop %v3562
          %v3873 = vmul.f32 1.0, %v3872
          %v3874 = vrcp.pop %v3563
          %v3875 = vmul.f32 1.0, %v3874
          %v3876 = vrcp.pop %v3564
          %v3877 = vmul.f32 1.0, %v3876
          %v3878 = vrcp.pop %v3565
          %v3879 = vmul.f32 1.0, %v3878
          %v3880 = vrcp.pop %v3566
          %v3881 = vmul.f32 1.0, %v3880
          %v3882 = vrcp.pop %v3567
          %v3883 = vmul.f32 1.0, %v3882
          %v3884 = vrcp.pop %v3568
          %v3885 = vmul.f32 1.0, %v3884
          %v3886 = vrcp.pop %v3569
          %v3887 = vmul.f32 1.0, %v3886
          %v3888 = vrcp.pop %v3570
          %v3889 = vmul.f32 1.0, %v3888
          %v3890 = vrcp.pop %v3571
          %v3891 = vmul.f32 1.0, %v3890
          %v3892 = vrcp.pop %v3572
          %v3893 = vmul.f32 1.0, %v3892
          %v3894 = vrcp.pop %v3573
          %v3895 = vmul.f32 1.0, %v3894
          %v3896 = vrcp.pop %v3574
          %v3897 = vmul.f32 1.0, %v3896
          %v3898 = vrcp.pop %v3575
          %v3899 = vmul.f32 1.0, %v3898
          %v3900 = vrcp.pop %v3576
          %v3901 = vmul.f32 1.0, %v3900
          %v3902 = vrcp.pop %v3577
          %v3903 = vmul.f32 1.0, %v3902
          %v3904 = vrcp.pop %v3578
          %v3905 = vmul.f32 1.0, %v3904
          %v3906 = vrcp.pop %v3579
          %v3907 = vmul.f32 1.0, %v3906
          %v3908 = vrcp.pop %v3580
          %v3909 = vmul.f32 1.0, %v3908
          %v3910 = vrcp.pop %v3581
          %v3911 = vmul.f32 1.0, %v3910
          %v3912 = vrcp.pop %v3582
          %v3913 = vmul.f32 1.0, %v3912
          %v3914 = vrcp.pop %v3583
          %v3915 = vmul.f32 1.0, %v3914
          %v3916 = vrcp.pop %v3584
          %v3917 = vmul.f32 1.0, %v3916
          %v3918 = vrcp.pop %v3585
          %v3919 = vmul.f32 1.0, %v3918
          %v3920 = vrcp.pop %v3586
          %v3921 = vmul.f32 1.0, %v3920
          %v3922 = vrcp.pop %v3587
          %v3923 = vmul.f32 1.0, %v3922
          %v3924 = vrcp.pop %v3588
          %v3925 = vmul.f32 1.0, %v3924
          %v3926 = vrcp.pop %v3589
          %v3927 = vmul.f32 1.0, %v3926
          %v3928 = vrcp.pop %v3590
          %v3929 = vmul.f32 1.0, %v3928
          %v3930 = vrcp.pop %v3591
          %v3931 = vmul.f32 1.0, %v3930
          %v3932 = vrcp.pop %v3592
          %v3933 = vmul.f32 1.0, %v3932
          %v3934 = vrcp.pop %v3593
          %v3935 = vmul.f32 1.0, %v3934
          %v3936 = vrcp.pop %v3594
          %v3937 = vmul.f32 1.0, %v3936
          %v3938 = vrcp.pop %v3595
          %v3939 = vmul.f32 1.0, %v3938
          %v3940 = vrcp.pop %v3596
          %v3941 = vmul.f32 1.0, %v3940
          %v3942 = vrcp.pop %v3597
          %v3943 = vmul.f32 1.0, %v3942
          %v3944 = vrcp.pop %v3598
          %v3945 = vmul.f32 1.0, %v3944
          %v3946 = vrcp.pop %v3599
          %v3947 = vmul.f32 1.0, %v3946
          %v3948 = vrcp.pop %v3600
          %v3949 = vmul.f32 1.0, %v3948
          %v3950 = vrcp.pop %v3601
          %v3951 = vmul.f32 1.0, %v3950
          %v3952 = vrcp.pop %v3602
          %v3953 = vmul.f32 1.0, %v3952
          %v3954 = vrcp.pop %v3603
          %v3955 = vmul.f32 1.0, %v3954
          %v3956 = vrcp.pop %v3604
          %v3957 = vmul.f32 1.0, %v3956
          %v3958 = vrcp.pop %v3605
          %v3959 = vmul.f32 1.0, %v3958
          %v3960 = vrcp.pop %v3606
          %v3961 = vmul.f32 1.0, %v3960
          %v3962 = vrcp.pop %v3607
          %v3963 = vmul.f32 1.0, %v3962
          %v3964 = vrcp.pop %v3608
          %v3965 = vmul.f32 1.0, %v3964
          %v3966 = vrcp.pop %v3609
          %v3967 = vmul.f32 1.0, %v3966
          %v3968 = vrcp.pop %v3610
          %v3969 = vmul.f32 1.0, %v3968
          %v3970 = vrcp.pop %v3611
          %v3971 = vmul.f32 1.0, %v3970
          %v3972 = vrcp.pop %v3612
          %v3973 = vmul.f32 1.0, %v3972
          %v3974 = vrcp.pop %v3613
          %v3975 = vmul.f32 1.0, %v3974
          %v3976 = vrcp.pop %v3614
          %v3977 = vmul.f32 1.0, %v3976
          %v3978 = vrcp.pop %v3615
          %v3979 = vmul.f32 1.0, %v3978
          %v3980 = vrcp.pop %v3616
          %v3981 = vmul.f32 1.0, %v3980
          %v3982 = vrcp.pop %v3617
          %v3983 = vmul.f32 1.0, %v3982
          %v3984 = vrcp.pop %v3618
          %v3985 = vmul.f32 1.0, %v3984
          %v3986 = vrcp.pop %v3619
          %v3987 = vmul.f32 1.0, %v3986
          %v3988 = vrcp.pop %v3620
          %v3989 = vmul.f32 1.0, %v3988
          %v3990 = vrcp.pop %v3621
          %v3991 = vmul.f32 1.0, %v3990
          %v3992 = vrcp.pop %v3622
          %v3993 = vmul.f32 1.0, %v3992
          %v3994 = vrcp.pop %v3623
          %v3995 = vmul.f32 1.0, %v3994
          %v3996 = vrcp.pop %v3624
          %v3997 = vmul.f32 1.0, %v3996
          %v3998 = vrcp.pop %v3625
          %v3999 = vmul.f32 1.0, %v3998
          %v4000 = vrcp.pop %v3626
          %v4001 = vmul.f32 1.0, %v4000
          %v4002 = vrcp.pop %v3627
          %v4003 = vmul.f32 1.0, %v4002
          %v4004 = vrcp.pop %v3628
          %v4005 = vmul.f32 1.0, %v4004
          %v4006 = vrcp.pop %v3629
          %v4007 = vmul.f32 1.0, %v4006
          %v4008 = vrcp.pop %v3630
          %v4009 = vmul.f32 1.0, %v4008
          %v4010 = vrcp.pop %v3631
          %v4011 = vmul.f32 1.0, %v4010
          %v4012 = vrcp.pop %v3632
          %v4013 = vmul.f32 1.0, %v4012
          %v4014 = vrcp.pop %v3633
          %v4015 = vmul.f32 1.0, %v4014
          %v4016 = vrcp.pop %v3634
          %v4017 = vmul.f32 1.0, %v4016
          %v4018 = vrcp.pop %v3635
          %v4019 = vmul.f32 1.0, %v4018
          %v4020 = vrcp.pop %v3636
          %v4021 = vmul.f32 1.0, %v4020
          %v4022 = vrcp.pop %v3637
          %v4023 = vmul.f32 1.0, %v4022
          %v4024 = vrcp.pop %v3638
          %v4025 = vmul.f32 1.0, %v4024
          %v4026 = vrcp.pop %v3639
          %v4027 = vmul.f32 1.0, %v4026
          %v4028 = vrcp.pop %v3640
          %v4029 = vmul.f32 1.0, %v4028
          %v4030 = vrcp.pop %v3641
          %v4031 = vmul.f32 1.0, %v4030
          %v4032 = vrcp.pop %v3642
          %v4033 = vmul.f32 1.0, %v4032
          %v4034 = vrcp.pop %v3643
          %v4035 = vmul.f32 1.0, %v4034
          %v4036 = vrcp.pop %v3644
          %v4037 = vmul.f32 1.0, %v4036
          %v4038 = vrcp.pop %v3645
          %v4039 = vmul.f32 1.0, %v4038
          %v4040 = vrcp.pop %v3646
          %v4041 = vmul.f32 1.0, %v4040
          %v4042 = vrcp.pop %v3647
          %v4043 = vmul.f32 1.0, %v4042
          %v4044 = vrcp.pop %v3648
          %v4045 = vmul.f32 1.0, %v4044
          %v4046 = vrcp.pop %v3649
          %v4047 = vmul.f32 1.0, %v4046
          %v4048 = vrcp.pop %v3650
          %v4049 = vmul.f32 1.0, %v4048
          %v4050 = vrcp.pop %v3651
          %v4051 = vmul.f32 1.0, %v4050
          %v4052 = vrcp.pop %v3652
          %v4053 = vmul.f32 1.0, %v4052
          %v4054 = vrcp.pop %v3653
          %v4055 = vmul.f32 1.0, %v4054
          %v4056 = vrcp.pop %v3654
          %v4057 = vmul.f32 1.0, %v4056
          %v4058 = vrcp.pop %v3655
          %v4059 = vmul.f32 1.0, %v4058
          %v4060 = vrcp.pop %v3656
          %v4061 = vmul.f32 1.0, %v4060
          %v4062 = vrcp.pop %v3657
          %v4063 = vmul.f32 1.0, %v4062
          %v4064 = vrcp.pop %v3658
          %v4065 = vmul.f32 1.0, %v4064
          %v4066 = vrcp.pop %v3659
          %v4067 = vmul.f32 1.0, %v4066
          %v4068 = vrcp.pop %v3660
          %v4069 = vmul.f32 1.0, %v4068
          %v4070 = vrcp.pop %v3661
          %v4071 = vmul.f32 1.0, %v4070
          %v4072 = vrcp.pop %v3662
          %v4073 = vmul.f32 1.0, %v4072
          %v4074 = vrcp.pop %v3663
          %v4075 = vmul.f32 1.0, %v4074
          %v4076 = vrcp.pop %v3664
          %v4077 = vmul.f32 1.0, %v4076
          %v4078 = vrcp.pop %v3665
          %v4079 = vmul.f32 1.0, %v4078
          %v4080 = vrcp.pop %v3666
          %v4081 = vmul.f32 1.0, %v4080
          %v4082 = vrcp.pop %v3667
          %v4083 = vmul.f32 1.0, %v4082
          %v4084 = vrcp.pop %v3668
          %v4085 = vmul.f32 1.0, %v4084
          %v4086 = vrcp.pop %v3669
          %v4087 = vmul.f32 1.0, %v4086
          %v4088 = vrcp.pop %v3670
          %v4089 = vmul.f32 1.0, %v4088
          %v4090 = vrcp.pop %v3671
          %v4091 = vmul.f32 1.0, %v4090
          %v4092 = vrcp.pop %v3672
          %v4093 = vmul.f32 1.0, %v4092
          %v4094 = vrcp.pop %v3673
          %v4095 = vmul.f32 1.0, %v4094
          %v4096 = vrcp.pop %v3674
          %v4097 = vmul.f32 1.0, %v4096
          %v4098 = vrcp.pop %v3675
          %v4099 = vmul.f32 1.0, %v4098
          %v4100 = vrcp.pop %v3676
          %v4101 = vmul.f32 1.0, %v4100
          %v4102 = vrcp.pop %v3677
          %v4103 = vmul.f32 1.0, %v4102
          %v4104 = vrcp.pop %v3678
          %v4105 = vmul.f32 1.0, %v4104
          %v4106 = vrcp.pop %v3679
          %v4107 = vmul.f32 1.0, %v4106
          %v4108 = vrcp.pop %v3680
          %v4109 = vmul.f32 1.0, %v4108
          %v4110 = vrcp.pop %v3681
          %v4111 = vmul.f32 1.0, %v4110
          %v4112 = vrcp.pop %v3682
          %v4113 = vmul.f32 1.0, %v4112
          %v4114 = vrcp.pop %v3683
          %v4115 = vmul.f32 1.0, %v4114
          %v4116 = vrcp.pop %v3684
          %v4117 = vmul.f32 1.0, %v4116
          %v4118 = vrcp.pop %v3685
          %v4119 = vmul.f32 1.0, %v4118
          %v4120 = vrcp.pop %v3686
          %v4121 = vmul.f32 1.0, %v4120
          %v4122 = vrcp.pop %v3687
          %v4123 = vmul.f32 1.0, %v4122
          %v4124 = vrcp.pop %v3688
          %v4125 = vmul.f32 1.0, %v4124
          %v4126 = vrcp.pop %v3689
          %v4127 = vmul.f32 1.0, %v4126
          %v4128 = vrcp.pop %v3690
          %v4129 = vmul.f32 1.0, %v4128
          %v4130 = vrcp.pop %v3691
          %v4131 = vmul.f32 1.0, %v4130
          %v4132 = vrcp.pop %v3692
          %v4133 = vmul.f32 1.0, %v4132
          %v4134 = vrcp.pop %v3693
          %v4135 = vmul.f32 1.0, %v4134
          %v4136 = vrcp.pop %v3694
          %v4137 = vmul.f32 1.0, %v4136
          %v4138 = vrcp.pop %v3695
          %v4139 = vmul.f32 1.0, %v4138
          %v4140 = vrcp.pop %v3696
          %v4141 = vmul.f32 1.0, %v4140
          %v4142 = vrcp.pop %v3697
          %v4143 = vmul.f32 1.0, %v4142
          %v4144 = vrcp.pop %v3698
          %v4145 = vmul.f32 1.0, %v4144
          %v4146 = vrcp.pop %v3699
          %v4147 = vmul.f32 1.0, %v4146
          %v4148 = vrcp.pop %v3700
          %v4149 = vmul.f32 1.0, %v4148
          %v4150 = vrcp.pop %v3701
          %v4151 = vmul.f32 1.0, %v4150
          %v4152 = vrcp.pop %v3702
          %v4153 = vmul.f32 1.0, %v4152
          %v4154 = vrcp.pop %v3703
          %v4155 = vmul.f32 1.0, %v4154
          %v4156 = vrcp.pop %v3704
          %v4157 = vmul.f32 1.0, %v4156
          %v4158 = vrcp.pop %v3705
          %v4159 = vmul.f32 1.0, %v4158
          %v4160 = vrcp.pop %v3706
          %v4161 = vmul.f32 1.0, %v4160
          %v4162 = vrcp.pop %v3707
          %v4163 = vmul.f32 1.0, %v4162
          %v4164 = vrcp.pop %v3708
          %v4165 = vmul.f32 1.0, %v4164
          %v4166 = vrcp.pop %v3709
          %v4167 = vmul.f32 1.0, %v4166
          %v4168 = vrcp.pop %v3710
          %v4169 = vmul.f32 1.0, %v4168
          %v4170 = vrcp.pop %v3711
          %v4171 = vmul.f32 1.0, %v4170
          %v4172 = vrcp.pop %v3712
          %v4173 = vmul.f32 1.0, %v4172
          %v4174 = vrcp.pop %v3713
          %v4175 = vmul.f32 1.0, %v4174
          %v4176 = vrcp.pop %v3714
          %v4177 = vmul.f32 1.0, %v4176
          %v4178 = vrcp.pop %v3715
          %v4179 = vmul.f32 1.0, %v4178
          %v4180 = vrcp.pop %v3716
          %v4181 = vmul.f32 1.0, %v4180
          %v4182 = vrcp.pop %v3717
          %v4183 = vmul.f32 1.0, %v4182
          %v4184 = vrcp.pop %v3718
          %v4185 = vmul.f32 1.0, %v4184
          %v4186 = vrcp.pop %v3719
          %v4187 = vmul.f32 1.0, %v4186
          %v4188 = vrcp.pop %v3720
          %v4189 = vmul.f32 1.0, %v4188
          %v4190 = vrcp.pop %v3721
          %v4191 = vmul.f32 1.0, %v4190
          %v4192 = vrcp.pop %v3722
          %v4193 = vmul.f32 1.0, %v4192
          %v4194 = vrcp.pop %v3723
          %v4195 = vmul.f32 1.0, %v4194
          %v4196 = vrcp.pop %v3724
          %v4197 = vmul.f32 1.0, %v4196
          %v4198 = vrcp.pop %v3725
          %v4199 = vmul.f32 1.0, %v4198
          %v4200 = vrcp.pop %v3726
          %v4201 = vmul.f32 1.0, %v4200
          %v4202 = vrcp.pop %v3727
          %v4203 = vmul.f32 1.0, %v4202
          %v4204 = vrcp.pop %v3728
          %v4205 = vmul.f32 1.0, %v4204
          %v4206 = vrcp.pop %v3729
          %v4207 = vmul.f32 1.0, %v4206
          %v4208 = vrcp.pop %v3730
          %v4209 = vmul.f32 1.0, %v4208
          %v4210 = vrcp.pop %v3731
          %v4211 = vmul.f32 1.0, %v4210
          %v4212 = vrcp.pop %v3732
          %v4213 = vmul.f32 1.0, %v4212
          %v4214 = vrcp.pop %v3733
          %v4215 = vmul.f32 1.0, %v4214
          %v4216 = vrcp.pop %v3734
          %v4217 = vmul.f32 1.0, %v4216
          %v4218 = vrcp.pop %v3735
          %v4219 = vmul.f32 1.0, %v4218
          %v4220 = vrcp.pop %v3736
          %v4221 = vmul.f32 1.0, %v4220
          %v4222 = vrcp.pop %v3737
          %v4223 = vmul.f32 1.0, %v4222
          %v4224 = vrcp.pop %v3738
          %v4225 = vmul.f32 1.0, %v4224
          %v4226 = vrcp.pop %v3739
          %v4227 = vmul.f32 1.0, %v4226
          %v4228 = vrcp.pop %v3740
          %v4229 = vmul.f32 1.0, %v4228
          %v4230 = vrcp.pop %v3741
          %v4231 = vmul.f32 1.0, %v4230
          %v4232 = vrcp.pop %v3742
          %v4233 = vmul.f32 1.0, %v4232
          %v4234 = vrcp.pop %v3743
          %v4235 = vmul.f32 1.0, %v4234
          %v4236 = vrcp.pop %v3744
          %v4237 = vmul.f32 1.0, %v4236
          %v4238 = vrcp.pop %v3745
          %v4239 = vmul.f32 1.0, %v4238
          %v4240 = vrcp.pop %v3746
          %v4241 = vmul.f32 1.0, %v4240
          %v4242 = vrcp.pop %v3747
          %v4243 = vmul.f32 1.0, %v4242
          %v4244 = vrcp.pop %v3748
          %v4245 = vmul.f32 1.0, %v4244
          %v4246 = vrcp.pop %v3749
          %v4247 = vmul.f32 1.0, %v4246
          %v4248 = vrcp.pop %v3750
          %v4249 = vmul.f32 1.0, %v4248
          %v4250 = vrcp.pop %v3751
          %v4251 = vmul.f32 1.0, %v4250
          %v4252 = vrcp.pop %v3752
          %v4253 = vmul.f32 1.0, %v4252
          %v4254 = vrcp.pop %v3753
          %v4255 = vmul.f32 1.0, %v4254
          %v4256 = vrcp.pop %v3754
          %v4257 = vmul.f32 1.0, %v4256
          %v4258 = vrcp.pop %v3755
          %v4259 = vmul.f32 1.0, %v4258
          %v4260 = vrcp.pop %v3756
          %v4261 = vmul.f32 1.0, %v4260
          %v4262 = vrcp.pop %v3757
          %v4263 = vmul.f32 1.0, %v4262
          %v4264 = vrcp.pop %v3758
          %v4265 = vmul.f32 1.0, %v4264
          %v4266 = vrcp.pop %v3759
          %v4267 = vmul.f32 1.0, %v4266
          %v4268 = vrcp.pop %v3760
          %v4269 = vmul.f32 1.0, %v4268
          %v4270 = vrcp.pop %v3761
          %v4271 = vmul.f32 1.0, %v4270
          %v4272 = vrcp.pop %v3762
          %v4273 = vmul.f32 1.0, %v4272
          %v4274 = vrcp.pop %v3763
          %v4275 = vmul.f32 1.0, %v4274
          %v4276 = vmul.f32 %v3765, %v3765
          %v4277 = vmul.f32 %v3767, %v3767
          %v4278 = vmul.f32 %v3769, %v3769
          %v4279 = vmul.f32 %v3771, %v3771
          %v4280 = vmul.f32 %v3773, %v3773
          %v4281 = vmul.f32 %v3775, %v3775
          %v4282 = vmul.f32 %v3777, %v3777
          %v4283 = vmul.f32 %v3779, %v3779
          %v4284 = vmul.f32 %v3781, %v3781
          %v4285 = vmul.f32 %v3783, %v3783
          %v4286 = vmul.f32 %v3785, %v3785
          %v4287 = vmul.f32 %v3787, %v3787
          %v4288 = vmul.f32 %v3789, %v3789
          %v4289 = vmul.f32 %v3791, %v3791
          %v4290 = vmul.f32 %v3793, %v3793
          %v4291 = vmul.f32 %v3795, %v3795
          %v4292 = vmul.f32 %v3797, %v3797
          %v4293 = vmul.f32 %v3799, %v3799
          %v4294 = vmul.f32 %v3801, %v3801
          %v4295 = vmul.f32 %v3803, %v3803
          %v4296 = vmul.f32 %v3805, %v3805
          %v4297 = vmul.f32 %v3807, %v3807
          %v4298 = vmul.f32 %v3809, %v3809
          %v4299 = vmul.f32 %v3811, %v3811
          %v4300 = vmul.f32 %v3813, %v3813
          %v4301 = vmul.f32 %v3815, %v3815
          %v4302 = vmul.f32 %v3817, %v3817
          %v4303 = vmul.f32 %v3819, %v3819
          %v4304 = vmul.f32 %v3821, %v3821
          %v4305 = vmul.f32 %v3823, %v3823
          %v4306 = vmul.f32 %v3825, %v3825
          %v4307 = vmul.f32 %v3827, %v3827
          %v4308 = vmul.f32 %v3829, %v3829
          %v4309 = vmul.f32 %v3831, %v3831
          %v4310 = vmul.f32 %v3833, %v3833
          %v4311 = vmul.f32 %v3835, %v3835
          %v4312 = vmul.f32 %v3837, %v3837
          %v4313 = vmul.f32 %v3839, %v3839
          %v4314 = vmul.f32 %v3841, %v3841
          %v4315 = vmul.f32 %v3843, %v3843
          %v4316 = vmul.f32 %v3845, %v3845
          %v4317 = vmul.f32 %v3847, %v3847
          %v4318 = vmul.f32 %v3849, %v3849
          %v4319 = vmul.f32 %v3851, %v3851
          %v4320 = vmul.f32 %v3853, %v3853
          %v4321 = vmul.f32 %v3855, %v3855
          %v4322 = vmul.f32 %v3857, %v3857
          %v4323 = vmul.f32 %v3859, %v3859
          %v4324 = vmul.f32 %v3861, %v3861
          %v4325 = vmul.f32 %v3863, %v3863
          %v4326 = vmul.f32 %v3865, %v3865
          %v4327 = vmul.f32 %v3867, %v3867
          %v4328 = vmul.f32 %v3869, %v3869
          %v4329 = vmul.f32 %v3871, %v3871
          %v4330 = vmul.f32 %v3873, %v3873
          %v4331 = vmul.f32 %v3875, %v3875
          %v4332 = vmul.f32 %v3877, %v3877
          %v4333 = vmul.f32 %v3879, %v3879
          %v4334 = vmul.f32 %v3881, %v3881
          %v4335 = vmul.f32 %v3883, %v3883
          %v4336 = vmul.f32 %v3885, %v3885
          %v4337 = vmul.f32 %v3887, %v3887
          %v4338 = vmul.f32 %v3889, %v3889
          %v4339 = vmul.f32 %v3891, %v3891
          %v4340 = vmul.f32 %v3893, %v3893
          %v4341 = vmul.f32 %v3895, %v3895
          %v4342 = vmul.f32 %v3897, %v3897
          %v4343 = vmul.f32 %v3899, %v3899
          %v4344 = vmul.f32 %v3901, %v3901
          %v4345 = vmul.f32 %v3903, %v3903
          %v4346 = vmul.f32 %v3905, %v3905
          %v4347 = vmul.f32 %v3907, %v3907
          %v4348 = vmul.f32 %v3909, %v3909
          %v4349 = vmul.f32 %v3911, %v3911
          %v4350 = vmul.f32 %v3913, %v3913
          %v4351 = vmul.f32 %v3915, %v3915
          %v4352 = vmul.f32 %v3917, %v3917
          %v4353 = vmul.f32 %v3919, %v3919
          %v4354 = vmul.f32 %v3921, %v3921
          %v4355 = vmul.f32 %v3923, %v3923
          %v4356 = vmul.f32 %v3925, %v3925
          %v4357 = vmul.f32 %v3927, %v3927
          %v4358 = vmul.f32 %v3929, %v3929
          %v4359 = vmul.f32 %v3931, %v3931
          %v4360 = vmul.f32 %v3933, %v3933
          %v4361 = vmul.f32 %v3935, %v3935
          %v4362 = vmul.f32 %v3937, %v3937
          %v4363 = vmul.f32 %v3939, %v3939
          %v4364 = vmul.f32 %v3941, %v3941
          %v4365 = vmul.f32 %v3943, %v3943
          %v4366 = vmul.f32 %v3945, %v3945
          %v4367 = vmul.f32 %v3947, %v3947
          %v4368 = vmul.f32 %v3949, %v3949
          %v4369 = vmul.f32 %v3951, %v3951
          %v4370 = vmul.f32 %v3953, %v3953
          %v4371 = vmul.f32 %v3955, %v3955
          %v4372 = vmul.f32 %v3957, %v3957
          %v4373 = vmul.f32 %v3959, %v3959
          %v4374 = vmul.f32 %v3961, %v3961
          %v4375 = vmul.f32 %v3963, %v3963
          %v4376 = vmul.f32 %v3965, %v3965
          %v4377 = vmul.f32 %v3967, %v3967
          %v4378 = vmul.f32 %v3969, %v3969
          %v4379 = vmul.f32 %v3971, %v3971
          %v4380 = vmul.f32 %v3973, %v3973
          %v4381 = vmul.f32 %v3975, %v3975
          %v4382 = vmul.f32 %v3977, %v3977
          %v4383 = vmul.f32 %v3979, %v3979
          %v4384 = vmul.f32 %v3981, %v3981
          %v4385 = vmul.f32 %v3983, %v3983
          %v4386 = vmul.f32 %v3985, %v3985
          %v4387 = vmul.f32 %v3987, %v3987
          %v4388 = vmul.f32 %v3989, %v3989
          %v4389 = vmul.f32 %v3991, %v3991
          %v4390 = vmul.f32 %v3993, %v3993
          %v4391 = vmul.f32 %v3995, %v3995
          %v4392 = vmul.f32 %v3997, %v3997
          %v4393 = vmul.f32 %v3999, %v3999
          %v4394 = vmul.f32 %v4001, %v4001
          %v4395 = vmul.f32 %v4003, %v4003
          %v4396 = vmul.f32 %v4005, %v4005
          %v4397 = vmul.f32 %v4007, %v4007
          %v4398 = vmul.f32 %v4009, %v4009
          %v4399 = vmul.f32 %v4011, %v4011
          %v4400 = vmul.f32 %v4013, %v4013
          %v4401 = vmul.f32 %v4015, %v4015
          %v4402 = vmul.f32 %v4017, %v4017
          %v4403 = vmul.f32 %v4019, %v4019
          %v4404 = vmul.f32 %v4021, %v4021
          %v4405 = vmul.f32 %v4023, %v4023
          %v4406 = vmul.f32 %v4025, %v4025
          %v4407 = vmul.f32 %v4027, %v4027
          %v4408 = vmul.f32 %v4029, %v4029
          %v4409 = vmul.f32 %v4031, %v4031
          %v4410 = vmul.f32 %v4033, %v4033
          %v4411 = vmul.f32 %v4035, %v4035
          %v4412 = vmul.f32 %v4037, %v4037
          %v4413 = vmul.f32 %v4039, %v4039
          %v4414 = vmul.f32 %v4041, %v4041
          %v4415 = vmul.f32 %v4043, %v4043
          %v4416 = vmul.f32 %v4045, %v4045
          %v4417 = vmul.f32 %v4047, %v4047
          %v4418 = vmul.f32 %v4049, %v4049
          %v4419 = vmul.f32 %v4051, %v4051
          %v4420 = vmul.f32 %v4053, %v4053
          %v4421 = vmul.f32 %v4055, %v4055
          %v4422 = vmul.f32 %v4057, %v4057
          %v4423 = vmul.f32 %v4059, %v4059
          %v4424 = vmul.f32 %v4061, %v4061
          %v4425 = vmul.f32 %v4063, %v4063
          %v4426 = vmul.f32 %v4065, %v4065
          %v4427 = vmul.f32 %v4067, %v4067
          %v4428 = vmul.f32 %v4069, %v4069
          %v4429 = vmul.f32 %v4071, %v4071
          %v4430 = vmul.f32 %v4073, %v4073
          %v4431 = vmul.f32 %v4075, %v4075
          %v4432 = vmul.f32 %v4077, %v4077
          %v4433 = vmul.f32 %v4079, %v4079
          %v4434 = vmul.f32 %v4081, %v4081
          %v4435 = vmul.f32 %v4083, %v4083
          %v4436 = vmul.f32 %v4085, %v4085
          %v4437 = vmul.f32 %v4087, %v4087
          %v4438 = vmul.f32 %v4089, %v4089
          %v4439 = vmul.f32 %v4091, %v4091
          %v4440 = vmul.f32 %v4093, %v4093
          %v4441 = vmul.f32 %v4095, %v4095
          %v4442 = vmul.f32 %v4097, %v4097
          %v4443 = vmul.f32 %v4099, %v4099
          %v4444 = vmul.f32 %v4101, %v4101
          %v4445 = vmul.f32 %v4103, %v4103
          %v4446 = vmul.f32 %v4105, %v4105
          %v4447 = vmul.f32 %v4107, %v4107
          %v4448 = vmul.f32 %v4109, %v4109
          %v4449 = vmul.f32 %v4111, %v4111
          %v4450 = vmul.f32 %v4113, %v4113
          %v4451 = vmul.f32 %v4115, %v4115
          %v4452 = vmul.f32 %v4117, %v4117
          %v4453 = vmul.f32 %v4119, %v4119
          %v4454 = vmul.f32 %v4121, %v4121
          %v4455 = vmul.f32 %v4123, %v4123
          %v4456 = vmul.f32 %v4125, %v4125
          %v4457 = vmul.f32 %v4127, %v4127
          %v4458 = vmul.f32 %v4129, %v4129
          %v4459 = vmul.f32 %v4131, %v4131
          %v4460 = vmul.f32 %v4133, %v4133
          %v4461 = vmul.f32 %v4135, %v4135
          %v4462 = vmul.f32 %v4137, %v4137
          %v4463 = vmul.f32 %v4139, %v4139
          %v4464 = vmul.f32 %v4141, %v4141
          %v4465 = vmul.f32 %v4143, %v4143
          %v4466 = vmul.f32 %v4145, %v4145
          %v4467 = vmul.f32 %v4147, %v4147
          %v4468 = vmul.f32 %v4149, %v4149
          %v4469 = vmul.f32 %v4151, %v4151
          %v4470 = vmul.f32 %v4153, %v4153
          %v4471 = vmul.f32 %v4155, %v4155
          %v4472 = vmul.f32 %v4157, %v4157
          %v4473 = vmul.f32 %v4159, %v4159
          %v4474 = vmul.f32 %v4161, %v4161
          %v4475 = vmul.f32 %v4163, %v4163
          %v4476 = vmul.f32 %v4165, %v4165
          %v4477 = vmul.f32 %v4167, %v4167
          %v4478 = vmul.f32 %v4169, %v4169
          %v4479 = vmul.f32 %v4171, %v4171
          %v4480 = vmul.f32 %v4173, %v4173
          %v4481 = vmul.f32 %v4175, %v4175
          %v4482 = vmul.f32 %v4177, %v4177
          %v4483 = vmul.f32 %v4179, %v4179
          %v4484 = vmul.f32 %v4181, %v4181
          %v4485 = vmul.f32 %v4183, %v4183
          %v4486 = vmul.f32 %v4185, %v4185
          %v4487 = vmul.f32 %v4187, %v4187
          %v4488 = vmul.f32 %v4189, %v4189
          %v4489 = vmul.f32 %v4191, %v4191
          %v4490 = vmul.f32 %v4193, %v4193
          %v4491 = vmul.f32 %v4195, %v4195
          %v4492 = vmul.f32 %v4197, %v4197
          %v4493 = vmul.f32 %v4199, %v4199
          %v4494 = vmul.f32 %v4201, %v4201
          %v4495 = vmul.f32 %v4203, %v4203
          %v4496 = vmul.f32 %v4205, %v4205
          %v4497 = vmul.f32 %v4207, %v4207
          %v4498 = vmul.f32 %v4209, %v4209
          %v4499 = vmul.f32 %v4211, %v4211
          %v4500 = vmul.f32 %v4213, %v4213
          %v4501 = vmul.f32 %v4215, %v4215
          %v4502 = vmul.f32 %v4217, %v4217
          %v4503 = vmul.f32 %v4219, %v4219
          %v4504 = vmul.f32 %v4221, %v4221
          %v4505 = vmul.f32 %v4223, %v4223
          %v4506 = vmul.f32 %v4225, %v4225
          %v4507 = vmul.f32 %v4227, %v4227
          %v4508 = vmul.f32 %v4229, %v4229
          %v4509 = vmul.f32 %v4231, %v4231
          %v4510 = vmul.f32 %v4233, %v4233
          %v4511 = vmul.f32 %v4235, %v4235
          %v4512 = vmul.f32 %v4237, %v4237
          %v4513 = vmul.f32 %v4239, %v4239
          %v4514 = vmul.f32 %v4241, %v4241
          %v4515 = vmul.f32 %v4243, %v4243
          %v4516 = vmul.f32 %v4245, %v4245
          %v4517 = vmul.f32 %v4247, %v4247
          %v4518 = vmul.f32 %v4249, %v4249
          %v4519 = vmul.f32 %v4251, %v4251
          %v4520 = vmul.f32 %v4253, %v4253
          %v4521 = vmul.f32 %v4255, %v4255
          %v4522 = vmul.f32 %v4257, %v4257
          %v4523 = vmul.f32 %v4259, %v4259
          %v4524 = vmul.f32 %v4261, %v4261
          %v4525 = vmul.f32 %v4263, %v4263
          %v4526 = vmul.f32 %v4265, %v4265
          %v4527 = vmul.f32 %v4267, %v4267
          %v4528 = vmul.f32 %v4269, %v4269
          %v4529 = vmul.f32 %v4271, %v4271
          %v4530 = vmul.f32 %v4273, %v4273
          %v4531 = vmul.f32 %v4275, %v4275
          %vm4532 = vcmask 64512
          %v4533 = vsel %vm4532, %v4276, 0.0
          %4534 = vadd.xlane.f32.xlu0 %v4533
          %v4535 = vpop.xlane.xlu0 %4534
          %v4536 = vsel %vm4532, %v4277, 0.0
          %4537 = vadd.xlane.f32.xlu0 %v4536
          %v4538 = vpop.xlane.xlu0 %4537
          %v4539 = vsel %vm4532, %v4278, 0.0
          %4540 = vadd.xlane.f32.xlu0 %v4539
          %v4541 = vpop.xlane.xlu0 %4540
          %v4542 = vsel %vm4532, %v4279, 0.0
          %4543 = vadd.xlane.f32.xlu0 %v4542
          %v4544 = vpop.xlane.xlu0 %4543
          %v4545 = vsel %vm4532, %v4280, 0.0
          %4546 = vadd.xlane.f32.xlu0 %v4545
          %v4547 = vpop.xlane.xlu0 %4546
          %v4548 = vsel %vm4532, %v4281, 0.0
          %4549 = vadd.xlane.f32.xlu0 %v4548
          %v4550 = vpop.xlane.xlu0 %4549
          %v4551 = vsel %vm4532, %v4282, 0.0
          %4552 = vadd.xlane.f32.xlu0 %v4551
          %v4553 = vpop.xlane.xlu0 %4552
          %v4554 = vsel %vm4532, %v4283, 0.0
          %4555 = vadd.xlane.f32.xlu0 %v4554
          %v4556 = vpop.xlane.xlu0 %4555
          %v4557 = vsel %vm4532, %v4284, 0.0
          %4558 = vadd.xlane.f32.xlu0 %v4557
          %v4559 = vpop.xlane.xlu0 %4558
          %v4560 = vsel %vm4532, %v4285, 0.0
          %4561 = vadd.xlane.f32.xlu0 %v4560
          %v4562 = vpop.xlane.xlu0 %4561
          %v4563 = vsel %vm4532, %v4286, 0.0
          %4564 = vadd.xlane.f32.xlu0 %v4563
          %v4565 = vpop.xlane.xlu0 %4564
          %v4566 = vsel %vm4532, %v4287, 0.0
          %4567 = vadd.xlane.f32.xlu0 %v4566
          %v4568 = vpop.xlane.xlu0 %4567
          %v4569 = vsel %vm4532, %v4288, 0.0
          %4570 = vadd.xlane.f32.xlu0 %v4569
          %v4571 = vpop.xlane.xlu0 %4570
          %v4572 = vsel %vm4532, %v4289, 0.0
          %4573 = vadd.xlane.f32.xlu0 %v4572
          %v4574 = vpop.xlane.xlu0 %4573
          %v4575 = vsel %vm4532, %v4290, 0.0
          %4576 = vadd.xlane.f32.xlu0 %v4575
          %v4577 = vpop.xlane.xlu0 %4576
          %v4578 = vsel %vm4532, %v4291, 0.0
          %4579 = vadd.xlane.f32.xlu0 %v4578
          %v4580 = vpop.xlane.xlu0 %4579
          %v4581 = vsel %vm4532, %v4292, 0.0
          %4582 = vadd.xlane.f32.xlu0 %v4581
          %v4583 = vpop.xlane.xlu0 %4582
          %v4584 = vsel %vm4532, %v4293, 0.0
          %4585 = vadd.xlane.f32.xlu0 %v4584
          %v4586 = vpop.xlane.xlu0 %4585
          %v4587 = vsel %vm4532, %v4294, 0.0
          %4588 = vadd.xlane.f32.xlu0 %v4587
          %v4589 = vpop.xlane.xlu0 %4588
          %v4590 = vsel %vm4532, %v4295, 0.0
          %4591 = vadd.xlane.f32.xlu0 %v4590
          %v4592 = vpop.xlane.xlu0 %4591
          %v4593 = vsel %vm4532, %v4296, 0.0
          %4594 = vadd.xlane.f32.xlu0 %v4593
          %v4595 = vpop.xlane.xlu0 %4594
          %v4596 = vsel %vm4532, %v4297, 0.0
          %4597 = vadd.xlane.f32.xlu0 %v4596
          %v4598 = vpop.xlane.xlu0 %4597
          %v4599 = vsel %vm4532, %v4298, 0.0
          %4600 = vadd.xlane.f32.xlu0 %v4599
          %v4601 = vpop.xlane.xlu0 %4600
          %v4602 = vsel %vm4532, %v4299, 0.0
          %4603 = vadd.xlane.f32.xlu0 %v4602
          %v4604 = vpop.xlane.xlu0 %4603
          %v4605 = vsel %vm4532, %v4300, 0.0
          %4606 = vadd.xlane.f32.xlu0 %v4605
          %v4607 = vpop.xlane.xlu0 %4606
          %v4608 = vsel %vm4532, %v4301, 0.0
          %4609 = vadd.xlane.f32.xlu0 %v4608
          %v4610 = vpop.xlane.xlu0 %4609
          %v4611 = vsel %vm4532, %v4302, 0.0
          %4612 = vadd.xlane.f32.xlu0 %v4611
          %v4613 = vpop.xlane.xlu0 %4612
          %v4614 = vsel %vm4532, %v4303, 0.0
          %4615 = vadd.xlane.f32.xlu0 %v4614
          %v4616 = vpop.xlane.xlu0 %4615
          %v4617 = vsel %vm4532, %v4304, 0.0
          %4618 = vadd.xlane.f32.xlu0 %v4617
          %v4619 = vpop.xlane.xlu0 %4618
          %v4620 = vsel %vm4532, %v4305, 0.0
          %4621 = vadd.xlane.f32.xlu0 %v4620
          %v4622 = vpop.xlane.xlu0 %4621
          %v4623 = vsel %vm4532, %v4306, 0.0
          %4624 = vadd.xlane.f32.xlu0 %v4623
          %v4625 = vpop.xlane.xlu0 %4624
          %v4626 = vsel %vm4532, %v4307, 0.0
          %4627 = vadd.xlane.f32.xlu0 %v4626
          %v4628 = vpop.xlane.xlu0 %4627
          %v4629 = vsel %vm4532, %v4308, 0.0
          %4630 = vadd.xlane.f32.xlu0 %v4629
          %v4631 = vpop.xlane.xlu0 %4630
          %v4632 = vsel %vm4532, %v4309, 0.0
          %4633 = vadd.xlane.f32.xlu0 %v4632
          %v4634 = vpop.xlane.xlu0 %4633
          %v4635 = vsel %vm4532, %v4310, 0.0
          %4636 = vadd.xlane.f32.xlu0 %v4635
          %v4637 = vpop.xlane.xlu0 %4636
          %v4638 = vsel %vm4532, %v4311, 0.0
          %4639 = vadd.xlane.f32.xlu0 %v4638
          %v4640 = vpop.xlane.xlu0 %4639
          %v4641 = vsel %vm4532, %v4312, 0.0
          %4642 = vadd.xlane.f32.xlu0 %v4641
          %v4643 = vpop.xlane.xlu0 %4642
          %v4644 = vsel %vm4532, %v4313, 0.0
          %4645 = vadd.xlane.f32.xlu0 %v4644
          %v4646 = vpop.xlane.xlu0 %4645
          %v4647 = vsel %vm4532, %v4314, 0.0
          %4648 = vadd.xlane.f32.xlu0 %v4647
          %v4649 = vpop.xlane.xlu0 %4648
          %v4650 = vsel %vm4532, %v4315, 0.0
          %4651 = vadd.xlane.f32.xlu0 %v4650
          %v4652 = vpop.xlane.xlu0 %4651
          %v4653 = vsel %vm4532, %v4316, 0.0
          %4654 = vadd.xlane.f32.xlu0 %v4653
          %v4655 = vpop.xlane.xlu0 %4654
          %v4656 = vsel %vm4532, %v4317, 0.0
          %4657 = vadd.xlane.f32.xlu0 %v4656
          %v4658 = vpop.xlane.xlu0 %4657
          %v4659 = vsel %vm4532, %v4318, 0.0
          %4660 = vadd.xlane.f32.xlu0 %v4659
          %v4661 = vpop.xlane.xlu0 %4660
          %v4662 = vsel %vm4532, %v4319, 0.0
          %4663 = vadd.xlane.f32.xlu0 %v4662
          %v4664 = vpop.xlane.xlu0 %4663
          %v4665 = vsel %vm4532, %v4320, 0.0
          %4666 = vadd.xlane.f32.xlu0 %v4665
          %v4667 = vpop.xlane.xlu0 %4666
          %v4668 = vsel %vm4532, %v4321, 0.0
          %4669 = vadd.xlane.f32.xlu0 %v4668
          %v4670 = vpop.xlane.xlu0 %4669
          %v4671 = vsel %vm4532, %v4322, 0.0
          %4672 = vadd.xlane.f32.xlu0 %v4671
          %v4673 = vpop.xlane.xlu0 %4672
          %v4674 = vsel %vm4532, %v4323, 0.0
          %4675 = vadd.xlane.f32.xlu0 %v4674
          %v4676 = vpop.xlane.xlu0 %4675
          %v4677 = vsel %vm4532, %v4324, 0.0
          %4678 = vadd.xlane.f32.xlu0 %v4677
          %v4679 = vpop.xlane.xlu0 %4678
          %v4680 = vsel %vm4532, %v4325, 0.0
          %4681 = vadd.xlane.f32.xlu0 %v4680
          %v4682 = vpop.xlane.xlu0 %4681
          %v4683 = vsel %vm4532, %v4326, 0.0
          %4684 = vadd.xlane.f32.xlu0 %v4683
          %v4685 = vpop.xlane.xlu0 %4684
          %v4686 = vsel %vm4532, %v4327, 0.0
          %4687 = vadd.xlane.f32.xlu0 %v4686
          %v4688 = vpop.xlane.xlu0 %4687
          %v4689 = vsel %vm4532, %v4328, 0.0
          %4690 = vadd.xlane.f32.xlu0 %v4689
          %v4691 = vpop.xlane.xlu0 %4690
          %v4692 = vsel %vm4532, %v4329, 0.0
          %4693 = vadd.xlane.f32.xlu0 %v4692
          %v4694 = vpop.xlane.xlu0 %4693
          %v4695 = vsel %vm4532, %v4330, 0.0
          %4696 = vadd.xlane.f32.xlu0 %v4695
          %v4697 = vpop.xlane.xlu0 %4696
          %v4698 = vsel %vm4532, %v4331, 0.0
          %4699 = vadd.xlane.f32.xlu0 %v4698
          %v4700 = vpop.xlane.xlu0 %4699
          %v4701 = vsel %vm4532, %v4332, 0.0
          %4702 = vadd.xlane.f32.xlu0 %v4701
          %v4703 = vpop.xlane.xlu0 %4702
          %v4704 = vsel %vm4532, %v4333, 0.0
          %4705 = vadd.xlane.f32.xlu0 %v4704
          %v4706 = vpop.xlane.xlu0 %4705
          %v4707 = vsel %vm4532, %v4334, 0.0
          %4708 = vadd.xlane.f32.xlu0 %v4707
          %v4709 = vpop.xlane.xlu0 %4708
          %v4710 = vsel %vm4532, %v4335, 0.0
          %4711 = vadd.xlane.f32.xlu0 %v4710
          %v4712 = vpop.xlane.xlu0 %4711
          %v4713 = vsel %vm4532, %v4336, 0.0
          %4714 = vadd.xlane.f32.xlu0 %v4713
          %v4715 = vpop.xlane.xlu0 %4714
          %v4716 = vsel %vm4532, %v4337, 0.0
          %4717 = vadd.xlane.f32.xlu0 %v4716
          %v4718 = vpop.xlane.xlu0 %4717
          %v4719 = vsel %vm4532, %v4338, 0.0
          %4720 = vadd.xlane.f32.xlu0 %v4719
          %v4721 = vpop.xlane.xlu0 %4720
          %v4722 = vsel %vm4532, %v4339, 0.0
          %4723 = vadd.xlane.f32.xlu0 %v4722
          %v4724 = vpop.xlane.xlu0 %4723
          %v4725 = vsel %vm4532, %v4340, 0.0
          %4726 = vadd.xlane.f32.xlu0 %v4725
          %v4727 = vpop.xlane.xlu0 %4726
          %v4728 = vsel %vm4532, %v4341, 0.0
          %4729 = vadd.xlane.f32.xlu0 %v4728
          %v4730 = vpop.xlane.xlu0 %4729
          %v4731 = vsel %vm4532, %v4342, 0.0
          %4732 = vadd.xlane.f32.xlu0 %v4731
          %v4733 = vpop.xlane.xlu0 %4732
          %v4734 = vsel %vm4532, %v4343, 0.0
          %4735 = vadd.xlane.f32.xlu0 %v4734
          %v4736 = vpop.xlane.xlu0 %4735
          %v4737 = vsel %vm4532, %v4344, 0.0
          %4738 = vadd.xlane.f32.xlu0 %v4737
          %v4739 = vpop.xlane.xlu0 %4738
          %v4740 = vsel %vm4532, %v4345, 0.0
          %4741 = vadd.xlane.f32.xlu0 %v4740
          %v4742 = vpop.xlane.xlu0 %4741
          %v4743 = vsel %vm4532, %v4346, 0.0
          %4744 = vadd.xlane.f32.xlu0 %v4743
          %v4745 = vpop.xlane.xlu0 %4744
          %v4746 = vsel %vm4532, %v4347, 0.0
          %4747 = vadd.xlane.f32.xlu0 %v4746
          %v4748 = vpop.xlane.xlu0 %4747
          %v4749 = vsel %vm4532, %v4348, 0.0
          %4750 = vadd.xlane.f32.xlu0 %v4749
          %v4751 = vpop.xlane.xlu0 %4750
          %v4752 = vsel %vm4532, %v4349, 0.0
          %4753 = vadd.xlane.f32.xlu0 %v4752
          %v4754 = vpop.xlane.xlu0 %4753
          %v4755 = vsel %vm4532, %v4350, 0.0
          %4756 = vadd.xlane.f32.xlu0 %v4755
          %v4757 = vpop.xlane.xlu0 %4756
          %v4758 = vsel %vm4532, %v4351, 0.0
          %4759 = vadd.xlane.f32.xlu0 %v4758
          %v4760 = vpop.xlane.xlu0 %4759
          %v4761 = vsel %vm4532, %v4352, 0.0
          %4762 = vadd.xlane.f32.xlu0 %v4761
          %v4763 = vpop.xlane.xlu0 %4762
          %v4764 = vsel %vm4532, %v4353, 0.0
          %4765 = vadd.xlane.f32.xlu0 %v4764
          %v4766 = vpop.xlane.xlu0 %4765
          %v4767 = vsel %vm4532, %v4354, 0.0
          %4768 = vadd.xlane.f32.xlu0 %v4767
          %v4769 = vpop.xlane.xlu0 %4768
          %v4770 = vsel %vm4532, %v4355, 0.0
          %4771 = vadd.xlane.f32.xlu0 %v4770
          %v4772 = vpop.xlane.xlu0 %4771
          %v4773 = vsel %vm4532, %v4356, 0.0
          %4774 = vadd.xlane.f32.xlu0 %v4773
          %v4775 = vpop.xlane.xlu0 %4774
          %v4776 = vsel %vm4532, %v4357, 0.0
          %4777 = vadd.xlane.f32.xlu0 %v4776
          %v4778 = vpop.xlane.xlu0 %4777
          %v4779 = vsel %vm4532, %v4358, 0.0
          %4780 = vadd.xlane.f32.xlu0 %v4779
          %v4781 = vpop.xlane.xlu0 %4780
          %v4782 = vsel %vm4532, %v4359, 0.0
          %4783 = vadd.xlane.f32.xlu0 %v4782
          %v4784 = vpop.xlane.xlu0 %4783
          %v4785 = vsel %vm4532, %v4360, 0.0
          %4786 = vadd.xlane.f32.xlu0 %v4785
          %v4787 = vpop.xlane.xlu0 %4786
          %v4788 = vsel %vm4532, %v4361, 0.0
          %4789 = vadd.xlane.f32.xlu0 %v4788
          %v4790 = vpop.xlane.xlu0 %4789
          %v4791 = vsel %vm4532, %v4362, 0.0
          %4792 = vadd.xlane.f32.xlu0 %v4791
          %v4793 = vpop.xlane.xlu0 %4792
          %v4794 = vsel %vm4532, %v4363, 0.0
          %4795 = vadd.xlane.f32.xlu0 %v4794
          %v4796 = vpop.xlane.xlu0 %4795
          %v4797 = vsel %vm4532, %v4364, 0.0
          %4798 = vadd.xlane.f32.xlu0 %v4797
          %v4799 = vpop.xlane.xlu0 %4798
          %v4800 = vsel %vm4532, %v4365, 0.0
          %4801 = vadd.xlane.f32.xlu0 %v4800
          %v4802 = vpop.xlane.xlu0 %4801
          %v4803 = vsel %vm4532, %v4366, 0.0
          %4804 = vadd.xlane.f32.xlu0 %v4803
          %v4805 = vpop.xlane.xlu0 %4804
          %v4806 = vsel %vm4532, %v4367, 0.0
          %4807 = vadd.xlane.f32.xlu0 %v4806
          %v4808 = vpop.xlane.xlu0 %4807
          %v4809 = vsel %vm4532, %v4368, 0.0
          %4810 = vadd.xlane.f32.xlu0 %v4809
          %v4811 = vpop.xlane.xlu0 %4810
          %v4812 = vsel %vm4532, %v4369, 0.0
          %4813 = vadd.xlane.f32.xlu0 %v4812
          %v4814 = vpop.xlane.xlu0 %4813
          %v4815 = vsel %vm4532, %v4370, 0.0
          %4816 = vadd.xlane.f32.xlu0 %v4815
          %v4817 = vpop.xlane.xlu0 %4816
          %v4818 = vsel %vm4532, %v4371, 0.0
          %4819 = vadd.xlane.f32.xlu0 %v4818
          %v4820 = vpop.xlane.xlu0 %4819
          %v4821 = vsel %vm4532, %v4372, 0.0
          %4822 = vadd.xlane.f32.xlu0 %v4821
          %v4823 = vpop.xlane.xlu0 %4822
          %v4824 = vsel %vm4532, %v4373, 0.0
          %4825 = vadd.xlane.f32.xlu0 %v4824
          %v4826 = vpop.xlane.xlu0 %4825
          %v4827 = vsel %vm4532, %v4374, 0.0
          %4828 = vadd.xlane.f32.xlu0 %v4827
          %v4829 = vpop.xlane.xlu0 %4828
          %v4830 = vsel %vm4532, %v4375, 0.0
          %4831 = vadd.xlane.f32.xlu0 %v4830
          %v4832 = vpop.xlane.xlu0 %4831
          %v4833 = vsel %vm4532, %v4376, 0.0
          %4834 = vadd.xlane.f32.xlu0 %v4833
          %v4835 = vpop.xlane.xlu0 %4834
          %v4836 = vsel %vm4532, %v4377, 0.0
          %4837 = vadd.xlane.f32.xlu0 %v4836
          %v4838 = vpop.xlane.xlu0 %4837
          %v4839 = vsel %vm4532, %v4378, 0.0
          %4840 = vadd.xlane.f32.xlu0 %v4839
          %v4841 = vpop.xlane.xlu0 %4840
          %v4842 = vsel %vm4532, %v4379, 0.0
          %4843 = vadd.xlane.f32.xlu0 %v4842
          %v4844 = vpop.xlane.xlu0 %4843
          %v4845 = vsel %vm4532, %v4380, 0.0
          %4846 = vadd.xlane.f32.xlu0 %v4845
          %v4847 = vpop.xlane.xlu0 %4846
          %v4848 = vsel %vm4532, %v4381, 0.0
          %4849 = vadd.xlane.f32.xlu0 %v4848
          %v4850 = vpop.xlane.xlu0 %4849
          %v4851 = vsel %vm4532, %v4382, 0.0
          %4852 = vadd.xlane.f32.xlu0 %v4851
          %v4853 = vpop.xlane.xlu0 %4852
          %v4854 = vsel %vm4532, %v4383, 0.0
          %4855 = vadd.xlane.f32.xlu0 %v4854
          %v4856 = vpop.xlane.xlu0 %4855
          %v4857 = vsel %vm4532, %v4384, 0.0
          %4858 = vadd.xlane.f32.xlu0 %v4857
          %v4859 = vpop.xlane.xlu0 %4858
          %v4860 = vsel %vm4532, %v4385, 0.0
          %4861 = vadd.xlane.f32.xlu0 %v4860
          %v4862 = vpop.xlane.xlu0 %4861
          %v4863 = vsel %vm4532, %v4386, 0.0
          %4864 = vadd.xlane.f32.xlu0 %v4863
          %v4865 = vpop.xlane.xlu0 %4864
          %v4866 = vsel %vm4532, %v4387, 0.0
          %4867 = vadd.xlane.f32.xlu0 %v4866
          %v4868 = vpop.xlane.xlu0 %4867
          %v4869 = vsel %vm4532, %v4388, 0.0
          %4870 = vadd.xlane.f32.xlu0 %v4869
          %v4871 = vpop.xlane.xlu0 %4870
          %v4872 = vsel %vm4532, %v4389, 0.0
          %4873 = vadd.xlane.f32.xlu0 %v4872
          %v4874 = vpop.xlane.xlu0 %4873
          %v4875 = vsel %vm4532, %v4390, 0.0
          %4876 = vadd.xlane.f32.xlu0 %v4875
          %v4877 = vpop.xlane.xlu0 %4876
          %v4878 = vsel %vm4532, %v4391, 0.0
          %4879 = vadd.xlane.f32.xlu0 %v4878
          %v4880 = vpop.xlane.xlu0 %4879
          %v4881 = vsel %vm4532, %v4392, 0.0
          %4882 = vadd.xlane.f32.xlu0 %v4881
          %v4883 = vpop.xlane.xlu0 %4882
          %v4884 = vsel %vm4532, %v4393, 0.0
          %4885 = vadd.xlane.f32.xlu0 %v4884
          %v4886 = vpop.xlane.xlu0 %4885
          %v4887 = vsel %vm4532, %v4394, 0.0
          %4888 = vadd.xlane.f32.xlu0 %v4887
          %v4889 = vpop.xlane.xlu0 %4888
          %v4890 = vsel %vm4532, %v4395, 0.0
          %4891 = vadd.xlane.f32.xlu0 %v4890
          %v4892 = vpop.xlane.xlu0 %4891
          %v4893 = vsel %vm4532, %v4396, 0.0
          %4894 = vadd.xlane.f32.xlu0 %v4893
          %v4895 = vpop.xlane.xlu0 %4894
          %v4896 = vsel %vm4532, %v4397, 0.0
          %4897 = vadd.xlane.f32.xlu0 %v4896
          %v4898 = vpop.xlane.xlu0 %4897
          %v4899 = vsel %vm4532, %v4398, 0.0
          %4900 = vadd.xlane.f32.xlu0 %v4899
          %v4901 = vpop.xlane.xlu0 %4900
          %v4902 = vsel %vm4532, %v4399, 0.0
          %4903 = vadd.xlane.f32.xlu0 %v4902
          %v4904 = vpop.xlane.xlu0 %4903
          %v4905 = vsel %vm4532, %v4400, 0.0
          %4906 = vadd.xlane.f32.xlu0 %v4905
          %v4907 = vpop.xlane.xlu0 %4906
          %v4908 = vsel %vm4532, %v4401, 0.0
          %4909 = vadd.xlane.f32.xlu0 %v4908
          %v4910 = vpop.xlane.xlu0 %4909
          %v4911 = vsel %vm4532, %v4402, 0.0
          %4912 = vadd.xlane.f32.xlu0 %v4911
          %v4913 = vpop.xlane.xlu0 %4912
          %v4914 = vsel %vm4532, %v4403, 0.0
          %4915 = vadd.xlane.f32.xlu0 %v4914
          %v4916 = vpop.xlane.xlu0 %4915
          %v4917 = vsel %vm4532, %v4404, 0.0
          %4918 = vadd.xlane.f32.xlu0 %v4917
          %v4919 = vpop.xlane.xlu0 %4918
          %v4920 = vsel %vm4532, %v4405, 0.0
          %4921 = vadd.xlane.f32.xlu0 %v4920
          %v4922 = vpop.xlane.xlu0 %4921
          %v4923 = vsel %vm4532, %v4406, 0.0
          %4924 = vadd.xlane.f32.xlu0 %v4923
          %v4925 = vpop.xlane.xlu0 %4924
          %v4926 = vsel %vm4532, %v4407, 0.0
          %4927 = vadd.xlane.f32.xlu0 %v4926
          %v4928 = vpop.xlane.xlu0 %4927
          %v4929 = vsel %vm4532, %v4408, 0.0
          %4930 = vadd.xlane.f32.xlu0 %v4929
          %v4931 = vpop.xlane.xlu0 %4930
          %v4932 = vsel %vm4532, %v4409, 0.0
          %4933 = vadd.xlane.f32.xlu0 %v4932
          %v4934 = vpop.xlane.xlu0 %4933
          %v4935 = vsel %vm4532, %v4410, 0.0
          %4936 = vadd.xlane.f32.xlu0 %v4935
          %v4937 = vpop.xlane.xlu0 %4936
          %v4938 = vsel %vm4532, %v4411, 0.0
          %4939 = vadd.xlane.f32.xlu0 %v4938
          %v4940 = vpop.xlane.xlu0 %4939
          %v4941 = vsel %vm4532, %v4412, 0.0
          %4942 = vadd.xlane.f32.xlu0 %v4941
          %v4943 = vpop.xlane.xlu0 %4942
          %v4944 = vsel %vm4532, %v4413, 0.0
          %4945 = vadd.xlane.f32.xlu0 %v4944
          %v4946 = vpop.xlane.xlu0 %4945
          %v4947 = vsel %vm4532, %v4414, 0.0
          %4948 = vadd.xlane.f32.xlu0 %v4947
          %v4949 = vpop.xlane.xlu0 %4948
          %v4950 = vsel %vm4532, %v4415, 0.0
          %4951 = vadd.xlane.f32.xlu0 %v4950
          %v4952 = vpop.xlane.xlu0 %4951
          %v4953 = vsel %vm4532, %v4416, 0.0
          %4954 = vadd.xlane.f32.xlu0 %v4953
          %v4955 = vpop.xlane.xlu0 %4954
          %v4956 = vsel %vm4532, %v4417, 0.0
          %4957 = vadd.xlane.f32.xlu0 %v4956
          %v4958 = vpop.xlane.xlu0 %4957
          %v4959 = vsel %vm4532, %v4418, 0.0
          %4960 = vadd.xlane.f32.xlu0 %v4959
          %v4961 = vpop.xlane.xlu0 %4960
          %v4962 = vsel %vm4532, %v4419, 0.0
          %4963 = vadd.xlane.f32.xlu0 %v4962
          %v4964 = vpop.xlane.xlu0 %4963
          %v4965 = vsel %vm4532, %v4420, 0.0
          %4966 = vadd.xlane.f32.xlu0 %v4965
          %v4967 = vpop.xlane.xlu0 %4966
          %v4968 = vsel %vm4532, %v4421, 0.0
          %4969 = vadd.xlane.f32.xlu0 %v4968
          %v4970 = vpop.xlane.xlu0 %4969
          %v4971 = vsel %vm4532, %v4422, 0.0
          %4972 = vadd.xlane.f32.xlu0 %v4971
          %v4973 = vpop.xlane.xlu0 %4972
          %v4974 = vsel %vm4532, %v4423, 0.0
          %4975 = vadd.xlane.f32.xlu0 %v4974
          %v4976 = vpop.xlane.xlu0 %4975
          %v4977 = vsel %vm4532, %v4424, 0.0
          %4978 = vadd.xlane.f32.xlu0 %v4977
          %v4979 = vpop.xlane.xlu0 %4978
          %v4980 = vsel %vm4532, %v4425, 0.0
          %4981 = vadd.xlane.f32.xlu0 %v4980
          %v4982 = vpop.xlane.xlu0 %4981
          %v4983 = vsel %vm4532, %v4426, 0.0
          %4984 = vadd.xlane.f32.xlu0 %v4983
          %v4985 = vpop.xlane.xlu0 %4984
          %v4986 = vsel %vm4532, %v4427, 0.0
          %4987 = vadd.xlane.f32.xlu0 %v4986
          %v4988 = vpop.xlane.xlu0 %4987
          %v4989 = vsel %vm4532, %v4428, 0.0
          %4990 = vadd.xlane.f32.xlu0 %v4989
          %v4991 = vpop.xlane.xlu0 %4990
          %v4992 = vsel %vm4532, %v4429, 0.0
          %4993 = vadd.xlane.f32.xlu0 %v4992
          %v4994 = vpop.xlane.xlu0 %4993
          %v4995 = vsel %vm4532, %v4430, 0.0
          %4996 = vadd.xlane.f32.xlu0 %v4995
          %v4997 = vpop.xlane.xlu0 %4996
          %v4998 = vsel %vm4532, %v4431, 0.0
          %4999 = vadd.xlane.f32.xlu0 %v4998
          %v5000 = vpop.xlane.xlu0 %4999
          %v5001 = vsel %vm4532, %v4432, 0.0
          %5002 = vadd.xlane.f32.xlu0 %v5001
          %v5003 = vpop.xlane.xlu0 %5002
          %v5004 = vsel %vm4532, %v4433, 0.0
          %5005 = vadd.xlane.f32.xlu0 %v5004
          %v5006 = vpop.xlane.xlu0 %5005
          %v5007 = vsel %vm4532, %v4434, 0.0
          %5008 = vadd.xlane.f32.xlu0 %v5007
          %v5009 = vpop.xlane.xlu0 %5008
          %v5010 = vsel %vm4532, %v4435, 0.0
          %5011 = vadd.xlane.f32.xlu0 %v5010
          %v5012 = vpop.xlane.xlu0 %5011
          %v5013 = vsel %vm4532, %v4436, 0.0
          %5014 = vadd.xlane.f32.xlu0 %v5013
          %v5015 = vpop.xlane.xlu0 %5014
          %v5016 = vsel %vm4532, %v4437, 0.0
          %5017 = vadd.xlane.f32.xlu0 %v5016
          %v5018 = vpop.xlane.xlu0 %5017
          %v5019 = vsel %vm4532, %v4438, 0.0
          %5020 = vadd.xlane.f32.xlu0 %v5019
          %v5021 = vpop.xlane.xlu0 %5020
          %v5022 = vsel %vm4532, %v4439, 0.0
          %5023 = vadd.xlane.f32.xlu0 %v5022
          %v5024 = vpop.xlane.xlu0 %5023
          %v5025 = vsel %vm4532, %v4440, 0.0
          %5026 = vadd.xlane.f32.xlu0 %v5025
          %v5027 = vpop.xlane.xlu0 %5026
          %v5028 = vsel %vm4532, %v4441, 0.0
          %5029 = vadd.xlane.f32.xlu0 %v5028
          %v5030 = vpop.xlane.xlu0 %5029
          %v5031 = vsel %vm4532, %v4442, 0.0
          %5032 = vadd.xlane.f32.xlu0 %v5031
          %v5033 = vpop.xlane.xlu0 %5032
          %v5034 = vsel %vm4532, %v4443, 0.0
          %5035 = vadd.xlane.f32.xlu0 %v5034
          %v5036 = vpop.xlane.xlu0 %5035
          %v5037 = vsel %vm4532, %v4444, 0.0
          %5038 = vadd.xlane.f32.xlu0 %v5037
          %v5039 = vpop.xlane.xlu0 %5038
          %v5040 = vsel %vm4532, %v4445, 0.0
          %5041 = vadd.xlane.f32.xlu0 %v5040
          %v5042 = vpop.xlane.xlu0 %5041
          %v5043 = vsel %vm4532, %v4446, 0.0
          %5044 = vadd.xlane.f32.xlu0 %v5043
          %v5045 = vpop.xlane.xlu0 %5044
          %v5046 = vsel %vm4532, %v4447, 0.0
          %5047 = vadd.xlane.f32.xlu0 %v5046
          %v5048 = vpop.xlane.xlu0 %5047
          %v5049 = vsel %vm4532, %v4448, 0.0
          %5050 = vadd.xlane.f32.xlu0 %v5049
          %v5051 = vpop.xlane.xlu0 %5050
          %v5052 = vsel %vm4532, %v4449, 0.0
          %5053 = vadd.xlane.f32.xlu0 %v5052
          %v5054 = vpop.xlane.xlu0 %5053
          %v5055 = vsel %vm4532, %v4450, 0.0
          %5056 = vadd.xlane.f32.xlu0 %v5055
          %v5057 = vpop.xlane.xlu0 %5056
          %v5058 = vsel %vm4532, %v4451, 0.0
          %5059 = vadd.xlane.f32.xlu0 %v5058
          %v5060 = vpop.xlane.xlu0 %5059
          %v5061 = vsel %vm4532, %v4452, 0.0
          %5062 = vadd.xlane.f32.xlu0 %v5061
          %v5063 = vpop.xlane.xlu0 %5062
          %v5064 = vsel %vm4532, %v4453, 0.0
          %5065 = vadd.xlane.f32.xlu0 %v5064
          %v5066 = vpop.xlane.xlu0 %5065
          %v5067 = vsel %vm4532, %v4454, 0.0
          %5068 = vadd.xlane.f32.xlu0 %v5067
          %v5069 = vpop.xlane.xlu0 %5068
          %v5070 = vsel %vm4532, %v4455, 0.0
          %5071 = vadd.xlane.f32.xlu0 %v5070
          %v5072 = vpop.xlane.xlu0 %5071
          %v5073 = vsel %vm4532, %v4456, 0.0
          %5074 = vadd.xlane.f32.xlu0 %v5073
          %v5075 = vpop.xlane.xlu0 %5074
          %v5076 = vsel %vm4532, %v4457, 0.0
          %5077 = vadd.xlane.f32.xlu0 %v5076
          %v5078 = vpop.xlane.xlu0 %5077
          %v5079 = vsel %vm4532, %v4458, 0.0
          %5080 = vadd.xlane.f32.xlu0 %v5079
          %v5081 = vpop.xlane.xlu0 %5080
          %v5082 = vsel %vm4532, %v4459, 0.0
          %5083 = vadd.xlane.f32.xlu0 %v5082
          %v5084 = vpop.xlane.xlu0 %5083
          %v5085 = vsel %vm4532, %v4460, 0.0
          %5086 = vadd.xlane.f32.xlu0 %v5085
          %v5087 = vpop.xlane.xlu0 %5086
          %v5088 = vsel %vm4532, %v4461, 0.0
          %5089 = vadd.xlane.f32.xlu0 %v5088
          %v5090 = vpop.xlane.xlu0 %5089
          %v5091 = vsel %vm4532, %v4462, 0.0
          %5092 = vadd.xlane.f32.xlu0 %v5091
          %v5093 = vpop.xlane.xlu0 %5092
          %v5094 = vsel %vm4532, %v4463, 0.0
          %5095 = vadd.xlane.f32.xlu0 %v5094
          %v5096 = vpop.xlane.xlu0 %5095
          %v5097 = vsel %vm4532, %v4464, 0.0
          %5098 = vadd.xlane.f32.xlu0 %v5097
          %v5099 = vpop.xlane.xlu0 %5098
          %v5100 = vsel %vm4532, %v4465, 0.0
          %5101 = vadd.xlane.f32.xlu0 %v5100
          %v5102 = vpop.xlane.xlu0 %5101
          %v5103 = vsel %vm4532, %v4466, 0.0
          %5104 = vadd.xlane.f32.xlu0 %v5103
          %v5105 = vpop.xlane.xlu0 %5104
          %v5106 = vsel %vm4532, %v4467, 0.0
          %5107 = vadd.xlane.f32.xlu0 %v5106
          %v5108 = vpop.xlane.xlu0 %5107
          %v5109 = vsel %vm4532, %v4468, 0.0
          %5110 = vadd.xlane.f32.xlu0 %v5109
          %v5111 = vpop.xlane.xlu0 %5110
          %v5112 = vsel %vm4532, %v4469, 0.0
          %5113 = vadd.xlane.f32.xlu0 %v5112
          %v5114 = vpop.xlane.xlu0 %5113
          %v5115 = vsel %vm4532, %v4470, 0.0
          %5116 = vadd.xlane.f32.xlu0 %v5115
          %v5117 = vpop.xlane.xlu0 %5116
          %v5118 = vsel %vm4532, %v4471, 0.0
          %5119 = vadd.xlane.f32.xlu0 %v5118
          %v5120 = vpop.xlane.xlu0 %5119
          %v5121 = vsel %vm4532, %v4472, 0.0
          %5122 = vadd.xlane.f32.xlu0 %v5121
          %v5123 = vpop.xlane.xlu0 %5122
          %v5124 = vsel %vm4532, %v4473, 0.0
          %5125 = vadd.xlane.f32.xlu0 %v5124
          %v5126 = vpop.xlane.xlu0 %5125
          %v5127 = vsel %vm4532, %v4474, 0.0
          %5128 = vadd.xlane.f32.xlu0 %v5127
          %v5129 = vpop.xlane.xlu0 %5128
          %v5130 = vsel %vm4532, %v4475, 0.0
          %5131 = vadd.xlane.f32.xlu0 %v5130
          %v5132 = vpop.xlane.xlu0 %5131
          %v5133 = vsel %vm4532, %v4476, 0.0
          %5134 = vadd.xlane.f32.xlu0 %v5133
          %v5135 = vpop.xlane.xlu0 %5134
          %v5136 = vsel %vm4532, %v4477, 0.0
          %5137 = vadd.xlane.f32.xlu0 %v5136
          %v5138 = vpop.xlane.xlu0 %5137
          %v5139 = vsel %vm4532, %v4478, 0.0
          %5140 = vadd.xlane.f32.xlu0 %v5139
          %v5141 = vpop.xlane.xlu0 %5140
          %v5142 = vsel %vm4532, %v4479, 0.0
          %5143 = vadd.xlane.f32.xlu0 %v5142
          %v5144 = vpop.xlane.xlu0 %5143
          %v5145 = vsel %vm4532, %v4480, 0.0
          %5146 = vadd.xlane.f32.xlu0 %v5145
          %v5147 = vpop.xlane.xlu0 %5146
          %v5148 = vsel %vm4532, %v4481, 0.0
          %5149 = vadd.xlane.f32.xlu0 %v5148
          %v5150 = vpop.xlane.xlu0 %5149
          %v5151 = vsel %vm4532, %v4482, 0.0
          %5152 = vadd.xlane.f32.xlu0 %v5151
          %v5153 = vpop.xlane.xlu0 %5152
          %v5154 = vsel %vm4532, %v4483, 0.0
          %5155 = vadd.xlane.f32.xlu0 %v5154
          %v5156 = vpop.xlane.xlu0 %5155
          %v5157 = vsel %vm4532, %v4484, 0.0
          %5158 = vadd.xlane.f32.xlu0 %v5157
          %v5159 = vpop.xlane.xlu0 %5158
          %v5160 = vsel %vm4532, %v4485, 0.0
          %5161 = vadd.xlane.f32.xlu0 %v5160
          %v5162 = vpop.xlane.xlu0 %5161
          %v5163 = vsel %vm4532, %v4486, 0.0
          %5164 = vadd.xlane.f32.xlu0 %v5163
          %v5165 = vpop.xlane.xlu0 %5164
          %v5166 = vsel %vm4532, %v4487, 0.0
          %5167 = vadd.xlane.f32.xlu0 %v5166
          %v5168 = vpop.xlane.xlu0 %5167
          %v5169 = vsel %vm4532, %v4488, 0.0
          %5170 = vadd.xlane.f32.xlu0 %v5169
          %v5171 = vpop.xlane.xlu0 %5170
          %v5172 = vsel %vm4532, %v4489, 0.0
          %5173 = vadd.xlane.f32.xlu0 %v5172
          %v5174 = vpop.xlane.xlu0 %5173
          %v5175 = vsel %vm4532, %v4490, 0.0
          %5176 = vadd.xlane.f32.xlu0 %v5175
          %v5177 = vpop.xlane.xlu0 %5176
          %v5178 = vsel %vm4532, %v4491, 0.0
          %5179 = vadd.xlane.f32.xlu0 %v5178
          %v5180 = vpop.xlane.xlu0 %5179
          %v5181 = vsel %vm4532, %v4492, 0.0
          %5182 = vadd.xlane.f32.xlu0 %v5181
          %v5183 = vpop.xlane.xlu0 %5182
          %v5184 = vsel %vm4532, %v4493, 0.0
          %5185 = vadd.xlane.f32.xlu0 %v5184
          %v5186 = vpop.xlane.xlu0 %5185
          %v5187 = vsel %vm4532, %v4494, 0.0
          %5188 = vadd.xlane.f32.xlu0 %v5187
          %v5189 = vpop.xlane.xlu0 %5188
          %v5190 = vsel %vm4532, %v4495, 0.0
          %5191 = vadd.xlane.f32.xlu0 %v5190
          %v5192 = vpop.xlane.xlu0 %5191
          %v5193 = vsel %vm4532, %v4496, 0.0
          %5194 = vadd.xlane.f32.xlu0 %v5193
          %v5195 = vpop.xlane.xlu0 %5194
          %v5196 = vsel %vm4532, %v4497, 0.0
          %5197 = vadd.xlane.f32.xlu0 %v5196
          %v5198 = vpop.xlane.xlu0 %5197
          %v5199 = vsel %vm4532, %v4498, 0.0
          %5200 = vadd.xlane.f32.xlu0 %v5199
          %v5201 = vpop.xlane.xlu0 %5200
          %v5202 = vsel %vm4532, %v4499, 0.0
          %5203 = vadd.xlane.f32.xlu0 %v5202
          %v5204 = vpop.xlane.xlu0 %5203
          %v5205 = vsel %vm4532, %v4500, 0.0
          %5206 = vadd.xlane.f32.xlu0 %v5205
          %v5207 = vpop.xlane.xlu0 %5206
          %v5208 = vsel %vm4532, %v4501, 0.0
          %5209 = vadd.xlane.f32.xlu0 %v5208
          %v5210 = vpop.xlane.xlu0 %5209
          %v5211 = vsel %vm4532, %v4502, 0.0
          %5212 = vadd.xlane.f32.xlu0 %v5211
          %v5213 = vpop.xlane.xlu0 %5212
          %v5214 = vsel %vm4532, %v4503, 0.0
          %5215 = vadd.xlane.f32.xlu0 %v5214
          %v5216 = vpop.xlane.xlu0 %5215
          %v5217 = vsel %vm4532, %v4504, 0.0
          %5218 = vadd.xlane.f32.xlu0 %v5217
          %v5219 = vpop.xlane.xlu0 %5218
          %v5220 = vsel %vm4532, %v4505, 0.0
          %5221 = vadd.xlane.f32.xlu0 %v5220
          %v5222 = vpop.xlane.xlu0 %5221
          %v5223 = vsel %vm4532, %v4506, 0.0
          %5224 = vadd.xlane.f32.xlu0 %v5223
          %v5225 = vpop.xlane.xlu0 %5224
          %v5226 = vsel %vm4532, %v4507, 0.0
          %5227 = vadd.xlane.f32.xlu0 %v5226
          %v5228 = vpop.xlane.xlu0 %5227
          %v5229 = vsel %vm4532, %v4508, 0.0
          %5230 = vadd.xlane.f32.xlu0 %v5229
          %v5231 = vpop.xlane.xlu0 %5230
          %v5232 = vsel %vm4532, %v4509, 0.0
          %5233 = vadd.xlane.f32.xlu0 %v5232
          %v5234 = vpop.xlane.xlu0 %5233
          %v5235 = vsel %vm4532, %v4510, 0.0
          %5236 = vadd.xlane.f32.xlu0 %v5235
          %v5237 = vpop.xlane.xlu0 %5236
          %v5238 = vsel %vm4532, %v4511, 0.0
          %5239 = vadd.xlane.f32.xlu0 %v5238
          %v5240 = vpop.xlane.xlu0 %5239
          %v5241 = vsel %vm4532, %v4512, 0.0
          %5242 = vadd.xlane.f32.xlu0 %v5241
          %v5243 = vpop.xlane.xlu0 %5242
          %v5244 = vsel %vm4532, %v4513, 0.0
          %5245 = vadd.xlane.f32.xlu0 %v5244
          %v5246 = vpop.xlane.xlu0 %5245
          %v5247 = vsel %vm4532, %v4514, 0.0
          %5248 = vadd.xlane.f32.xlu0 %v5247
          %v5249 = vpop.xlane.xlu0 %5248
          %v5250 = vsel %vm4532, %v4515, 0.0
          %5251 = vadd.xlane.f32.xlu0 %v5250
          %v5252 = vpop.xlane.xlu0 %5251
          %v5253 = vsel %vm4532, %v4516, 0.0
          %5254 = vadd.xlane.f32.xlu0 %v5253
          %v5255 = vpop.xlane.xlu0 %5254
          %v5256 = vsel %vm4532, %v4517, 0.0
          %5257 = vadd.xlane.f32.xlu0 %v5256
          %v5258 = vpop.xlane.xlu0 %5257
          %v5259 = vsel %vm4532, %v4518, 0.0
          %5260 = vadd.xlane.f32.xlu0 %v5259
          %v5261 = vpop.xlane.xlu0 %5260
          %v5262 = vsel %vm4532, %v4519, 0.0
          %5263 = vadd.xlane.f32.xlu0 %v5262
          %v5264 = vpop.xlane.xlu0 %5263
          %v5265 = vsel %vm4532, %v4520, 0.0
          %5266 = vadd.xlane.f32.xlu0 %v5265
          %v5267 = vpop.xlane.xlu0 %5266
          %v5268 = vsel %vm4532, %v4521, 0.0
          %5269 = vadd.xlane.f32.xlu0 %v5268
          %v5270 = vpop.xlane.xlu0 %5269
          %v5271 = vsel %vm4532, %v4522, 0.0
          %5272 = vadd.xlane.f32.xlu0 %v5271
          %v5273 = vpop.xlane.xlu0 %5272
          %v5274 = vsel %vm4532, %v4523, 0.0
          %5275 = vadd.xlane.f32.xlu0 %v5274
          %v5276 = vpop.xlane.xlu0 %5275
          %v5277 = vsel %vm4532, %v4524, 0.0
          %5278 = vadd.xlane.f32.xlu0 %v5277
          %v5279 = vpop.xlane.xlu0 %5278
          %v5280 = vsel %vm4532, %v4525, 0.0
          %5281 = vadd.xlane.f32.xlu0 %v5280
          %v5282 = vpop.xlane.xlu0 %5281
          %v5283 = vsel %vm4532, %v4526, 0.0
          %5284 = vadd.xlane.f32.xlu0 %v5283
          %v5285 = vpop.xlane.xlu0 %5284
          %v5286 = vsel %vm4532, %v4527, 0.0
          %5287 = vadd.xlane.f32.xlu0 %v5286
          %v5288 = vpop.xlane.xlu0 %5287
          %v5289 = vsel %vm4532, %v4528, 0.0
          %5290 = vadd.xlane.f32.xlu0 %v5289
          %v5291 = vpop.xlane.xlu0 %5290
          %v5292 = vsel %vm4532, %v4529, 0.0
          %5293 = vadd.xlane.f32.xlu0 %v5292
          %v5294 = vpop.xlane.xlu0 %5293
          %v5295 = vsel %vm4532, %v4530, 0.0
          %5296 = vadd.xlane.f32.xlu0 %v5295
          %v5297 = vpop.xlane.xlu0 %5296
          %v5298 = vsel %vm4532, %v4531, 0.0
          %5299 = vadd.xlane.f32.xlu0 %v5298
          %v5300 = vpop.xlane.xlu0 %5299
          %vm5301 = vcmask 7168
          %5302 = vst.msk [vmem:[#allocation3] sm:$0xff] %vm5301, %v4535
          %5303 = vst.msk [vmem:[#allocation3 + $0x8] sm:$0xff] %vm5301, %v4538
          %5304 = vst.msk [vmem:[#allocation3 + $0x10] sm:$0xff] %vm5301, %v4541
          %5305 = vst.msk [vmem:[#allocation3 + $0x18] sm:$0xff] %vm5301, %v4544
          %5306 = vst.msk [vmem:[#allocation3 + $0x20] sm:$0xff] %vm5301, %v4547
          %5307 = vst.msk [vmem:[#allocation3 + $0x28] sm:$0xff] %vm5301, %v4550
          %5308 = vst.msk [vmem:[#allocation3 + $0x30] sm:$0xff] %vm5301, %v4553
          %5309 = vst.msk [vmem:[#allocation3 + $0x38] sm:$0xff] %vm5301, %v4556
          %5310 = vst.msk [vmem:[#allocation3 + $0x40] sm:$0xff] %vm5301, %v4559
          %5311 = vst.msk [vmem:[#allocation3 + $0x48] sm:$0xff] %vm5301, %v4562
          %5312 = vst.msk [vmem:[#allocation3 + $0x50] sm:$0xff] %vm5301, %v4565
          %5313 = vst.msk [vmem:[#allocation3 + $0x58] sm:$0xff] %vm5301, %v4568
          %5314 = vst.msk [vmem:[#allocation3 + $0x60] sm:$0xff] %vm5301, %v4571
          %5315 = vst.msk [vmem:[#allocation3 + $0x68] sm:$0xff] %vm5301, %v4574
          %5316 = vst.msk [vmem:[#allocation3 + $0x70] sm:$0xff] %vm5301, %v4577
          %5317 = vst.msk [vmem:[#allocation3 + $0x78] sm:$0xff] %vm5301, %v4580
          %5318 = vst.msk [vmem:[#allocation3 + $0x80] sm:$0xff] %vm5301, %v4583
          %5319 = vst.msk [vmem:[#allocation3 + $0x88] sm:$0xff] %vm5301, %v4586
          %5320 = vst.msk [vmem:[#allocation3 + $0x90] sm:$0xff] %vm5301, %v4589
          %5321 = vst.msk [vmem:[#allocation3 + $0x98] sm:$0xff] %vm5301, %v4592
          %5322 = vst.msk [vmem:[#allocation3 + $0xa0] sm:$0xff] %vm5301, %v4595
          %5323 = vst.msk [vmem:[#allocation3 + $0xa8] sm:$0xff] %vm5301, %v4598
          %5324 = vst.msk [vmem:[#allocation3 + $0xb0] sm:$0xff] %vm5301, %v4601
          %5325 = vst.msk [vmem:[#allocation3 + $0xb8] sm:$0xff] %vm5301, %v4604
          %5326 = vst.msk [vmem:[#allocation3 + $0xc0] sm:$0xff] %vm5301, %v4607
          %5327 = vst.msk [vmem:[#allocation3 + $0xc8] sm:$0xff] %vm5301, %v4610
          %5328 = vst.msk [vmem:[#allocation3 + $0xd0] sm:$0xff] %vm5301, %v4613
          %5329 = vst.msk [vmem:[#allocation3 + $0xd8] sm:$0xff] %vm5301, %v4616
          %5330 = vst.msk [vmem:[#allocation3 + $0xe0] sm:$0xff] %vm5301, %v4619
          %5331 = vst.msk [vmem:[#allocation3 + $0xe8] sm:$0xff] %vm5301, %v4622
          %5332 = vst.msk [vmem:[#allocation3 + $0xf0] sm:$0xff] %vm5301, %v4625
          %5333 = vst.msk [vmem:[#allocation3 + $0xf8] sm:$0xff] %vm5301, %v4628
          %5334 = vst.msk [vmem:[#allocation3 + $0x100] sm:$0xff] %vm5301, %v4631
          %5335 = vst.msk [vmem:[#allocation3 + $0x108] sm:$0xff] %vm5301, %v4634
          %5336 = vst.msk [vmem:[#allocation3 + $0x110] sm:$0xff] %vm5301, %v4637
          %5337 = vst.msk [vmem:[#allocation3 + $0x118] sm:$0xff] %vm5301, %v4640
          %5338 = vst.msk [vmem:[#allocation3 + $0x120] sm:$0xff] %vm5301, %v4643
          %5339 = vst.msk [vmem:[#allocation3 + $0x128] sm:$0xff] %vm5301, %v4646
          %5340 = vst.msk [vmem:[#allocation3 + $0x130] sm:$0xff] %vm5301, %v4649
          %5341 = vst.msk [vmem:[#allocation3 + $0x138] sm:$0xff] %vm5301, %v4652
          %5342 = vst.msk [vmem:[#allocation3 + $0x140] sm:$0xff] %vm5301, %v4655
          %5343 = vst.msk [vmem:[#allocation3 + $0x148] sm:$0xff] %vm5301, %v4658
          %5344 = vst.msk [vmem:[#allocation3 + $0x150] sm:$0xff] %vm5301, %v4661
          %5345 = vst.msk [vmem:[#allocation3 + $0x158] sm:$0xff] %vm5301, %v4664
          %5346 = vst.msk [vmem:[#allocation3 + $0x160] sm:$0xff] %vm5301, %v4667
          %5347 = vst.msk [vmem:[#allocation3 + $0x168] sm:$0xff] %vm5301, %v4670
          %5348 = vst.msk [vmem:[#allocation3 + $0x170] sm:$0xff] %vm5301, %v4673
          %5349 = vst.msk [vmem:[#allocation3 + $0x178] sm:$0xff] %vm5301, %v4676
          %5350 = vst.msk [vmem:[#allocation3 + $0x180] sm:$0xff] %vm5301, %v4679
          %5351 = vst.msk [vmem:[#allocation3 + $0x188] sm:$0xff] %vm5301, %v4682
          %5352 = vst.msk [vmem:[#allocation3 + $0x190] sm:$0xff] %vm5301, %v4685
          %5353 = vst.msk [vmem:[#allocation3 + $0x198] sm:$0xff] %vm5301, %v4688
          %5354 = vst.msk [vmem:[#allocation3 + $0x1a0] sm:$0xff] %vm5301, %v4691
          %5355 = vst.msk [vmem:[#allocation3 + $0x1a8] sm:$0xff] %vm5301, %v4694
          %5356 = vst.msk [vmem:[#allocation3 + $0x1b0] sm:$0xff] %vm5301, %v4697
          %5357 = vst.msk [vmem:[#allocation3 + $0x1b8] sm:$0xff] %vm5301, %v4700
          %5358 = vst.msk [vmem:[#allocation3 + $0x1c0] sm:$0xff] %vm5301, %v4703
          %5359 = vst.msk [vmem:[#allocation3 + $0x1c8] sm:$0xff] %vm5301, %v4706
          %5360 = vst.msk [vmem:[#allocation3 + $0x1d0] sm:$0xff] %vm5301, %v4709
          %5361 = vst.msk [vmem:[#allocation3 + $0x1d8] sm:$0xff] %vm5301, %v4712
          %5362 = vst.msk [vmem:[#allocation3 + $0x1e0] sm:$0xff] %vm5301, %v4715
          %5363 = vst.msk [vmem:[#allocation3 + $0x1e8] sm:$0xff] %vm5301, %v4718
          %5364 = vst.msk [vmem:[#allocation3 + $0x1f0] sm:$0xff] %vm5301, %v4721
          %5365 = vst.msk [vmem:[#allocation3 + $0x1f8] sm:$0xff] %vm5301, %v4724
          %5366 = vst.msk [vmem:[#allocation3 + $0x200] sm:$0xff] %vm5301, %v4727
          %5367 = vst.msk [vmem:[#allocation3 + $0x208] sm:$0xff] %vm5301, %v4730
          %5368 = vst.msk [vmem:[#allocation3 + $0x210] sm:$0xff] %vm5301, %v4733
          %5369 = vst.msk [vmem:[#allocation3 + $0x218] sm:$0xff] %vm5301, %v4736
          %5370 = vst.msk [vmem:[#allocation3 + $0x220] sm:$0xff] %vm5301, %v4739
          %5371 = vst.msk [vmem:[#allocation3 + $0x228] sm:$0xff] %vm5301, %v4742
          %5372 = vst.msk [vmem:[#allocation3 + $0x230] sm:$0xff] %vm5301, %v4745
          %5373 = vst.msk [vmem:[#allocation3 + $0x238] sm:$0xff] %vm5301, %v4748
          %5374 = vst.msk [vmem:[#allocation3 + $0x240] sm:$0xff] %vm5301, %v4751
          %5375 = vst.msk [vmem:[#allocation3 + $0x248] sm:$0xff] %vm5301, %v4754
          %5376 = vst.msk [vmem:[#allocation3 + $0x250] sm:$0xff] %vm5301, %v4757
          %5377 = vst.msk [vmem:[#allocation3 + $0x258] sm:$0xff] %vm5301, %v4760
          %5378 = vst.msk [vmem:[#allocation3 + $0x260] sm:$0xff] %vm5301, %v4763
          %5379 = vst.msk [vmem:[#allocation3 + $0x268] sm:$0xff] %vm5301, %v4766
          %5380 = vst.msk [vmem:[#allocation3 + $0x270] sm:$0xff] %vm5301, %v4769
          %5381 = vst.msk [vmem:[#allocation3 + $0x278] sm:$0xff] %vm5301, %v4772
          %5382 = vst.msk [vmem:[#allocation3 + $0x280] sm:$0xff] %vm5301, %v4775
          %5383 = vst.msk [vmem:[#allocation3 + $0x288] sm:$0xff] %vm5301, %v4778
          %5384 = vst.msk [vmem:[#allocation3 + $0x290] sm:$0xff] %vm5301, %v4781
          %5385 = vst.msk [vmem:[#allocation3 + $0x298] sm:$0xff] %vm5301, %v4784
          %5386 = vst.msk [vmem:[#allocation3 + $0x2a0] sm:$0xff] %vm5301, %v4787
          %5387 = vst.msk [vmem:[#allocation3 + $0x2a8] sm:$0xff] %vm5301, %v4790
          %5388 = vst.msk [vmem:[#allocation3 + $0x2b0] sm:$0xff] %vm5301, %v4793
          %5389 = vst.msk [vmem:[#allocation3 + $0x2b8] sm:$0xff] %vm5301, %v4796
          %5390 = vst.msk [vmem:[#allocation3 + $0x2c0] sm:$0xff] %vm5301, %v4799
          %5391 = vst.msk [vmem:[#allocation3 + $0x2c8] sm:$0xff] %vm5301, %v4802
          %5392 = vst.msk [vmem:[#allocation3 + $0x2d0] sm:$0xff] %vm5301, %v4805
          %5393 = vst.msk [vmem:[#allocation3 + $0x2d8] sm:$0xff] %vm5301, %v4808
          %5394 = vst.msk [vmem:[#allocation3 + $0x2e0] sm:$0xff] %vm5301, %v4811
          %5395 = vst.msk [vmem:[#allocation3 + $0x2e8] sm:$0xff] %vm5301, %v4814
          %5396 = vst.msk [vmem:[#allocation3 + $0x2f0] sm:$0xff] %vm5301, %v4817
          %5397 = vst.msk [vmem:[#allocation3 + $0x2f8] sm:$0xff] %vm5301, %v4820
          %5398 = vst.msk [vmem:[#allocation3 + $0x300] sm:$0xff] %vm5301, %v4823
          %5399 = vst.msk [vmem:[#allocation3 + $0x308] sm:$0xff] %vm5301, %v4826
          %5400 = vst.msk [vmem:[#allocation3 + $0x310] sm:$0xff] %vm5301, %v4829
          %5401 = vst.msk [vmem:[#allocation3 + $0x318] sm:$0xff] %vm5301, %v4832
          %5402 = vst.msk [vmem:[#allocation3 + $0x320] sm:$0xff] %vm5301, %v4835
          %5403 = vst.msk [vmem:[#allocation3 + $0x328] sm:$0xff] %vm5301, %v4838
          %5404 = vst.msk [vmem:[#allocation3 + $0x330] sm:$0xff] %vm5301, %v4841
          %5405 = vst.msk [vmem:[#allocation3 + $0x338] sm:$0xff] %vm5301, %v4844
          %5406 = vst.msk [vmem:[#allocation3 + $0x340] sm:$0xff] %vm5301, %v4847
          %5407 = vst.msk [vmem:[#allocation3 + $0x348] sm:$0xff] %vm5301, %v4850
          %5408 = vst.msk [vmem:[#allocation3 + $0x350] sm:$0xff] %vm5301, %v4853
          %5409 = vst.msk [vmem:[#allocation3 + $0x358] sm:$0xff] %vm5301, %v4856
          %5410 = vst.msk [vmem:[#allocation3 + $0x360] sm:$0xff] %vm5301, %v4859
          %5411 = vst.msk [vmem:[#allocation3 + $0x368] sm:$0xff] %vm5301, %v4862
          %5412 = vst.msk [vmem:[#allocation3 + $0x370] sm:$0xff] %vm5301, %v4865
          %5413 = vst.msk [vmem:[#allocation3 + $0x378] sm:$0xff] %vm5301, %v4868
          %5414 = vst.msk [vmem:[#allocation3 + $0x380] sm:$0xff] %vm5301, %v4871
          %5415 = vst.msk [vmem:[#allocation3 + $0x388] sm:$0xff] %vm5301, %v4874
          %5416 = vst.msk [vmem:[#allocation3 + $0x390] sm:$0xff] %vm5301, %v4877
          %5417 = vst.msk [vmem:[#allocation3 + $0x398] sm:$0xff] %vm5301, %v4880
          %5418 = vst.msk [vmem:[#allocation3 + $0x3a0] sm:$0xff] %vm5301, %v4883
          %5419 = vst.msk [vmem:[#allocation3 + $0x3a8] sm:$0xff] %vm5301, %v4886
          %5420 = vst.msk [vmem:[#allocation3 + $0x3b0] sm:$0xff] %vm5301, %v4889
          %5421 = vst.msk [vmem:[#allocation3 + $0x3b8] sm:$0xff] %vm5301, %v4892
          %5422 = vst.msk [vmem:[#allocation3 + $0x3c0] sm:$0xff] %vm5301, %v4895
          %5423 = vst.msk [vmem:[#allocation3 + $0x3c8] sm:$0xff] %vm5301, %v4898
          %5424 = vst.msk [vmem:[#allocation3 + $0x3d0] sm:$0xff] %vm5301, %v4901
          %5425 = vst.msk [vmem:[#allocation3 + $0x3d8] sm:$0xff] %vm5301, %v4904
          %5426 = vst.msk [vmem:[#allocation3 + $0x3e0] sm:$0xff] %vm5301, %v4907
          %5427 = vst.msk [vmem:[#allocation3 + $0x3e8] sm:$0xff] %vm5301, %v4910
          %5428 = vst.msk [vmem:[#allocation3 + $0x3f0] sm:$0xff] %vm5301, %v4913
          %5429 = vst.msk [vmem:[#allocation3 + $0x3f8] sm:$0xff] %vm5301, %v4916
          %5430 = vst.msk [vmem:[#allocation3 + $0x400] sm:$0xff] %vm5301, %v4919
          %5431 = vst.msk [vmem:[#allocation3 + $0x408] sm:$0xff] %vm5301, %v4922
          %5432 = vst.msk [vmem:[#allocation3 + $0x410] sm:$0xff] %vm5301, %v4925
          %5433 = vst.msk [vmem:[#allocation3 + $0x418] sm:$0xff] %vm5301, %v4928
          %5434 = vst.msk [vmem:[#allocation3 + $0x420] sm:$0xff] %vm5301, %v4931
          %5435 = vst.msk [vmem:[#allocation3 + $0x428] sm:$0xff] %vm5301, %v4934
          %5436 = vst.msk [vmem:[#allocation3 + $0x430] sm:$0xff] %vm5301, %v4937
          %5437 = vst.msk [vmem:[#allocation3 + $0x438] sm:$0xff] %vm5301, %v4940
          %5438 = vst.msk [vmem:[#allocation3 + $0x440] sm:$0xff] %vm5301, %v4943
          %5439 = vst.msk [vmem:[#allocation3 + $0x448] sm:$0xff] %vm5301, %v4946
          %5440 = vst.msk [vmem:[#allocation3 + $0x450] sm:$0xff] %vm5301, %v4949
          %5441 = vst.msk [vmem:[#allocation3 + $0x458] sm:$0xff] %vm5301, %v4952
          %5442 = vst.msk [vmem:[#allocation3 + $0x460] sm:$0xff] %vm5301, %v4955
          %5443 = vst.msk [vmem:[#allocation3 + $0x468] sm:$0xff] %vm5301, %v4958
          %5444 = vst.msk [vmem:[#allocation3 + $0x470] sm:$0xff] %vm5301, %v4961
          %5445 = vst.msk [vmem:[#allocation3 + $0x478] sm:$0xff] %vm5301, %v4964
          %5446 = vst.msk [vmem:[#allocation3 + $0x480] sm:$0xff] %vm5301, %v4967
          %5447 = vst.msk [vmem:[#allocation3 + $0x488] sm:$0xff] %vm5301, %v4970
          %5448 = vst.msk [vmem:[#allocation3 + $0x490] sm:$0xff] %vm5301, %v4973
          %5449 = vst.msk [vmem:[#allocation3 + $0x498] sm:$0xff] %vm5301, %v4976
          %5450 = vst.msk [vmem:[#allocation3 + $0x4a0] sm:$0xff] %vm5301, %v4979
          %5451 = vst.msk [vmem:[#allocation3 + $0x4a8] sm:$0xff] %vm5301, %v4982
          %5452 = vst.msk [vmem:[#allocation3 + $0x4b0] sm:$0xff] %vm5301, %v4985
          %5453 = vst.msk [vmem:[#allocation3 + $0x4b8] sm:$0xff] %vm5301, %v4988
          %5454 = vst.msk [vmem:[#allocation3 + $0x4c0] sm:$0xff] %vm5301, %v4991
          %5455 = vst.msk [vmem:[#allocation3 + $0x4c8] sm:$0xff] %vm5301, %v4994
          %5456 = vst.msk [vmem:[#allocation3 + $0x4d0] sm:$0xff] %vm5301, %v4997
          %5457 = vst.msk [vmem:[#allocation3 + $0x4d8] sm:$0xff] %vm5301, %v5000
          %5458 = vst.msk [vmem:[#allocation3 + $0x4e0] sm:$0xff] %vm5301, %v5003
          %5459 = vst.msk [vmem:[#allocation3 + $0x4e8] sm:$0xff] %vm5301, %v5006
          %5460 = vst.msk [vmem:[#allocation3 + $0x4f0] sm:$0xff] %vm5301, %v5009
          %5461 = vst.msk [vmem:[#allocation3 + $0x4f8] sm:$0xff] %vm5301, %v5012
          %5462 = vst.msk [vmem:[#allocation3 + $0x500] sm:$0xff] %vm5301, %v5015
          %5463 = vst.msk [vmem:[#allocation3 + $0x508] sm:$0xff] %vm5301, %v5018
          %5464 = vst.msk [vmem:[#allocation3 + $0x510] sm:$0xff] %vm5301, %v5021
          %5465 = vst.msk [vmem:[#allocation3 + $0x518] sm:$0xff] %vm5301, %v5024
          %5466 = vst.msk [vmem:[#allocation3 + $0x520] sm:$0xff] %vm5301, %v5027
          %5467 = vst.msk [vmem:[#allocation3 + $0x528] sm:$0xff] %vm5301, %v5030
          %5468 = vst.msk [vmem:[#allocation3 + $0x530] sm:$0xff] %vm5301, %v5033
          %5469 = vst.msk [vmem:[#allocation3 + $0x538] sm:$0xff] %vm5301, %v5036
          %5470 = vst.msk [vmem:[#allocation3 + $0x540] sm:$0xff] %vm5301, %v5039
          %5471 = vst.msk [vmem:[#allocation3 + $0x548] sm:$0xff] %vm5301, %v5042
          %5472 = vst.msk [vmem:[#allocation3 + $0x550] sm:$0xff] %vm5301, %v5045
          %5473 = vst.msk [vmem:[#allocation3 + $0x558] sm:$0xff] %vm5301, %v5048
          %5474 = vst.msk [vmem:[#allocation3 + $0x560] sm:$0xff] %vm5301, %v5051
          %5475 = vst.msk [vmem:[#allocation3 + $0x568] sm:$0xff] %vm5301, %v5054
          %5476 = vst.msk [vmem:[#allocation3 + $0x570] sm:$0xff] %vm5301, %v5057
          %5477 = vst.msk [vmem:[#allocation3 + $0x578] sm:$0xff] %vm5301, %v5060
          %5478 = vst.msk [vmem:[#allocation3 + $0x580] sm:$0xff] %vm5301, %v5063
          %5479 = vst.msk [vmem:[#allocation3 + $0x588] sm:$0xff] %vm5301, %v5066
          %5480 = vst.msk [vmem:[#allocation3 + $0x590] sm:$0xff] %vm5301, %v5069
          %5481 = vst.msk [vmem:[#allocation3 + $0x598] sm:$0xff] %vm5301, %v5072
          %5482 = vst.msk [vmem:[#allocation3 + $0x5a0] sm:$0xff] %vm5301, %v5075
          %5483 = vst.msk [vmem:[#allocation3 + $0x5a8] sm:$0xff] %vm5301, %v5078
          %5484 = vst.msk [vmem:[#allocation3 + $0x5b0] sm:$0xff] %vm5301, %v5081
          %5485 = vst.msk [vmem:[#allocation3 + $0x5b8] sm:$0xff] %vm5301, %v5084
          %5486 = vst.msk [vmem:[#allocation3 + $0x5c0] sm:$0xff] %vm5301, %v5087
          %5487 = vst.msk [vmem:[#allocation3 + $0x5c8] sm:$0xff] %vm5301, %v5090
          %5488 = vst.msk [vmem:[#allocation3 + $0x5d0] sm:$0xff] %vm5301, %v5093
          %5489 = vst.msk [vmem:[#allocation3 + $0x5d8] sm:$0xff] %vm5301, %v5096
          %5490 = vst.msk [vmem:[#allocation3 + $0x5e0] sm:$0xff] %vm5301, %v5099
          %5491 = vst.msk [vmem:[#allocation3 + $0x5e8] sm:$0xff] %vm5301, %v5102
          %5492 = vst.msk [vmem:[#allocation3 + $0x5f0] sm:$0xff] %vm5301, %v5105
          %5493 = vst.msk [vmem:[#allocation3 + $0x5f8] sm:$0xff] %vm5301, %v5108
          %5494 = vst.msk [vmem:[#allocation3 + $0x600] sm:$0xff] %vm5301, %v5111
          %5495 = vst.msk [vmem:[#allocation3 + $0x608] sm:$0xff] %vm5301, %v5114
          %5496 = vst.msk [vmem:[#allocation3 + $0x610] sm:$0xff] %vm5301, %v5117
          %5497 = vst.msk [vmem:[#allocation3 + $0x618] sm:$0xff] %vm5301, %v5120
          %5498 = vst.msk [vmem:[#allocation3 + $0x620] sm:$0xff] %vm5301, %v5123
          %5499 = vst.msk [vmem:[#allocation3 + $0x628] sm:$0xff] %vm5301, %v5126
          %5500 = vst.msk [vmem:[#allocation3 + $0x630] sm:$0xff] %vm5301, %v5129
          %5501 = vst.msk [vmem:[#allocation3 + $0x638] sm:$0xff] %vm5301, %v5132
          %5502 = vst.msk [vmem:[#allocation3 + $0x640] sm:$0xff] %vm5301, %v5135
          %5503 = vst.msk [vmem:[#allocation3 + $0x648] sm:$0xff] %vm5301, %v5138
          %5504 = vst.msk [vmem:[#allocation3 + $0x650] sm:$0xff] %vm5301, %v5141
          %5505 = vst.msk [vmem:[#allocation3 + $0x658] sm:$0xff] %vm5301, %v5144
          %5506 = vst.msk [vmem:[#allocation3 + $0x660] sm:$0xff] %vm5301, %v5147
          %5507 = vst.msk [vmem:[#allocation3 + $0x668] sm:$0xff] %vm5301, %v5150
          %5508 = vst.msk [vmem:[#allocation3 + $0x670] sm:$0xff] %vm5301, %v5153
          %5509 = vst.msk [vmem:[#allocation3 + $0x678] sm:$0xff] %vm5301, %v5156
          %5510 = vst.msk [vmem:[#allocation3 + $0x680] sm:$0xff] %vm5301, %v5159
          %5511 = vst.msk [vmem:[#allocation3 + $0x688] sm:$0xff] %vm5301, %v5162
          %5512 = vst.msk [vmem:[#allocation3 + $0x690] sm:$0xff] %vm5301, %v5165
          %5513 = vst.msk [vmem:[#allocation3 + $0x698] sm:$0xff] %vm5301, %v5168
          %5514 = vst.msk [vmem:[#allocation3 + $0x6a0] sm:$0xff] %vm5301, %v5171
          %5515 = vst.msk [vmem:[#allocation3 + $0x6a8] sm:$0xff] %vm5301, %v5174
          %5516 = vst.msk [vmem:[#allocation3 + $0x6b0] sm:$0xff] %vm5301, %v5177
          %5517 = vst.msk [vmem:[#allocation3 + $0x6b8] sm:$0xff] %vm5301, %v5180
          %5518 = vst.msk [vmem:[#allocation3 + $0x6c0] sm:$0xff] %vm5301, %v5183
          %5519 = vst.msk [vmem:[#allocation3 + $0x6c8] sm:$0xff] %vm5301, %v5186
          %5520 = vst.msk [vmem:[#allocation3 + $0x6d0] sm:$0xff] %vm5301, %v5189
          %5521 = vst.msk [vmem:[#allocation3 + $0x6d8] sm:$0xff] %vm5301, %v5192
          %5522 = vst.msk [vmem:[#allocation3 + $0x6e0] sm:$0xff] %vm5301, %v5195
          %5523 = vst.msk [vmem:[#allocation3 + $0x6e8] sm:$0xff] %vm5301, %v5198
          %5524 = vst.msk [vmem:[#allocation3 + $0x6f0] sm:$0xff] %vm5301, %v5201
          %5525 = vst.msk [vmem:[#allocation3 + $0x6f8] sm:$0xff] %vm5301, %v5204
          %5526 = vst.msk [vmem:[#allocation3 + $0x700] sm:$0xff] %vm5301, %v5207
          %5527 = vst.msk [vmem:[#allocation3 + $0x708] sm:$0xff] %vm5301, %v5210
          %5528 = vst.msk [vmem:[#allocation3 + $0x710] sm:$0xff] %vm5301, %v5213
          %5529 = vst.msk [vmem:[#allocation3 + $0x718] sm:$0xff] %vm5301, %v5216
          %5530 = vst.msk [vmem:[#allocation3 + $0x720] sm:$0xff] %vm5301, %v5219
          %5531 = vst.msk [vmem:[#allocation3 + $0x728] sm:$0xff] %vm5301, %v5222
          %5532 = vst.msk [vmem:[#allocation3 + $0x730] sm:$0xff] %vm5301, %v5225
          %5533 = vst.msk [vmem:[#allocation3 + $0x738] sm:$0xff] %vm5301, %v5228
          %5534 = vst.msk [vmem:[#allocation3 + $0x740] sm:$0xff] %vm5301, %v5231
          %5535 = vst.msk [vmem:[#allocation3 + $0x748] sm:$0xff] %vm5301, %v5234
          %5536 = vst.msk [vmem:[#allocation3 + $0x750] sm:$0xff] %vm5301, %v5237
          %5537 = vst.msk [vmem:[#allocation3 + $0x758] sm:$0xff] %vm5301, %v5240
          %5538 = vst.msk [vmem:[#allocation3 + $0x760] sm:$0xff] %vm5301, %v5243
          %5539 = vst.msk [vmem:[#allocation3 + $0x768] sm:$0xff] %vm5301, %v5246
          %5540 = vst.msk [vmem:[#allocation3 + $0x770] sm:$0xff] %vm5301, %v5249
          %5541 = vst.msk [vmem:[#allocation3 + $0x778] sm:$0xff] %vm5301, %v5252
          %5542 = vst.msk [vmem:[#allocation3 + $0x780] sm:$0xff] %vm5301, %v5255
          %5543 = vst.msk [vmem:[#allocation3 + $0x788] sm:$0xff] %vm5301, %v5258
          %5544 = vst.msk [vmem:[#allocation3 + $0x790] sm:$0xff] %vm5301, %v5261
          %5545 = vst.msk [vmem:[#allocation3 + $0x798] sm:$0xff] %vm5301, %v5264
          %5546 = vst.msk [vmem:[#allocation3 + $0x7a0] sm:$0xff] %vm5301, %v5267
          %5547 = vst.msk [vmem:[#allocation3 + $0x7a8] sm:$0xff] %vm5301, %v5270
          %5548 = vst.msk [vmem:[#allocation3 + $0x7b0] sm:$0xff] %vm5301, %v5273
          %5549 = vst.msk [vmem:[#allocation3 + $0x7b8] sm:$0xff] %vm5301, %v5276
          %5550 = vst.msk [vmem:[#allocation3 + $0x7c0] sm:$0xff] %vm5301, %v5279
          %5551 = vst.msk [vmem:[#allocation3 + $0x7c8] sm:$0xff] %vm5301, %v5282
          %5552 = vst.msk [vmem:[#allocation3 + $0x7d0] sm:$0xff] %vm5301, %v5285
          %5553 = vst.msk [vmem:[#allocation3 + $0x7d8] sm:$0xff] %vm5301, %v5288
          %5554 = vst.msk [vmem:[#allocation3 + $0x7e0] sm:$0xff] %vm5301, %v5291
          %5555 = vst.msk [vmem:[#allocation3 + $0x7e8] sm:$0xff] %vm5301, %v5294
          %5556 = vst.msk [vmem:[#allocation3 + $0x7f0] sm:$0xff] %vm5301, %v5297
          %5557 = vst.msk [vmem:[#allocation3 + $0x7f8] sm:$0xff] %vm5301, %v5300
          %5558 = vst.msk [vmem:[#allocation2] sm:$0xff] %vm4532, %v3765
          %5559 = vst.msk [vmem:[#allocation2 + $0x8] sm:$0xff] %vm4532, %v3767
          %5560 = vst.msk [vmem:[#allocation2 + $0x10] sm:$0xff] %vm4532, %v3769
          %5561 = vst.msk [vmem:[#allocation2 + $0x18] sm:$0xff] %vm4532, %v3771
          %5562 = vst.msk [vmem:[#allocation2 + $0x20] sm:$0xff] %vm4532, %v3773
          %5563 = vst.msk [vmem:[#allocation2 + $0x28] sm:$0xff] %vm4532, %v3775
          %5564 = vst.msk [vmem:[#allocation2 + $0x30] sm:$0xff] %vm4532, %v3777
          %5565 = vst.msk [vmem:[#allocation2 + $0x38] sm:$0xff] %vm4532, %v3779
          %5566 = vst.msk [vmem:[#allocation2 + $0x40] sm:$0xff] %vm4532, %v3781
          %5567 = vst.msk [vmem:[#allocation2 + $0x48] sm:$0xff] %vm4532, %v3783
          %5568 = vst.msk [vmem:[#allocation2 + $0x50] sm:$0xff] %vm4532, %v3785
          %5569 = vst.msk [vmem:[#allocation2 + $0x58] sm:$0xff] %vm4532, %v3787
          %5570 = vst.msk [vmem:[#allocation2 + $0x60] sm:$0xff] %vm4532, %v3789
          %5571 = vst.msk [vmem:[#allocation2 + $0x68] sm:$0xff] %vm4532, %v3791
          %5572 = vst.msk [vmem:[#allocation2 + $0x70] sm:$0xff] %vm4532, %v3793
          %5573 = vst.msk [vmem:[#allocation2 + $0x78] sm:$0xff] %vm4532, %v3795
          %5574 = vst.msk [vmem:[#allocation2 + $0x80] sm:$0xff] %vm4532, %v3797
          %5575 = vst.msk [vmem:[#allocation2 + $0x88] sm:$0xff] %vm4532, %v3799
          %5576 = vst.msk [vmem:[#allocation2 + $0x90] sm:$0xff] %vm4532, %v3801
          %5577 = vst.msk [vmem:[#allocation2 + $0x98] sm:$0xff] %vm4532, %v3803
          %5578 = vst.msk [vmem:[#allocation2 + $0xa0] sm:$0xff] %vm4532, %v3805
          %5579 = vst.msk [vmem:[#allocation2 + $0xa8] sm:$0xff] %vm4532, %v3807
          %5580 = vst.msk [vmem:[#allocation2 + $0xb0] sm:$0xff] %vm4532, %v3809
          %5581 = vst.msk [vmem:[#allocation2 + $0xb8] sm:$0xff] %vm4532, %v3811
          %5582 = vst.msk [vmem:[#allocation2 + $0xc0] sm:$0xff] %vm4532, %v3813
          %5583 = vst.msk [vmem:[#allocation2 + $0xc8] sm:$0xff] %vm4532, %v3815
          %5584 = vst.msk [vmem:[#allocation2 + $0xd0] sm:$0xff] %vm4532, %v3817
          %5585 = vst.msk [vmem:[#allocation2 + $0xd8] sm:$0xff] %vm4532, %v3819
          %5586 = vst.msk [vmem:[#allocation2 + $0xe0] sm:$0xff] %vm4532, %v3821
          %5587 = vst.msk [vmem:[#allocation2 + $0xe8] sm:$0xff] %vm4532, %v3823
          %5588 = vst.msk [vmem:[#allocation2 + $0xf0] sm:$0xff] %vm4532, %v3825
          %5589 = vst.msk [vmem:[#allocation2 + $0xf8] sm:$0xff] %vm4532, %v3827
          %5590 = vst.msk [vmem:[#allocation2 + $0x100] sm:$0xff] %vm4532, %v3829
          %5591 = vst.msk [vmem:[#allocation2 + $0x108] sm:$0xff] %vm4532, %v3831
          %5592 = vst.msk [vmem:[#allocation2 + $0x110] sm:$0xff] %vm4532, %v3833
          %5593 = vst.msk [vmem:[#allocation2 + $0x118] sm:$0xff] %vm4532, %v3835
          %5594 = vst.msk [vmem:[#allocation2 + $0x120] sm:$0xff] %vm4532, %v3837
          %5595 = vst.msk [vmem:[#allocation2 + $0x128] sm:$0xff] %vm4532, %v3839
          %5596 = vst.msk [vmem:[#allocation2 + $0x130] sm:$0xff] %vm4532, %v3841
          %5597 = vst.msk [vmem:[#allocation2 + $0x138] sm:$0xff] %vm4532, %v3843
          %5598 = vst.msk [vmem:[#allocation2 + $0x140] sm:$0xff] %vm4532, %v3845
          %5599 = vst.msk [vmem:[#allocation2 + $0x148] sm:$0xff] %vm4532, %v3847
          %5600 = vst.msk [vmem:[#allocation2 + $0x150] sm:$0xff] %vm4532, %v3849
          %5601 = vst.msk [vmem:[#allocation2 + $0x158] sm:$0xff] %vm4532, %v3851
          %5602 = vst.msk [vmem:[#allocation2 + $0x160] sm:$0xff] %vm4532, %v3853
          %5603 = vst.msk [vmem:[#allocation2 + $0x168] sm:$0xff] %vm4532, %v3855
          %5604 = vst.msk [vmem:[#allocation2 + $0x170] sm:$0xff] %vm4532, %v3857
          %5605 = vst.msk [vmem:[#allocation2 + $0x178] sm:$0xff] %vm4532, %v3859
          %5606 = vst.msk [vmem:[#allocation2 + $0x180] sm:$0xff] %vm4532, %v3861
          %5607 = vst.msk [vmem:[#allocation2 + $0x188] sm:$0xff] %vm4532, %v3863
          %5608 = vst.msk [vmem:[#allocation2 + $0x190] sm:$0xff] %vm4532, %v3865
          %5609 = vst.msk [vmem:[#allocation2 + $0x198] sm:$0xff] %vm4532, %v3867
          %5610 = vst.msk [vmem:[#allocation2 + $0x1a0] sm:$0xff] %vm4532, %v3869
          %5611 = vst.msk [vmem:[#allocation2 + $0x1a8] sm:$0xff] %vm4532, %v3871
          %5612 = vst.msk [vmem:[#allocation2 + $0x1b0] sm:$0xff] %vm4532, %v3873
          %5613 = vst.msk [vmem:[#allocation2 + $0x1b8] sm:$0xff] %vm4532, %v3875
          %5614 = vst.msk [vmem:[#allocation2 + $0x1c0] sm:$0xff] %vm4532, %v3877
          %5615 = vst.msk [vmem:[#allocation2 + $0x1c8] sm:$0xff] %vm4532, %v3879
          %5616 = vst.msk [vmem:[#allocation2 + $0x1d0] sm:$0xff] %vm4532, %v3881
          %5617 = vst.msk [vmem:[#allocation2 + $0x1d8] sm:$0xff] %vm4532, %v3883
          %5618 = vst.msk [vmem:[#allocation2 + $0x1e0] sm:$0xff] %vm4532, %v3885
          %5619 = vst.msk [vmem:[#allocation2 + $0x1e8] sm:$0xff] %vm4532, %v3887
          %5620 = vst.msk [vmem:[#allocation2 + $0x1f0] sm:$0xff] %vm4532, %v3889
          %5621 = vst.msk [vmem:[#allocation2 + $0x1f8] sm:$0xff] %vm4532, %v3891
          %5622 = vst.msk [vmem:[#allocation2 + $0x200] sm:$0xff] %vm4532, %v3893
          %5623 = vst.msk [vmem:[#allocation2 + $0x208] sm:$0xff] %vm4532, %v3895
          %5624 = vst.msk [vmem:[#allocation2 + $0x210] sm:$0xff] %vm4532, %v3897
          %5625 = vst.msk [vmem:[#allocation2 + $0x218] sm:$0xff] %vm4532, %v3899
          %5626 = vst.msk [vmem:[#allocation2 + $0x220] sm:$0xff] %vm4532, %v3901
          %5627 = vst.msk [vmem:[#allocation2 + $0x228] sm:$0xff] %vm4532, %v3903
          %5628 = vst.msk [vmem:[#allocation2 + $0x230] sm:$0xff] %vm4532, %v3905
          %5629 = vst.msk [vmem:[#allocation2 + $0x238] sm:$0xff] %vm4532, %v3907
          %5630 = vst.msk [vmem:[#allocation2 + $0x240] sm:$0xff] %vm4532, %v3909
          %5631 = vst.msk [vmem:[#allocation2 + $0x248] sm:$0xff] %vm4532, %v3911
          %5632 = vst.msk [vmem:[#allocation2 + $0x250] sm:$0xff] %vm4532, %v3913
          %5633 = vst.msk [vmem:[#allocation2 + $0x258] sm:$0xff] %vm4532, %v3915
          %5634 = vst.msk [vmem:[#allocation2 + $0x260] sm:$0xff] %vm4532, %v3917
          %5635 = vst.msk [vmem:[#allocation2 + $0x268] sm:$0xff] %vm4532, %v3919
          %5636 = vst.msk [vmem:[#allocation2 + $0x270] sm:$0xff] %vm4532, %v3921
          %5637 = vst.msk [vmem:[#allocation2 + $0x278] sm:$0xff] %vm4532, %v3923
          %5638 = vst.msk [vmem:[#allocation2 + $0x280] sm:$0xff] %vm4532, %v3925
          %5639 = vst.msk [vmem:[#allocation2 + $0x288] sm:$0xff] %vm4532, %v3927
          %5640 = vst.msk [vmem:[#allocation2 + $0x290] sm:$0xff] %vm4532, %v3929
          %5641 = vst.msk [vmem:[#allocation2 + $0x298] sm:$0xff] %vm4532, %v3931
          %5642 = vst.msk [vmem:[#allocation2 + $0x2a0] sm:$0xff] %vm4532, %v3933
          %5643 = vst.msk [vmem:[#allocation2 + $0x2a8] sm:$0xff] %vm4532, %v3935
          %5644 = vst.msk [vmem:[#allocation2 + $0x2b0] sm:$0xff] %vm4532, %v3937
          %5645 = vst.msk [vmem:[#allocation2 + $0x2b8] sm:$0xff] %vm4532, %v3939
          %5646 = vst.msk [vmem:[#allocation2 + $0x2c0] sm:$0xff] %vm4532, %v3941
          %5647 = vst.msk [vmem:[#allocation2 + $0x2c8] sm:$0xff] %vm4532, %v3943
          %5648 = vst.msk [vmem:[#allocation2 + $0x2d0] sm:$0xff] %vm4532, %v3945
          %5649 = vst.msk [vmem:[#allocation2 + $0x2d8] sm:$0xff] %vm4532, %v3947
          %5650 = vst.msk [vmem:[#allocation2 + $0x2e0] sm:$0xff] %vm4532, %v3949
          %5651 = vst.msk [vmem:[#allocation2 + $0x2e8] sm:$0xff] %vm4532, %v3951
          %5652 = vst.msk [vmem:[#allocation2 + $0x2f0] sm:$0xff] %vm4532, %v3953
          %5653 = vst.msk [vmem:[#allocation2 + $0x2f8] sm:$0xff] %vm4532, %v3955
          %5654 = vst.msk [vmem:[#allocation2 + $0x300] sm:$0xff] %vm4532, %v3957
          %5655 = vst.msk [vmem:[#allocation2 + $0x308] sm:$0xff] %vm4532, %v3959
          %5656 = vst.msk [vmem:[#allocation2 + $0x310] sm:$0xff] %vm4532, %v3961
          %5657 = vst.msk [vmem:[#allocation2 + $0x318] sm:$0xff] %vm4532, %v3963
          %5658 = vst.msk [vmem:[#allocation2 + $0x320] sm:$0xff] %vm4532, %v3965
          %5659 = vst.msk [vmem:[#allocation2 + $0x328] sm:$0xff] %vm4532, %v3967
          %5660 = vst.msk [vmem:[#allocation2 + $0x330] sm:$0xff] %vm4532, %v3969
          %5661 = vst.msk [vmem:[#allocation2 + $0x338] sm:$0xff] %vm4532, %v3971
          %5662 = vst.msk [vmem:[#allocation2 + $0x340] sm:$0xff] %vm4532, %v3973
          %5663 = vst.msk [vmem:[#allocation2 + $0x348] sm:$0xff] %vm4532, %v3975
          %5664 = vst.msk [vmem:[#allocation2 + $0x350] sm:$0xff] %vm4532, %v3977
          %5665 = vst.msk [vmem:[#allocation2 + $0x358] sm:$0xff] %vm4532, %v3979
          %5666 = vst.msk [vmem:[#allocation2 + $0x360] sm:$0xff] %vm4532, %v3981
          %5667 = vst.msk [vmem:[#allocation2 + $0x368] sm:$0xff] %vm4532, %v3983
          %5668 = vst.msk [vmem:[#allocation2 + $0x370] sm:$0xff] %vm4532, %v3985
          %5669 = vst.msk [vmem:[#allocation2 + $0x378] sm:$0xff] %vm4532, %v3987
          %5670 = vst.msk [vmem:[#allocation2 + $0x380] sm:$0xff] %vm4532, %v3989
          %5671 = vst.msk [vmem:[#allocation2 + $0x388] sm:$0xff] %vm4532, %v3991
          %5672 = vst.msk [vmem:[#allocation2 + $0x390] sm:$0xff] %vm4532, %v3993
          %5673 = vst.msk [vmem:[#allocation2 + $0x398] sm:$0xff] %vm4532, %v3995
          %5674 = vst.msk [vmem:[#allocation2 + $0x3a0] sm:$0xff] %vm4532, %v3997
          %5675 = vst.msk [vmem:[#allocation2 + $0x3a8] sm:$0xff] %vm4532, %v3999
          %5676 = vst.msk [vmem:[#allocation2 + $0x3b0] sm:$0xff] %vm4532, %v4001
          %5677 = vst.msk [vmem:[#allocation2 + $0x3b8] sm:$0xff] %vm4532, %v4003
          %5678 = vst.msk [vmem:[#allocation2 + $0x3c0] sm:$0xff] %vm4532, %v4005
          %5679 = vst.msk [vmem:[#allocation2 + $0x3c8] sm:$0xff] %vm4532, %v4007
          %5680 = vst.msk [vmem:[#allocation2 + $0x3d0] sm:$0xff] %vm4532, %v4009
          %5681 = vst.msk [vmem:[#allocation2 + $0x3d8] sm:$0xff] %vm4532, %v4011
          %5682 = vst.msk [vmem:[#allocation2 + $0x3e0] sm:$0xff] %vm4532, %v4013
          %5683 = vst.msk [vmem:[#allocation2 + $0x3e8] sm:$0xff] %vm4532, %v4015
          %5684 = vst.msk [vmem:[#allocation2 + $0x3f0] sm:$0xff] %vm4532, %v4017
          %5685 = vst.msk [vmem:[#allocation2 + $0x3f8] sm:$0xff] %vm4532, %v4019
          %5686 = vst.msk [vmem:[#allocation2 + $0x400] sm:$0xff] %vm4532, %v4021
          %5687 = vst.msk [vmem:[#allocation2 + $0x408] sm:$0xff] %vm4532, %v4023
          %5688 = vst.msk [vmem:[#allocation2 + $0x410] sm:$0xff] %vm4532, %v4025
          %5689 = vst.msk [vmem:[#allocation2 + $0x418] sm:$0xff] %vm4532, %v4027
          %5690 = vst.msk [vmem:[#allocation2 + $0x420] sm:$0xff] %vm4532, %v4029
          %5691 = vst.msk [vmem:[#allocation2 + $0x428] sm:$0xff] %vm4532, %v4031
          %5692 = vst.msk [vmem:[#allocation2 + $0x430] sm:$0xff] %vm4532, %v4033
          %5693 = vst.msk [vmem:[#allocation2 + $0x438] sm:$0xff] %vm4532, %v4035
          %5694 = vst.msk [vmem:[#allocation2 + $0x440] sm:$0xff] %vm4532, %v4037
          %5695 = vst.msk [vmem:[#allocation2 + $0x448] sm:$0xff] %vm4532, %v4039
          %5696 = vst.msk [vmem:[#allocation2 + $0x450] sm:$0xff] %vm4532, %v4041
          %5697 = vst.msk [vmem:[#allocation2 + $0x458] sm:$0xff] %vm4532, %v4043
          %5698 = vst.msk [vmem:[#allocation2 + $0x460] sm:$0xff] %vm4532, %v4045
          %5699 = vst.msk [vmem:[#allocation2 + $0x468] sm:$0xff] %vm4532, %v4047
          %5700 = vst.msk [vmem:[#allocation2 + $0x470] sm:$0xff] %vm4532, %v4049
          %5701 = vst.msk [vmem:[#allocation2 + $0x478] sm:$0xff] %vm4532, %v4051
          %5702 = vst.msk [vmem:[#allocation2 + $0x480] sm:$0xff] %vm4532, %v4053
          %5703 = vst.msk [vmem:[#allocation2 + $0x488] sm:$0xff] %vm4532, %v4055
          %5704 = vst.msk [vmem:[#allocation2 + $0x490] sm:$0xff] %vm4532, %v4057
          %5705 = vst.msk [vmem:[#allocation2 + $0x498] sm:$0xff] %vm4532, %v4059
          %5706 = vst.msk [vmem:[#allocation2 + $0x4a0] sm:$0xff] %vm4532, %v4061
          %5707 = vst.msk [vmem:[#allocation2 + $0x4a8] sm:$0xff] %vm4532, %v4063
          %5708 = vst.msk [vmem:[#allocation2 + $0x4b0] sm:$0xff] %vm4532, %v4065
          %5709 = vst.msk [vmem:[#allocation2 + $0x4b8] sm:$0xff] %vm4532, %v4067
          %5710 = vst.msk [vmem:[#allocation2 + $0x4c0] sm:$0xff] %vm4532, %v4069
          %5711 = vst.msk [vmem:[#allocation2 + $0x4c8] sm:$0xff] %vm4532, %v4071
          %5712 = vst.msk [vmem:[#allocation2 + $0x4d0] sm:$0xff] %vm4532, %v4073
          %5713 = vst.msk [vmem:[#allocation2 + $0x4d8] sm:$0xff] %vm4532, %v4075
          %5714 = vst.msk [vmem:[#allocation2 + $0x4e0] sm:$0xff] %vm4532, %v4077
          %5715 = vst.msk [vmem:[#allocation2 + $0x4e8] sm:$0xff] %vm4532, %v4079
          %5716 = vst.msk [vmem:[#allocation2 + $0x4f0] sm:$0xff] %vm4532, %v4081
          %5717 = vst.msk [vmem:[#allocation2 + $0x4f8] sm:$0xff] %vm4532, %v4083
          %5718 = vst.msk [vmem:[#allocation2 + $0x500] sm:$0xff] %vm4532, %v4085
          %5719 = vst.msk [vmem:[#allocation2 + $0x508] sm:$0xff] %vm4532, %v4087
          %5720 = vst.msk [vmem:[#allocation2 + $0x510] sm:$0xff] %vm4532, %v4089
          %5721 = vst.msk [vmem:[#allocation2 + $0x518] sm:$0xff] %vm4532, %v4091
          %5722 = vst.msk [vmem:[#allocation2 + $0x520] sm:$0xff] %vm4532, %v4093
          %5723 = vst.msk [vmem:[#allocation2 + $0x528] sm:$0xff] %vm4532, %v4095
          %5724 = vst.msk [vmem:[#allocation2 + $0x530] sm:$0xff] %vm4532, %v4097
          %5725 = vst.msk [vmem:[#allocation2 + $0x538] sm:$0xff] %vm4532, %v4099
          %5726 = vst.msk [vmem:[#allocation2 + $0x540] sm:$0xff] %vm4532, %v4101
          %5727 = vst.msk [vmem:[#allocation2 + $0x548] sm:$0xff] %vm4532, %v4103
          %5728 = vst.msk [vmem:[#allocation2 + $0x550] sm:$0xff] %vm4532, %v4105
          %5729 = vst.msk [vmem:[#allocation2 + $0x558] sm:$0xff] %vm4532, %v4107
          %5730 = vst.msk [vmem:[#allocation2 + $0x560] sm:$0xff] %vm4532, %v4109
          %5731 = vst.msk [vmem:[#allocation2 + $0x568] sm:$0xff] %vm4532, %v4111
          %5732 = vst.msk [vmem:[#allocation2 + $0x570] sm:$0xff] %vm4532, %v4113
          %5733 = vst.msk [vmem:[#allocation2 + $0x578] sm:$0xff] %vm4532, %v4115
          %5734 = vst.msk [vmem:[#allocation2 + $0x580] sm:$0xff] %vm4532, %v4117
          %5735 = vst.msk [vmem:[#allocation2 + $0x588] sm:$0xff] %vm4532, %v4119
          %5736 = vst.msk [vmem:[#allocation2 + $0x590] sm:$0xff] %vm4532, %v4121
          %5737 = vst.msk [vmem:[#allocation2 + $0x598] sm:$0xff] %vm4532, %v4123
          %5738 = vst.msk [vmem:[#allocation2 + $0x5a0] sm:$0xff] %vm4532, %v4125
          %5739 = vst.msk [vmem:[#allocation2 + $0x5a8] sm:$0xff] %vm4532, %v4127
          %5740 = vst.msk [vmem:[#allocation2 + $0x5b0] sm:$0xff] %vm4532, %v4129
          %5741 = vst.msk [vmem:[#allocation2 + $0x5b8] sm:$0xff] %vm4532, %v4131
          %5742 = vst.msk [vmem:[#allocation2 + $0x5c0] sm:$0xff] %vm4532, %v4133
          %5743 = vst.msk [vmem:[#allocation2 + $0x5c8] sm:$0xff] %vm4532, %v4135
          %5744 = vst.msk [vmem:[#allocation2 + $0x5d0] sm:$0xff] %vm4532, %v4137
          %5745 = vst.msk [vmem:[#allocation2 + $0x5d8] sm:$0xff] %vm4532, %v4139
          %5746 = vst.msk [vmem:[#allocation2 + $0x5e0] sm:$0xff] %vm4532, %v4141
          %5747 = vst.msk [vmem:[#allocation2 + $0x5e8] sm:$0xff] %vm4532, %v4143
          %5748 = vst.msk [vmem:[#allocation2 + $0x5f0] sm:$0xff] %vm4532, %v4145
          %5749 = vst.msk [vmem:[#allocation2 + $0x5f8] sm:$0xff] %vm4532, %v4147
          %5750 = vst.msk [vmem:[#allocation2 + $0x600] sm:$0xff] %vm4532, %v4149
          %5751 = vst.msk [vmem:[#allocation2 + $0x608] sm:$0xff] %vm4532, %v4151
          %5752 = vst.msk [vmem:[#allocation2 + $0x610] sm:$0xff] %vm4532, %v4153
          %5753 = vst.msk [vmem:[#allocation2 + $0x618] sm:$0xff] %vm4532, %v4155
          %5754 = vst.msk [vmem:[#allocation2 + $0x620] sm:$0xff] %vm4532, %v4157
          %5755 = vst.msk [vmem:[#allocation2 + $0x628] sm:$0xff] %vm4532, %v4159
          %5756 = vst.msk [vmem:[#allocation2 + $0x630] sm:$0xff] %vm4532, %v4161
          %5757 = vst.msk [vmem:[#allocation2 + $0x638] sm:$0xff] %vm4532, %v4163
          %5758 = vst.msk [vmem:[#allocation2 + $0x640] sm:$0xff] %vm4532, %v4165
          %5759 = vst.msk [vmem:[#allocation2 + $0x648] sm:$0xff] %vm4532, %v4167
          %5760 = vst.msk [vmem:[#allocation2 + $0x650] sm:$0xff] %vm4532, %v4169
          %5761 = vst.msk [vmem:[#allocation2 + $0x658] sm:$0xff] %vm4532, %v4171
          %5762 = vst.msk [vmem:[#allocation2 + $0x660] sm:$0xff] %vm4532, %v4173
          %5763 = vst.msk [vmem:[#allocation2 + $0x668] sm:$0xff] %vm4532, %v4175
          %5764 = vst.msk [vmem:[#allocation2 + $0x670] sm:$0xff] %vm4532, %v4177
          %5765 = vst.msk [vmem:[#allocation2 + $0x678] sm:$0xff] %vm4532, %v4179
          %5766 = vst.msk [vmem:[#allocation2 + $0x680] sm:$0xff] %vm4532, %v4181
          %5767 = vst.msk [vmem:[#allocation2 + $0x688] sm:$0xff] %vm4532, %v4183
          %5768 = vst.msk [vmem:[#allocation2 + $0x690] sm:$0xff] %vm4532, %v4185
          %5769 = vst.msk [vmem:[#allocation2 + $0x698] sm:$0xff] %vm4532, %v4187
          %5770 = vst.msk [vmem:[#allocation2 + $0x6a0] sm:$0xff] %vm4532, %v4189
          %5771 = vst.msk [vmem:[#allocation2 + $0x6a8] sm:$0xff] %vm4532, %v4191
          %5772 = vst.msk [vmem:[#allocation2 + $0x6b0] sm:$0xff] %vm4532, %v4193
          %5773 = vst.msk [vmem:[#allocation2 + $0x6b8] sm:$0xff] %vm4532, %v4195
          %5774 = vst.msk [vmem:[#allocation2 + $0x6c0] sm:$0xff] %vm4532, %v4197
          %5775 = vst.msk [vmem:[#allocation2 + $0x6c8] sm:$0xff] %vm4532, %v4199
          %5776 = vst.msk [vmem:[#allocation2 + $0x6d0] sm:$0xff] %vm4532, %v4201
          %5777 = vst.msk [vmem:[#allocation2 + $0x6d8] sm:$0xff] %vm4532, %v4203
          %5778 = vst.msk [vmem:[#allocation2 + $0x6e0] sm:$0xff] %vm4532, %v4205
          %5779 = vst.msk [vmem:[#allocation2 + $0x6e8] sm:$0xff] %vm4532, %v4207
          %5780 = vst.msk [vmem:[#allocation2 + $0x6f0] sm:$0xff] %vm4532, %v4209
          %5781 = vst.msk [vmem:[#allocation2 + $0x6f8] sm:$0xff] %vm4532, %v4211
          %5782 = vst.msk [vmem:[#allocation2 + $0x700] sm:$0xff] %vm4532, %v4213
          %5783 = vst.msk [vmem:[#allocation2 + $0x708] sm:$0xff] %vm4532, %v4215
          %5784 = vst.msk [vmem:[#allocation2 + $0x710] sm:$0xff] %vm4532, %v4217
          %5785 = vst.msk [vmem:[#allocation2 + $0x718] sm:$0xff] %vm4532, %v4219
          %5786 = vst.msk [vmem:[#allocation2 + $0x720] sm:$0xff] %vm4532, %v4221
          %5787 = vst.msk [vmem:[#allocation2 + $0x728] sm:$0xff] %vm4532, %v4223
          %5788 = vst.msk [vmem:[#allocation2 + $0x730] sm:$0xff] %vm4532, %v4225
          %5789 = vst.msk [vmem:[#allocation2 + $0x738] sm:$0xff] %vm4532, %v4227
          %5790 = vst.msk [vmem:[#allocation2 + $0x740] sm:$0xff] %vm4532, %v4229
          %5791 = vst.msk [vmem:[#allocation2 + $0x748] sm:$0xff] %vm4532, %v4231
          %5792 = vst.msk [vmem:[#allocation2 + $0x750] sm:$0xff] %vm4532, %v4233
          %5793 = vst.msk [vmem:[#allocation2 + $0x758] sm:$0xff] %vm4532, %v4235
          %5794 = vst.msk [vmem:[#allocation2 + $0x760] sm:$0xff] %vm4532, %v4237
          %5795 = vst.msk [vmem:[#allocation2 + $0x768] sm:$0xff] %vm4532, %v4239
          %5796 = vst.msk [vmem:[#allocation2 + $0x770] sm:$0xff] %vm4532, %v4241
          %5797 = vst.msk [vmem:[#allocation2 + $0x778] sm:$0xff] %vm4532, %v4243
          %5798 = vst.msk [vmem:[#allocation2 + $0x780] sm:$0xff] %vm4532, %v4245
          %5799 = vst.msk [vmem:[#allocation2 + $0x788] sm:$0xff] %vm4532, %v4247
          %5800 = vst.msk [vmem:[#allocation2 + $0x790] sm:$0xff] %vm4532, %v4249
          %5801 = vst.msk [vmem:[#allocation2 + $0x798] sm:$0xff] %vm4532, %v4251
          %5802 = vst.msk [vmem:[#allocation2 + $0x7a0] sm:$0xff] %vm4532, %v4253
          %5803 = vst.msk [vmem:[#allocation2 + $0x7a8] sm:$0xff] %vm4532, %v4255
          %5804 = vst.msk [vmem:[#allocation2 + $0x7b0] sm:$0xff] %vm4532, %v4257
          %5805 = vst.msk [vmem:[#allocation2 + $0x7b8] sm:$0xff] %vm4532, %v4259
          %5806 = vst.msk [vmem:[#allocation2 + $0x7c0] sm:$0xff] %vm4532, %v4261
          %5807 = vst.msk [vmem:[#allocation2 + $0x7c8] sm:$0xff] %vm4532, %v4263
          %5808 = vst.msk [vmem:[#allocation2 + $0x7d0] sm:$0xff] %vm4532, %v4265
          %5809 = vst.msk [vmem:[#allocation2 + $0x7d8] sm:$0xff] %vm4532, %v4267
          %5810 = vst.msk [vmem:[#allocation2 + $0x7e0] sm:$0xff] %vm4532, %v4269
          %5811 = vst.msk [vmem:[#allocation2 + $0x7e8] sm:$0xff] %vm4532, %v4271
          %5812 = vst.msk [vmem:[#allocation2 + $0x7f0] sm:$0xff] %vm4532, %v4273
          %5813 = vst.msk [vmem:[#allocation2 + $0x7f8] sm:$0xff] %vm4532, %v4275
          %5814 = vst [vmem:[%s326] sm:$0xff] 0.0
        $region44: #{tpu_custom_call.1} parent=39 // pred_fallthru
          _
        %v5815 = vld [vmem:[#allocation2] sm:$0xff]
        %v5816 = vld [vmem:[#allocation2 + $0x8] sm:$0xff]
        %v5817 = vld [vmem:[#allocation2 + $0x10] sm:$0xff]
        %v5818 = vld [vmem:[#allocation2 + $0x18] sm:$0xff]
        %v5819 = vld [vmem:[#allocation2 + $0x20] sm:$0xff]
        %v5820 = vld [vmem:[#allocation2 + $0x28] sm:$0xff]
        %v5821 = vld [vmem:[#allocation2 + $0x30] sm:$0xff]
        %v5822 = vld [vmem:[#allocation2 + $0x38] sm:$0xff]
        %v5823 = vld [vmem:[#allocation2 + $0x40] sm:$0xff]
        %v5824 = vld [vmem:[#allocation2 + $0x48] sm:$0xff]
        %v5825 = vld [vmem:[#allocation2 + $0x50] sm:$0xff]
        %v5826 = vld [vmem:[#allocation2 + $0x58] sm:$0xff]
        %v5827 = vld [vmem:[#allocation2 + $0x60] sm:$0xff]
        %v5828 = vld [vmem:[#allocation2 + $0x68] sm:$0xff]
        %v5829 = vld [vmem:[#allocation2 + $0x70] sm:$0xff]
        %v5830 = vld [vmem:[#allocation2 + $0x78] sm:$0xff]
        %v5831 = vld [vmem:[#allocation2 + $0x80] sm:$0xff]
        %v5832 = vld [vmem:[#allocation2 + $0x88] sm:$0xff]
        %v5833 = vld [vmem:[#allocation2 + $0x90] sm:$0xff]
        %v5834 = vld [vmem:[#allocation2 + $0x98] sm:$0xff]
        %v5835 = vld [vmem:[#allocation2 + $0xa0] sm:$0xff]
        %v5836 = vld [vmem:[#allocation2 + $0xa8] sm:$0xff]
        %v5837 = vld [vmem:[#allocation2 + $0xb0] sm:$0xff]
        %v5838 = vld [vmem:[#allocation2 + $0xb8] sm:$0xff]
        %v5839 = vld [vmem:[#allocation2 + $0xc0] sm:$0xff]
        %v5840 = vld [vmem:[#allocation2 + $0xc8] sm:$0xff]
        %v5841 = vld [vmem:[#allocation2 + $0xd0] sm:$0xff]
        %v5842 = vld [vmem:[#allocation2 + $0xd8] sm:$0xff]
        %v5843 = vld [vmem:[#allocation2 + $0xe0] sm:$0xff]
        %v5844 = vld [vmem:[#allocation2 + $0xe8] sm:$0xff]
        %v5845 = vld [vmem:[#allocation2 + $0xf0] sm:$0xff]
        %v5846 = vld [vmem:[#allocation2 + $0xf8] sm:$0xff]
        %v5847 = vld [vmem:[#allocation2 + $0x100] sm:$0xff]
        %v5848 = vld [vmem:[#allocation2 + $0x108] sm:$0xff]
        %v5849 = vld [vmem:[#allocation2 + $0x110] sm:$0xff]
        %v5850 = vld [vmem:[#allocation2 + $0x118] sm:$0xff]
        %v5851 = vld [vmem:[#allocation2 + $0x120] sm:$0xff]
        %v5852 = vld [vmem:[#allocation2 + $0x128] sm:$0xff]
        %v5853 = vld [vmem:[#allocation2 + $0x130] sm:$0xff]
        %v5854 = vld [vmem:[#allocation2 + $0x138] sm:$0xff]
        %v5855 = vld [vmem:[#allocation2 + $0x140] sm:$0xff]
        %v5856 = vld [vmem:[#allocation2 + $0x148] sm:$0xff]
        %v5857 = vld [vmem:[#allocation2 + $0x150] sm:$0xff]
        %v5858 = vld [vmem:[#allocation2 + $0x158] sm:$0xff]
        %v5859 = vld [vmem:[#allocation2 + $0x160] sm:$0xff]
        %v5860 = vld [vmem:[#allocation2 + $0x168] sm:$0xff]
        %v5861 = vld [vmem:[#allocation2 + $0x170] sm:$0xff]
        %v5862 = vld [vmem:[#allocation2 + $0x178] sm:$0xff]
        %v5863 = vld [vmem:[#allocation2 + $0x180] sm:$0xff]
        %v5864 = vld [vmem:[#allocation2 + $0x188] sm:$0xff]
        %v5865 = vld [vmem:[#allocation2 + $0x190] sm:$0xff]
        %v5866 = vld [vmem:[#allocation2 + $0x198] sm:$0xff]
        %v5867 = vld [vmem:[#allocation2 + $0x1a0] sm:$0xff]
        %v5868 = vld [vmem:[#allocation2 + $0x1a8] sm:$0xff]
        %v5869 = vld [vmem:[#allocation2 + $0x1b0] sm:$0xff]
        %v5870 = vld [vmem:[#allocation2 + $0x1b8] sm:$0xff]
        %v5871 = vld [vmem:[#allocation2 + $0x1c0] sm:$0xff]
        %v5872 = vld [vmem:[#allocation2 + $0x1c8] sm:$0xff]
        %v5873 = vld [vmem:[#allocation2 + $0x1d0] sm:$0xff]
        %v5874 = vld [vmem:[#allocation2 + $0x1d8] sm:$0xff]
        %v5875 = vld [vmem:[#allocation2 + $0x1e0] sm:$0xff]
        %v5876 = vld [vmem:[#allocation2 + $0x1e8] sm:$0xff]
        %v5877 = vld [vmem:[#allocation2 + $0x1f0] sm:$0xff]
        %v5878 = vld [vmem:[#allocation2 + $0x1f8] sm:$0xff]
        %v5879 = vld [vmem:[#allocation2 + $0x200] sm:$0xff]
        %v5880 = vld [vmem:[#allocation2 + $0x208] sm:$0xff]
        %v5881 = vld [vmem:[#allocation2 + $0x210] sm:$0xff]
        %v5882 = vld [vmem:[#allocation2 + $0x218] sm:$0xff]
        %v5883 = vld [vmem:[#allocation2 + $0x220] sm:$0xff]
        %v5884 = vld [vmem:[#allocation2 + $0x228] sm:$0xff]
        %v5885 = vld [vmem:[#allocation2 + $0x230] sm:$0xff]
        %v5886 = vld [vmem:[#allocation2 + $0x238] sm:$0xff]
        %v5887 = vld [vmem:[#allocation2 + $0x240] sm:$0xff]
        %v5888 = vld [vmem:[#allocation2 + $0x248] sm:$0xff]
        %v5889 = vld [vmem:[#allocation2 + $0x250] sm:$0xff]
        %v5890 = vld [vmem:[#allocation2 + $0x258] sm:$0xff]
        %v5891 = vld [vmem:[#allocation2 + $0x260] sm:$0xff]
        %v5892 = vld [vmem:[#allocation2 + $0x268] sm:$0xff]
        %v5893 = vld [vmem:[#allocation2 + $0x270] sm:$0xff]
        %v5894 = vld [vmem:[#allocation2 + $0x278] sm:$0xff]
        %v5895 = vld [vmem:[#allocation2 + $0x280] sm:$0xff]
        %v5896 = vld [vmem:[#allocation2 + $0x288] sm:$0xff]
        %v5897 = vld [vmem:[#allocation2 + $0x290] sm:$0xff]
        %v5898 = vld [vmem:[#allocation2 + $0x298] sm:$0xff]
        %v5899 = vld [vmem:[#allocation2 + $0x2a0] sm:$0xff]
        %v5900 = vld [vmem:[#allocation2 + $0x2a8] sm:$0xff]
        %v5901 = vld [vmem:[#allocation2 + $0x2b0] sm:$0xff]
        %v5902 = vld [vmem:[#allocation2 + $0x2b8] sm:$0xff]
        %v5903 = vld [vmem:[#allocation2 + $0x2c0] sm:$0xff]
        %v5904 = vld [vmem:[#allocation2 + $0x2c8] sm:$0xff]
        %v5905 = vld [vmem:[#allocation2 + $0x2d0] sm:$0xff]
        %v5906 = vld [vmem:[#allocation2 + $0x2d8] sm:$0xff]
        %v5907 = vld [vmem:[#allocation2 + $0x2e0] sm:$0xff]
        %v5908 = vld [vmem:[#allocation2 + $0x2e8] sm:$0xff]
        %v5909 = vld [vmem:[#allocation2 + $0x2f0] sm:$0xff]
        %v5910 = vld [vmem:[#allocation2 + $0x2f8] sm:$0xff]
        %v5911 = vld [vmem:[#allocation2 + $0x300] sm:$0xff]
        %v5912 = vld [vmem:[#allocation2 + $0x308] sm:$0xff]
        %v5913 = vld [vmem:[#allocation2 + $0x310] sm:$0xff]
        %v5914 = vld [vmem:[#allocation2 + $0x318] sm:$0xff]
        %v5915 = vld [vmem:[#allocation2 + $0x320] sm:$0xff]
        %v5916 = vld [vmem:[#allocation2 + $0x328] sm:$0xff]
        %v5917 = vld [vmem:[#allocation2 + $0x330] sm:$0xff]
        %v5918 = vld [vmem:[#allocation2 + $0x338] sm:$0xff]
        %v5919 = vld [vmem:[#allocation2 + $0x340] sm:$0xff]
        %v5920 = vld [vmem:[#allocation2 + $0x348] sm:$0xff]
        %v5921 = vld [vmem:[#allocation2 + $0x350] sm:$0xff]
        %v5922 = vld [vmem:[#allocation2 + $0x358] sm:$0xff]
        %v5923 = vld [vmem:[#allocation2 + $0x360] sm:$0xff]
        %v5924 = vld [vmem:[#allocation2 + $0x368] sm:$0xff]
        %v5925 = vld [vmem:[#allocation2 + $0x370] sm:$0xff]
        %v5926 = vld [vmem:[#allocation2 + $0x378] sm:$0xff]
        %v5927 = vld [vmem:[#allocation2 + $0x380] sm:$0xff]
        %v5928 = vld [vmem:[#allocation2 + $0x388] sm:$0xff]
        %v5929 = vld [vmem:[#allocation2 + $0x390] sm:$0xff]
        %v5930 = vld [vmem:[#allocation2 + $0x398] sm:$0xff]
        %v5931 = vld [vmem:[#allocation2 + $0x3a0] sm:$0xff]
        %v5932 = vld [vmem:[#allocation2 + $0x3a8] sm:$0xff]
        %v5933 = vld [vmem:[#allocation2 + $0x3b0] sm:$0xff]
        %v5934 = vld [vmem:[#allocation2 + $0x3b8] sm:$0xff]
        %v5935 = vld [vmem:[#allocation2 + $0x3c0] sm:$0xff]
        %v5936 = vld [vmem:[#allocation2 + $0x3c8] sm:$0xff]
        %v5937 = vld [vmem:[#allocation2 + $0x3d0] sm:$0xff]
        %v5938 = vld [vmem:[#allocation2 + $0x3d8] sm:$0xff]
        %v5939 = vld [vmem:[#allocation2 + $0x3e0] sm:$0xff]
        %v5940 = vld [vmem:[#allocation2 + $0x3e8] sm:$0xff]
        %v5941 = vld [vmem:[#allocation2 + $0x3f0] sm:$0xff]
        %v5942 = vld [vmem:[#allocation2 + $0x3f8] sm:$0xff]
        %v5943 = vld [vmem:[#allocation2 + $0x400] sm:$0xff]
        %v5944 = vld [vmem:[#allocation2 + $0x408] sm:$0xff]
        %v5945 = vld [vmem:[#allocation2 + $0x410] sm:$0xff]
        %v5946 = vld [vmem:[#allocation2 + $0x418] sm:$0xff]
        %v5947 = vld [vmem:[#allocation2 + $0x420] sm:$0xff]
        %v5948 = vld [vmem:[#allocation2 + $0x428] sm:$0xff]
        %v5949 = vld [vmem:[#allocation2 + $0x430] sm:$0xff]
        %v5950 = vld [vmem:[#allocation2 + $0x438] sm:$0xff]
        %v5951 = vld [vmem:[#allocation2 + $0x440] sm:$0xff]
        %v5952 = vld [vmem:[#allocation2 + $0x448] sm:$0xff]
        %v5953 = vld [vmem:[#allocation2 + $0x450] sm:$0xff]
        %v5954 = vld [vmem:[#allocation2 + $0x458] sm:$0xff]
        %v5955 = vld [vmem:[#allocation2 + $0x460] sm:$0xff]
        %v5956 = vld [vmem:[#allocation2 + $0x468] sm:$0xff]
        %v5957 = vld [vmem:[#allocation2 + $0x470] sm:$0xff]
        %v5958 = vld [vmem:[#allocation2 + $0x478] sm:$0xff]
        %v5959 = vld [vmem:[#allocation2 + $0x480] sm:$0xff]
        %v5960 = vld [vmem:[#allocation2 + $0x488] sm:$0xff]
        %v5961 = vld [vmem:[#allocation2 + $0x490] sm:$0xff]
        %v5962 = vld [vmem:[#allocation2 + $0x498] sm:$0xff]
        %v5963 = vld [vmem:[#allocation2 + $0x4a0] sm:$0xff]
        %v5964 = vld [vmem:[#allocation2 + $0x4a8] sm:$0xff]
        %v5965 = vld [vmem:[#allocation2 + $0x4b0] sm:$0xff]
        %v5966 = vld [vmem:[#allocation2 + $0x4b8] sm:$0xff]
        %v5967 = vld [vmem:[#allocation2 + $0x4c0] sm:$0xff]
        %v5968 = vld [vmem:[#allocation2 + $0x4c8] sm:$0xff]
        %v5969 = vld [vmem:[#allocation2 + $0x4d0] sm:$0xff]
        %v5970 = vld [vmem:[#allocation2 + $0x4d8] sm:$0xff]
        %v5971 = vld [vmem:[#allocation2 + $0x4e0] sm:$0xff]
        %v5972 = vld [vmem:[#allocation2 + $0x4e8] sm:$0xff]
        %v5973 = vld [vmem:[#allocation2 + $0x4f0] sm:$0xff]
        %v5974 = vld [vmem:[#allocation2 + $0x4f8] sm:$0xff]
        %v5975 = vld [vmem:[#allocation2 + $0x500] sm:$0xff]
        %v5976 = vld [vmem:[#allocation2 + $0x508] sm:$0xff]
        %v5977 = vld [vmem:[#allocation2 + $0x510] sm:$0xff]
        %v5978 = vld [vmem:[#allocation2 + $0x518] sm:$0xff]
        %v5979 = vld [vmem:[#allocation2 + $0x520] sm:$0xff]
        %v5980 = vld [vmem:[#allocation2 + $0x528] sm:$0xff]
        %v5981 = vld [vmem:[#allocation2 + $0x530] sm:$0xff]
        %v5982 = vld [vmem:[#allocation2 + $0x538] sm:$0xff]
        %v5983 = vld [vmem:[#allocation2 + $0x540] sm:$0xff]
        %v5984 = vld [vmem:[#allocation2 + $0x548] sm:$0xff]
        %v5985 = vld [vmem:[#allocation2 + $0x550] sm:$0xff]
        %v5986 = vld [vmem:[#allocation2 + $0x558] sm:$0xff]
        %v5987 = vld [vmem:[#allocation2 + $0x560] sm:$0xff]
        %v5988 = vld [vmem:[#allocation2 + $0x568] sm:$0xff]
        %v5989 = vld [vmem:[#allocation2 + $0x570] sm:$0xff]
        %v5990 = vld [vmem:[#allocation2 + $0x578] sm:$0xff]
        %v5991 = vld [vmem:[#allocation2 + $0x580] sm:$0xff]
        %v5992 = vld [vmem:[#allocation2 + $0x588] sm:$0xff]
        %v5993 = vld [vmem:[#allocation2 + $0x590] sm:$0xff]
        %v5994 = vld [vmem:[#allocation2 + $0x598] sm:$0xff]
        %v5995 = vld [vmem:[#allocation2 + $0x5a0] sm:$0xff]
        %v5996 = vld [vmem:[#allocation2 + $0x5a8] sm:$0xff]
        %v5997 = vld [vmem:[#allocation2 + $0x5b0] sm:$0xff]
        %v5998 = vld [vmem:[#allocation2 + $0x5b8] sm:$0xff]
        %v5999 = vld [vmem:[#allocation2 + $0x5c0] sm:$0xff]
        %v6000 = vld [vmem:[#allocation2 + $0x5c8] sm:$0xff]
        %v6001 = vld [vmem:[#allocation2 + $0x5d0] sm:$0xff]
        %v6002 = vld [vmem:[#allocation2 + $0x5d8] sm:$0xff]
        %v6003 = vld [vmem:[#allocation2 + $0x5e0] sm:$0xff]
        %v6004 = vld [vmem:[#allocation2 + $0x5e8] sm:$0xff]
        %v6005 = vld [vmem:[#allocation2 + $0x5f0] sm:$0xff]
        %v6006 = vld [vmem:[#allocation2 + $0x5f8] sm:$0xff]
        %v6007 = vld [vmem:[#allocation2 + $0x600] sm:$0xff]
        %v6008 = vld [vmem:[#allocation2 + $0x608] sm:$0xff]
        %v6009 = vld [vmem:[#allocation2 + $0x610] sm:$0xff]
        %v6010 = vld [vmem:[#allocation2 + $0x618] sm:$0xff]
        %v6011 = vld [vmem:[#allocation2 + $0x620] sm:$0xff]
        %v6012 = vld [vmem:[#allocation2 + $0x628] sm:$0xff]
        %v6013 = vld [vmem:[#allocation2 + $0x630] sm:$0xff]
        %v6014 = vld [vmem:[#allocation2 + $0x638] sm:$0xff]
        %v6015 = vld [vmem:[#allocation2 + $0x640] sm:$0xff]
        %v6016 = vld [vmem:[#allocation2 + $0x648] sm:$0xff]
        %v6017 = vld [vmem:[#allocation2 + $0x650] sm:$0xff]
        %v6018 = vld [vmem:[#allocation2 + $0x658] sm:$0xff]
        %v6019 = vld [vmem:[#allocation2 + $0x660] sm:$0xff]
        %v6020 = vld [vmem:[#allocation2 + $0x668] sm:$0xff]
        %v6021 = vld [vmem:[#allocation2 + $0x670] sm:$0xff]
        %v6022 = vld [vmem:[#allocation2 + $0x678] sm:$0xff]
        %v6023 = vld [vmem:[#allocation2 + $0x680] sm:$0xff]
        %v6024 = vld [vmem:[#allocation2 + $0x688] sm:$0xff]
        %v6025 = vld [vmem:[#allocation2 + $0x690] sm:$0xff]
        %v6026 = vld [vmem:[#allocation2 + $0x698] sm:$0xff]
        %v6027 = vld [vmem:[#allocation2 + $0x6a0] sm:$0xff]
        %v6028 = vld [vmem:[#allocation2 + $0x6a8] sm:$0xff]
        %v6029 = vld [vmem:[#allocation2 + $0x6b0] sm:$0xff]
        %v6030 = vld [vmem:[#allocation2 + $0x6b8] sm:$0xff]
        %v6031 = vld [vmem:[#allocation2 + $0x6c0] sm:$0xff]
        %v6032 = vld [vmem:[#allocation2 + $0x6c8] sm:$0xff]
        %v6033 = vld [vmem:[#allocation2 + $0x6d0] sm:$0xff]
        %v6034 = vld [vmem:[#allocation2 + $0x6d8] sm:$0xff]
        %v6035 = vld [vmem:[#allocation2 + $0x6e0] sm:$0xff]
        %v6036 = vld [vmem:[#allocation2 + $0x6e8] sm:$0xff]
        %v6037 = vld [vmem:[#allocation2 + $0x6f0] sm:$0xff]
        %v6038 = vld [vmem:[#allocation2 + $0x6f8] sm:$0xff]
        %v6039 = vld [vmem:[#allocation2 + $0x700] sm:$0xff]
        %v6040 = vld [vmem:[#allocation2 + $0x708] sm:$0xff]
        %v6041 = vld [vmem:[#allocation2 + $0x710] sm:$0xff]
        %v6042 = vld [vmem:[#allocation2 + $0x718] sm:$0xff]
        %v6043 = vld [vmem:[#allocation2 + $0x720] sm:$0xff]
        %v6044 = vld [vmem:[#allocation2 + $0x728] sm:$0xff]
        %v6045 = vld [vmem:[#allocation2 + $0x730] sm:$0xff]
        %v6046 = vld [vmem:[#allocation2 + $0x738] sm:$0xff]
        %v6047 = vld [vmem:[#allocation2 + $0x740] sm:$0xff]
        %v6048 = vld [vmem:[#allocation2 + $0x748] sm:$0xff]
        %v6049 = vld [vmem:[#allocation2 + $0x750] sm:$0xff]
        %v6050 = vld [vmem:[#allocation2 + $0x758] sm:$0xff]
        %v6051 = vld [vmem:[#allocation2 + $0x760] sm:$0xff]
        %v6052 = vld [vmem:[#allocation2 + $0x768] sm:$0xff]
        %v6053 = vld [vmem:[#allocation2 + $0x770] sm:$0xff]
        %v6054 = vld [vmem:[#allocation2 + $0x778] sm:$0xff]
        %v6055 = vld [vmem:[#allocation2 + $0x780] sm:$0xff]
        %v6056 = vld [vmem:[#allocation2 + $0x788] sm:$0xff]
        %v6057 = vld [vmem:[#allocation2 + $0x790] sm:$0xff]
        %v6058 = vld [vmem:[#allocation2 + $0x798] sm:$0xff]
        %v6059 = vld [vmem:[#allocation2 + $0x7a0] sm:$0xff]
        %v6060 = vld [vmem:[#allocation2 + $0x7a8] sm:$0xff]
        %v6061 = vld [vmem:[#allocation2 + $0x7b0] sm:$0xff]
        %v6062 = vld [vmem:[#allocation2 + $0x7b8] sm:$0xff]
        %v6063 = vld [vmem:[#allocation2 + $0x7c0] sm:$0xff]
        %v6064 = vld [vmem:[#allocation2 + $0x7c8] sm:$0xff]
        %v6065 = vld [vmem:[#allocation2 + $0x7d0] sm:$0xff]
        %v6066 = vld [vmem:[#allocation2 + $0x7d8] sm:$0xff]
        %v6067 = vld [vmem:[#allocation2 + $0x7e0] sm:$0xff]
        %v6068 = vld [vmem:[#allocation2 + $0x7e8] sm:$0xff]
        %v6069 = vld [vmem:[#allocation2 + $0x7f0] sm:$0xff]
        %v6070 = vld [vmem:[#allocation2 + $0x7f8] sm:$0xff]
        %v6071 = vld [vmem:[%s344] sm:$0xff]
        %vm6072 = vcmask 64512
        %v6074 = vsel %vm6072, %v5815, 0
        %v6077 = vsel %vm6072, %v5816, 0
        %v6080 = vsel %vm6072, %v5817, 0
        %v6083 = vsel %vm6072, %v5818, 0
        %v6086 = vsel %vm6072, %v5819, 0
        %v6089 = vsel %vm6072, %v5820, 0
        %v6092 = vsel %vm6072, %v5821, 0
        %v6095 = vsel %vm6072, %v5822, 0
        %v6098 = vsel %vm6072, %v5823, 0
        %v6101 = vsel %vm6072, %v5824, 0
        %v6104 = vsel %vm6072, %v5825, 0
        %v6107 = vsel %vm6072, %v5826, 0
        %v6110 = vsel %vm6072, %v5827, 0
        %v6113 = vsel %vm6072, %v5828, 0
        %v6116 = vsel %vm6072, %v5829, 0
        %v6119 = vsel %vm6072, %v5830, 0
        %v6122 = vsel %vm6072, %v5831, 0
        %v6125 = vsel %vm6072, %v5832, 0
        %v6128 = vsel %vm6072, %v5833, 0
        %v6131 = vsel %vm6072, %v5834, 0
        %v6134 = vsel %vm6072, %v5835, 0
        %v6137 = vsel %vm6072, %v5836, 0
        %v6140 = vsel %vm6072, %v5837, 0
        %v6143 = vsel %vm6072, %v5838, 0
        %v6146 = vsel %vm6072, %v5839, 0
        %v6149 = vsel %vm6072, %v5840, 0
        %v6152 = vsel %vm6072, %v5841, 0
        %v6155 = vsel %vm6072, %v5842, 0
        %v6158 = vsel %vm6072, %v5843, 0
        %v6161 = vsel %vm6072, %v5844, 0
        %v6164 = vsel %vm6072, %v5845, 0
        %v6167 = vsel %vm6072, %v5846, 0
        %v6170 = vsel %vm6072, %v5847, 0
        %v6173 = vsel %vm6072, %v5848, 0
        %v6176 = vsel %vm6072, %v5849, 0
        %v6179 = vsel %vm6072, %v5850, 0
        %v6182 = vsel %vm6072, %v5851, 0
        %v6185 = vsel %vm6072, %v5852, 0
        %v6188 = vsel %vm6072, %v5853, 0
        %v6191 = vsel %vm6072, %v5854, 0
        %v6194 = vsel %vm6072, %v5855, 0
        %v6197 = vsel %vm6072, %v5856, 0
        %v6200 = vsel %vm6072, %v5857, 0
        %v6203 = vsel %vm6072, %v5858, 0
        %v6206 = vsel %vm6072, %v5859, 0
        %v6209 = vsel %vm6072, %v5860, 0
        %v6212 = vsel %vm6072, %v5861, 0
        %v6215 = vsel %vm6072, %v5862, 0
        %v6218 = vsel %vm6072, %v5863, 0
        %v6221 = vsel %vm6072, %v5864, 0
        %v6224 = vsel %vm6072, %v5865, 0
        %v6227 = vsel %vm6072, %v5866, 0
        %v6230 = vsel %vm6072, %v5867, 0
        %v6233 = vsel %vm6072, %v5868, 0
        %v6236 = vsel %vm6072, %v5869, 0
        %v6239 = vsel %vm6072, %v5870, 0
        %v6242 = vsel %vm6072, %v5871, 0
        %v6245 = vsel %vm6072, %v5872, 0
        %v6248 = vsel %vm6072, %v5873, 0
        %v6251 = vsel %vm6072, %v5874, 0
        %v6254 = vsel %vm6072, %v5875, 0
        %v6257 = vsel %vm6072, %v5876, 0
        %v6260 = vsel %vm6072, %v5877, 0
        %v6263 = vsel %vm6072, %v5878, 0
        %v6266 = vsel %vm6072, %v5879, 0
        %v6269 = vsel %vm6072, %v5880, 0
        %v6272 = vsel %vm6072, %v5881, 0
        %v6275 = vsel %vm6072, %v5882, 0
        %v6278 = vsel %vm6072, %v5883, 0
        %v6281 = vsel %vm6072, %v5884, 0
        %v6284 = vsel %vm6072, %v5885, 0
        %v6287 = vsel %vm6072, %v5886, 0
        %v6290 = vsel %vm6072, %v5887, 0
        %v6293 = vsel %vm6072, %v5888, 0
        %v6296 = vsel %vm6072, %v5889, 0
        %v6299 = vsel %vm6072, %v5890, 0
        %v6302 = vsel %vm6072, %v5891, 0
        %v6305 = vsel %vm6072, %v5892, 0
        %v6308 = vsel %vm6072, %v5893, 0
        %v6311 = vsel %vm6072, %v5894, 0
        %v6314 = vsel %vm6072, %v5895, 0
        %v6317 = vsel %vm6072, %v5896, 0
        %v6320 = vsel %vm6072, %v5897, 0
        %v6323 = vsel %vm6072, %v5898, 0
        %v6326 = vsel %vm6072, %v5899, 0
        %v6329 = vsel %vm6072, %v5900, 0
        %v6332 = vsel %vm6072, %v5901, 0
        %v6335 = vsel %vm6072, %v5902, 0
        %v6338 = vsel %vm6072, %v5903, 0
        %v6341 = vsel %vm6072, %v5904, 0
        %v6344 = vsel %vm6072, %v5905, 0
        %v6347 = vsel %vm6072, %v5906, 0
        %v6350 = vsel %vm6072, %v5907, 0
        %v6353 = vsel %vm6072, %v5908, 0
        %v6356 = vsel %vm6072, %v5909, 0
        %v6359 = vsel %vm6072, %v5910, 0
        %v6362 = vsel %vm6072, %v5911, 0
        %v6365 = vsel %vm6072, %v5912, 0
        %v6368 = vsel %vm6072, %v5913, 0
        %v6371 = vsel %vm6072, %v5914, 0
        %v6374 = vsel %vm6072, %v5915, 0
        %v6377 = vsel %vm6072, %v5916, 0
        %v6380 = vsel %vm6072, %v5917, 0
        %v6383 = vsel %vm6072, %v5918, 0
        %v6386 = vsel %vm6072, %v5919, 0
        %v6389 = vsel %vm6072, %v5920, 0
        %v6392 = vsel %vm6072, %v5921, 0
        %v6395 = vsel %vm6072, %v5922, 0
        %v6398 = vsel %vm6072, %v5923, 0
        %v6401 = vsel %vm6072, %v5924, 0
        %v6404 = vsel %vm6072, %v5925, 0
        %v6407 = vsel %vm6072, %v5926, 0
        %v6410 = vsel %vm6072, %v5927, 0
        %v6413 = vsel %vm6072, %v5928, 0
        %v6416 = vsel %vm6072, %v5929, 0
        %v6419 = vsel %vm6072, %v5930, 0
        %v6422 = vsel %vm6072, %v5931, 0
        %v6425 = vsel %vm6072, %v5932, 0
        %v6428 = vsel %vm6072, %v5933, 0
        %v6431 = vsel %vm6072, %v5934, 0
        %v6434 = vsel %vm6072, %v5935, 0
        %v6437 = vsel %vm6072, %v5936, 0
        %v6440 = vsel %vm6072, %v5937, 0
        %v6443 = vsel %vm6072, %v5938, 0
        %v6446 = vsel %vm6072, %v5939, 0
        %v6449 = vsel %vm6072, %v5940, 0
        %v6452 = vsel %vm6072, %v5941, 0
        %v6455 = vsel %vm6072, %v5942, 0
        %v6458 = vsel %vm6072, %v5943, 0
        %v6461 = vsel %vm6072, %v5944, 0
        %v6464 = vsel %vm6072, %v5945, 0
        %v6467 = vsel %vm6072, %v5946, 0
        %v6470 = vsel %vm6072, %v5947, 0
        %v6473 = vsel %vm6072, %v5948, 0
        %v6476 = vsel %vm6072, %v5949, 0
        %v6479 = vsel %vm6072, %v5950, 0
        %v6482 = vsel %vm6072, %v5951, 0
        %v6485 = vsel %vm6072, %v5952, 0
        %v6488 = vsel %vm6072, %v5953, 0
        %v6491 = vsel %vm6072, %v5954, 0
        %v6494 = vsel %vm6072, %v5955, 0
        %v6497 = vsel %vm6072, %v5956, 0
        %v6500 = vsel %vm6072, %v5957, 0
        %v6503 = vsel %vm6072, %v5958, 0
        %v6506 = vsel %vm6072, %v5959, 0
        %v6509 = vsel %vm6072, %v5960, 0
        %v6512 = vsel %vm6072, %v5961, 0
        %v6515 = vsel %vm6072, %v5962, 0
        %v6518 = vsel %vm6072, %v5963, 0
        %v6521 = vsel %vm6072, %v5964, 0
        %v6524 = vsel %vm6072, %v5965, 0
        %v6527 = vsel %vm6072, %v5966, 0
        %v6530 = vsel %vm6072, %v5967, 0
        %v6533 = vsel %vm6072, %v5968, 0
        %v6536 = vsel %vm6072, %v5969, 0
        %v6539 = vsel %vm6072, %v5970, 0
        %v6542 = vsel %vm6072, %v5971, 0
        %v6545 = vsel %vm6072, %v5972, 0
        %v6548 = vsel %vm6072, %v5973, 0
        %v6551 = vsel %vm6072, %v5974, 0
        %v6554 = vsel %vm6072, %v5975, 0
        %v6557 = vsel %vm6072, %v5976, 0
        %v6560 = vsel %vm6072, %v5977, 0
        %v6563 = vsel %vm6072, %v5978, 0
        %v6566 = vsel %vm6072, %v5979, 0
        %v6569 = vsel %vm6072, %v5980, 0
        %v6572 = vsel %vm6072, %v5981, 0
        %v6575 = vsel %vm6072, %v5982, 0
        %v6578 = vsel %vm6072, %v5983, 0
        %v6581 = vsel %vm6072, %v5984, 0
        %v6584 = vsel %vm6072, %v5985, 0
        %v6587 = vsel %vm6072, %v5986, 0
        %v6590 = vsel %vm6072, %v5987, 0
        %v6593 = vsel %vm6072, %v5988, 0
        %v6596 = vsel %vm6072, %v5989, 0
        %v6599 = vsel %vm6072, %v5990, 0
        %v6602 = vsel %vm6072, %v5991, 0
        %v6605 = vsel %vm6072, %v5992, 0
        %v6608 = vsel %vm6072, %v5993, 0
        %v6611 = vsel %vm6072, %v5994, 0
        %v6614 = vsel %vm6072, %v5995, 0
        %v6617 = vsel %vm6072, %v5996, 0
        %v6620 = vsel %vm6072, %v5997, 0
        %v6623 = vsel %vm6072, %v5998, 0
        %v6626 = vsel %vm6072, %v5999, 0
        %v6629 = vsel %vm6072, %v6000, 0
        %v6632 = vsel %vm6072, %v6001, 0
        %v6635 = vsel %vm6072, %v6002, 0
        %v6638 = vsel %vm6072, %v6003, 0
        %v6641 = vsel %vm6072, %v6004, 0
        %v6644 = vsel %vm6072, %v6005, 0
        %v6647 = vsel %vm6072, %v6006, 0
        %v6650 = vsel %vm6072, %v6007, 0
        %v6653 = vsel %vm6072, %v6008, 0
        %v6656 = vsel %vm6072, %v6009, 0
        %v6659 = vsel %vm6072, %v6010, 0
        %v6662 = vsel %vm6072, %v6011, 0
        %v6665 = vsel %vm6072, %v6012, 0
        %v6668 = vsel %vm6072, %v6013, 0
        %v6671 = vsel %vm6072, %v6014, 0
        %v6674 = vsel %vm6072, %v6015, 0
        %v6677 = vsel %vm6072, %v6016, 0
        %v6680 = vsel %vm6072, %v6017, 0
        %v6683 = vsel %vm6072, %v6018, 0
        %v6686 = vsel %vm6072, %v6019, 0
        %v6689 = vsel %vm6072, %v6020, 0
        %v6692 = vsel %vm6072, %v6021, 0
        %v6695 = vsel %vm6072, %v6022, 0
        %v6698 = vsel %vm6072, %v6023, 0
        %v6701 = vsel %vm6072, %v6024, 0
        %v6704 = vsel %vm6072, %v6025, 0
        %v6707 = vsel %vm6072, %v6026, 0
        %v6710 = vsel %vm6072, %v6027, 0
        %v6713 = vsel %vm6072, %v6028, 0
        %v6716 = vsel %vm6072, %v6029, 0
        %v6719 = vsel %vm6072, %v6030, 0
        %v6722 = vsel %vm6072, %v6031, 0
        %v6725 = vsel %vm6072, %v6032, 0
        %v6728 = vsel %vm6072, %v6033, 0
        %v6731 = vsel %vm6072, %v6034, 0
        %v6734 = vsel %vm6072, %v6035, 0
        %v6737 = vsel %vm6072, %v6036, 0
        %v6740 = vsel %vm6072, %v6037, 0
        %v6743 = vsel %vm6072, %v6038, 0
        %v6746 = vsel %vm6072, %v6039, 0
        %v6749 = vsel %vm6072, %v6040, 0
        %v6752 = vsel %vm6072, %v6041, 0
        %v6755 = vsel %vm6072, %v6042, 0
        %v6758 = vsel %vm6072, %v6043, 0
        %v6761 = vsel %vm6072, %v6044, 0
        %v6764 = vsel %vm6072, %v6045, 0
        %v6767 = vsel %vm6072, %v6046, 0
        %v6770 = vsel %vm6072, %v6047, 0
        %v6773 = vsel %vm6072, %v6048, 0
        %v6776 = vsel %vm6072, %v6049, 0
        %v6779 = vsel %vm6072, %v6050, 0
        %v6782 = vsel %vm6072, %v6051, 0
        %v6785 = vsel %vm6072, %v6052, 0
        %v6788 = vsel %vm6072, %v6053, 0
        %v6791 = vsel %vm6072, %v6054, 0
        %v6794 = vsel %vm6072, %v6055, 0
        %v6797 = vsel %vm6072, %v6056, 0
        %v6800 = vsel %vm6072, %v6057, 0
        %v6803 = vsel %vm6072, %v6058, 0
        %v6806 = vsel %vm6072, %v6059, 0
        %v6809 = vsel %vm6072, %v6060, 0
        %v6812 = vsel %vm6072, %v6061, 0
        %v6815 = vsel %vm6072, %v6062, 0
        %v6818 = vsel %vm6072, %v6063, 0
        %v6821 = vsel %vm6072, %v6064, 0
        %v6824 = vsel %vm6072, %v6065, 0
        %v6827 = vsel %vm6072, %v6066, 0
        %v6830 = vsel %vm6072, %v6067, 0
        %v6833 = vsel %vm6072, %v6068, 0
        %v6836 = vsel %vm6072, %v6069, 0
        %v6839 = vsel %vm6072, %v6070, 0
        %6841 = vmatprep.subr.mxu0 0.0
        %6842 = vmatpush1.msra.mxu0 0.0
        %6843 = vmatprep.subr.mxu0 0.0
        %6844 = vmatpush1.msra.mxu0 0.0
        %6845 = vmatprep.subr.mxu0 0.0
        %6846 = vmatpush1.msra.mxu0 0.0
        %6847 = vmatprep.subr.mxu0 0.0
        %6848 = vmatpush1.msra.mxu0 0.0
        %6849 = vmatprep.subr.mxu0 0.0
        %6850 = vmatpush1.msra.mxu0 0.0
        %6851 = vmatprep.subr.mxu0 0.0
        %6852 = vmatpush1.msra.mxu0 0.0
        %6853 = vmatprep.subr.mxu0 0.0
        %6854 = vmatpush1.msra.mxu0 0.0
        %6855 = vmatprep.subr.mxu0 0.0
        %6856 = vmatpush1.msra.mxu0 0.0
        %6857 = vmatprep.subr.mxu0 0.0
        %6858 = vmatpush1.msra.mxu0 0.0
        %6859 = vmatprep.subr.mxu0 0.0
        %6860 = vmatpush1.msra.mxu0 0.0
        %6861 = vmatprep.subr.mxu0 0.0
        %6862 = vmatpush1.msra.mxu0 0.0
        %6863 = vmatprep.subr.mxu0 0.0
        %6864 = vmatpush1.msra.mxu0 0.0
        %6865 = vmatprep.subr.mxu0 0.0
        %6866 = vmatpush1.msra.mxu0 0.0
        %6867 = vmatprep.subr.mxu0 0.0
        %6868 = vmatpush1.msra.mxu0 0.0
        %6869 = vmatprep.subr.mxu0 0.0
        %6870 = vmatpush1.msra.mxu0 0.0
        %6871 = vmatprep.subr.mxu0 0.0
        %6872 = vmatpush1.msra.mxu0 %v6071
        %6873 = vmatprep.subr.mxu0 0.0
        %6874 = vmatpush2.msra.mxu0 0.0
        %6875 = vmatprep.subr.mxu0 0.0
        %6876 = vmatpush2.msra.mxu0 0.0
        %6877 = vmatprep.subr.mxu0 0.0
        %6878 = vmatpush2.msra.mxu0 0.0
        %6879 = vmatprep.subr.mxu0 0.0
        %6880 = vmatpush2.msra.mxu0 0.0
        %6881 = vmatprep.subr.mxu0 0.0
        %6882 = vmatpush2.msra.mxu0 0.0
        %6883 = vmatprep.subr.mxu0 0.0
        %6884 = vmatpush2.msra.mxu0 0.0
        %6885 = vmatprep.subr.mxu0 0.0
        %6886 = vmatpush2.msra.mxu0 0.0
        %6887 = vmatprep.subr.mxu0 0.0
        %6888 = vmatpush2.msra.mxu0 0.0
        %6889 = vmatprep.subr.mxu0 0.0
        %6890 = vmatpush2.msra.mxu0 0.0
        %6891 = vmatprep.subr.mxu0 0.0
        %6892 = vmatpush2.msra.mxu0 0.0
        %6893 = vmatprep.subr.mxu0 0.0
        %6894 = vmatpush2.msra.mxu0 0.0
        %6895 = vmatprep.subr.mxu0 0.0
        %6896 = vmatpush2.msra.mxu0 0.0
        %6897 = vmatprep.subr.mxu0 0.0
        %6898 = vmatpush2.msra.mxu0 0.0
        %6899 = vmatprep.subr.mxu0 0.0
        %6900 = vmatpush2.msra.mxu0 0.0
        %6901 = vmatprep.subr.mxu0 0.0
        %6902 = vmatpush2.msra.mxu0 0.0
        %6903 = vmatprep.subr.mxu0 0.0
        %6904 = vmatpush2.msra.mxu0 0.0
        %6905 = vmatprep.mubr.f32.mxu0 0.0
        %6906 = vmatmul.mubr.f32.gmra.mxu0 %v6074
        %v6907 = vpop.f32.mrf.mxu0
        %v6908 = vadd.f32 0.0, %v6907
        %v6909 = vpop.f32.mrf.mxu0
        %6910 = vmatprep.mubr.f32.mxu0 0.0
        %6911 = vmatmul.mubr.f32.gmra.mxu0 %v6077
        %v6912 = vpop.f32.mrf.mxu0
        %v6913 = vadd.f32 0.0, %v6912
        %v6914 = vpop.f32.mrf.mxu0
        %6915 = vmatprep.mubr.f32.mxu0 0.0
        %6916 = vmatmul.mubr.f32.gmra.mxu0 %v6080
        %v6917 = vpop.f32.mrf.mxu0
        %v6918 = vadd.f32 0.0, %v6917
        %v6919 = vpop.f32.mrf.mxu0
        %6920 = vmatprep.mubr.f32.mxu0 0.0
        %6921 = vmatmul.mubr.f32.gmra.mxu0 %v6083
        %v6922 = vpop.f32.mrf.mxu0
        %v6923 = vadd.f32 0.0, %v6922
        %v6924 = vpop.f32.mrf.mxu0
        %6925 = vmatprep.mubr.f32.mxu0 0.0
        %6926 = vmatmul.mubr.f32.gmra.mxu0 %v6086
        %v6927 = vpop.f32.mrf.mxu0
        %v6928 = vadd.f32 0.0, %v6927
        %v6929 = vpop.f32.mrf.mxu0
        %6930 = vmatprep.mubr.f32.mxu0 0.0
        %6931 = vmatmul.mubr.f32.gmra.mxu0 %v6089
        %v6932 = vpop.f32.mrf.mxu0
        %v6933 = vadd.f32 0.0, %v6932
        %v6934 = vpop.f32.mrf.mxu0
        %6935 = vmatprep.mubr.f32.mxu0 0.0
        %6936 = vmatmul.mubr.f32.gmra.mxu0 %v6092
        %v6937 = vpop.f32.mrf.mxu0
        %v6938 = vadd.f32 0.0, %v6937
        %v6939 = vpop.f32.mrf.mxu0
        %6940 = vmatprep.mubr.f32.mxu0 0.0
        %6941 = vmatmul.mubr.f32.gmra.mxu0 %v6095
        %v6942 = vpop.f32.mrf.mxu0
        %v6943 = vadd.f32 0.0, %v6942
        %v6944 = vpop.f32.mrf.mxu0
        %6945 = vmatprep.mubr.f32.mxu0 0.0
        %6946 = vmatmul.mubr.f32.gmra.mxu0 %v6098
        %v6947 = vpop.f32.mrf.mxu0
        %v6948 = vadd.f32 0.0, %v6947
        %v6949 = vpop.f32.mrf.mxu0
        %6950 = vmatprep.mubr.f32.mxu0 0.0
        %6951 = vmatmul.mubr.f32.gmra.mxu0 %v6101
        %v6952 = vpop.f32.mrf.mxu0
        %v6953 = vadd.f32 0.0, %v6952
        %v6954 = vpop.f32.mrf.mxu0
        %6955 = vmatprep.mubr.f32.mxu0 0.0
        %6956 = vmatmul.mubr.f32.gmra.mxu0 %v6104
        %v6957 = vpop.f32.mrf.mxu0
        %v6958 = vadd.f32 0.0, %v6957
        %v6959 = vpop.f32.mrf.mxu0
        %6960 = vmatprep.mubr.f32.mxu0 0.0
        %6961 = vmatmul.mubr.f32.gmra.mxu0 %v6107
        %v6962 = vpop.f32.mrf.mxu0
        %v6963 = vadd.f32 0.0, %v6962
        %v6964 = vpop.f32.mrf.mxu0
        %6965 = vmatprep.mubr.f32.mxu0 0.0
        %6966 = vmatmul.mubr.f32.gmra.mxu0 %v6110
        %v6967 = vpop.f32.mrf.mxu0
        %v6968 = vadd.f32 0.0, %v6967
        %v6969 = vpop.f32.mrf.mxu0
        %6970 = vmatprep.mubr.f32.mxu0 0.0
        %6971 = vmatmul.mubr.f32.gmra.mxu0 %v6113
        %v6972 = vpop.f32.mrf.mxu0
        %v6973 = vadd.f32 0.0, %v6972
        %v6974 = vpop.f32.mrf.mxu0
        %6975 = vmatprep.mubr.f32.mxu0 0.0
        %6976 = vmatmul.mubr.f32.gmra.mxu0 %v6116
        %v6977 = vpop.f32.mrf.mxu0
        %v6978 = vadd.f32 0.0, %v6977
        %v6979 = vpop.f32.mrf.mxu0
        %6980 = vmatprep.mubr.f32.mxu0 0.0
        %6981 = vmatmul.mubr.f32.gmra.mxu0 %v6119
        %v6982 = vpop.f32.mrf.mxu0
        %v6983 = vadd.f32 0.0, %v6982
        %v6984 = vpop.f32.mrf.mxu0
        %6985 = vmatprep.mubr.f32.mxu0 0.0
        %6986 = vmatmul.mubr.f32.gmra.mxu0 %v6122
        %v6987 = vpop.f32.mrf.mxu0
        %v6988 = vadd.f32 0.0, %v6987
        %v6989 = vpop.f32.mrf.mxu0
        %6990 = vmatprep.mubr.f32.mxu0 0.0
        %6991 = vmatmul.mubr.f32.gmra.mxu0 %v6125
        %v6992 = vpop.f32.mrf.mxu0
        %v6993 = vadd.f32 0.0, %v6992
        %v6994 = vpop.f32.mrf.mxu0
        %6995 = vmatprep.mubr.f32.mxu0 0.0
        %6996 = vmatmul.mubr.f32.gmra.mxu0 %v6128
        %v6997 = vpop.f32.mrf.mxu0
        %v6998 = vadd.f32 0.0, %v6997
        %v6999 = vpop.f32.mrf.mxu0
        %7000 = vmatprep.mubr.f32.mxu0 0.0
        %7001 = vmatmul.mubr.f32.gmra.mxu0 %v6131
        %v7002 = vpop.f32.mrf.mxu0
        %v7003 = vadd.f32 0.0, %v7002
        %v7004 = vpop.f32.mrf.mxu0
        %7005 = vmatprep.mubr.f32.mxu0 0.0
        %7006 = vmatmul.mubr.f32.gmra.mxu0 %v6134
        %v7007 = vpop.f32.mrf.mxu0
        %v7008 = vadd.f32 0.0, %v7007
        %v7009 = vpop.f32.mrf.mxu0
        %7010 = vmatprep.mubr.f32.mxu0 0.0
        %7011 = vmatmul.mubr.f32.gmra.mxu0 %v6137
        %v7012 = vpop.f32.mrf.mxu0
        %v7013 = vadd.f32 0.0, %v7012
        %v7014 = vpop.f32.mrf.mxu0
        %7015 = vmatprep.mubr.f32.mxu0 0.0
        %7016 = vmatmul.mubr.f32.gmra.mxu0 %v6140
        %v7017 = vpop.f32.mrf.mxu0
        %v7018 = vadd.f32 0.0, %v7017
        %v7019 = vpop.f32.mrf.mxu0
        %7020 = vmatprep.mubr.f32.mxu0 0.0
        %7021 = vmatmul.mubr.f32.gmra.mxu0 %v6143
        %v7022 = vpop.f32.mrf.mxu0
        %v7023 = vadd.f32 0.0, %v7022
        %v7024 = vpop.f32.mrf.mxu0
        %7025 = vmatprep.mubr.f32.mxu0 0.0
        %7026 = vmatmul.mubr.f32.gmra.mxu0 %v6146
        %v7027 = vpop.f32.mrf.mxu0
        %v7028 = vadd.f32 0.0, %v7027
        %v7029 = vpop.f32.mrf.mxu0
        %7030 = vmatprep.mubr.f32.mxu0 0.0
        %7031 = vmatmul.mubr.f32.gmra.mxu0 %v6149
        %v7032 = vpop.f32.mrf.mxu0
        %v7033 = vadd.f32 0.0, %v7032
        %v7034 = vpop.f32.mrf.mxu0
        %7035 = vmatprep.mubr.f32.mxu0 0.0
        %7036 = vmatmul.mubr.f32.gmra.mxu0 %v6152
        %v7037 = vpop.f32.mrf.mxu0
        %v7038 = vadd.f32 0.0, %v7037
        %v7039 = vpop.f32.mrf.mxu0
        %7040 = vmatprep.mubr.f32.mxu0 0.0
        %7041 = vmatmul.mubr.f32.gmra.mxu0 %v6155
        %v7042 = vpop.f32.mrf.mxu0
        %v7043 = vadd.f32 0.0, %v7042
        %v7044 = vpop.f32.mrf.mxu0
        %7045 = vmatprep.mubr.f32.mxu0 0.0
        %7046 = vmatmul.mubr.f32.gmra.mxu0 %v6158
        %v7047 = vpop.f32.mrf.mxu0
        %v7048 = vadd.f32 0.0, %v7047
        %v7049 = vpop.f32.mrf.mxu0
        %7050 = vmatprep.mubr.f32.mxu0 0.0
        %7051 = vmatmul.mubr.f32.gmra.mxu0 %v6161
        %v7052 = vpop.f32.mrf.mxu0
        %v7053 = vadd.f32 0.0, %v7052
        %v7054 = vpop.f32.mrf.mxu0
        %7055 = vmatprep.mubr.f32.mxu0 0.0
        %7056 = vmatmul.mubr.f32.gmra.mxu0 %v6164
        %v7057 = vpop.f32.mrf.mxu0
        %v7058 = vadd.f32 0.0, %v7057
        %v7059 = vpop.f32.mrf.mxu0
        %7060 = vmatprep.mubr.f32.mxu0 0.0
        %7061 = vmatmul.mubr.f32.gmra.mxu0 %v6167
        %v7062 = vpop.f32.mrf.mxu0
        %v7063 = vadd.f32 0.0, %v7062
        %v7064 = vpop.f32.mrf.mxu0
        %7065 = vmatprep.mubr.f32.mxu0 0.0
        %7066 = vmatmul.mubr.f32.gmra.mxu0 %v6170
        %v7067 = vpop.f32.mrf.mxu0
        %v7068 = vadd.f32 0.0, %v7067
        %v7069 = vpop.f32.mrf.mxu0
        %7070 = vmatprep.mubr.f32.mxu0 0.0
        %7071 = vmatmul.mubr.f32.gmra.mxu0 %v6173
        %v7072 = vpop.f32.mrf.mxu0
        %v7073 = vadd.f32 0.0, %v7072
        %v7074 = vpop.f32.mrf.mxu0
        %7075 = vmatprep.mubr.f32.mxu0 0.0
        %7076 = vmatmul.mubr.f32.gmra.mxu0 %v6176
        %v7077 = vpop.f32.mrf.mxu0
        %v7078 = vadd.f32 0.0, %v7077
        %v7079 = vpop.f32.mrf.mxu0
        %7080 = vmatprep.mubr.f32.mxu0 0.0
        %7081 = vmatmul.mubr.f32.gmra.mxu0 %v6179
        %v7082 = vpop.f32.mrf.mxu0
        %v7083 = vadd.f32 0.0, %v7082
        %v7084 = vpop.f32.mrf.mxu0
        %7085 = vmatprep.mubr.f32.mxu0 0.0
        %7086 = vmatmul.mubr.f32.gmra.mxu0 %v6182
        %v7087 = vpop.f32.mrf.mxu0
        %v7088 = vadd.f32 0.0, %v7087
        %v7089 = vpop.f32.mrf.mxu0
        %7090 = vmatprep.mubr.f32.mxu0 0.0
        %7091 = vmatmul.mubr.f32.gmra.mxu0 %v6185
        %v7092 = vpop.f32.mrf.mxu0
        %v7093 = vadd.f32 0.0, %v7092
        %v7094 = vpop.f32.mrf.mxu0
        %7095 = vmatprep.mubr.f32.mxu0 0.0
        %7096 = vmatmul.mubr.f32.gmra.mxu0 %v6188
        %v7097 = vpop.f32.mrf.mxu0
        %v7098 = vadd.f32 0.0, %v7097
        %v7099 = vpop.f32.mrf.mxu0
        %7100 = vmatprep.mubr.f32.mxu0 0.0
        %7101 = vmatmul.mubr.f32.gmra.mxu0 %v6191
        %v7102 = vpop.f32.mrf.mxu0
        %v7103 = vadd.f32 0.0, %v7102
        %v7104 = vpop.f32.mrf.mxu0
        %7105 = vmatprep.mubr.f32.mxu0 0.0
        %7106 = vmatmul.mubr.f32.gmra.mxu0 %v6194
        %v7107 = vpop.f32.mrf.mxu0
        %v7108 = vadd.f32 0.0, %v7107
        %v7109 = vpop.f32.mrf.mxu0
        %7110 = vmatprep.mubr.f32.mxu0 0.0
        %7111 = vmatmul.mubr.f32.gmra.mxu0 %v6197
        %v7112 = vpop.f32.mrf.mxu0
        %v7113 = vadd.f32 0.0, %v7112
        %v7114 = vpop.f32.mrf.mxu0
        %7115 = vmatprep.mubr.f32.mxu0 0.0
        %7116 = vmatmul.mubr.f32.gmra.mxu0 %v6200
        %v7117 = vpop.f32.mrf.mxu0
        %v7118 = vadd.f32 0.0, %v7117
        %v7119 = vpop.f32.mrf.mxu0
        %7120 = vmatprep.mubr.f32.mxu0 0.0
        %7121 = vmatmul.mubr.f32.gmra.mxu0 %v6203
        %v7122 = vpop.f32.mrf.mxu0
        %v7123 = vadd.f32 0.0, %v7122
        %v7124 = vpop.f32.mrf.mxu0
        %7125 = vmatprep.mubr.f32.mxu0 0.0
        %7126 = vmatmul.mubr.f32.gmra.mxu0 %v6206
        %v7127 = vpop.f32.mrf.mxu0
        %v7128 = vadd.f32 0.0, %v7127
        %v7129 = vpop.f32.mrf.mxu0
        %7130 = vmatprep.mubr.f32.mxu0 0.0
        %7131 = vmatmul.mubr.f32.gmra.mxu0 %v6209
        %v7132 = vpop.f32.mrf.mxu0
        %v7133 = vadd.f32 0.0, %v7132
        %v7134 = vpop.f32.mrf.mxu0
        %7135 = vmatprep.mubr.f32.mxu0 0.0
        %7136 = vmatmul.mubr.f32.gmra.mxu0 %v6212
        %v7137 = vpop.f32.mrf.mxu0
        %v7138 = vadd.f32 0.0, %v7137
        %v7139 = vpop.f32.mrf.mxu0
        %7140 = vmatprep.mubr.f32.mxu0 0.0
        %7141 = vmatmul.mubr.f32.gmra.mxu0 %v6215
        %v7142 = vpop.f32.mrf.mxu0
        %v7143 = vadd.f32 0.0, %v7142
        %v7144 = vpop.f32.mrf.mxu0
        %7145 = vmatprep.mubr.f32.mxu0 0.0
        %7146 = vmatmul.mubr.f32.gmra.mxu0 %v6218
        %v7147 = vpop.f32.mrf.mxu0
        %v7148 = vadd.f32 0.0, %v7147
        %v7149 = vpop.f32.mrf.mxu0
        %7150 = vmatprep.mubr.f32.mxu0 0.0
        %7151 = vmatmul.mubr.f32.gmra.mxu0 %v6221
        %v7152 = vpop.f32.mrf.mxu0
        %v7153 = vadd.f32 0.0, %v7152
        %v7154 = vpop.f32.mrf.mxu0
        %7155 = vmatprep.mubr.f32.mxu0 0.0
        %7156 = vmatmul.mubr.f32.gmra.mxu0 %v6224
        %v7157 = vpop.f32.mrf.mxu0
        %v7158 = vadd.f32 0.0, %v7157
        %v7159 = vpop.f32.mrf.mxu0
        %7160 = vmatprep.mubr.f32.mxu0 0.0
        %7161 = vmatmul.mubr.f32.gmra.mxu0 %v6227
        %v7162 = vpop.f32.mrf.mxu0
        %v7163 = vadd.f32 0.0, %v7162
        %v7164 = vpop.f32.mrf.mxu0
        %7165 = vmatprep.mubr.f32.mxu0 0.0
        %7166 = vmatmul.mubr.f32.gmra.mxu0 %v6230
        %v7167 = vpop.f32.mrf.mxu0
        %v7168 = vadd.f32 0.0, %v7167
        %v7169 = vpop.f32.mrf.mxu0
        %7170 = vmatprep.mubr.f32.mxu0 0.0
        %7171 = vmatmul.mubr.f32.gmra.mxu0 %v6233
        %v7172 = vpop.f32.mrf.mxu0
        %v7173 = vadd.f32 0.0, %v7172
        %v7174 = vpop.f32.mrf.mxu0
        %7175 = vmatprep.mubr.f32.mxu0 0.0
        %7176 = vmatmul.mubr.f32.gmra.mxu0 %v6236
        %v7177 = vpop.f32.mrf.mxu0
        %v7178 = vadd.f32 0.0, %v7177
        %v7179 = vpop.f32.mrf.mxu0
        %7180 = vmatprep.mubr.f32.mxu0 0.0
        %7181 = vmatmul.mubr.f32.gmra.mxu0 %v6239
        %v7182 = vpop.f32.mrf.mxu0
        %v7183 = vadd.f32 0.0, %v7182
        %v7184 = vpop.f32.mrf.mxu0
        %7185 = vmatprep.mubr.f32.mxu0 0.0
        %7186 = vmatmul.mubr.f32.gmra.mxu0 %v6242
        %v7187 = vpop.f32.mrf.mxu0
        %v7188 = vadd.f32 0.0, %v7187
        %v7189 = vpop.f32.mrf.mxu0
        %7190 = vmatprep.mubr.f32.mxu0 0.0
        %7191 = vmatmul.mubr.f32.gmra.mxu0 %v6245
        %v7192 = vpop.f32.mrf.mxu0
        %v7193 = vadd.f32 0.0, %v7192
        %v7194 = vpop.f32.mrf.mxu0
        %7195 = vmatprep.mubr.f32.mxu0 0.0
        %7196 = vmatmul.mubr.f32.gmra.mxu0 %v6248
        %v7197 = vpop.f32.mrf.mxu0
        %v7198 = vadd.f32 0.0, %v7197
        %v7199 = vpop.f32.mrf.mxu0
        %7200 = vmatprep.mubr.f32.mxu0 0.0
        %7201 = vmatmul.mubr.f32.gmra.mxu0 %v6251
        %v7202 = vpop.f32.mrf.mxu0
        %v7203 = vadd.f32 0.0, %v7202
        %v7204 = vpop.f32.mrf.mxu0
        %7205 = vmatprep.mubr.f32.mxu0 0.0
        %7206 = vmatmul.mubr.f32.gmra.mxu0 %v6254
        %v7207 = vpop.f32.mrf.mxu0
        %v7208 = vadd.f32 0.0, %v7207
        %v7209 = vpop.f32.mrf.mxu0
        %7210 = vmatprep.mubr.f32.mxu0 0.0
        %7211 = vmatmul.mubr.f32.gmra.mxu0 %v6257
        %v7212 = vpop.f32.mrf.mxu0
        %v7213 = vadd.f32 0.0, %v7212
        %v7214 = vpop.f32.mrf.mxu0
        %7215 = vmatprep.mubr.f32.mxu0 0.0
        %7216 = vmatmul.mubr.f32.gmra.mxu0 %v6260
        %v7217 = vpop.f32.mrf.mxu0
        %v7218 = vadd.f32 0.0, %v7217
        %v7219 = vpop.f32.mrf.mxu0
        %7220 = vmatprep.mubr.f32.mxu0 0.0
        %7221 = vmatmul.mubr.f32.gmra.mxu0 %v6263
        %v7222 = vpop.f32.mrf.mxu0
        %v7223 = vadd.f32 0.0, %v7222
        %v7224 = vpop.f32.mrf.mxu0
        %7225 = vmatprep.mubr.f32.mxu0 0.0
        %7226 = vmatmul.mubr.f32.gmra.mxu0 %v6266
        %v7227 = vpop.f32.mrf.mxu0
        %v7228 = vadd.f32 0.0, %v7227
        %v7229 = vpop.f32.mrf.mxu0
        %7230 = vmatprep.mubr.f32.mxu0 0.0
        %7231 = vmatmul.mubr.f32.gmra.mxu0 %v6269
        %v7232 = vpop.f32.mrf.mxu0
        %v7233 = vadd.f32 0.0, %v7232
        %v7234 = vpop.f32.mrf.mxu0
        %7235 = vmatprep.mubr.f32.mxu0 0.0
        %7236 = vmatmul.mubr.f32.gmra.mxu0 %v6272
        %v7237 = vpop.f32.mrf.mxu0
        %v7238 = vadd.f32 0.0, %v7237
        %v7239 = vpop.f32.mrf.mxu0
        %7240 = vmatprep.mubr.f32.mxu0 0.0
        %7241 = vmatmul.mubr.f32.gmra.mxu0 %v6275
        %v7242 = vpop.f32.mrf.mxu0
        %v7243 = vadd.f32 0.0, %v7242
        %v7244 = vpop.f32.mrf.mxu0
        %7245 = vmatprep.mubr.f32.mxu0 0.0
        %7246 = vmatmul.mubr.f32.gmra.mxu0 %v6278
        %v7247 = vpop.f32.mrf.mxu0
        %v7248 = vadd.f32 0.0, %v7247
        %v7249 = vpop.f32.mrf.mxu0
        %7250 = vmatprep.mubr.f32.mxu0 0.0
        %7251 = vmatmul.mubr.f32.gmra.mxu0 %v6281
        %v7252 = vpop.f32.mrf.mxu0
        %v7253 = vadd.f32 0.0, %v7252
        %v7254 = vpop.f32.mrf.mxu0
        %7255 = vmatprep.mubr.f32.mxu0 0.0
        %7256 = vmatmul.mubr.f32.gmra.mxu0 %v6284
        %v7257 = vpop.f32.mrf.mxu0
        %v7258 = vadd.f32 0.0, %v7257
        %v7259 = vpop.f32.mrf.mxu0
        %7260 = vmatprep.mubr.f32.mxu0 0.0
        %7261 = vmatmul.mubr.f32.gmra.mxu0 %v6287
        %v7262 = vpop.f32.mrf.mxu0
        %v7263 = vadd.f32 0.0, %v7262
        %v7264 = vpop.f32.mrf.mxu0
        %7265 = vmatprep.mubr.f32.mxu0 0.0
        %7266 = vmatmul.mubr.f32.gmra.mxu0 %v6290
        %v7267 = vpop.f32.mrf.mxu0
        %v7268 = vadd.f32 0.0, %v7267
        %v7269 = vpop.f32.mrf.mxu0
        %7270 = vmatprep.mubr.f32.mxu0 0.0
        %7271 = vmatmul.mubr.f32.gmra.mxu0 %v6293
        %v7272 = vpop.f32.mrf.mxu0
        %v7273 = vadd.f32 0.0, %v7272
        %v7274 = vpop.f32.mrf.mxu0
        %7275 = vmatprep.mubr.f32.mxu0 0.0
        %7276 = vmatmul.mubr.f32.gmra.mxu0 %v6296
        %v7277 = vpop.f32.mrf.mxu0
        %v7278 = vadd.f32 0.0, %v7277
        %v7279 = vpop.f32.mrf.mxu0
        %7280 = vmatprep.mubr.f32.mxu0 0.0
        %7281 = vmatmul.mubr.f32.gmra.mxu0 %v6299
        %v7282 = vpop.f32.mrf.mxu0
        %v7283 = vadd.f32 0.0, %v7282
        %v7284 = vpop.f32.mrf.mxu0
        %7285 = vmatprep.mubr.f32.mxu0 0.0
        %7286 = vmatmul.mubr.f32.gmra.mxu0 %v6302
        %v7287 = vpop.f32.mrf.mxu0
        %v7288 = vadd.f32 0.0, %v7287
        %v7289 = vpop.f32.mrf.mxu0
        %7290 = vmatprep.mubr.f32.mxu0 0.0
        %7291 = vmatmul.mubr.f32.gmra.mxu0 %v6305
        %v7292 = vpop.f32.mrf.mxu0
        %v7293 = vadd.f32 0.0, %v7292
        %v7294 = vpop.f32.mrf.mxu0
        %7295 = vmatprep.mubr.f32.mxu0 0.0
        %7296 = vmatmul.mubr.f32.gmra.mxu0 %v6308
        %v7297 = vpop.f32.mrf.mxu0
        %v7298 = vadd.f32 0.0, %v7297
        %v7299 = vpop.f32.mrf.mxu0
        %7300 = vmatprep.mubr.f32.mxu0 0.0
        %7301 = vmatmul.mubr.f32.gmra.mxu0 %v6311
        %v7302 = vpop.f32.mrf.mxu0
        %v7303 = vadd.f32 0.0, %v7302
        %v7304 = vpop.f32.mrf.mxu0
        %7305 = vmatprep.mubr.f32.mxu0 0.0
        %7306 = vmatmul.mubr.f32.gmra.mxu0 %v6314
        %v7307 = vpop.f32.mrf.mxu0
        %v7308 = vadd.f32 0.0, %v7307
        %v7309 = vpop.f32.mrf.mxu0
        %7310 = vmatprep.mubr.f32.mxu0 0.0
        %7311 = vmatmul.mubr.f32.gmra.mxu0 %v6317
        %v7312 = vpop.f32.mrf.mxu0
        %v7313 = vadd.f32 0.0, %v7312
        %v7314 = vpop.f32.mrf.mxu0
        %7315 = vmatprep.mubr.f32.mxu0 0.0
        %7316 = vmatmul.mubr.f32.gmra.mxu0 %v6320
        %v7317 = vpop.f32.mrf.mxu0
        %v7318 = vadd.f32 0.0, %v7317
        %v7319 = vpop.f32.mrf.mxu0
        %7320 = vmatprep.mubr.f32.mxu0 0.0
        %7321 = vmatmul.mubr.f32.gmra.mxu0 %v6323
        %v7322 = vpop.f32.mrf.mxu0
        %v7323 = vadd.f32 0.0, %v7322
        %v7324 = vpop.f32.mrf.mxu0
        %7325 = vmatprep.mubr.f32.mxu0 0.0
        %7326 = vmatmul.mubr.f32.gmra.mxu0 %v6326
        %v7327 = vpop.f32.mrf.mxu0
        %v7328 = vadd.f32 0.0, %v7327
        %v7329 = vpop.f32.mrf.mxu0
        %7330 = vmatprep.mubr.f32.mxu0 0.0
        %7331 = vmatmul.mubr.f32.gmra.mxu0 %v6329
        %v7332 = vpop.f32.mrf.mxu0
        %v7333 = vadd.f32 0.0, %v7332
        %v7334 = vpop.f32.mrf.mxu0
        %7335 = vmatprep.mubr.f32.mxu0 0.0
        %7336 = vmatmul.mubr.f32.gmra.mxu0 %v6332
        %v7337 = vpop.f32.mrf.mxu0
        %v7338 = vadd.f32 0.0, %v7337
        %v7339 = vpop.f32.mrf.mxu0
        %7340 = vmatprep.mubr.f32.mxu0 0.0
        %7341 = vmatmul.mubr.f32.gmra.mxu0 %v6335
        %v7342 = vpop.f32.mrf.mxu0
        %v7343 = vadd.f32 0.0, %v7342
        %v7344 = vpop.f32.mrf.mxu0
        %7345 = vmatprep.mubr.f32.mxu0 0.0
        %7346 = vmatmul.mubr.f32.gmra.mxu0 %v6338
        %v7347 = vpop.f32.mrf.mxu0
        %v7348 = vadd.f32 0.0, %v7347
        %v7349 = vpop.f32.mrf.mxu0
        %7350 = vmatprep.mubr.f32.mxu0 0.0
        %7351 = vmatmul.mubr.f32.gmra.mxu0 %v6341
        %v7352 = vpop.f32.mrf.mxu0
        %v7353 = vadd.f32 0.0, %v7352
        %v7354 = vpop.f32.mrf.mxu0
        %7355 = vmatprep.mubr.f32.mxu0 0.0
        %7356 = vmatmul.mubr.f32.gmra.mxu0 %v6344
        %v7357 = vpop.f32.mrf.mxu0
        %v7358 = vadd.f32 0.0, %v7357
        %v7359 = vpop.f32.mrf.mxu0
        %7360 = vmatprep.mubr.f32.mxu0 0.0
        %7361 = vmatmul.mubr.f32.gmra.mxu0 %v6347
        %v7362 = vpop.f32.mrf.mxu0
        %v7363 = vadd.f32 0.0, %v7362
        %v7364 = vpop.f32.mrf.mxu0
        %7365 = vmatprep.mubr.f32.mxu0 0.0
        %7366 = vmatmul.mubr.f32.gmra.mxu0 %v6350
        %v7367 = vpop.f32.mrf.mxu0
        %v7368 = vadd.f32 0.0, %v7367
        %v7369 = vpop.f32.mrf.mxu0
        %7370 = vmatprep.mubr.f32.mxu0 0.0
        %7371 = vmatmul.mubr.f32.gmra.mxu0 %v6353
        %v7372 = vpop.f32.mrf.mxu0
        %v7373 = vadd.f32 0.0, %v7372
        %v7374 = vpop.f32.mrf.mxu0
        %7375 = vmatprep.mubr.f32.mxu0 0.0
        %7376 = vmatmul.mubr.f32.gmra.mxu0 %v6356
        %v7377 = vpop.f32.mrf.mxu0
        %v7378 = vadd.f32 0.0, %v7377
        %v7379 = vpop.f32.mrf.mxu0
        %7380 = vmatprep.mubr.f32.mxu0 0.0
        %7381 = vmatmul.mubr.f32.gmra.mxu0 %v6359
        %v7382 = vpop.f32.mrf.mxu0
        %v7383 = vadd.f32 0.0, %v7382
        %v7384 = vpop.f32.mrf.mxu0
        %7385 = vmatprep.mubr.f32.mxu0 0.0
        %7386 = vmatmul.mubr.f32.gmra.mxu0 %v6362
        %v7387 = vpop.f32.mrf.mxu0
        %v7388 = vadd.f32 0.0, %v7387
        %v7389 = vpop.f32.mrf.mxu0
        %7390 = vmatprep.mubr.f32.mxu0 0.0
        %7391 = vmatmul.mubr.f32.gmra.mxu0 %v6365
        %v7392 = vpop.f32.mrf.mxu0
        %v7393 = vadd.f32 0.0, %v7392
        %v7394 = vpop.f32.mrf.mxu0
        %7395 = vmatprep.mubr.f32.mxu0 0.0
        %7396 = vmatmul.mubr.f32.gmra.mxu0 %v6368
        %v7397 = vpop.f32.mrf.mxu0
        %v7398 = vadd.f32 0.0, %v7397
        %v7399 = vpop.f32.mrf.mxu0
        %7400 = vmatprep.mubr.f32.mxu0 0.0
        %7401 = vmatmul.mubr.f32.gmra.mxu0 %v6371
        %v7402 = vpop.f32.mrf.mxu0
        %v7403 = vadd.f32 0.0, %v7402
        %v7404 = vpop.f32.mrf.mxu0
        %7405 = vmatprep.mubr.f32.mxu0 0.0
        %7406 = vmatmul.mubr.f32.gmra.mxu0 %v6374
        %v7407 = vpop.f32.mrf.mxu0
        %v7408 = vadd.f32 0.0, %v7407
        %v7409 = vpop.f32.mrf.mxu0
        %7410 = vmatprep.mubr.f32.mxu0 0.0
        %7411 = vmatmul.mubr.f32.gmra.mxu0 %v6377
        %v7412 = vpop.f32.mrf.mxu0
        %v7413 = vadd.f32 0.0, %v7412
        %v7414 = vpop.f32.mrf.mxu0
        %7415 = vmatprep.mubr.f32.mxu0 0.0
        %7416 = vmatmul.mubr.f32.gmra.mxu0 %v6380
        %v7417 = vpop.f32.mrf.mxu0
        %v7418 = vadd.f32 0.0, %v7417
        %v7419 = vpop.f32.mrf.mxu0
        %7420 = vmatprep.mubr.f32.mxu0 0.0
        %7421 = vmatmul.mubr.f32.gmra.mxu0 %v6383
        %v7422 = vpop.f32.mrf.mxu0
        %v7423 = vadd.f32 0.0, %v7422
        %v7424 = vpop.f32.mrf.mxu0
        %7425 = vmatprep.mubr.f32.mxu0 0.0
        %7426 = vmatmul.mubr.f32.gmra.mxu0 %v6386
        %v7427 = vpop.f32.mrf.mxu0
        %v7428 = vadd.f32 0.0, %v7427
        %v7429 = vpop.f32.mrf.mxu0
        %7430 = vmatprep.mubr.f32.mxu0 0.0
        %7431 = vmatmul.mubr.f32.gmra.mxu0 %v6389
        %v7432 = vpop.f32.mrf.mxu0
        %v7433 = vadd.f32 0.0, %v7432
        %v7434 = vpop.f32.mrf.mxu0
        %7435 = vmatprep.mubr.f32.mxu0 0.0
        %7436 = vmatmul.mubr.f32.gmra.mxu0 %v6392
        %v7437 = vpop.f32.mrf.mxu0
        %v7438 = vadd.f32 0.0, %v7437
        %v7439 = vpop.f32.mrf.mxu0
        %7440 = vmatprep.mubr.f32.mxu0 0.0
        %7441 = vmatmul.mubr.f32.gmra.mxu0 %v6395
        %v7442 = vpop.f32.mrf.mxu0
        %v7443 = vadd.f32 0.0, %v7442
        %v7444 = vpop.f32.mrf.mxu0
        %7445 = vmatprep.mubr.f32.mxu0 0.0
        %7446 = vmatmul.mubr.f32.gmra.mxu0 %v6398
        %v7447 = vpop.f32.mrf.mxu0
        %v7448 = vadd.f32 0.0, %v7447
        %v7449 = vpop.f32.mrf.mxu0
        %7450 = vmatprep.mubr.f32.mxu0 0.0
        %7451 = vmatmul.mubr.f32.gmra.mxu0 %v6401
        %v7452 = vpop.f32.mrf.mxu0
        %v7453 = vadd.f32 0.0, %v7452
        %v7454 = vpop.f32.mrf.mxu0
        %7455 = vmatprep.mubr.f32.mxu0 0.0
        %7456 = vmatmul.mubr.f32.gmra.mxu0 %v6404
        %v7457 = vpop.f32.mrf.mxu0
        %v7458 = vadd.f32 0.0, %v7457
        %v7459 = vpop.f32.mrf.mxu0
        %7460 = vmatprep.mubr.f32.mxu0 0.0
        %7461 = vmatmul.mubr.f32.gmra.mxu0 %v6407
        %v7462 = vpop.f32.mrf.mxu0
        %v7463 = vadd.f32 0.0, %v7462
        %v7464 = vpop.f32.mrf.mxu0
        %7465 = vmatprep.mubr.f32.mxu0 0.0
        %7466 = vmatmul.mubr.f32.gmra.mxu0 %v6410
        %v7467 = vpop.f32.mrf.mxu0
        %v7468 = vadd.f32 0.0, %v7467
        %v7469 = vpop.f32.mrf.mxu0
        %7470 = vmatprep.mubr.f32.mxu0 0.0
        %7471 = vmatmul.mubr.f32.gmra.mxu0 %v6413
        %v7472 = vpop.f32.mrf.mxu0
        %v7473 = vadd.f32 0.0, %v7472
        %v7474 = vpop.f32.mrf.mxu0
        %7475 = vmatprep.mubr.f32.mxu0 0.0
        %7476 = vmatmul.mubr.f32.gmra.mxu0 %v6416
        %v7477 = vpop.f32.mrf.mxu0
        %v7478 = vadd.f32 0.0, %v7477
        %v7479 = vpop.f32.mrf.mxu0
        %7480 = vmatprep.mubr.f32.mxu0 0.0
        %7481 = vmatmul.mubr.f32.gmra.mxu0 %v6419
        %v7482 = vpop.f32.mrf.mxu0
        %v7483 = vadd.f32 0.0, %v7482
        %v7484 = vpop.f32.mrf.mxu0
        %7485 = vmatprep.mubr.f32.mxu0 0.0
        %7486 = vmatmul.mubr.f32.gmra.mxu0 %v6422
        %v7487 = vpop.f32.mrf.mxu0
        %v7488 = vadd.f32 0.0, %v7487
        %v7489 = vpop.f32.mrf.mxu0
        %7490 = vmatprep.mubr.f32.mxu0 0.0
        %7491 = vmatmul.mubr.f32.gmra.mxu0 %v6425
        %v7492 = vpop.f32.mrf.mxu0
        %v7493 = vadd.f32 0.0, %v7492
        %v7494 = vpop.f32.mrf.mxu0
        %7495 = vmatprep.mubr.f32.mxu0 0.0
        %7496 = vmatmul.mubr.f32.gmra.mxu0 %v6428
        %v7497 = vpop.f32.mrf.mxu0
        %v7498 = vadd.f32 0.0, %v7497
        %v7499 = vpop.f32.mrf.mxu0
        %7500 = vmatprep.mubr.f32.mxu0 0.0
        %7501 = vmatmul.mubr.f32.gmra.mxu0 %v6431
        %v7502 = vpop.f32.mrf.mxu0
        %v7503 = vadd.f32 0.0, %v7502
        %v7504 = vpop.f32.mrf.mxu0
        %7505 = vmatprep.mubr.f32.mxu0 0.0
        %7506 = vmatmul.mubr.f32.gmra.mxu0 %v6434
        %v7507 = vpop.f32.mrf.mxu0
        %v7508 = vadd.f32 0.0, %v7507
        %v7509 = vpop.f32.mrf.mxu0
        %7510 = vmatprep.mubr.f32.mxu0 0.0
        %7511 = vmatmul.mubr.f32.gmra.mxu0 %v6437
        %v7512 = vpop.f32.mrf.mxu0
        %v7513 = vadd.f32 0.0, %v7512
        %v7514 = vpop.f32.mrf.mxu0
        %7515 = vmatprep.mubr.f32.mxu0 0.0
        %7516 = vmatmul.mubr.f32.gmra.mxu0 %v6440
        %v7517 = vpop.f32.mrf.mxu0
        %v7518 = vadd.f32 0.0, %v7517
        %v7519 = vpop.f32.mrf.mxu0
        %7520 = vmatprep.mubr.f32.mxu0 0.0
        %7521 = vmatmul.mubr.f32.gmra.mxu0 %v6443
        %v7522 = vpop.f32.mrf.mxu0
        %v7523 = vadd.f32 0.0, %v7522
        %v7524 = vpop.f32.mrf.mxu0
        %7525 = vmatprep.mubr.f32.mxu0 0.0
        %7526 = vmatmul.mubr.f32.gmra.mxu0 %v6446
        %v7527 = vpop.f32.mrf.mxu0
        %v7528 = vadd.f32 0.0, %v7527
        %v7529 = vpop.f32.mrf.mxu0
        %7530 = vmatprep.mubr.f32.mxu0 0.0
        %7531 = vmatmul.mubr.f32.gmra.mxu0 %v6449
        %v7532 = vpop.f32.mrf.mxu0
        %v7533 = vadd.f32 0.0, %v7532
        %v7534 = vpop.f32.mrf.mxu0
        %7535 = vmatprep.mubr.f32.mxu0 0.0
        %7536 = vmatmul.mubr.f32.gmra.mxu0 %v6452
        %v7537 = vpop.f32.mrf.mxu0
        %v7538 = vadd.f32 0.0, %v7537
        %v7539 = vpop.f32.mrf.mxu0
        %7540 = vmatprep.mubr.f32.mxu0 0.0
        %7541 = vmatmul.mubr.f32.gmra.mxu0 %v6455
        %v7542 = vpop.f32.mrf.mxu0
        %v7543 = vadd.f32 0.0, %v7542
        %v7544 = vpop.f32.mrf.mxu0
        %7545 = vmatprep.mubr.f32.mxu0 0.0
        %7546 = vmatmul.mubr.f32.gmra.mxu0 %v6458
        %v7547 = vpop.f32.mrf.mxu0
        %v7548 = vadd.f32 0.0, %v7547
        %v7549 = vpop.f32.mrf.mxu0
        %7550 = vmatprep.mubr.f32.mxu0 0.0
        %7551 = vmatmul.mubr.f32.gmra.mxu0 %v6461
        %v7552 = vpop.f32.mrf.mxu0
        %v7553 = vadd.f32 0.0, %v7552
        %v7554 = vpop.f32.mrf.mxu0
        %7555 = vmatprep.mubr.f32.mxu0 0.0
        %7556 = vmatmul.mubr.f32.gmra.mxu0 %v6464
        %v7557 = vpop.f32.mrf.mxu0
        %v7558 = vadd.f32 0.0, %v7557
        %v7559 = vpop.f32.mrf.mxu0
        %7560 = vmatprep.mubr.f32.mxu0 0.0
        %7561 = vmatmul.mubr.f32.gmra.mxu0 %v6467
        %v7562 = vpop.f32.mrf.mxu0
        %v7563 = vadd.f32 0.0, %v7562
        %v7564 = vpop.f32.mrf.mxu0
        %7565 = vmatprep.mubr.f32.mxu0 0.0
        %7566 = vmatmul.mubr.f32.gmra.mxu0 %v6470
        %v7567 = vpop.f32.mrf.mxu0
        %v7568 = vadd.f32 0.0, %v7567
        %v7569 = vpop.f32.mrf.mxu0
        %7570 = vmatprep.mubr.f32.mxu0 0.0
        %7571 = vmatmul.mubr.f32.gmra.mxu0 %v6473
        %v7572 = vpop.f32.mrf.mxu0
        %v7573 = vadd.f32 0.0, %v7572
        %v7574 = vpop.f32.mrf.mxu0
        %7575 = vmatprep.mubr.f32.mxu0 0.0
        %7576 = vmatmul.mubr.f32.gmra.mxu0 %v6476
        %v7577 = vpop.f32.mrf.mxu0
        %v7578 = vadd.f32 0.0, %v7577
        %v7579 = vpop.f32.mrf.mxu0
        %7580 = vmatprep.mubr.f32.mxu0 0.0
        %7581 = vmatmul.mubr.f32.gmra.mxu0 %v6479
        %v7582 = vpop.f32.mrf.mxu0
        %v7583 = vadd.f32 0.0, %v7582
        %v7584 = vpop.f32.mrf.mxu0
        %7585 = vmatprep.mubr.f32.mxu0 0.0
        %7586 = vmatmul.mubr.f32.gmra.mxu0 %v6482
        %v7587 = vpop.f32.mrf.mxu0
        %v7588 = vadd.f32 0.0, %v7587
        %v7589 = vpop.f32.mrf.mxu0
        %7590 = vmatprep.mubr.f32.mxu0 0.0
        %7591 = vmatmul.mubr.f32.gmra.mxu0 %v6485
        %v7592 = vpop.f32.mrf.mxu0
        %v7593 = vadd.f32 0.0, %v7592
        %v7594 = vpop.f32.mrf.mxu0
        %7595 = vmatprep.mubr.f32.mxu0 0.0
        %7596 = vmatmul.mubr.f32.gmra.mxu0 %v6488
        %v7597 = vpop.f32.mrf.mxu0
        %v7598 = vadd.f32 0.0, %v7597
        %v7599 = vpop.f32.mrf.mxu0
        %7600 = vmatprep.mubr.f32.mxu0 0.0
        %7601 = vmatmul.mubr.f32.gmra.mxu0 %v6491
        %v7602 = vpop.f32.mrf.mxu0
        %v7603 = vadd.f32 0.0, %v7602
        %v7604 = vpop.f32.mrf.mxu0
        %7605 = vmatprep.mubr.f32.mxu0 0.0
        %7606 = vmatmul.mubr.f32.gmra.mxu0 %v6494
        %v7607 = vpop.f32.mrf.mxu0
        %v7608 = vadd.f32 0.0, %v7607
        %v7609 = vpop.f32.mrf.mxu0
        %7610 = vmatprep.mubr.f32.mxu0 0.0
        %7611 = vmatmul.mubr.f32.gmra.mxu0 %v6497
        %v7612 = vpop.f32.mrf.mxu0
        %v7613 = vadd.f32 0.0, %v7612
        %v7614 = vpop.f32.mrf.mxu0
        %7615 = vmatprep.mubr.f32.mxu0 0.0
        %7616 = vmatmul.mubr.f32.gmra.mxu0 %v6500
        %v7617 = vpop.f32.mrf.mxu0
        %v7618 = vadd.f32 0.0, %v7617
        %v7619 = vpop.f32.mrf.mxu0
        %7620 = vmatprep.mubr.f32.mxu0 0.0
        %7621 = vmatmul.mubr.f32.gmra.mxu0 %v6503
        %v7622 = vpop.f32.mrf.mxu0
        %v7623 = vadd.f32 0.0, %v7622
        %v7624 = vpop.f32.mrf.mxu0
        %7625 = vmatprep.mubr.f32.mxu0 0.0
        %7626 = vmatmul.mubr.f32.gmra.mxu0 %v6506
        %v7627 = vpop.f32.mrf.mxu0
        %v7628 = vadd.f32 0.0, %v7627
        %v7629 = vpop.f32.mrf.mxu0
        %7630 = vmatprep.mubr.f32.mxu0 0.0
        %7631 = vmatmul.mubr.f32.gmra.mxu0 %v6509
        %v7632 = vpop.f32.mrf.mxu0
        %v7633 = vadd.f32 0.0, %v7632
        %v7634 = vpop.f32.mrf.mxu0
        %7635 = vmatprep.mubr.f32.mxu0 0.0
        %7636 = vmatmul.mubr.f32.gmra.mxu0 %v6512
        %v7637 = vpop.f32.mrf.mxu0
        %v7638 = vadd.f32 0.0, %v7637
        %v7639 = vpop.f32.mrf.mxu0
        %7640 = vmatprep.mubr.f32.mxu0 0.0
        %7641 = vmatmul.mubr.f32.gmra.mxu0 %v6515
        %v7642 = vpop.f32.mrf.mxu0
        %v7643 = vadd.f32 0.0, %v7642
        %v7644 = vpop.f32.mrf.mxu0
        %7645 = vmatprep.mubr.f32.mxu0 0.0
        %7646 = vmatmul.mubr.f32.gmra.mxu0 %v6518
        %v7647 = vpop.f32.mrf.mxu0
        %v7648 = vadd.f32 0.0, %v7647
        %v7649 = vpop.f32.mrf.mxu0
        %7650 = vmatprep.mubr.f32.mxu0 0.0
        %7651 = vmatmul.mubr.f32.gmra.mxu0 %v6521
        %v7652 = vpop.f32.mrf.mxu0
        %v7653 = vadd.f32 0.0, %v7652
        %v7654 = vpop.f32.mrf.mxu0
        %7655 = vmatprep.mubr.f32.mxu0 0.0
        %7656 = vmatmul.mubr.f32.gmra.mxu0 %v6524
        %v7657 = vpop.f32.mrf.mxu0
        %v7658 = vadd.f32 0.0, %v7657
        %v7659 = vpop.f32.mrf.mxu0
        %7660 = vmatprep.mubr.f32.mxu0 0.0
        %7661 = vmatmul.mubr.f32.gmra.mxu0 %v6527
        %v7662 = vpop.f32.mrf.mxu0
        %v7663 = vadd.f32 0.0, %v7662
        %v7664 = vpop.f32.mrf.mxu0
        %7665 = vmatprep.mubr.f32.mxu0 0.0
        %7666 = vmatmul.mubr.f32.gmra.mxu0 %v6530
        %v7667 = vpop.f32.mrf.mxu0
        %v7668 = vadd.f32 0.0, %v7667
        %v7669 = vpop.f32.mrf.mxu0
        %7670 = vmatprep.mubr.f32.mxu0 0.0
        %7671 = vmatmul.mubr.f32.gmra.mxu0 %v6533
        %v7672 = vpop.f32.mrf.mxu0
        %v7673 = vadd.f32 0.0, %v7672
        %v7674 = vpop.f32.mrf.mxu0
        %7675 = vmatprep.mubr.f32.mxu0 0.0
        %7676 = vmatmul.mubr.f32.gmra.mxu0 %v6536
        %v7677 = vpop.f32.mrf.mxu0
        %v7678 = vadd.f32 0.0, %v7677
        %v7679 = vpop.f32.mrf.mxu0
        %7680 = vmatprep.mubr.f32.mxu0 0.0
        %7681 = vmatmul.mubr.f32.gmra.mxu0 %v6539
        %v7682 = vpop.f32.mrf.mxu0
        %v7683 = vadd.f32 0.0, %v7682
        %v7684 = vpop.f32.mrf.mxu0
        %7685 = vmatprep.mubr.f32.mxu0 0.0
        %7686 = vmatmul.mubr.f32.gmra.mxu0 %v6542
        %v7687 = vpop.f32.mrf.mxu0
        %v7688 = vadd.f32 0.0, %v7687
        %v7689 = vpop.f32.mrf.mxu0
        %7690 = vmatprep.mubr.f32.mxu0 0.0
        %7691 = vmatmul.mubr.f32.gmra.mxu0 %v6545
        %v7692 = vpop.f32.mrf.mxu0
        %v7693 = vadd.f32 0.0, %v7692
        %v7694 = vpop.f32.mrf.mxu0
        %7695 = vmatprep.mubr.f32.mxu0 0.0
        %7696 = vmatmul.mubr.f32.gmra.mxu0 %v6548
        %v7697 = vpop.f32.mrf.mxu0
        %v7698 = vadd.f32 0.0, %v7697
        %v7699 = vpop.f32.mrf.mxu0
        %7700 = vmatprep.mubr.f32.mxu0 0.0
        %7701 = vmatmul.mubr.f32.gmra.mxu0 %v6551
        %v7702 = vpop.f32.mrf.mxu0
        %v7703 = vadd.f32 0.0, %v7702
        %v7704 = vpop.f32.mrf.mxu0
        %7705 = vmatprep.mubr.f32.mxu0 0.0
        %7706 = vmatmul.mubr.f32.gmra.mxu0 %v6554
        %v7707 = vpop.f32.mrf.mxu0
        %v7708 = vadd.f32 0.0, %v7707
        %v7709 = vpop.f32.mrf.mxu0
        %7710 = vmatprep.mubr.f32.mxu0 0.0
        %7711 = vmatmul.mubr.f32.gmra.mxu0 %v6557
        %v7712 = vpop.f32.mrf.mxu0
        %v7713 = vadd.f32 0.0, %v7712
        %v7714 = vpop.f32.mrf.mxu0
        %7715 = vmatprep.mubr.f32.mxu0 0.0
        %7716 = vmatmul.mubr.f32.gmra.mxu0 %v6560
        %v7717 = vpop.f32.mrf.mxu0
        %v7718 = vadd.f32 0.0, %v7717
        %v7719 = vpop.f32.mrf.mxu0
        %7720 = vmatprep.mubr.f32.mxu0 0.0
        %7721 = vmatmul.mubr.f32.gmra.mxu0 %v6563
        %v7722 = vpop.f32.mrf.mxu0
        %v7723 = vadd.f32 0.0, %v7722
        %v7724 = vpop.f32.mrf.mxu0
        %7725 = vmatprep.mubr.f32.mxu0 0.0
        %7726 = vmatmul.mubr.f32.gmra.mxu0 %v6566
        %v7727 = vpop.f32.mrf.mxu0
        %v7728 = vadd.f32 0.0, %v7727
        %v7729 = vpop.f32.mrf.mxu0
        %7730 = vmatprep.mubr.f32.mxu0 0.0
        %7731 = vmatmul.mubr.f32.gmra.mxu0 %v6569
        %v7732 = vpop.f32.mrf.mxu0
        %v7733 = vadd.f32 0.0, %v7732
        %v7734 = vpop.f32.mrf.mxu0
        %7735 = vmatprep.mubr.f32.mxu0 0.0
        %7736 = vmatmul.mubr.f32.gmra.mxu0 %v6572
        %v7737 = vpop.f32.mrf.mxu0
        %v7738 = vadd.f32 0.0, %v7737
        %v7739 = vpop.f32.mrf.mxu0
        %7740 = vmatprep.mubr.f32.mxu0 0.0
        %7741 = vmatmul.mubr.f32.gmra.mxu0 %v6575
        %v7742 = vpop.f32.mrf.mxu0
        %v7743 = vadd.f32 0.0, %v7742
        %v7744 = vpop.f32.mrf.mxu0
        %7745 = vmatprep.mubr.f32.mxu0 0.0
        %7746 = vmatmul.mubr.f32.gmra.mxu0 %v6578
        %v7747 = vpop.f32.mrf.mxu0
        %v7748 = vadd.f32 0.0, %v7747
        %v7749 = vpop.f32.mrf.mxu0
        %7750 = vmatprep.mubr.f32.mxu0 0.0
        %7751 = vmatmul.mubr.f32.gmra.mxu0 %v6581
        %v7752 = vpop.f32.mrf.mxu0
        %v7753 = vadd.f32 0.0, %v7752
        %v7754 = vpop.f32.mrf.mxu0
        %7755 = vmatprep.mubr.f32.mxu0 0.0
        %7756 = vmatmul.mubr.f32.gmra.mxu0 %v6584
        %v7757 = vpop.f32.mrf.mxu0
        %v7758 = vadd.f32 0.0, %v7757
        %v7759 = vpop.f32.mrf.mxu0
        %7760 = vmatprep.mubr.f32.mxu0 0.0
        %7761 = vmatmul.mubr.f32.gmra.mxu0 %v6587
        %v7762 = vpop.f32.mrf.mxu0
        %v7763 = vadd.f32 0.0, %v7762
        %v7764 = vpop.f32.mrf.mxu0
        %7765 = vmatprep.mubr.f32.mxu0 0.0
        %7766 = vmatmul.mubr.f32.gmra.mxu0 %v6590
        %v7767 = vpop.f32.mrf.mxu0
        %v7768 = vadd.f32 0.0, %v7767
        %v7769 = vpop.f32.mrf.mxu0
        %7770 = vmatprep.mubr.f32.mxu0 0.0
        %7771 = vmatmul.mubr.f32.gmra.mxu0 %v6593
        %v7772 = vpop.f32.mrf.mxu0
        %v7773 = vadd.f32 0.0, %v7772
        %v7774 = vpop.f32.mrf.mxu0
        %7775 = vmatprep.mubr.f32.mxu0 0.0
        %7776 = vmatmul.mubr.f32.gmra.mxu0 %v6596
        %v7777 = vpop.f32.mrf.mxu0
        %v7778 = vadd.f32 0.0, %v7777
        %v7779 = vpop.f32.mrf.mxu0
        %7780 = vmatprep.mubr.f32.mxu0 0.0
        %7781 = vmatmul.mubr.f32.gmra.mxu0 %v6599
        %v7782 = vpop.f32.mrf.mxu0
        %v7783 = vadd.f32 0.0, %v7782
        %v7784 = vpop.f32.mrf.mxu0
        %7785 = vmatprep.mubr.f32.mxu0 0.0
        %7786 = vmatmul.mubr.f32.gmra.mxu0 %v6602
        %v7787 = vpop.f32.mrf.mxu0
        %v7788 = vadd.f32 0.0, %v7787
        %v7789 = vpop.f32.mrf.mxu0
        %7790 = vmatprep.mubr.f32.mxu0 0.0
        %7791 = vmatmul.mubr.f32.gmra.mxu0 %v6605
        %v7792 = vpop.f32.mrf.mxu0
        %v7793 = vadd.f32 0.0, %v7792
        %v7794 = vpop.f32.mrf.mxu0
        %7795 = vmatprep.mubr.f32.mxu0 0.0
        %7796 = vmatmul.mubr.f32.gmra.mxu0 %v6608
        %v7797 = vpop.f32.mrf.mxu0
        %v7798 = vadd.f32 0.0, %v7797
        %v7799 = vpop.f32.mrf.mxu0
        %7800 = vmatprep.mubr.f32.mxu0 0.0
        %7801 = vmatmul.mubr.f32.gmra.mxu0 %v6611
        %v7802 = vpop.f32.mrf.mxu0
        %v7803 = vadd.f32 0.0, %v7802
        %v7804 = vpop.f32.mrf.mxu0
        %7805 = vmatprep.mubr.f32.mxu0 0.0
        %7806 = vmatmul.mubr.f32.gmra.mxu0 %v6614
        %v7807 = vpop.f32.mrf.mxu0
        %v7808 = vadd.f32 0.0, %v7807
        %v7809 = vpop.f32.mrf.mxu0
        %7810 = vmatprep.mubr.f32.mxu0 0.0
        %7811 = vmatmul.mubr.f32.gmra.mxu0 %v6617
        %v7812 = vpop.f32.mrf.mxu0
        %v7813 = vadd.f32 0.0, %v7812
        %v7814 = vpop.f32.mrf.mxu0
        %7815 = vmatprep.mubr.f32.mxu0 0.0
        %7816 = vmatmul.mubr.f32.gmra.mxu0 %v6620
        %v7817 = vpop.f32.mrf.mxu0
        %v7818 = vadd.f32 0.0, %v7817
        %v7819 = vpop.f32.mrf.mxu0
        %7820 = vmatprep.mubr.f32.mxu0 0.0
        %7821 = vmatmul.mubr.f32.gmra.mxu0 %v6623
        %v7822 = vpop.f32.mrf.mxu0
        %v7823 = vadd.f32 0.0, %v7822
        %v7824 = vpop.f32.mrf.mxu0
        %7825 = vmatprep.mubr.f32.mxu0 0.0
        %7826 = vmatmul.mubr.f32.gmra.mxu0 %v6626
        %v7827 = vpop.f32.mrf.mxu0
        %v7828 = vadd.f32 0.0, %v7827
        %v7829 = vpop.f32.mrf.mxu0
        %7830 = vmatprep.mubr.f32.mxu0 0.0
        %7831 = vmatmul.mubr.f32.gmra.mxu0 %v6629
        %v7832 = vpop.f32.mrf.mxu0
        %v7833 = vadd.f32 0.0, %v7832
        %v7834 = vpop.f32.mrf.mxu0
        %7835 = vmatprep.mubr.f32.mxu0 0.0
        %7836 = vmatmul.mubr.f32.gmra.mxu0 %v6632
        %v7837 = vpop.f32.mrf.mxu0
        %v7838 = vadd.f32 0.0, %v7837
        %v7839 = vpop.f32.mrf.mxu0
        %7840 = vmatprep.mubr.f32.mxu0 0.0
        %7841 = vmatmul.mubr.f32.gmra.mxu0 %v6635
        %v7842 = vpop.f32.mrf.mxu0
        %v7843 = vadd.f32 0.0, %v7842
        %v7844 = vpop.f32.mrf.mxu0
        %7845 = vmatprep.mubr.f32.mxu0 0.0
        %7846 = vmatmul.mubr.f32.gmra.mxu0 %v6638
        %v7847 = vpop.f32.mrf.mxu0
        %v7848 = vadd.f32 0.0, %v7847
        %v7849 = vpop.f32.mrf.mxu0
        %7850 = vmatprep.mubr.f32.mxu0 0.0
        %7851 = vmatmul.mubr.f32.gmra.mxu0 %v6641
        %v7852 = vpop.f32.mrf.mxu0
        %v7853 = vadd.f32 0.0, %v7852
        %v7854 = vpop.f32.mrf.mxu0
        %7855 = vmatprep.mubr.f32.mxu0 0.0
        %7856 = vmatmul.mubr.f32.gmra.mxu0 %v6644
        %v7857 = vpop.f32.mrf.mxu0
        %v7858 = vadd.f32 0.0, %v7857
        %v7859 = vpop.f32.mrf.mxu0
        %7860 = vmatprep.mubr.f32.mxu0 0.0
        %7861 = vmatmul.mubr.f32.gmra.mxu0 %v6647
        %v7862 = vpop.f32.mrf.mxu0
        %v7863 = vadd.f32 0.0, %v7862
        %v7864 = vpop.f32.mrf.mxu0
        %7865 = vmatprep.mubr.f32.mxu0 0.0
        %7866 = vmatmul.mubr.f32.gmra.mxu0 %v6650
        %v7867 = vpop.f32.mrf.mxu0
        %v7868 = vadd.f32 0.0, %v7867
        %v7869 = vpop.f32.mrf.mxu0
        %7870 = vmatprep.mubr.f32.mxu0 0.0
        %7871 = vmatmul.mubr.f32.gmra.mxu0 %v6653
        %v7872 = vpop.f32.mrf.mxu0
        %v7873 = vadd.f32 0.0, %v7872
        %v7874 = vpop.f32.mrf.mxu0
        %7875 = vmatprep.mubr.f32.mxu0 0.0
        %7876 = vmatmul.mubr.f32.gmra.mxu0 %v6656
        %v7877 = vpop.f32.mrf.mxu0
        %v7878 = vadd.f32 0.0, %v7877
        %v7879 = vpop.f32.mrf.mxu0
        %7880 = vmatprep.mubr.f32.mxu0 0.0
        %7881 = vmatmul.mubr.f32.gmra.mxu0 %v6659
        %v7882 = vpop.f32.mrf.mxu0
        %v7883 = vadd.f32 0.0, %v7882
        %v7884 = vpop.f32.mrf.mxu0
        %7885 = vmatprep.mubr.f32.mxu0 0.0
        %7886 = vmatmul.mubr.f32.gmra.mxu0 %v6662
        %v7887 = vpop.f32.mrf.mxu0
        %v7888 = vadd.f32 0.0, %v7887
        %v7889 = vpop.f32.mrf.mxu0
        %7890 = vmatprep.mubr.f32.mxu0 0.0
        %7891 = vmatmul.mubr.f32.gmra.mxu0 %v6665
        %v7892 = vpop.f32.mrf.mxu0
        %v7893 = vadd.f32 0.0, %v7892
        %v7894 = vpop.f32.mrf.mxu0
        %7895 = vmatprep.mubr.f32.mxu0 0.0
        %7896 = vmatmul.mubr.f32.gmra.mxu0 %v6668
        %v7897 = vpop.f32.mrf.mxu0
        %v7898 = vadd.f32 0.0, %v7897
        %v7899 = vpop.f32.mrf.mxu0
        %7900 = vmatprep.mubr.f32.mxu0 0.0
        %7901 = vmatmul.mubr.f32.gmra.mxu0 %v6671
        %v7902 = vpop.f32.mrf.mxu0
        %v7903 = vadd.f32 0.0, %v7902
        %v7904 = vpop.f32.mrf.mxu0
        %7905 = vmatprep.mubr.f32.mxu0 0.0
        %7906 = vmatmul.mubr.f32.gmra.mxu0 %v6674
        %v7907 = vpop.f32.mrf.mxu0
        %v7908 = vadd.f32 0.0, %v7907
        %v7909 = vpop.f32.mrf.mxu0
        %7910 = vmatprep.mubr.f32.mxu0 0.0
        %7911 = vmatmul.mubr.f32.gmra.mxu0 %v6677
        %v7912 = vpop.f32.mrf.mxu0
        %v7913 = vadd.f32 0.0, %v7912
        %v7914 = vpop.f32.mrf.mxu0
        %7915 = vmatprep.mubr.f32.mxu0 0.0
        %7916 = vmatmul.mubr.f32.gmra.mxu0 %v6680
        %v7917 = vpop.f32.mrf.mxu0
        %v7918 = vadd.f32 0.0, %v7917
        %v7919 = vpop.f32.mrf.mxu0
        %7920 = vmatprep.mubr.f32.mxu0 0.0
        %7921 = vmatmul.mubr.f32.gmra.mxu0 %v6683
        %v7922 = vpop.f32.mrf.mxu0
        %v7923 = vadd.f32 0.0, %v7922
        %v7924 = vpop.f32.mrf.mxu0
        %7925 = vmatprep.mubr.f32.mxu0 0.0
        %7926 = vmatmul.mubr.f32.gmra.mxu0 %v6686
        %v7927 = vpop.f32.mrf.mxu0
        %v7928 = vadd.f32 0.0, %v7927
        %v7929 = vpop.f32.mrf.mxu0
        %7930 = vmatprep.mubr.f32.mxu0 0.0
        %7931 = vmatmul.mubr.f32.gmra.mxu0 %v6689
        %v7932 = vpop.f32.mrf.mxu0
        %v7933 = vadd.f32 0.0, %v7932
        %v7934 = vpop.f32.mrf.mxu0
        %7935 = vmatprep.mubr.f32.mxu0 0.0
        %7936 = vmatmul.mubr.f32.gmra.mxu0 %v6692
        %v7937 = vpop.f32.mrf.mxu0
        %v7938 = vadd.f32 0.0, %v7937
        %v7939 = vpop.f32.mrf.mxu0
        %7940 = vmatprep.mubr.f32.mxu0 0.0
        %7941 = vmatmul.mubr.f32.gmra.mxu0 %v6695
        %v7942 = vpop.f32.mrf.mxu0
        %v7943 = vadd.f32 0.0, %v7942
        %v7944 = vpop.f32.mrf.mxu0
        %7945 = vmatprep.mubr.f32.mxu0 0.0
        %7946 = vmatmul.mubr.f32.gmra.mxu0 %v6698
        %v7947 = vpop.f32.mrf.mxu0
        %v7948 = vadd.f32 0.0, %v7947
        %v7949 = vpop.f32.mrf.mxu0
        %7950 = vmatprep.mubr.f32.mxu0 0.0
        %7951 = vmatmul.mubr.f32.gmra.mxu0 %v6701
        %v7952 = vpop.f32.mrf.mxu0
        %v7953 = vadd.f32 0.0, %v7952
        %v7954 = vpop.f32.mrf.mxu0
        %7955 = vmatprep.mubr.f32.mxu0 0.0
        %7956 = vmatmul.mubr.f32.gmra.mxu0 %v6704
        %v7957 = vpop.f32.mrf.mxu0
        %v7958 = vadd.f32 0.0, %v7957
        %v7959 = vpop.f32.mrf.mxu0
        %7960 = vmatprep.mubr.f32.mxu0 0.0
        %7961 = vmatmul.mubr.f32.gmra.mxu0 %v6707
        %v7962 = vpop.f32.mrf.mxu0
        %v7963 = vadd.f32 0.0, %v7962
        %v7964 = vpop.f32.mrf.mxu0
        %7965 = vmatprep.mubr.f32.mxu0 0.0
        %7966 = vmatmul.mubr.f32.gmra.mxu0 %v6710
        %v7967 = vpop.f32.mrf.mxu0
        %v7968 = vadd.f32 0.0, %v7967
        %v7969 = vpop.f32.mrf.mxu0
        %7970 = vmatprep.mubr.f32.mxu0 0.0
        %7971 = vmatmul.mubr.f32.gmra.mxu0 %v6713
        %v7972 = vpop.f32.mrf.mxu0
        %v7973 = vadd.f32 0.0, %v7972
        %v7974 = vpop.f32.mrf.mxu0
        %7975 = vmatprep.mubr.f32.mxu0 0.0
        %7976 = vmatmul.mubr.f32.gmra.mxu0 %v6716
        %v7977 = vpop.f32.mrf.mxu0
        %v7978 = vadd.f32 0.0, %v7977
        %v7979 = vpop.f32.mrf.mxu0
        %7980 = vmatprep.mubr.f32.mxu0 0.0
        %7981 = vmatmul.mubr.f32.gmra.mxu0 %v6719
        %v7982 = vpop.f32.mrf.mxu0
        %v7983 = vadd.f32 0.0, %v7982
        %v7984 = vpop.f32.mrf.mxu0
        %7985 = vmatprep.mubr.f32.mxu0 0.0
        %7986 = vmatmul.mubr.f32.gmra.mxu0 %v6722
        %v7987 = vpop.f32.mrf.mxu0
        %v7988 = vadd.f32 0.0, %v7987
        %v7989 = vpop.f32.mrf.mxu0
        %7990 = vmatprep.mubr.f32.mxu0 0.0
        %7991 = vmatmul.mubr.f32.gmra.mxu0 %v6725
        %v7992 = vpop.f32.mrf.mxu0
        %v7993 = vadd.f32 0.0, %v7992
        %v7994 = vpop.f32.mrf.mxu0
        %7995 = vmatprep.mubr.f32.mxu0 0.0
        %7996 = vmatmul.mubr.f32.gmra.mxu0 %v6728
        %v7997 = vpop.f32.mrf.mxu0
        %v7998 = vadd.f32 0.0, %v7997
        %v7999 = vpop.f32.mrf.mxu0
        %8000 = vmatprep.mubr.f32.mxu0 0.0
        %8001 = vmatmul.mubr.f32.gmra.mxu0 %v6731
        %v8002 = vpop.f32.mrf.mxu0
        %v8003 = vadd.f32 0.0, %v8002
        %v8004 = vpop.f32.mrf.mxu0
        %8005 = vmatprep.mubr.f32.mxu0 0.0
        %8006 = vmatmul.mubr.f32.gmra.mxu0 %v6734
        %v8007 = vpop.f32.mrf.mxu0
        %v8008 = vadd.f32 0.0, %v8007
        %v8009 = vpop.f32.mrf.mxu0
        %8010 = vmatprep.mubr.f32.mxu0 0.0
        %8011 = vmatmul.mubr.f32.gmra.mxu0 %v6737
        %v8012 = vpop.f32.mrf.mxu0
        %v8013 = vadd.f32 0.0, %v8012
        %v8014 = vpop.f32.mrf.mxu0
        %8015 = vmatprep.mubr.f32.mxu0 0.0
        %8016 = vmatmul.mubr.f32.gmra.mxu0 %v6740
        %v8017 = vpop.f32.mrf.mxu0
        %v8018 = vadd.f32 0.0, %v8017
        %v8019 = vpop.f32.mrf.mxu0
        %8020 = vmatprep.mubr.f32.mxu0 0.0
        %8021 = vmatmul.mubr.f32.gmra.mxu0 %v6743
        %v8022 = vpop.f32.mrf.mxu0
        %v8023 = vadd.f32 0.0, %v8022
        %v8024 = vpop.f32.mrf.mxu0
        %8025 = vmatprep.mubr.f32.mxu0 0.0
        %8026 = vmatmul.mubr.f32.gmra.mxu0 %v6746
        %v8027 = vpop.f32.mrf.mxu0
        %v8028 = vadd.f32 0.0, %v8027
        %v8029 = vpop.f32.mrf.mxu0
        %8030 = vmatprep.mubr.f32.mxu0 0.0
        %8031 = vmatmul.mubr.f32.gmra.mxu0 %v6749
        %v8032 = vpop.f32.mrf.mxu0
        %v8033 = vadd.f32 0.0, %v8032
        %v8034 = vpop.f32.mrf.mxu0
        %8035 = vmatprep.mubr.f32.mxu0 0.0
        %8036 = vmatmul.mubr.f32.gmra.mxu0 %v6752
        %v8037 = vpop.f32.mrf.mxu0
        %v8038 = vadd.f32 0.0, %v8037
        %v8039 = vpop.f32.mrf.mxu0
        %8040 = vmatprep.mubr.f32.mxu0 0.0
        %8041 = vmatmul.mubr.f32.gmra.mxu0 %v6755
        %v8042 = vpop.f32.mrf.mxu0
        %v8043 = vadd.f32 0.0, %v8042
        %v8044 = vpop.f32.mrf.mxu0
        %8045 = vmatprep.mubr.f32.mxu0 0.0
        %8046 = vmatmul.mubr.f32.gmra.mxu0 %v6758
        %v8047 = vpop.f32.mrf.mxu0
        %v8048 = vadd.f32 0.0, %v8047
        %v8049 = vpop.f32.mrf.mxu0
        %8050 = vmatprep.mubr.f32.mxu0 0.0
        %8051 = vmatmul.mubr.f32.gmra.mxu0 %v6761
        %v8052 = vpop.f32.mrf.mxu0
        %v8053 = vadd.f32 0.0, %v8052
        %v8054 = vpop.f32.mrf.mxu0
        %8055 = vmatprep.mubr.f32.mxu0 0.0
        %8056 = vmatmul.mubr.f32.gmra.mxu0 %v6764
        %v8057 = vpop.f32.mrf.mxu0
        %v8058 = vadd.f32 0.0, %v8057
        %v8059 = vpop.f32.mrf.mxu0
        %8060 = vmatprep.mubr.f32.mxu0 0.0
        %8061 = vmatmul.mubr.f32.gmra.mxu0 %v6767
        %v8062 = vpop.f32.mrf.mxu0
        %v8063 = vadd.f32 0.0, %v8062
        %v8064 = vpop.f32.mrf.mxu0
        %8065 = vmatprep.mubr.f32.mxu0 0.0
        %8066 = vmatmul.mubr.f32.gmra.mxu0 %v6770
        %v8067 = vpop.f32.mrf.mxu0
        %v8068 = vadd.f32 0.0, %v8067
        %v8069 = vpop.f32.mrf.mxu0
        %8070 = vmatprep.mubr.f32.mxu0 0.0
        %8071 = vmatmul.mubr.f32.gmra.mxu0 %v6773
        %v8072 = vpop.f32.mrf.mxu0
        %v8073 = vadd.f32 0.0, %v8072
        %v8074 = vpop.f32.mrf.mxu0
        %8075 = vmatprep.mubr.f32.mxu0 0.0
        %8076 = vmatmul.mubr.f32.gmra.mxu0 %v6776
        %v8077 = vpop.f32.mrf.mxu0
        %v8078 = vadd.f32 0.0, %v8077
        %v8079 = vpop.f32.mrf.mxu0
        %8080 = vmatprep.mubr.f32.mxu0 0.0
        %8081 = vmatmul.mubr.f32.gmra.mxu0 %v6779
        %v8082 = vpop.f32.mrf.mxu0
        %v8083 = vadd.f32 0.0, %v8082
        %v8084 = vpop.f32.mrf.mxu0
        %8085 = vmatprep.mubr.f32.mxu0 0.0
        %8086 = vmatmul.mubr.f32.gmra.mxu0 %v6782
        %v8087 = vpop.f32.mrf.mxu0
        %v8088 = vadd.f32 0.0, %v8087
        %v8089 = vpop.f32.mrf.mxu0
        %8090 = vmatprep.mubr.f32.mxu0 0.0
        %8091 = vmatmul.mubr.f32.gmra.mxu0 %v6785
        %v8092 = vpop.f32.mrf.mxu0
        %v8093 = vadd.f32 0.0, %v8092
        %v8094 = vpop.f32.mrf.mxu0
        %8095 = vmatprep.mubr.f32.mxu0 0.0
        %8096 = vmatmul.mubr.f32.gmra.mxu0 %v6788
        %v8097 = vpop.f32.mrf.mxu0
        %v8098 = vadd.f32 0.0, %v8097
        %v8099 = vpop.f32.mrf.mxu0
        %8100 = vmatprep.mubr.f32.mxu0 0.0
        %8101 = vmatmul.mubr.f32.gmra.mxu0 %v6791
        %v8102 = vpop.f32.mrf.mxu0
        %v8103 = vadd.f32 0.0, %v8102
        %v8104 = vpop.f32.mrf.mxu0
        %8105 = vmatprep.mubr.f32.mxu0 0.0
        %8106 = vmatmul.mubr.f32.gmra.mxu0 %v6794
        %v8107 = vpop.f32.mrf.mxu0
        %v8108 = vadd.f32 0.0, %v8107
        %v8109 = vpop.f32.mrf.mxu0
        %8110 = vmatprep.mubr.f32.mxu0 0.0
        %8111 = vmatmul.mubr.f32.gmra.mxu0 %v6797
        %v8112 = vpop.f32.mrf.mxu0
        %v8113 = vadd.f32 0.0, %v8112
        %v8114 = vpop.f32.mrf.mxu0
        %8115 = vmatprep.mubr.f32.mxu0 0.0
        %8116 = vmatmul.mubr.f32.gmra.mxu0 %v6800
        %v8117 = vpop.f32.mrf.mxu0
        %v8118 = vadd.f32 0.0, %v8117
        %v8119 = vpop.f32.mrf.mxu0
        %8120 = vmatprep.mubr.f32.mxu0 0.0
        %8121 = vmatmul.mubr.f32.gmra.mxu0 %v6803
        %v8122 = vpop.f32.mrf.mxu0
        %v8123 = vadd.f32 0.0, %v8122
        %v8124 = vpop.f32.mrf.mxu0
        %8125 = vmatprep.mubr.f32.mxu0 0.0
        %8126 = vmatmul.mubr.f32.gmra.mxu0 %v6806
        %v8127 = vpop.f32.mrf.mxu0
        %v8128 = vadd.f32 0.0, %v8127
        %v8129 = vpop.f32.mrf.mxu0
        %8130 = vmatprep.mubr.f32.mxu0 0.0
        %8131 = vmatmul.mubr.f32.gmra.mxu0 %v6809
        %v8132 = vpop.f32.mrf.mxu0
        %v8133 = vadd.f32 0.0, %v8132
        %v8134 = vpop.f32.mrf.mxu0
        %8135 = vmatprep.mubr.f32.mxu0 0.0
        %8136 = vmatmul.mubr.f32.gmra.mxu0 %v6812
        %v8137 = vpop.f32.mrf.mxu0
        %v8138 = vadd.f32 0.0, %v8137
        %v8139 = vpop.f32.mrf.mxu0
        %8140 = vmatprep.mubr.f32.mxu0 0.0
        %8141 = vmatmul.mubr.f32.gmra.mxu0 %v6815
        %v8142 = vpop.f32.mrf.mxu0
        %v8143 = vadd.f32 0.0, %v8142
        %v8144 = vpop.f32.mrf.mxu0
        %8145 = vmatprep.mubr.f32.mxu0 0.0
        %8146 = vmatmul.mubr.f32.gmra.mxu0 %v6818
        %v8147 = vpop.f32.mrf.mxu0
        %v8148 = vadd.f32 0.0, %v8147
        %v8149 = vpop.f32.mrf.mxu0
        %8150 = vmatprep.mubr.f32.mxu0 0.0
        %8151 = vmatmul.mubr.f32.gmra.mxu0 %v6821
        %v8152 = vpop.f32.mrf.mxu0
        %v8153 = vadd.f32 0.0, %v8152
        %v8154 = vpop.f32.mrf.mxu0
        %8155 = vmatprep.mubr.f32.mxu0 0.0
        %8156 = vmatmul.mubr.f32.gmra.mxu0 %v6824
        %v8157 = vpop.f32.mrf.mxu0
        %v8158 = vadd.f32 0.0, %v8157
        %v8159 = vpop.f32.mrf.mxu0
        %8160 = vmatprep.mubr.f32.mxu0 0.0
        %8161 = vmatmul.mubr.f32.gmra.mxu0 %v6827
        %v8162 = vpop.f32.mrf.mxu0
        %v8163 = vadd.f32 0.0, %v8162
        %v8164 = vpop.f32.mrf.mxu0
        %8165 = vmatprep.mubr.f32.mxu0 0.0
        %8166 = vmatmul.mubr.f32.gmra.mxu0 %v6830
        %v8167 = vpop.f32.mrf.mxu0
        %v8168 = vadd.f32 0.0, %v8167
        %v8169 = vpop.f32.mrf.mxu0
        %8170 = vmatprep.mubr.f32.mxu0 0.0
        %8171 = vmatmul.mubr.f32.gmra.mxu0 %v6833
        %v8172 = vpop.f32.mrf.mxu0
        %v8173 = vadd.f32 0.0, %v8172
        %v8174 = vpop.f32.mrf.mxu0
        %8175 = vmatprep.mubr.f32.mxu0 0.0
        %8176 = vmatmul.mubr.f32.gmra.mxu0 %v6836
        %v8177 = vpop.f32.mrf.mxu0
        %v8178 = vadd.f32 0.0, %v8177
        %v8179 = vpop.f32.mrf.mxu0
        %8180 = vmatprep.mubr.f32.mxu0 0.0
        %8181 = vmatmul.mubr.f32.gmra.mxu0 %v6839
        %v8182 = vpop.f32.mrf.mxu0
        %v8183 = vadd.f32 0.0, %v8182
        %v8184 = vpop.f32.mrf.mxu0
        %8185 = vdwg.mxu0
        %v8186 = vld [vmem:[#allocation3] sm:$0xff]
        %v8187 = vld [vmem:[#allocation3 + $0x8] sm:$0xff]
        %v8188 = vld [vmem:[#allocation3 + $0x10] sm:$0xff]
        %v8189 = vld [vmem:[#allocation3 + $0x18] sm:$0xff]
        %v8190 = vld [vmem:[#allocation3 + $0x20] sm:$0xff]
        %v8191 = vld [vmem:[#allocation3 + $0x28] sm:$0xff]
        %v8192 = vld [vmem:[#allocation3 + $0x30] sm:$0xff]
        %v8193 = vld [vmem:[#allocation3 + $0x38] sm:$0xff]
        %v8194 = vld [vmem:[#allocation3 + $0x40] sm:$0xff]
        %v8195 = vld [vmem:[#allocation3 + $0x48] sm:$0xff]
        %v8196 = vld [vmem:[#allocation3 + $0x50] sm:$0xff]
        %v8197 = vld [vmem:[#allocation3 + $0x58] sm:$0xff]
        %v8198 = vld [vmem:[#allocation3 + $0x60] sm:$0xff]
        %v8199 = vld [vmem:[#allocation3 + $0x68] sm:$0xff]
        %v8200 = vld [vmem:[#allocation3 + $0x70] sm:$0xff]
        %v8201 = vld [vmem:[#allocation3 + $0x78] sm:$0xff]
        %v8202 = vld [vmem:[#allocation3 + $0x80] sm:$0xff]
        %v8203 = vld [vmem:[#allocation3 + $0x88] sm:$0xff]
        %v8204 = vld [vmem:[#allocation3 + $0x90] sm:$0xff]
        %v8205 = vld [vmem:[#allocation3 + $0x98] sm:$0xff]
        %v8206 = vld [vmem:[#allocation3 + $0xa0] sm:$0xff]
        %v8207 = vld [vmem:[#allocation3 + $0xa8] sm:$0xff]
        %v8208 = vld [vmem:[#allocation3 + $0xb0] sm:$0xff]
        %v8209 = vld [vmem:[#allocation3 + $0xb8] sm:$0xff]
        %v8210 = vld [vmem:[#allocation3 + $0xc0] sm:$0xff]
        %v8211 = vld [vmem:[#allocation3 + $0xc8] sm:$0xff]
        %v8212 = vld [vmem:[#allocation3 + $0xd0] sm:$0xff]
        %v8213 = vld [vmem:[#allocation3 + $0xd8] sm:$0xff]
        %v8214 = vld [vmem:[#allocation3 + $0xe0] sm:$0xff]
        %v8215 = vld [vmem:[#allocation3 + $0xe8] sm:$0xff]
        %v8216 = vld [vmem:[#allocation3 + $0xf0] sm:$0xff]
        %v8217 = vld [vmem:[#allocation3 + $0xf8] sm:$0xff]
        %v8218 = vld [vmem:[#allocation3 + $0x100] sm:$0xff]
        %v8219 = vld [vmem:[#allocation3 + $0x108] sm:$0xff]
        %v8220 = vld [vmem:[#allocation3 + $0x110] sm:$0xff]
        %v8221 = vld [vmem:[#allocation3 + $0x118] sm:$0xff]
        %v8222 = vld [vmem:[#allocation3 + $0x120] sm:$0xff]
        %v8223 = vld [vmem:[#allocation3 + $0x128] sm:$0xff]
        %v8224 = vld [vmem:[#allocation3 + $0x130] sm:$0xff]
        %v8225 = vld [vmem:[#allocation3 + $0x138] sm:$0xff]
        %v8226 = vld [vmem:[#allocation3 + $0x140] sm:$0xff]
        %v8227 = vld [vmem:[#allocation3 + $0x148] sm:$0xff]
        %v8228 = vld [vmem:[#allocation3 + $0x150] sm:$0xff]
        %v8229 = vld [vmem:[#allocation3 + $0x158] sm:$0xff]
        %v8230 = vld [vmem:[#allocation3 + $0x160] sm:$0xff]
        %v8231 = vld [vmem:[#allocation3 + $0x168] sm:$0xff]
        %v8232 = vld [vmem:[#allocation3 + $0x170] sm:$0xff]
        %v8233 = vld [vmem:[#allocation3 + $0x178] sm:$0xff]
        %v8234 = vld [vmem:[#allocation3 + $0x180] sm:$0xff]
        %v8235 = vld [vmem:[#allocation3 + $0x188] sm:$0xff]
        %v8236 = vld [vmem:[#allocation3 + $0x190] sm:$0xff]
        %v8237 = vld [vmem:[#allocation3 + $0x198] sm:$0xff]
        %v8238 = vld [vmem:[#allocation3 + $0x1a0] sm:$0xff]
        %v8239 = vld [vmem:[#allocation3 + $0x1a8] sm:$0xff]
        %v8240 = vld [vmem:[#allocation3 + $0x1b0] sm:$0xff]
        %v8241 = vld [vmem:[#allocation3 + $0x1b8] sm:$0xff]
        %v8242 = vld [vmem:[#allocation3 + $0x1c0] sm:$0xff]
        %v8243 = vld [vmem:[#allocation3 + $0x1c8] sm:$0xff]
        %v8244 = vld [vmem:[#allocation3 + $0x1d0] sm:$0xff]
        %v8245 = vld [vmem:[#allocation3 + $0x1d8] sm:$0xff]
        %v8246 = vld [vmem:[#allocation3 + $0x1e0] sm:$0xff]
        %v8247 = vld [vmem:[#allocation3 + $0x1e8] sm:$0xff]
        %v8248 = vld [vmem:[#allocation3 + $0x1f0] sm:$0xff]
        %v8249 = vld [vmem:[#allocation3 + $0x1f8] sm:$0xff]
        %v8250 = vld [vmem:[#allocation3 + $0x200] sm:$0xff]
        %v8251 = vld [vmem:[#allocation3 + $0x208] sm:$0xff]
        %v8252 = vld [vmem:[#allocation3 + $0x210] sm:$0xff]
        %v8253 = vld [vmem:[#allocation3 + $0x218] sm:$0xff]
        %v8254 = vld [vmem:[#allocation3 + $0x220] sm:$0xff]
        %v8255 = vld [vmem:[#allocation3 + $0x228] sm:$0xff]
        %v8256 = vld [vmem:[#allocation3 + $0x230] sm:$0xff]
        %v8257 = vld [vmem:[#allocation3 + $0x238] sm:$0xff]
        %v8258 = vld [vmem:[#allocation3 + $0x240] sm:$0xff]
        %v8259 = vld [vmem:[#allocation3 + $0x248] sm:$0xff]
        %v8260 = vld [vmem:[#allocation3 + $0x250] sm:$0xff]
        %v8261 = vld [vmem:[#allocation3 + $0x258] sm:$0xff]
        %v8262 = vld [vmem:[#allocation3 + $0x260] sm:$0xff]
        %v8263 = vld [vmem:[#allocation3 + $0x268] sm:$0xff]
        %v8264 = vld [vmem:[#allocation3 + $0x270] sm:$0xff]
        %v8265 = vld [vmem:[#allocation3 + $0x278] sm:$0xff]
        %v8266 = vld [vmem:[#allocation3 + $0x280] sm:$0xff]
        %v8267 = vld [vmem:[#allocation3 + $0x288] sm:$0xff]
        %v8268 = vld [vmem:[#allocation3 + $0x290] sm:$0xff]
        %v8269 = vld [vmem:[#allocation3 + $0x298] sm:$0xff]
        %v8270 = vld [vmem:[#allocation3 + $0x2a0] sm:$0xff]
        %v8271 = vld [vmem:[#allocation3 + $0x2a8] sm:$0xff]
        %v8272 = vld [vmem:[#allocation3 + $0x2b0] sm:$0xff]
        %v8273 = vld [vmem:[#allocation3 + $0x2b8] sm:$0xff]
        %v8274 = vld [vmem:[#allocation3 + $0x2c0] sm:$0xff]
        %v8275 = vld [vmem:[#allocation3 + $0x2c8] sm:$0xff]
        %v8276 = vld [vmem:[#allocation3 + $0x2d0] sm:$0xff]
        %v8277 = vld [vmem:[#allocation3 + $0x2d8] sm:$0xff]
        %v8278 = vld [vmem:[#allocation3 + $0x2e0] sm:$0xff]
        %v8279 = vld [vmem:[#allocation3 + $0x2e8] sm:$0xff]
        %v8280 = vld [vmem:[#allocation3 + $0x2f0] sm:$0xff]
        %v8281 = vld [vmem:[#allocation3 + $0x2f8] sm:$0xff]
        %v8282 = vld [vmem:[#allocation3 + $0x300] sm:$0xff]
        %v8283 = vld [vmem:[#allocation3 + $0x308] sm:$0xff]
        %v8284 = vld [vmem:[#allocation3 + $0x310] sm:$0xff]
        %v8285 = vld [vmem:[#allocation3 + $0x318] sm:$0xff]
        %v8286 = vld [vmem:[#allocation3 + $0x320] sm:$0xff]
        %v8287 = vld [vmem:[#allocation3 + $0x328] sm:$0xff]
        %v8288 = vld [vmem:[#allocation3 + $0x330] sm:$0xff]
        %v8289 = vld [vmem:[#allocation3 + $0x338] sm:$0xff]
        %v8290 = vld [vmem:[#allocation3 + $0x340] sm:$0xff]
        %v8291 = vld [vmem:[#allocation3 + $0x348] sm:$0xff]
        %v8292 = vld [vmem:[#allocation3 + $0x350] sm:$0xff]
        %v8293 = vld [vmem:[#allocation3 + $0x358] sm:$0xff]
        %v8294 = vld [vmem:[#allocation3 + $0x360] sm:$0xff]
        %v8295 = vld [vmem:[#allocation3 + $0x368] sm:$0xff]
        %v8296 = vld [vmem:[#allocation3 + $0x370] sm:$0xff]
        %v8297 = vld [vmem:[#allocation3 + $0x378] sm:$0xff]
        %v8298 = vld [vmem:[#allocation3 + $0x380] sm:$0xff]
        %v8299 = vld [vmem:[#allocation3 + $0x388] sm:$0xff]
        %v8300 = vld [vmem:[#allocation3 + $0x390] sm:$0xff]
        %v8301 = vld [vmem:[#allocation3 + $0x398] sm:$0xff]
        %v8302 = vld [vmem:[#allocation3 + $0x3a0] sm:$0xff]
        %v8303 = vld [vmem:[#allocation3 + $0x3a8] sm:$0xff]
        %v8304 = vld [vmem:[#allocation3 + $0x3b0] sm:$0xff]
        %v8305 = vld [vmem:[#allocation3 + $0x3b8] sm:$0xff]
        %v8306 = vld [vmem:[#allocation3 + $0x3c0] sm:$0xff]
        %v8307 = vld [vmem:[#allocation3 + $0x3c8] sm:$0xff]
        %v8308 = vld [vmem:[#allocation3 + $0x3d0] sm:$0xff]
        %v8309 = vld [vmem:[#allocation3 + $0x3d8] sm:$0xff]
        %v8310 = vld [vmem:[#allocation3 + $0x3e0] sm:$0xff]
        %v8311 = vld [vmem:[#allocation3 + $0x3e8] sm:$0xff]
        %v8312 = vld [vmem:[#allocation3 + $0x3f0] sm:$0xff]
        %v8313 = vld [vmem:[#allocation3 + $0x3f8] sm:$0xff]
        %v8314 = vld [vmem:[#allocation3 + $0x400] sm:$0xff]
        %v8315 = vld [vmem:[#allocation3 + $0x408] sm:$0xff]
        %v8316 = vld [vmem:[#allocation3 + $0x410] sm:$0xff]
        %v8317 = vld [vmem:[#allocation3 + $0x418] sm:$0xff]
        %v8318 = vld [vmem:[#allocation3 + $0x420] sm:$0xff]
        %v8319 = vld [vmem:[#allocation3 + $0x428] sm:$0xff]
        %v8320 = vld [vmem:[#allocation3 + $0x430] sm:$0xff]
        %v8321 = vld [vmem:[#allocation3 + $0x438] sm:$0xff]
        %v8322 = vld [vmem:[#allocation3 + $0x440] sm:$0xff]
        %v8323 = vld [vmem:[#allocation3 + $0x448] sm:$0xff]
        %v8324 = vld [vmem:[#allocation3 + $0x450] sm:$0xff]
        %v8325 = vld [vmem:[#allocation3 + $0x458] sm:$0xff]
        %v8326 = vld [vmem:[#allocation3 + $0x460] sm:$0xff]
        %v8327 = vld [vmem:[#allocation3 + $0x468] sm:$0xff]
        %v8328 = vld [vmem:[#allocation3 + $0x470] sm:$0xff]
        %v8329 = vld [vmem:[#allocation3 + $0x478] sm:$0xff]
        %v8330 = vld [vmem:[#allocation3 + $0x480] sm:$0xff]
        %v8331 = vld [vmem:[#allocation3 + $0x488] sm:$0xff]
        %v8332 = vld [vmem:[#allocation3 + $0x490] sm:$0xff]
        %v8333 = vld [vmem:[#allocation3 + $0x498] sm:$0xff]
        %v8334 = vld [vmem:[#allocation3 + $0x4a0] sm:$0xff]
        %v8335 = vld [vmem:[#allocation3 + $0x4a8] sm:$0xff]
        %v8336 = vld [vmem:[#allocation3 + $0x4b0] sm:$0xff]
        %v8337 = vld [vmem:[#allocation3 + $0x4b8] sm:$0xff]
        %v8338 = vld [vmem:[#allocation3 + $0x4c0] sm:$0xff]
        %v8339 = vld [vmem:[#allocation3 + $0x4c8] sm:$0xff]
        %v8340 = vld [vmem:[#allocation3 + $0x4d0] sm:$0xff]
        %v8341 = vld [vmem:[#allocation3 + $0x4d8] sm:$0xff]
        %v8342 = vld [vmem:[#allocation3 + $0x4e0] sm:$0xff]
        %v8343 = vld [vmem:[#allocation3 + $0x4e8] sm:$0xff]
        %v8344 = vld [vmem:[#allocation3 + $0x4f0] sm:$0xff]
        %v8345 = vld [vmem:[#allocation3 + $0x4f8] sm:$0xff]
        %v8346 = vld [vmem:[#allocation3 + $0x500] sm:$0xff]
        %v8347 = vld [vmem:[#allocation3 + $0x508] sm:$0xff]
        %v8348 = vld [vmem:[#allocation3 + $0x510] sm:$0xff]
        %v8349 = vld [vmem:[#allocation3 + $0x518] sm:$0xff]
        %v8350 = vld [vmem:[#allocation3 + $0x520] sm:$0xff]
        %v8351 = vld [vmem:[#allocation3 + $0x528] sm:$0xff]
        %v8352 = vld [vmem:[#allocation3 + $0x530] sm:$0xff]
        %v8353 = vld [vmem:[#allocation3 + $0x538] sm:$0xff]
        %v8354 = vld [vmem:[#allocation3 + $0x540] sm:$0xff]
        %v8355 = vld [vmem:[#allocation3 + $0x548] sm:$0xff]
        %v8356 = vld [vmem:[#allocation3 + $0x550] sm:$0xff]
        %v8357 = vld [vmem:[#allocation3 + $0x558] sm:$0xff]
        %v8358 = vld [vmem:[#allocation3 + $0x560] sm:$0xff]
        %v8359 = vld [vmem:[#allocation3 + $0x568] sm:$0xff]
        %v8360 = vld [vmem:[#allocation3 + $0x570] sm:$0xff]
        %v8361 = vld [vmem:[#allocation3 + $0x578] sm:$0xff]
        %v8362 = vld [vmem:[#allocation3 + $0x580] sm:$0xff]
        %v8363 = vld [vmem:[#allocation3 + $0x588] sm:$0xff]
        %v8364 = vld [vmem:[#allocation3 + $0x590] sm:$0xff]
        %v8365 = vld [vmem:[#allocation3 + $0x598] sm:$0xff]
        %v8366 = vld [vmem:[#allocation3 + $0x5a0] sm:$0xff]
        %v8367 = vld [vmem:[#allocation3 + $0x5a8] sm:$0xff]
        %v8368 = vld [vmem:[#allocation3 + $0x5b0] sm:$0xff]
        %v8369 = vld [vmem:[#allocation3 + $0x5b8] sm:$0xff]
        %v8370 = vld [vmem:[#allocation3 + $0x5c0] sm:$0xff]
        %v8371 = vld [vmem:[#allocation3 + $0x5c8] sm:$0xff]
        %v8372 = vld [vmem:[#allocation3 + $0x5d0] sm:$0xff]
        %v8373 = vld [vmem:[#allocation3 + $0x5d8] sm:$0xff]
        %v8374 = vld [vmem:[#allocation3 + $0x5e0] sm:$0xff]
        %v8375 = vld [vmem:[#allocation3 + $0x5e8] sm:$0xff]
        %v8376 = vld [vmem:[#allocation3 + $0x5f0] sm:$0xff]
        %v8377 = vld [vmem:[#allocation3 + $0x5f8] sm:$0xff]
        %v8378 = vld [vmem:[#allocation3 + $0x600] sm:$0xff]
        %v8379 = vld [vmem:[#allocation3 + $0x608] sm:$0xff]
        %v8380 = vld [vmem:[#allocation3 + $0x610] sm:$0xff]
        %v8381 = vld [vmem:[#allocation3 + $0x618] sm:$0xff]
        %v8382 = vld [vmem:[#allocation3 + $0x620] sm:$0xff]
        %v8383 = vld [vmem:[#allocation3 + $0x628] sm:$0xff]
        %v8384 = vld [vmem:[#allocation3 + $0x630] sm:$0xff]
        %v8385 = vld [vmem:[#allocation3 + $0x638] sm:$0xff]
        %v8386 = vld [vmem:[#allocation3 + $0x640] sm:$0xff]
        %v8387 = vld [vmem:[#allocation3 + $0x648] sm:$0xff]
        %v8388 = vld [vmem:[#allocation3 + $0x650] sm:$0xff]
        %v8389 = vld [vmem:[#allocation3 + $0x658] sm:$0xff]
        %v8390 = vld [vmem:[#allocation3 + $0x660] sm:$0xff]
        %v8391 = vld [vmem:[#allocation3 + $0x668] sm:$0xff]
        %v8392 = vld [vmem:[#allocation3 + $0x670] sm:$0xff]
        %v8393 = vld [vmem:[#allocation3 + $0x678] sm:$0xff]
        %v8394 = vld [vmem:[#allocation3 + $0x680] sm:$0xff]
        %v8395 = vld [vmem:[#allocation3 + $0x688] sm:$0xff]
        %v8396 = vld [vmem:[#allocation3 + $0x690] sm:$0xff]
        %v8397 = vld [vmem:[#allocation3 + $0x698] sm:$0xff]
        %v8398 = vld [vmem:[#allocation3 + $0x6a0] sm:$0xff]
        %v8399 = vld [vmem:[#allocation3 + $0x6a8] sm:$0xff]
        %v8400 = vld [vmem:[#allocation3 + $0x6b0] sm:$0xff]
        %v8401 = vld [vmem:[#allocation3 + $0x6b8] sm:$0xff]
        %v8402 = vld [vmem:[#allocation3 + $0x6c0] sm:$0xff]
        %v8403 = vld [vmem:[#allocation3 + $0x6c8] sm:$0xff]
        %v8404 = vld [vmem:[#allocation3 + $0x6d0] sm:$0xff]
        %v8405 = vld [vmem:[#allocation3 + $0x6d8] sm:$0xff]
        %v8406 = vld [vmem:[#allocation3 + $0x6e0] sm:$0xff]
        %v8407 = vld [vmem:[#allocation3 + $0x6e8] sm:$0xff]
        %v8408 = vld [vmem:[#allocation3 + $0x6f0] sm:$0xff]
        %v8409 = vld [vmem:[#allocation3 + $0x6f8] sm:$0xff]
        %v8410 = vld [vmem:[#allocation3 + $0x700] sm:$0xff]
        %v8411 = vld [vmem:[#allocation3 + $0x708] sm:$0xff]
        %v8412 = vld [vmem:[#allocation3 + $0x710] sm:$0xff]
        %v8413 = vld [vmem:[#allocation3 + $0x718] sm:$0xff]
        %v8414 = vld [vmem:[#allocation3 + $0x720] sm:$0xff]
        %v8415 = vld [vmem:[#allocation3 + $0x728] sm:$0xff]
        %v8416 = vld [vmem:[#allocation3 + $0x730] sm:$0xff]
        %v8417 = vld [vmem:[#allocation3 + $0x738] sm:$0xff]
        %v8418 = vld [vmem:[#allocation3 + $0x740] sm:$0xff]
        %v8419 = vld [vmem:[#allocation3 + $0x748] sm:$0xff]
        %v8420 = vld [vmem:[#allocation3 + $0x750] sm:$0xff]
        %v8421 = vld [vmem:[#allocation3 + $0x758] sm:$0xff]
        %v8422 = vld [vmem:[#allocation3 + $0x760] sm:$0xff]
        %v8423 = vld [vmem:[#allocation3 + $0x768] sm:$0xff]
        %v8424 = vld [vmem:[#allocation3 + $0x770] sm:$0xff]
        %v8425 = vld [vmem:[#allocation3 + $0x778] sm:$0xff]
        %v8426 = vld [vmem:[#allocation3 + $0x780] sm:$0xff]
        %v8427 = vld [vmem:[#allocation3 + $0x788] sm:$0xff]
        %v8428 = vld [vmem:[#allocation3 + $0x790] sm:$0xff]
        %v8429 = vld [vmem:[#allocation3 + $0x798] sm:$0xff]
        %v8430 = vld [vmem:[#allocation3 + $0x7a0] sm:$0xff]
        %v8431 = vld [vmem:[#allocation3 + $0x7a8] sm:$0xff]
        %v8432 = vld [vmem:[#allocation3 + $0x7b0] sm:$0xff]
        %v8433 = vld [vmem:[#allocation3 + $0x7b8] sm:$0xff]
        %v8434 = vld [vmem:[#allocation3 + $0x7c0] sm:$0xff]
        %v8435 = vld [vmem:[#allocation3 + $0x7c8] sm:$0xff]
        %v8436 = vld [vmem:[#allocation3 + $0x7d0] sm:$0xff]
        %v8437 = vld [vmem:[#allocation3 + $0x7d8] sm:$0xff]
        %v8438 = vld [vmem:[#allocation3 + $0x7e0] sm:$0xff]
        %v8439 = vld [vmem:[#allocation3 + $0x7e8] sm:$0xff]
        %v8440 = vld [vmem:[#allocation3 + $0x7f0] sm:$0xff]
        %v8441 = vld [vmem:[#allocation3 + $0x7f8] sm:$0xff]
        %8443 = vset.pattern.permute.xlu0 0
        %8444 = vperm.xlu0 %8443, %v8186
        %v8445 = vpop.permute.xlu0 %8444
        %8448 = vset.pattern.permute.xlu0 0
        %8449 = vperm.xlu0 %8448, %v8187
        %v8450 = vpop.permute.xlu0 %8449
        %8453 = vset.pattern.permute.xlu0 0
        %8454 = vperm.xlu0 %8453, %v8188
        %v8455 = vpop.permute.xlu0 %8454
        %8458 = vset.pattern.permute.xlu0 0
        %8459 = vperm.xlu0 %8458, %v8189
        %v8460 = vpop.permute.xlu0 %8459
        %8463 = vset.pattern.permute.xlu0 0
        %8464 = vperm.xlu0 %8463, %v8190
        %v8465 = vpop.permute.xlu0 %8464
        %8468 = vset.pattern.permute.xlu0 0
        %8469 = vperm.xlu0 %8468, %v8191
        %v8470 = vpop.permute.xlu0 %8469
        %8473 = vset.pattern.permute.xlu0 0
        %8474 = vperm.xlu0 %8473, %v8192
        %v8475 = vpop.permute.xlu0 %8474
        %8478 = vset.pattern.permute.xlu0 0
        %8479 = vperm.xlu0 %8478, %v8193
        %v8480 = vpop.permute.xlu0 %8479
        %8483 = vset.pattern.permute.xlu0 0
        %8484 = vperm.xlu0 %8483, %v8194
        %v8485 = vpop.permute.xlu0 %8484
        %8488 = vset.pattern.permute.xlu0 0
        %8489 = vperm.xlu0 %8488, %v8195
        %v8490 = vpop.permute.xlu0 %8489
        %8493 = vset.pattern.permute.xlu0 0
        %8494 = vperm.xlu0 %8493, %v8196
        %v8495 = vpop.permute.xlu0 %8494
        %8498 = vset.pattern.permute.xlu0 0
        %8499 = vperm.xlu0 %8498, %v8197
        %v8500 = vpop.permute.xlu0 %8499
        %8503 = vset.pattern.permute.xlu0 0
        %8504 = vperm.xlu0 %8503, %v8198
        %v8505 = vpop.permute.xlu0 %8504
        %8508 = vset.pattern.permute.xlu0 0
        %8509 = vperm.xlu0 %8508, %v8199
        %v8510 = vpop.permute.xlu0 %8509
        %8513 = vset.pattern.permute.xlu0 0
        %8514 = vperm.xlu0 %8513, %v8200
        %v8515 = vpop.permute.xlu0 %8514
        %8518 = vset.pattern.permute.xlu0 0
        %8519 = vperm.xlu0 %8518, %v8201
        %v8520 = vpop.permute.xlu0 %8519
        %8523 = vset.pattern.permute.xlu0 0
        %8524 = vperm.xlu0 %8523, %v8202
        %v8525 = vpop.permute.xlu0 %8524
        %8528 = vset.pattern.permute.xlu0 0
        %8529 = vperm.xlu0 %8528, %v8203
        %v8530 = vpop.permute.xlu0 %8529
        %8533 = vset.pattern.permute.xlu0 0
        %8534 = vperm.xlu0 %8533, %v8204
        %v8535 = vpop.permute.xlu0 %8534
        %8538 = vset.pattern.permute.xlu0 0
        %8539 = vperm.xlu0 %8538, %v8205
        %v8540 = vpop.permute.xlu0 %8539
        %8543 = vset.pattern.permute.xlu0 0
        %8544 = vperm.xlu0 %8543, %v8206
        %v8545 = vpop.permute.xlu0 %8544
        %8548 = vset.pattern.permute.xlu0 0
        %8549 = vperm.xlu0 %8548, %v8207
        %v8550 = vpop.permute.xlu0 %8549
        %8553 = vset.pattern.permute.xlu0 0
        %8554 = vperm.xlu0 %8553, %v8208
        %v8555 = vpop.permute.xlu0 %8554
        %8558 = vset.pattern.permute.xlu0 0
        %8559 = vperm.xlu0 %8558, %v8209
        %v8560 = vpop.permute.xlu0 %8559
        %8563 = vset.pattern.permute.xlu0 0
        %8564 = vperm.xlu0 %8563, %v8210
        %v8565 = vpop.permute.xlu0 %8564
        %8568 = vset.pattern.permute.xlu0 0
        %8569 = vperm.xlu0 %8568, %v8211
        %v8570 = vpop.permute.xlu0 %8569
        %8573 = vset.pattern.permute.xlu0 0
        %8574 = vperm.xlu0 %8573, %v8212
        %v8575 = vpop.permute.xlu0 %8574
        %8578 = vset.pattern.permute.xlu0 0
        %8579 = vperm.xlu0 %8578, %v8213
        %v8580 = vpop.permute.xlu0 %8579
        %8583 = vset.pattern.permute.xlu0 0
        %8584 = vperm.xlu0 %8583, %v8214
        %v8585 = vpop.permute.xlu0 %8584
        %8588 = vset.pattern.permute.xlu0 0
        %8589 = vperm.xlu0 %8588, %v8215
        %v8590 = vpop.permute.xlu0 %8589
        %8593 = vset.pattern.permute.xlu0 0
        %8594 = vperm.xlu0 %8593, %v8216
        %v8595 = vpop.permute.xlu0 %8594
        %8598 = vset.pattern.permute.xlu0 0
        %8599 = vperm.xlu0 %8598, %v8217
        %v8600 = vpop.permute.xlu0 %8599
        %8603 = vset.pattern.permute.xlu0 0
        %8604 = vperm.xlu0 %8603, %v8218
        %v8605 = vpop.permute.xlu0 %8604
        %8608 = vset.pattern.permute.xlu0 0
        %8609 = vperm.xlu0 %8608, %v8219
        %v8610 = vpop.permute.xlu0 %8609
        %8613 = vset.pattern.permute.xlu0 0
        %8614 = vperm.xlu0 %8613, %v8220
        %v8615 = vpop.permute.xlu0 %8614
        %8618 = vset.pattern.permute.xlu0 0
        %8619 = vperm.xlu0 %8618, %v8221
        %v8620 = vpop.permute.xlu0 %8619
        %8623 = vset.pattern.permute.xlu0 0
        %8624 = vperm.xlu0 %8623, %v8222
        %v8625 = vpop.permute.xlu0 %8624
        %8628 = vset.pattern.permute.xlu0 0
        %8629 = vperm.xlu0 %8628, %v8223
        %v8630 = vpop.permute.xlu0 %8629
        %8633 = vset.pattern.permute.xlu0 0
        %8634 = vperm.xlu0 %8633, %v8224
        %v8635 = vpop.permute.xlu0 %8634
        %8638 = vset.pattern.permute.xlu0 0
        %8639 = vperm.xlu0 %8638, %v8225
        %v8640 = vpop.permute.xlu0 %8639
        %8643 = vset.pattern.permute.xlu0 0
        %8644 = vperm.xlu0 %8643, %v8226
        %v8645 = vpop.permute.xlu0 %8644
        %8648 = vset.pattern.permute.xlu0 0
        %8649 = vperm.xlu0 %8648, %v8227
        %v8650 = vpop.permute.xlu0 %8649
        %8653 = vset.pattern.permute.xlu0 0
        %8654 = vperm.xlu0 %8653, %v8228
        %v8655 = vpop.permute.xlu0 %8654
        %8658 = vset.pattern.permute.xlu0 0
        %8659 = vperm.xlu0 %8658, %v8229
        %v8660 = vpop.permute.xlu0 %8659
        %8663 = vset.pattern.permute.xlu0 0
        %8664 = vperm.xlu0 %8663, %v8230
        %v8665 = vpop.permute.xlu0 %8664
        %8668 = vset.pattern.permute.xlu0 0
        %8669 = vperm.xlu0 %8668, %v8231
        %v8670 = vpop.permute.xlu0 %8669
        %8673 = vset.pattern.permute.xlu0 0
        %8674 = vperm.xlu0 %8673, %v8232
        %v8675 = vpop.permute.xlu0 %8674
        %8678 = vset.pattern.permute.xlu0 0
        %8679 = vperm.xlu0 %8678, %v8233
        %v8680 = vpop.permute.xlu0 %8679
        %8683 = vset.pattern.permute.xlu0 0
        %8684 = vperm.xlu0 %8683, %v8234
        %v8685 = vpop.permute.xlu0 %8684
        %8688 = vset.pattern.permute.xlu0 0
        %8689 = vperm.xlu0 %8688, %v8235
        %v8690 = vpop.permute.xlu0 %8689
        %8693 = vset.pattern.permute.xlu0 0
        %8694 = vperm.xlu0 %8693, %v8236
        %v8695 = vpop.permute.xlu0 %8694
        %8698 = vset.pattern.permute.xlu0 0
        %8699 = vperm.xlu0 %8698, %v8237
        %v8700 = vpop.permute.xlu0 %8699
        %8703 = vset.pattern.permute.xlu0 0
        %8704 = vperm.xlu0 %8703, %v8238
        %v8705 = vpop.permute.xlu0 %8704
        %8708 = vset.pattern.permute.xlu0 0
        %8709 = vperm.xlu0 %8708, %v8239
        %v8710 = vpop.permute.xlu0 %8709
        %8713 = vset.pattern.permute.xlu0 0
        %8714 = vperm.xlu0 %8713, %v8240
        %v8715 = vpop.permute.xlu0 %8714
        %8718 = vset.pattern.permute.xlu0 0
        %8719 = vperm.xlu0 %8718, %v8241
        %v8720 = vpop.permute.xlu0 %8719
        %8723 = vset.pattern.permute.xlu0 0
        %8724 = vperm.xlu0 %8723, %v8242
        %v8725 = vpop.permute.xlu0 %8724
        %8728 = vset.pattern.permute.xlu0 0
        %8729 = vperm.xlu0 %8728, %v8243
        %v8730 = vpop.permute.xlu0 %8729
        %8733 = vset.pattern.permute.xlu0 0
        %8734 = vperm.xlu0 %8733, %v8244
        %v8735 = vpop.permute.xlu0 %8734
        %8738 = vset.pattern.permute.xlu0 0
        %8739 = vperm.xlu0 %8738, %v8245
        %v8740 = vpop.permute.xlu0 %8739
        %8743 = vset.pattern.permute.xlu0 0
        %8744 = vperm.xlu0 %8743, %v8246
        %v8745 = vpop.permute.xlu0 %8744
        %8748 = vset.pattern.permute.xlu0 0
        %8749 = vperm.xlu0 %8748, %v8247
        %v8750 = vpop.permute.xlu0 %8749
        %8753 = vset.pattern.permute.xlu0 0
        %8754 = vperm.xlu0 %8753, %v8248
        %v8755 = vpop.permute.xlu0 %8754
        %8758 = vset.pattern.permute.xlu0 0
        %8759 = vperm.xlu0 %8758, %v8249
        %v8760 = vpop.permute.xlu0 %8759
        %8763 = vset.pattern.permute.xlu0 0
        %8764 = vperm.xlu0 %8763, %v8250
        %v8765 = vpop.permute.xlu0 %8764
        %8768 = vset.pattern.permute.xlu0 0
        %8769 = vperm.xlu0 %8768, %v8251
        %v8770 = vpop.permute.xlu0 %8769
        %8773 = vset.pattern.permute.xlu0 0
        %8774 = vperm.xlu0 %8773, %v8252
        %v8775 = vpop.permute.xlu0 %8774
        %8778 = vset.pattern.permute.xlu0 0
        %8779 = vperm.xlu0 %8778, %v8253
        %v8780 = vpop.permute.xlu0 %8779
        %8783 = vset.pattern.permute.xlu0 0
        %8784 = vperm.xlu0 %8783, %v8254
        %v8785 = vpop.permute.xlu0 %8784
        %8788 = vset.pattern.permute.xlu0 0
        %8789 = vperm.xlu0 %8788, %v8255
        %v8790 = vpop.permute.xlu0 %8789
        %8793 = vset.pattern.permute.xlu0 0
        %8794 = vperm.xlu0 %8793, %v8256
        %v8795 = vpop.permute.xlu0 %8794
        %8798 = vset.pattern.permute.xlu0 0
        %8799 = vperm.xlu0 %8798, %v8257
        %v8800 = vpop.permute.xlu0 %8799
        %8803 = vset.pattern.permute.xlu0 0
        %8804 = vperm.xlu0 %8803, %v8258
        %v8805 = vpop.permute.xlu0 %8804
        %8808 = vset.pattern.permute.xlu0 0
        %8809 = vperm.xlu0 %8808, %v8259
        %v8810 = vpop.permute.xlu0 %8809
        %8813 = vset.pattern.permute.xlu0 0
        %8814 = vperm.xlu0 %8813, %v8260
        %v8815 = vpop.permute.xlu0 %8814
        %8818 = vset.pattern.permute.xlu0 0
        %8819 = vperm.xlu0 %8818, %v8261
        %v8820 = vpop.permute.xlu0 %8819
        %8823 = vset.pattern.permute.xlu0 0
        %8824 = vperm.xlu0 %8823, %v8262
        %v8825 = vpop.permute.xlu0 %8824
        %8828 = vset.pattern.permute.xlu0 0
        %8829 = vperm.xlu0 %8828, %v8263
        %v8830 = vpop.permute.xlu0 %8829
        %8833 = vset.pattern.permute.xlu0 0
        %8834 = vperm.xlu0 %8833, %v8264
        %v8835 = vpop.permute.xlu0 %8834
        %8838 = vset.pattern.permute.xlu0 0
        %8839 = vperm.xlu0 %8838, %v8265
        %v8840 = vpop.permute.xlu0 %8839
        %8843 = vset.pattern.permute.xlu0 0
        %8844 = vperm.xlu0 %8843, %v8266
        %v8845 = vpop.permute.xlu0 %8844
        %8848 = vset.pattern.permute.xlu0 0
        %8849 = vperm.xlu0 %8848, %v8267
        %v8850 = vpop.permute.xlu0 %8849
        %8853 = vset.pattern.permute.xlu0 0
        %8854 = vperm.xlu0 %8853, %v8268
        %v8855 = vpop.permute.xlu0 %8854
        %8858 = vset.pattern.permute.xlu0 0
        %8859 = vperm.xlu0 %8858, %v8269
        %v8860 = vpop.permute.xlu0 %8859
        %8863 = vset.pattern.permute.xlu0 0
        %8864 = vperm.xlu0 %8863, %v8270
        %v8865 = vpop.permute.xlu0 %8864
        %8868 = vset.pattern.permute.xlu0 0
        %8869 = vperm.xlu0 %8868, %v8271
        %v8870 = vpop.permute.xlu0 %8869
        %8873 = vset.pattern.permute.xlu0 0
        %8874 = vperm.xlu0 %8873, %v8272
        %v8875 = vpop.permute.xlu0 %8874
        %8878 = vset.pattern.permute.xlu0 0
        %8879 = vperm.xlu0 %8878, %v8273
        %v8880 = vpop.permute.xlu0 %8879
        %8883 = vset.pattern.permute.xlu0 0
        %8884 = vperm.xlu0 %8883, %v8274
        %v8885 = vpop.permute.xlu0 %8884
        %8888 = vset.pattern.permute.xlu0 0
        %8889 = vperm.xlu0 %8888, %v8275
        %v8890 = vpop.permute.xlu0 %8889
        %8893 = vset.pattern.permute.xlu0 0
        %8894 = vperm.xlu0 %8893, %v8276
        %v8895 = vpop.permute.xlu0 %8894
        %8898 = vset.pattern.permute.xlu0 0
        %8899 = vperm.xlu0 %8898, %v8277
        %v8900 = vpop.permute.xlu0 %8899
        %8903 = vset.pattern.permute.xlu0 0
        %8904 = vperm.xlu0 %8903, %v8278
        %v8905 = vpop.permute.xlu0 %8904
        %8908 = vset.pattern.permute.xlu0 0
        %8909 = vperm.xlu0 %8908, %v8279
        %v8910 = vpop.permute.xlu0 %8909
        %8913 = vset.pattern.permute.xlu0 0
        %8914 = vperm.xlu0 %8913, %v8280
        %v8915 = vpop.permute.xlu0 %8914
        %8918 = vset.pattern.permute.xlu0 0
        %8919 = vperm.xlu0 %8918, %v8281
        %v8920 = vpop.permute.xlu0 %8919
        %8923 = vset.pattern.permute.xlu0 0
        %8924 = vperm.xlu0 %8923, %v8282
        %v8925 = vpop.permute.xlu0 %8924
        %8928 = vset.pattern.permute.xlu0 0
        %8929 = vperm.xlu0 %8928, %v8283
        %v8930 = vpop.permute.xlu0 %8929
        %8933 = vset.pattern.permute.xlu0 0
        %8934 = vperm.xlu0 %8933, %v8284
        %v8935 = vpop.permute.xlu0 %8934
        %8938 = vset.pattern.permute.xlu0 0
        %8939 = vperm.xlu0 %8938, %v8285
        %v8940 = vpop.permute.xlu0 %8939
        %8943 = vset.pattern.permute.xlu0 0
        %8944 = vperm.xlu0 %8943, %v8286
        %v8945 = vpop.permute.xlu0 %8944
        %8948 = vset.pattern.permute.xlu0 0
        %8949 = vperm.xlu0 %8948, %v8287
        %v8950 = vpop.permute.xlu0 %8949
        %8953 = vset.pattern.permute.xlu0 0
        %8954 = vperm.xlu0 %8953, %v8288
        %v8955 = vpop.permute.xlu0 %8954
        %8958 = vset.pattern.permute.xlu0 0
        %8959 = vperm.xlu0 %8958, %v8289
        %v8960 = vpop.permute.xlu0 %8959
        %8963 = vset.pattern.permute.xlu0 0
        %8964 = vperm.xlu0 %8963, %v8290
        %v8965 = vpop.permute.xlu0 %8964
        %8968 = vset.pattern.permute.xlu0 0
        %8969 = vperm.xlu0 %8968, %v8291
        %v8970 = vpop.permute.xlu0 %8969
        %8973 = vset.pattern.permute.xlu0 0
        %8974 = vperm.xlu0 %8973, %v8292
        %v8975 = vpop.permute.xlu0 %8974
        %8978 = vset.pattern.permute.xlu0 0
        %8979 = vperm.xlu0 %8978, %v8293
        %v8980 = vpop.permute.xlu0 %8979
        %8983 = vset.pattern.permute.xlu0 0
        %8984 = vperm.xlu0 %8983, %v8294
        %v8985 = vpop.permute.xlu0 %8984
        %8988 = vset.pattern.permute.xlu0 0
        %8989 = vperm.xlu0 %8988, %v8295
        %v8990 = vpop.permute.xlu0 %8989
        %8993 = vset.pattern.permute.xlu0 0
        %8994 = vperm.xlu0 %8993, %v8296
        %v8995 = vpop.permute.xlu0 %8994
        %8998 = vset.pattern.permute.xlu0 0
        %8999 = vperm.xlu0 %8998, %v8297
        %v9000 = vpop.permute.xlu0 %8999
        %9003 = vset.pattern.permute.xlu0 0
        %9004 = vperm.xlu0 %9003, %v8298
        %v9005 = vpop.permute.xlu0 %9004
        %9008 = vset.pattern.permute.xlu0 0
        %9009 = vperm.xlu0 %9008, %v8299
        %v9010 = vpop.permute.xlu0 %9009
        %9013 = vset.pattern.permute.xlu0 0
        %9014 = vperm.xlu0 %9013, %v8300
        %v9015 = vpop.permute.xlu0 %9014
        %9018 = vset.pattern.permute.xlu0 0
        %9019 = vperm.xlu0 %9018, %v8301
        %v9020 = vpop.permute.xlu0 %9019
        %9023 = vset.pattern.permute.xlu0 0
        %9024 = vperm.xlu0 %9023, %v8302
        %v9025 = vpop.permute.xlu0 %9024
        %9028 = vset.pattern.permute.xlu0 0
        %9029 = vperm.xlu0 %9028, %v8303
        %v9030 = vpop.permute.xlu0 %9029
        %9033 = vset.pattern.permute.xlu0 0
        %9034 = vperm.xlu0 %9033, %v8304
        %v9035 = vpop.permute.xlu0 %9034
        %9038 = vset.pattern.permute.xlu0 0
        %9039 = vperm.xlu0 %9038, %v8305
        %v9040 = vpop.permute.xlu0 %9039
        %9043 = vset.pattern.permute.xlu0 0
        %9044 = vperm.xlu0 %9043, %v8306
        %v9045 = vpop.permute.xlu0 %9044
        %9048 = vset.pattern.permute.xlu0 0
        %9049 = vperm.xlu0 %9048, %v8307
        %v9050 = vpop.permute.xlu0 %9049
        %9053 = vset.pattern.permute.xlu0 0
        %9054 = vperm.xlu0 %9053, %v8308
        %v9055 = vpop.permute.xlu0 %9054
        %9058 = vset.pattern.permute.xlu0 0
        %9059 = vperm.xlu0 %9058, %v8309
        %v9060 = vpop.permute.xlu0 %9059
        %9063 = vset.pattern.permute.xlu0 0
        %9064 = vperm.xlu0 %9063, %v8310
        %v9065 = vpop.permute.xlu0 %9064
        %9068 = vset.pattern.permute.xlu0 0
        %9069 = vperm.xlu0 %9068, %v8311
        %v9070 = vpop.permute.xlu0 %9069
        %9073 = vset.pattern.permute.xlu0 0
        %9074 = vperm.xlu0 %9073, %v8312
        %v9075 = vpop.permute.xlu0 %9074
        %9078 = vset.pattern.permute.xlu0 0
        %9079 = vperm.xlu0 %9078, %v8313
        %v9080 = vpop.permute.xlu0 %9079
        %9083 = vset.pattern.permute.xlu0 0
        %9084 = vperm.xlu0 %9083, %v8314
        %v9085 = vpop.permute.xlu0 %9084
        %9088 = vset.pattern.permute.xlu0 0
        %9089 = vperm.xlu0 %9088, %v8315
        %v9090 = vpop.permute.xlu0 %9089
        %9093 = vset.pattern.permute.xlu0 0
        %9094 = vperm.xlu0 %9093, %v8316
        %v9095 = vpop.permute.xlu0 %9094
        %9098 = vset.pattern.permute.xlu0 0
        %9099 = vperm.xlu0 %9098, %v8317
        %v9100 = vpop.permute.xlu0 %9099
        %9103 = vset.pattern.permute.xlu0 0
        %9104 = vperm.xlu0 %9103, %v8318
        %v9105 = vpop.permute.xlu0 %9104
        %9108 = vset.pattern.permute.xlu0 0
        %9109 = vperm.xlu0 %9108, %v8319
        %v9110 = vpop.permute.xlu0 %9109
        %9113 = vset.pattern.permute.xlu0 0
        %9114 = vperm.xlu0 %9113, %v8320
        %v9115 = vpop.permute.xlu0 %9114
        %9118 = vset.pattern.permute.xlu0 0
        %9119 = vperm.xlu0 %9118, %v8321
        %v9120 = vpop.permute.xlu0 %9119
        %9123 = vset.pattern.permute.xlu0 0
        %9124 = vperm.xlu0 %9123, %v8322
        %v9125 = vpop.permute.xlu0 %9124
        %9128 = vset.pattern.permute.xlu0 0
        %9129 = vperm.xlu0 %9128, %v8323
        %v9130 = vpop.permute.xlu0 %9129
        %9133 = vset.pattern.permute.xlu0 0
        %9134 = vperm.xlu0 %9133, %v8324
        %v9135 = vpop.permute.xlu0 %9134
        %9138 = vset.pattern.permute.xlu0 0
        %9139 = vperm.xlu0 %9138, %v8325
        %v9140 = vpop.permute.xlu0 %9139
        %9143 = vset.pattern.permute.xlu0 0
        %9144 = vperm.xlu0 %9143, %v8326
        %v9145 = vpop.permute.xlu0 %9144
        %9148 = vset.pattern.permute.xlu0 0
        %9149 = vperm.xlu0 %9148, %v8327
        %v9150 = vpop.permute.xlu0 %9149
        %9153 = vset.pattern.permute.xlu0 0
        %9154 = vperm.xlu0 %9153, %v8328
        %v9155 = vpop.permute.xlu0 %9154
        %9158 = vset.pattern.permute.xlu0 0
        %9159 = vperm.xlu0 %9158, %v8329
        %v9160 = vpop.permute.xlu0 %9159
        %9163 = vset.pattern.permute.xlu0 0
        %9164 = vperm.xlu0 %9163, %v8330
        %v9165 = vpop.permute.xlu0 %9164
        %9168 = vset.pattern.permute.xlu0 0
        %9169 = vperm.xlu0 %9168, %v8331
        %v9170 = vpop.permute.xlu0 %9169
        %9173 = vset.pattern.permute.xlu0 0
        %9174 = vperm.xlu0 %9173, %v8332
        %v9175 = vpop.permute.xlu0 %9174
        %9178 = vset.pattern.permute.xlu0 0
        %9179 = vperm.xlu0 %9178, %v8333
        %v9180 = vpop.permute.xlu0 %9179
        %9183 = vset.pattern.permute.xlu0 0
        %9184 = vperm.xlu0 %9183, %v8334
        %v9185 = vpop.permute.xlu0 %9184
        %9188 = vset.pattern.permute.xlu0 0
        %9189 = vperm.xlu0 %9188, %v8335
        %v9190 = vpop.permute.xlu0 %9189
        %9193 = vset.pattern.permute.xlu0 0
        %9194 = vperm.xlu0 %9193, %v8336
        %v9195 = vpop.permute.xlu0 %9194
        %9198 = vset.pattern.permute.xlu0 0
        %9199 = vperm.xlu0 %9198, %v8337
        %v9200 = vpop.permute.xlu0 %9199
        %9203 = vset.pattern.permute.xlu0 0
        %9204 = vperm.xlu0 %9203, %v8338
        %v9205 = vpop.permute.xlu0 %9204
        %9208 = vset.pattern.permute.xlu0 0
        %9209 = vperm.xlu0 %9208, %v8339
        %v9210 = vpop.permute.xlu0 %9209
        %9213 = vset.pattern.permute.xlu0 0
        %9214 = vperm.xlu0 %9213, %v8340
        %v9215 = vpop.permute.xlu0 %9214
        %9218 = vset.pattern.permute.xlu0 0
        %9219 = vperm.xlu0 %9218, %v8341
        %v9220 = vpop.permute.xlu0 %9219
        %9223 = vset.pattern.permute.xlu0 0
        %9224 = vperm.xlu0 %9223, %v8342
        %v9225 = vpop.permute.xlu0 %9224
        %9228 = vset.pattern.permute.xlu0 0
        %9229 = vperm.xlu0 %9228, %v8343
        %v9230 = vpop.permute.xlu0 %9229
        %9233 = vset.pattern.permute.xlu0 0
        %9234 = vperm.xlu0 %9233, %v8344
        %v9235 = vpop.permute.xlu0 %9234
        %9238 = vset.pattern.permute.xlu0 0
        %9239 = vperm.xlu0 %9238, %v8345
        %v9240 = vpop.permute.xlu0 %9239
        %9243 = vset.pattern.permute.xlu0 0
        %9244 = vperm.xlu0 %9243, %v8346
        %v9245 = vpop.permute.xlu0 %9244
        %9248 = vset.pattern.permute.xlu0 0
        %9249 = vperm.xlu0 %9248, %v8347
        %v9250 = vpop.permute.xlu0 %9249
        %9253 = vset.pattern.permute.xlu0 0
        %9254 = vperm.xlu0 %9253, %v8348
        %v9255 = vpop.permute.xlu0 %9254
        %9258 = vset.pattern.permute.xlu0 0
        %9259 = vperm.xlu0 %9258, %v8349
        %v9260 = vpop.permute.xlu0 %9259
        %9263 = vset.pattern.permute.xlu0 0
        %9264 = vperm.xlu0 %9263, %v8350
        %v9265 = vpop.permute.xlu0 %9264
        %9268 = vset.pattern.permute.xlu0 0
        %9269 = vperm.xlu0 %9268, %v8351
        %v9270 = vpop.permute.xlu0 %9269
        %9273 = vset.pattern.permute.xlu0 0
        %9274 = vperm.xlu0 %9273, %v8352
        %v9275 = vpop.permute.xlu0 %9274
        %9278 = vset.pattern.permute.xlu0 0
        %9279 = vperm.xlu0 %9278, %v8353
        %v9280 = vpop.permute.xlu0 %9279
        %9283 = vset.pattern.permute.xlu0 0
        %9284 = vperm.xlu0 %9283, %v8354
        %v9285 = vpop.permute.xlu0 %9284
        %9288 = vset.pattern.permute.xlu0 0
        %9289 = vperm.xlu0 %9288, %v8355
        %v9290 = vpop.permute.xlu0 %9289
        %9293 = vset.pattern.permute.xlu0 0
        %9294 = vperm.xlu0 %9293, %v8356
        %v9295 = vpop.permute.xlu0 %9294
        %9298 = vset.pattern.permute.xlu0 0
        %9299 = vperm.xlu0 %9298, %v8357
        %v9300 = vpop.permute.xlu0 %9299
        %9303 = vset.pattern.permute.xlu0 0
        %9304 = vperm.xlu0 %9303, %v8358
        %v9305 = vpop.permute.xlu0 %9304
        %9308 = vset.pattern.permute.xlu0 0
        %9309 = vperm.xlu0 %9308, %v8359
        %v9310 = vpop.permute.xlu0 %9309
        %9313 = vset.pattern.permute.xlu0 0
        %9314 = vperm.xlu0 %9313, %v8360
        %v9315 = vpop.permute.xlu0 %9314
        %9318 = vset.pattern.permute.xlu0 0
        %9319 = vperm.xlu0 %9318, %v8361
        %v9320 = vpop.permute.xlu0 %9319
        %9323 = vset.pattern.permute.xlu0 0
        %9324 = vperm.xlu0 %9323, %v8362
        %v9325 = vpop.permute.xlu0 %9324
        %9328 = vset.pattern.permute.xlu0 0
        %9329 = vperm.xlu0 %9328, %v8363
        %v9330 = vpop.permute.xlu0 %9329
        %9333 = vset.pattern.permute.xlu0 0
        %9334 = vperm.xlu0 %9333, %v8364
        %v9335 = vpop.permute.xlu0 %9334
        %9338 = vset.pattern.permute.xlu0 0
        %9339 = vperm.xlu0 %9338, %v8365
        %v9340 = vpop.permute.xlu0 %9339
        %9343 = vset.pattern.permute.xlu0 0
        %9344 = vperm.xlu0 %9343, %v8366
        %v9345 = vpop.permute.xlu0 %9344
        %9348 = vset.pattern.permute.xlu0 0
        %9349 = vperm.xlu0 %9348, %v8367
        %v9350 = vpop.permute.xlu0 %9349
        %9353 = vset.pattern.permute.xlu0 0
        %9354 = vperm.xlu0 %9353, %v8368
        %v9355 = vpop.permute.xlu0 %9354
        %9358 = vset.pattern.permute.xlu0 0
        %9359 = vperm.xlu0 %9358, %v8369
        %v9360 = vpop.permute.xlu0 %9359
        %9363 = vset.pattern.permute.xlu0 0
        %9364 = vperm.xlu0 %9363, %v8370
        %v9365 = vpop.permute.xlu0 %9364
        %9368 = vset.pattern.permute.xlu0 0
        %9369 = vperm.xlu0 %9368, %v8371
        %v9370 = vpop.permute.xlu0 %9369
        %9373 = vset.pattern.permute.xlu0 0
        %9374 = vperm.xlu0 %9373, %v8372
        %v9375 = vpop.permute.xlu0 %9374
        %9378 = vset.pattern.permute.xlu0 0
        %9379 = vperm.xlu0 %9378, %v8373
        %v9380 = vpop.permute.xlu0 %9379
        %9383 = vset.pattern.permute.xlu0 0
        %9384 = vperm.xlu0 %9383, %v8374
        %v9385 = vpop.permute.xlu0 %9384
        %9388 = vset.pattern.permute.xlu0 0
        %9389 = vperm.xlu0 %9388, %v8375
        %v9390 = vpop.permute.xlu0 %9389
        %9393 = vset.pattern.permute.xlu0 0
        %9394 = vperm.xlu0 %9393, %v8376
        %v9395 = vpop.permute.xlu0 %9394
        %9398 = vset.pattern.permute.xlu0 0
        %9399 = vperm.xlu0 %9398, %v8377
        %v9400 = vpop.permute.xlu0 %9399
        %9403 = vset.pattern.permute.xlu0 0
        %9404 = vperm.xlu0 %9403, %v8378
        %v9405 = vpop.permute.xlu0 %9404
        %9408 = vset.pattern.permute.xlu0 0
        %9409 = vperm.xlu0 %9408, %v8379
        %v9410 = vpop.permute.xlu0 %9409
        %9413 = vset.pattern.permute.xlu0 0
        %9414 = vperm.xlu0 %9413, %v8380
        %v9415 = vpop.permute.xlu0 %9414
        %9418 = vset.pattern.permute.xlu0 0
        %9419 = vperm.xlu0 %9418, %v8381
        %v9420 = vpop.permute.xlu0 %9419
        %9423 = vset.pattern.permute.xlu0 0
        %9424 = vperm.xlu0 %9423, %v8382
        %v9425 = vpop.permute.xlu0 %9424
        %9428 = vset.pattern.permute.xlu0 0
        %9429 = vperm.xlu0 %9428, %v8383
        %v9430 = vpop.permute.xlu0 %9429
        %9433 = vset.pattern.permute.xlu0 0
        %9434 = vperm.xlu0 %9433, %v8384
        %v9435 = vpop.permute.xlu0 %9434
        %9438 = vset.pattern.permute.xlu0 0
        %9439 = vperm.xlu0 %9438, %v8385
        %v9440 = vpop.permute.xlu0 %9439
        %9443 = vset.pattern.permute.xlu0 0
        %9444 = vperm.xlu0 %9443, %v8386
        %v9445 = vpop.permute.xlu0 %9444
        %9448 = vset.pattern.permute.xlu0 0
        %9449 = vperm.xlu0 %9448, %v8387
        %v9450 = vpop.permute.xlu0 %9449
        %9453 = vset.pattern.permute.xlu0 0
        %9454 = vperm.xlu0 %9453, %v8388
        %v9455 = vpop.permute.xlu0 %9454
        %9458 = vset.pattern.permute.xlu0 0
        %9459 = vperm.xlu0 %9458, %v8389
        %v9460 = vpop.permute.xlu0 %9459
        %9463 = vset.pattern.permute.xlu0 0
        %9464 = vperm.xlu0 %9463, %v8390
        %v9465 = vpop.permute.xlu0 %9464
        %9468 = vset.pattern.permute.xlu0 0
        %9469 = vperm.xlu0 %9468, %v8391
        %v9470 = vpop.permute.xlu0 %9469
        %9473 = vset.pattern.permute.xlu0 0
        %9474 = vperm.xlu0 %9473, %v8392
        %v9475 = vpop.permute.xlu0 %9474
        %9478 = vset.pattern.permute.xlu0 0
        %9479 = vperm.xlu0 %9478, %v8393
        %v9480 = vpop.permute.xlu0 %9479
        %9483 = vset.pattern.permute.xlu0 0
        %9484 = vperm.xlu0 %9483, %v8394
        %v9485 = vpop.permute.xlu0 %9484
        %9488 = vset.pattern.permute.xlu0 0
        %9489 = vperm.xlu0 %9488, %v8395
        %v9490 = vpop.permute.xlu0 %9489
        %9493 = vset.pattern.permute.xlu0 0
        %9494 = vperm.xlu0 %9493, %v8396
        %v9495 = vpop.permute.xlu0 %9494
        %9498 = vset.pattern.permute.xlu0 0
        %9499 = vperm.xlu0 %9498, %v8397
        %v9500 = vpop.permute.xlu0 %9499
        %9503 = vset.pattern.permute.xlu0 0
        %9504 = vperm.xlu0 %9503, %v8398
        %v9505 = vpop.permute.xlu0 %9504
        %9508 = vset.pattern.permute.xlu0 0
        %9509 = vperm.xlu0 %9508, %v8399
        %v9510 = vpop.permute.xlu0 %9509
        %9513 = vset.pattern.permute.xlu0 0
        %9514 = vperm.xlu0 %9513, %v8400
        %v9515 = vpop.permute.xlu0 %9514
        %9518 = vset.pattern.permute.xlu0 0
        %9519 = vperm.xlu0 %9518, %v8401
        %v9520 = vpop.permute.xlu0 %9519
        %9523 = vset.pattern.permute.xlu0 0
        %9524 = vperm.xlu0 %9523, %v8402
        %v9525 = vpop.permute.xlu0 %9524
        %9528 = vset.pattern.permute.xlu0 0
        %9529 = vperm.xlu0 %9528, %v8403
        %v9530 = vpop.permute.xlu0 %9529
        %9533 = vset.pattern.permute.xlu0 0
        %9534 = vperm.xlu0 %9533, %v8404
        %v9535 = vpop.permute.xlu0 %9534
        %9538 = vset.pattern.permute.xlu0 0
        %9539 = vperm.xlu0 %9538, %v8405
        %v9540 = vpop.permute.xlu0 %9539
        %9543 = vset.pattern.permute.xlu0 0
        %9544 = vperm.xlu0 %9543, %v8406
        %v9545 = vpop.permute.xlu0 %9544
        %9548 = vset.pattern.permute.xlu0 0
        %9549 = vperm.xlu0 %9548, %v8407
        %v9550 = vpop.permute.xlu0 %9549
        %9553 = vset.pattern.permute.xlu0 0
        %9554 = vperm.xlu0 %9553, %v8408
        %v9555 = vpop.permute.xlu0 %9554
        %9558 = vset.pattern.permute.xlu0 0
        %9559 = vperm.xlu0 %9558, %v8409
        %v9560 = vpop.permute.xlu0 %9559
        %9563 = vset.pattern.permute.xlu0 0
        %9564 = vperm.xlu0 %9563, %v8410
        %v9565 = vpop.permute.xlu0 %9564
        %9568 = vset.pattern.permute.xlu0 0
        %9569 = vperm.xlu0 %9568, %v8411
        %v9570 = vpop.permute.xlu0 %9569
        %9573 = vset.pattern.permute.xlu0 0
        %9574 = vperm.xlu0 %9573, %v8412
        %v9575 = vpop.permute.xlu0 %9574
        %9578 = vset.pattern.permute.xlu0 0
        %9579 = vperm.xlu0 %9578, %v8413
        %v9580 = vpop.permute.xlu0 %9579
        %9583 = vset.pattern.permute.xlu0 0
        %9584 = vperm.xlu0 %9583, %v8414
        %v9585 = vpop.permute.xlu0 %9584
        %9588 = vset.pattern.permute.xlu0 0
        %9589 = vperm.xlu0 %9588, %v8415
        %v9590 = vpop.permute.xlu0 %9589
        %9593 = vset.pattern.permute.xlu0 0
        %9594 = vperm.xlu0 %9593, %v8416
        %v9595 = vpop.permute.xlu0 %9594
        %9598 = vset.pattern.permute.xlu0 0
        %9599 = vperm.xlu0 %9598, %v8417
        %v9600 = vpop.permute.xlu0 %9599
        %9603 = vset.pattern.permute.xlu0 0
        %9604 = vperm.xlu0 %9603, %v8418
        %v9605 = vpop.permute.xlu0 %9604
        %9608 = vset.pattern.permute.xlu0 0
        %9609 = vperm.xlu0 %9608, %v8419
        %v9610 = vpop.permute.xlu0 %9609
        %9613 = vset.pattern.permute.xlu0 0
        %9614 = vperm.xlu0 %9613, %v8420
        %v9615 = vpop.permute.xlu0 %9614
        %9618 = vset.pattern.permute.xlu0 0
        %9619 = vperm.xlu0 %9618, %v8421
        %v9620 = vpop.permute.xlu0 %9619
        %9623 = vset.pattern.permute.xlu0 0
        %9624 = vperm.xlu0 %9623, %v8422
        %v9625 = vpop.permute.xlu0 %9624
        %9628 = vset.pattern.permute.xlu0 0
        %9629 = vperm.xlu0 %9628, %v8423
        %v9630 = vpop.permute.xlu0 %9629
        %9633 = vset.pattern.permute.xlu0 0
        %9634 = vperm.xlu0 %9633, %v8424
        %v9635 = vpop.permute.xlu0 %9634
        %9638 = vset.pattern.permute.xlu0 0
        %9639 = vperm.xlu0 %9638, %v8425
        %v9640 = vpop.permute.xlu0 %9639
        %9643 = vset.pattern.permute.xlu0 0
        %9644 = vperm.xlu0 %9643, %v8426
        %v9645 = vpop.permute.xlu0 %9644
        %9648 = vset.pattern.permute.xlu0 0
        %9649 = vperm.xlu0 %9648, %v8427
        %v9650 = vpop.permute.xlu0 %9649
        %9653 = vset.pattern.permute.xlu0 0
        %9654 = vperm.xlu0 %9653, %v8428
        %v9655 = vpop.permute.xlu0 %9654
        %9658 = vset.pattern.permute.xlu0 0
        %9659 = vperm.xlu0 %9658, %v8429
        %v9660 = vpop.permute.xlu0 %9659
        %9663 = vset.pattern.permute.xlu0 0
        %9664 = vperm.xlu0 %9663, %v8430
        %v9665 = vpop.permute.xlu0 %9664
        %9668 = vset.pattern.permute.xlu0 0
        %9669 = vperm.xlu0 %9668, %v8431
        %v9670 = vpop.permute.xlu0 %9669
        %9673 = vset.pattern.permute.xlu0 0
        %9674 = vperm.xlu0 %9673, %v8432
        %v9675 = vpop.permute.xlu0 %9674
        %9678 = vset.pattern.permute.xlu0 0
        %9679 = vperm.xlu0 %9678, %v8433
        %v9680 = vpop.permute.xlu0 %9679
        %9683 = vset.pattern.permute.xlu0 0
        %9684 = vperm.xlu0 %9683, %v8434
        %v9685 = vpop.permute.xlu0 %9684
        %9688 = vset.pattern.permute.xlu0 0
        %9689 = vperm.xlu0 %9688, %v8435
        %v9690 = vpop.permute.xlu0 %9689
        %9693 = vset.pattern.permute.xlu0 0
        %9694 = vperm.xlu0 %9693, %v8436
        %v9695 = vpop.permute.xlu0 %9694
        %9698 = vset.pattern.permute.xlu0 0
        %9699 = vperm.xlu0 %9698, %v8437
        %v9700 = vpop.permute.xlu0 %9699
        %9703 = vset.pattern.permute.xlu0 0
        %9704 = vperm.xlu0 %9703, %v8438
        %v9705 = vpop.permute.xlu0 %9704
        %9708 = vset.pattern.permute.xlu0 0
        %9709 = vperm.xlu0 %9708, %v8439
        %v9710 = vpop.permute.xlu0 %9709
        %9713 = vset.pattern.permute.xlu0 0
        %9714 = vperm.xlu0 %9713, %v8440
        %v9715 = vpop.permute.xlu0 %9714
        %9718 = vset.pattern.permute.xlu0 0
        %9719 = vperm.xlu0 %9718, %v8441
        %v9720 = vpop.permute.xlu0 %9719
        %v9722 = vadd.f32 %v8445, %v6908
        %v9723 = vadd.f32 %v8450, %v6913
        %v9724 = vadd.f32 %v8455, %v6918
        %v9725 = vadd.f32 %v8460, %v6923
        %v9726 = vadd.f32 %v8465, %v6928
        %v9727 = vadd.f32 %v8470, %v6933
        %v9728 = vadd.f32 %v8475, %v6938
        %v9729 = vadd.f32 %v8480, %v6943
        %v9730 = vadd.f32 %v8485, %v6948
        %v9731 = vadd.f32 %v8490, %v6953
        %v9732 = vadd.f32 %v8495, %v6958
        %v9733 = vadd.f32 %v8500, %v6963
        %v9734 = vadd.f32 %v8505, %v6968
        %v9735 = vadd.f32 %v8510, %v6973
        %v9736 = vadd.f32 %v8515, %v6978
        %v9737 = vadd.f32 %v8520, %v6983
        %v9738 = vadd.f32 %v8525, %v6988
        %v9739 = vadd.f32 %v8530, %v6993
        %v9740 = vadd.f32 %v8535, %v6998
        %v9741 = vadd.f32 %v8540, %v7003
        %v9742 = vadd.f32 %v8545, %v7008
        %v9743 = vadd.f32 %v8550, %v7013
        %v9744 = vadd.f32 %v8555, %v7018
        %v9745 = vadd.f32 %v8560, %v7023
        %v9746 = vadd.f32 %v8565, %v7028
        %v9747 = vadd.f32 %v8570, %v7033
        %v9748 = vadd.f32 %v8575, %v7038
        %v9749 = vadd.f32 %v8580, %v7043
        %v9750 = vadd.f32 %v8585, %v7048
        %v9751 = vadd.f32 %v8590, %v7053
        %v9752 = vadd.f32 %v8595, %v7058
        %v9753 = vadd.f32 %v8600, %v7063
        %v9754 = vadd.f32 %v8605, %v7068
        %v9755 = vadd.f32 %v8610, %v7073
        %v9756 = vadd.f32 %v8615, %v7078
        %v9757 = vadd.f32 %v8620, %v7083
        %v9758 = vadd.f32 %v8625, %v7088
        %v9759 = vadd.f32 %v8630, %v7093
        %v9760 = vadd.f32 %v8635, %v7098
        %v9761 = vadd.f32 %v8640, %v7103
        %v9762 = vadd.f32 %v8645, %v7108
        %v9763 = vadd.f32 %v8650, %v7113
        %v9764 = vadd.f32 %v8655, %v7118
        %v9765 = vadd.f32 %v8660, %v7123
        %v9766 = vadd.f32 %v8665, %v7128
        %v9767 = vadd.f32 %v8670, %v7133
        %v9768 = vadd.f32 %v8675, %v7138
        %v9769 = vadd.f32 %v8680, %v7143
        %v9770 = vadd.f32 %v8685, %v7148
        %v9771 = vadd.f32 %v8690, %v7153
        %v9772 = vadd.f32 %v8695, %v7158
        %v9773 = vadd.f32 %v8700, %v7163
        %v9774 = vadd.f32 %v8705, %v7168
        %v9775 = vadd.f32 %v8710, %v7173
        %v9776 = vadd.f32 %v8715, %v7178
        %v9777 = vadd.f32 %v8720, %v7183
        %v9778 = vadd.f32 %v8725, %v7188
        %v9779 = vadd.f32 %v8730, %v7193
        %v9780 = vadd.f32 %v8735, %v7198
        %v9781 = vadd.f32 %v8740, %v7203
        %v9782 = vadd.f32 %v8745, %v7208
        %v9783 = vadd.f32 %v8750, %v7213
        %v9784 = vadd.f32 %v8755, %v7218
        %v9785 = vadd.f32 %v8760, %v7223
        %v9786 = vadd.f32 %v8765, %v7228
        %v9787 = vadd.f32 %v8770, %v7233
        %v9788 = vadd.f32 %v8775, %v7238
        %v9789 = vadd.f32 %v8780, %v7243
        %v9790 = vadd.f32 %v8785, %v7248
        %v9791 = vadd.f32 %v8790, %v7253
        %v9792 = vadd.f32 %v8795, %v7258
        %v9793 = vadd.f32 %v8800, %v7263
        %v9794 = vadd.f32 %v8805, %v7268
        %v9795 = vadd.f32 %v8810, %v7273
        %v9796 = vadd.f32 %v8815, %v7278
        %v9797 = vadd.f32 %v8820, %v7283
        %v9798 = vadd.f32 %v8825, %v7288
        %v9799 = vadd.f32 %v8830, %v7293
        %v9800 = vadd.f32 %v8835, %v7298
        %v9801 = vadd.f32 %v8840, %v7303
        %v9802 = vadd.f32 %v8845, %v7308
        %v9803 = vadd.f32 %v8850, %v7313
        %v9804 = vadd.f32 %v8855, %v7318
        %v9805 = vadd.f32 %v8860, %v7323
        %v9806 = vadd.f32 %v8865, %v7328
        %v9807 = vadd.f32 %v8870, %v7333
        %v9808 = vadd.f32 %v8875, %v7338
        %v9809 = vadd.f32 %v8880, %v7343
        %v9810 = vadd.f32 %v8885, %v7348
        %v9811 = vadd.f32 %v8890, %v7353
        %v9812 = vadd.f32 %v8895, %v7358
        %v9813 = vadd.f32 %v8900, %v7363
        %v9814 = vadd.f32 %v8905, %v7368
        %v9815 = vadd.f32 %v8910, %v7373
        %v9816 = vadd.f32 %v8915, %v7378
        %v9817 = vadd.f32 %v8920, %v7383
        %v9818 = vadd.f32 %v8925, %v7388
        %v9819 = vadd.f32 %v8930, %v7393
        %v9820 = vadd.f32 %v8935, %v7398
        %v9821 = vadd.f32 %v8940, %v7403
        %v9822 = vadd.f32 %v8945, %v7408
        %v9823 = vadd.f32 %v8950, %v7413
        %v9824 = vadd.f32 %v8955, %v7418
        %v9825 = vadd.f32 %v8960, %v7423
        %v9826 = vadd.f32 %v8965, %v7428
        %v9827 = vadd.f32 %v8970, %v7433
        %v9828 = vadd.f32 %v8975, %v7438
        %v9829 = vadd.f32 %v8980, %v7443
        %v9830 = vadd.f32 %v8985, %v7448
        %v9831 = vadd.f32 %v8990, %v7453
        %v9832 = vadd.f32 %v8995, %v7458
        %v9833 = vadd.f32 %v9000, %v7463
        %v9834 = vadd.f32 %v9005, %v7468
        %v9835 = vadd.f32 %v9010, %v7473
        %v9836 = vadd.f32 %v9015, %v7478
        %v9837 = vadd.f32 %v9020, %v7483
        %v9838 = vadd.f32 %v9025, %v7488
        %v9839 = vadd.f32 %v9030, %v7493
        %v9840 = vadd.f32 %v9035, %v7498
        %v9841 = vadd.f32 %v9040, %v7503
        %v9842 = vadd.f32 %v9045, %v7508
        %v9843 = vadd.f32 %v9050, %v7513
        %v9844 = vadd.f32 %v9055, %v7518
        %v9845 = vadd.f32 %v9060, %v7523
        %v9846 = vadd.f32 %v9065, %v7528
        %v9847 = vadd.f32 %v9070, %v7533
        %v9848 = vadd.f32 %v9075, %v7538
        %v9849 = vadd.f32 %v9080, %v7543
        %v9850 = vadd.f32 %v9085, %v7548
        %v9851 = vadd.f32 %v9090, %v7553
        %v9852 = vadd.f32 %v9095, %v7558
        %v9853 = vadd.f32 %v9100, %v7563
        %v9854 = vadd.f32 %v9105, %v7568
        %v9855 = vadd.f32 %v9110, %v7573
        %v9856 = vadd.f32 %v9115, %v7578
        %v9857 = vadd.f32 %v9120, %v7583
        %v9858 = vadd.f32 %v9125, %v7588
        %v9859 = vadd.f32 %v9130, %v7593
        %v9860 = vadd.f32 %v9135, %v7598
        %v9861 = vadd.f32 %v9140, %v7603
        %v9862 = vadd.f32 %v9145, %v7608
        %v9863 = vadd.f32 %v9150, %v7613
        %v9864 = vadd.f32 %v9155, %v7618
        %v9865 = vadd.f32 %v9160, %v7623
        %v9866 = vadd.f32 %v9165, %v7628
        %v9867 = vadd.f32 %v9170, %v7633
        %v9868 = vadd.f32 %v9175, %v7638
        %v9869 = vadd.f32 %v9180, %v7643
        %v9870 = vadd.f32 %v9185, %v7648
        %v9871 = vadd.f32 %v9190, %v7653
        %v9872 = vadd.f32 %v9195, %v7658
        %v9873 = vadd.f32 %v9200, %v7663
        %v9874 = vadd.f32 %v9205, %v7668
        %v9875 = vadd.f32 %v9210, %v7673
        %v9876 = vadd.f32 %v9215, %v7678
        %v9877 = vadd.f32 %v9220, %v7683
        %v9878 = vadd.f32 %v9225, %v7688
        %v9879 = vadd.f32 %v9230, %v7693
        %v9880 = vadd.f32 %v9235, %v7698
        %v9881 = vadd.f32 %v9240, %v7703
        %v9882 = vadd.f32 %v9245, %v7708
        %v9883 = vadd.f32 %v9250, %v7713
        %v9884 = vadd.f32 %v9255, %v7718
        %v9885 = vadd.f32 %v9260, %v7723
        %v9886 = vadd.f32 %v9265, %v7728
        %v9887 = vadd.f32 %v9270, %v7733
        %v9888 = vadd.f32 %v9275, %v7738
        %v9889 = vadd.f32 %v9280, %v7743
        %v9890 = vadd.f32 %v9285, %v7748
        %v9891 = vadd.f32 %v9290, %v7753
        %v9892 = vadd.f32 %v9295, %v7758
        %v9893 = vadd.f32 %v9300, %v7763
        %v9894 = vadd.f32 %v9305, %v7768
        %v9895 = vadd.f32 %v9310, %v7773
        %v9896 = vadd.f32 %v9315, %v7778
        %v9897 = vadd.f32 %v9320, %v7783
        %v9898 = vadd.f32 %v9325, %v7788
        %v9899 = vadd.f32 %v9330, %v7793
        %v9900 = vadd.f32 %v9335, %v7798
        %v9901 = vadd.f32 %v9340, %v7803
        %v9902 = vadd.f32 %v9345, %v7808
        %v9903 = vadd.f32 %v9350, %v7813
        %v9904 = vadd.f32 %v9355, %v7818
        %v9905 = vadd.f32 %v9360, %v7823
        %v9906 = vadd.f32 %v9365, %v7828
        %v9907 = vadd.f32 %v9370, %v7833
        %v9908 = vadd.f32 %v9375, %v7838
        %v9909 = vadd.f32 %v9380, %v7843
        %v9910 = vadd.f32 %v9385, %v7848
        %v9911 = vadd.f32 %v9390, %v7853
        %v9912 = vadd.f32 %v9395, %v7858
        %v9913 = vadd.f32 %v9400, %v7863
        %v9914 = vadd.f32 %v9405, %v7868
        %v9915 = vadd.f32 %v9410, %v7873
        %v9916 = vadd.f32 %v9415, %v7878
        %v9917 = vadd.f32 %v9420, %v7883
        %v9918 = vadd.f32 %v9425, %v7888
        %v9919 = vadd.f32 %v9430, %v7893
        %v9920 = vadd.f32 %v9435, %v7898
        %v9921 = vadd.f32 %v9440, %v7903
        %v9922 = vadd.f32 %v9445, %v7908
        %v9923 = vadd.f32 %v9450, %v7913
        %v9924 = vadd.f32 %v9455, %v7918
        %v9925 = vadd.f32 %v9460, %v7923
        %v9926 = vadd.f32 %v9465, %v7928
        %v9927 = vadd.f32 %v9470, %v7933
        %v9928 = vadd.f32 %v9475, %v7938
        %v9929 = vadd.f32 %v9480, %v7943
        %v9930 = vadd.f32 %v9485, %v7948
        %v9931 = vadd.f32 %v9490, %v7953
        %v9932 = vadd.f32 %v9495, %v7958
        %v9933 = vadd.f32 %v9500, %v7963
        %v9934 = vadd.f32 %v9505, %v7968
        %v9935 = vadd.f32 %v9510, %v7973
        %v9936 = vadd.f32 %v9515, %v7978
        %v9937 = vadd.f32 %v9520, %v7983
        %v9938 = vadd.f32 %v9525, %v7988
        %v9939 = vadd.f32 %v9530, %v7993
        %v9940 = vadd.f32 %v9535, %v7998
        %v9941 = vadd.f32 %v9540, %v8003
        %v9942 = vadd.f32 %v9545, %v8008
        %v9943 = vadd.f32 %v9550, %v8013
        %v9944 = vadd.f32 %v9555, %v8018
        %v9945 = vadd.f32 %v9560, %v8023
        %v9946 = vadd.f32 %v9565, %v8028
        %v9947 = vadd.f32 %v9570, %v8033
        %v9948 = vadd.f32 %v9575, %v8038
        %v9949 = vadd.f32 %v9580, %v8043
        %v9950 = vadd.f32 %v9585, %v8048
        %v9951 = vadd.f32 %v9590, %v8053
        %v9952 = vadd.f32 %v9595, %v8058
        %v9953 = vadd.f32 %v9600, %v8063
        %v9954 = vadd.f32 %v9605, %v8068
        %v9955 = vadd.f32 %v9610, %v8073
        %v9956 = vadd.f32 %v9615, %v8078
        %v9957 = vadd.f32 %v9620, %v8083
        %v9958 = vadd.f32 %v9625, %v8088
        %v9959 = vadd.f32 %v9630, %v8093
        %v9960 = vadd.f32 %v9635, %v8098
        %v9961 = vadd.f32 %v9640, %v8103
        %v9962 = vadd.f32 %v9645, %v8108
        %v9963 = vadd.f32 %v9650, %v8113
        %v9964 = vadd.f32 %v9655, %v8118
        %v9965 = vadd.f32 %v9660, %v8123
        %v9966 = vadd.f32 %v9665, %v8128
        %v9967 = vadd.f32 %v9670, %v8133
        %v9968 = vadd.f32 %v9675, %v8138
        %v9969 = vadd.f32 %v9680, %v8143
        %v9970 = vadd.f32 %v9685, %v8148
        %v9971 = vadd.f32 %v9690, %v8153
        %v9972 = vadd.f32 %v9695, %v8158
        %v9973 = vadd.f32 %v9700, %v8163
        %v9974 = vadd.f32 %v9705, %v8168
        %v9975 = vadd.f32 %v9710, %v8173
        %v9976 = vadd.f32 %v9715, %v8178
        %v9977 = vadd.f32 %v9720, %v8183
        %v9978 = vld [vmem:[%s350] sm:$0x1]
        %v9980 = vlaneseq
        %v9981 = vshrl.u32 %v9980, 7
        %v9982 = vsub.s32 0, %v9981
        %v9983 = vrot.slane %v9978, %v9982
        %v9985 = vadd.f32 %v9722, %v9983
        %v9986 = vadd.f32 %v9723, %v9983
        %v9987 = vadd.f32 %v9724, %v9983
        %v9988 = vadd.f32 %v9725, %v9983
        %v9989 = vadd.f32 %v9726, %v9983
        %v9990 = vadd.f32 %v9727, %v9983
        %v9991 = vadd.f32 %v9728, %v9983
        %v9992 = vadd.f32 %v9729, %v9983
        %v9993 = vadd.f32 %v9730, %v9983
        %v9994 = vadd.f32 %v9731, %v9983
        %v9995 = vadd.f32 %v9732, %v9983
        %v9996 = vadd.f32 %v9733, %v9983
        %v9997 = vadd.f32 %v9734, %v9983
        %v9998 = vadd.f32 %v9735, %v9983
        %v9999 = vadd.f32 %v9736, %v9983
        %v10000 = vadd.f32 %v9737, %v9983
        %v10001 = vadd.f32 %v9738, %v9983
        %v10002 = vadd.f32 %v9739, %v9983
        %v10003 = vadd.f32 %v9740, %v9983
        %v10004 = vadd.f32 %v9741, %v9983
        %v10005 = vadd.f32 %v9742, %v9983
        %v10006 = vadd.f32 %v9743, %v9983
        %v10007 = vadd.f32 %v9744, %v9983
        %v10008 = vadd.f32 %v9745, %v9983
        %v10009 = vadd.f32 %v9746, %v9983
        %v10010 = vadd.f32 %v9747, %v9983
        %v10011 = vadd.f32 %v9748, %v9983
        %v10012 = vadd.f32 %v9749, %v9983
        %v10013 = vadd.f32 %v9750, %v9983
        %v10014 = vadd.f32 %v9751, %v9983
        %v10015 = vadd.f32 %v9752, %v9983
        %v10016 = vadd.f32 %v9753, %v9983
        %v10017 = vadd.f32 %v9754, %v9983
        %v10018 = vadd.f32 %v9755, %v9983
        %v10019 = vadd.f32 %v9756, %v9983
        %v10020 = vadd.f32 %v9757, %v9983
        %v10021 = vadd.f32 %v9758, %v9983
        %v10022 = vadd.f32 %v9759, %v9983
        %v10023 = vadd.f32 %v9760, %v9983
        %v10024 = vadd.f32 %v9761, %v9983
        %v10025 = vadd.f32 %v9762, %v9983
        %v10026 = vadd.f32 %v9763, %v9983
        %v10027 = vadd.f32 %v9764, %v9983
        %v10028 = vadd.f32 %v9765, %v9983
        %v10029 = vadd.f32 %v9766, %v9983
        %v10030 = vadd.f32 %v9767, %v9983
        %v10031 = vadd.f32 %v9768, %v9983
        %v10032 = vadd.f32 %v9769, %v9983
        %v10033 = vadd.f32 %v9770, %v9983
        %v10034 = vadd.f32 %v9771, %v9983
        %v10035 = vadd.f32 %v9772, %v9983
        %v10036 = vadd.f32 %v9773, %v9983
        %v10037 = vadd.f32 %v9774, %v9983
        %v10038 = vadd.f32 %v9775, %v9983
        %v10039 = vadd.f32 %v9776, %v9983
        %v10040 = vadd.f32 %v9777, %v9983
        %v10041 = vadd.f32 %v9778, %v9983
        %v10042 = vadd.f32 %v9779, %v9983
        %v10043 = vadd.f32 %v9780, %v9983
        %v10044 = vadd.f32 %v9781, %v9983
        %v10045 = vadd.f32 %v9782, %v9983
        %v10046 = vadd.f32 %v9783, %v9983
        %v10047 = vadd.f32 %v9784, %v9983
        %v10048 = vadd.f32 %v9785, %v9983
        %v10049 = vadd.f32 %v9786, %v9983
        %v10050 = vadd.f32 %v9787, %v9983
        %v10051 = vadd.f32 %v9788, %v9983
        %v10052 = vadd.f32 %v9789, %v9983
        %v10053 = vadd.f32 %v9790, %v9983
        %v10054 = vadd.f32 %v9791, %v9983
        %v10055 = vadd.f32 %v9792, %v9983
        %v10056 = vadd.f32 %v9793, %v9983
        %v10057 = vadd.f32 %v9794, %v9983
        %v10058 = vadd.f32 %v9795, %v9983
        %v10059 = vadd.f32 %v9796, %v9983
        %v10060 = vadd.f32 %v9797, %v9983
        %v10061 = vadd.f32 %v9798, %v9983
        %v10062 = vadd.f32 %v9799, %v9983
        %v10063 = vadd.f32 %v9800, %v9983
        %v10064 = vadd.f32 %v9801, %v9983
        %v10065 = vadd.f32 %v9802, %v9983
        %v10066 = vadd.f32 %v9803, %v9983
        %v10067 = vadd.f32 %v9804, %v9983
        %v10068 = vadd.f32 %v9805, %v9983
        %v10069 = vadd.f32 %v9806, %v9983
        %v10070 = vadd.f32 %v9807, %v9983
        %v10071 = vadd.f32 %v9808, %v9983
        %v10072 = vadd.f32 %v9809, %v9983
        %v10073 = vadd.f32 %v9810, %v9983
        %v10074 = vadd.f32 %v9811, %v9983
        %v10075 = vadd.f32 %v9812, %v9983
        %v10076 = vadd.f32 %v9813, %v9983
        %v10077 = vadd.f32 %v9814, %v9983
        %v10078 = vadd.f32 %v9815, %v9983
        %v10079 = vadd.f32 %v9816, %v9983
        %v10080 = vadd.f32 %v9817, %v9983
        %v10081 = vadd.f32 %v9818, %v9983
        %v10082 = vadd.f32 %v9819, %v9983
        %v10083 = vadd.f32 %v9820, %v9983
        %v10084 = vadd.f32 %v9821, %v9983
        %v10085 = vadd.f32 %v9822, %v9983
        %v10086 = vadd.f32 %v9823, %v9983
        %v10087 = vadd.f32 %v9824, %v9983
        %v10088 = vadd.f32 %v9825, %v9983
        %v10089 = vadd.f32 %v9826, %v9983
        %v10090 = vadd.f32 %v9827, %v9983
        %v10091 = vadd.f32 %v9828, %v9983
        %v10092 = vadd.f32 %v9829, %v9983
        %v10093 = vadd.f32 %v9830, %v9983
        %v10094 = vadd.f32 %v9831, %v9983
        %v10095 = vadd.f32 %v9832, %v9983
        %v10096 = vadd.f32 %v9833, %v9983
        %v10097 = vadd.f32 %v9834, %v9983
        %v10098 = vadd.f32 %v9835, %v9983
        %v10099 = vadd.f32 %v9836, %v9983
        %v10100 = vadd.f32 %v9837, %v9983
        %v10101 = vadd.f32 %v9838, %v9983
        %v10102 = vadd.f32 %v9839, %v9983
        %v10103 = vadd.f32 %v9840, %v9983
        %v10104 = vadd.f32 %v9841, %v9983
        %v10105 = vadd.f32 %v9842, %v9983
        %v10106 = vadd.f32 %v9843, %v9983
        %v10107 = vadd.f32 %v9844, %v9983
        %v10108 = vadd.f32 %v9845, %v9983
        %v10109 = vadd.f32 %v9846, %v9983
        %v10110 = vadd.f32 %v9847, %v9983
        %v10111 = vadd.f32 %v9848, %v9983
        %v10112 = vadd.f32 %v9849, %v9983
        %v10113 = vadd.f32 %v9850, %v9983
        %v10114 = vadd.f32 %v9851, %v9983
        %v10115 = vadd.f32 %v9852, %v9983
        %v10116 = vadd.f32 %v9853, %v9983
        %v10117 = vadd.f32 %v9854, %v9983
        %v10118 = vadd.f32 %v9855, %v9983
        %v10119 = vadd.f32 %v9856, %v9983
        %v10120 = vadd.f32 %v9857, %v9983
        %v10121 = vadd.f32 %v9858, %v9983
        %v10122 = vadd.f32 %v9859, %v9983
        %v10123 = vadd.f32 %v9860, %v9983
        %v10124 = vadd.f32 %v9861, %v9983
        %v10125 = vadd.f32 %v9862, %v9983
        %v10126 = vadd.f32 %v9863, %v9983
        %v10127 = vadd.f32 %v9864, %v9983
        %v10128 = vadd.f32 %v9865, %v9983
        %v10129 = vadd.f32 %v9866, %v9983
        %v10130 = vadd.f32 %v9867, %v9983
        %v10131 = vadd.f32 %v9868, %v9983
        %v10132 = vadd.f32 %v9869, %v9983
        %v10133 = vadd.f32 %v9870, %v9983
        %v10134 = vadd.f32 %v9871, %v9983
        %v10135 = vadd.f32 %v9872, %v9983
        %v10136 = vadd.f32 %v9873, %v9983
        %v10137 = vadd.f32 %v9874, %v9983
        %v10138 = vadd.f32 %v9875, %v9983
        %v10139 = vadd.f32 %v9876, %v9983
        %v10140 = vadd.f32 %v9877, %v9983
        %v10141 = vadd.f32 %v9878, %v9983
        %v10142 = vadd.f32 %v9879, %v9983
        %v10143 = vadd.f32 %v9880, %v9983
        %v10144 = vadd.f32 %v9881, %v9983
        %v10145 = vadd.f32 %v9882, %v9983
        %v10146 = vadd.f32 %v9883, %v9983
        %v10147 = vadd.f32 %v9884, %v9983
        %v10148 = vadd.f32 %v9885, %v9983
        %v10149 = vadd.f32 %v9886, %v9983
        %v10150 = vadd.f32 %v9887, %v9983
        %v10151 = vadd.f32 %v9888, %v9983
        %v10152 = vadd.f32 %v9889, %v9983
        %v10153 = vadd.f32 %v9890, %v9983
        %v10154 = vadd.f32 %v9891, %v9983
        %v10155 = vadd.f32 %v9892, %v9983
        %v10156 = vadd.f32 %v9893, %v9983
        %v10157 = vadd.f32 %v9894, %v9983
        %v10158 = vadd.f32 %v9895, %v9983
        %v10159 = vadd.f32 %v9896, %v9983
        %v10160 = vadd.f32 %v9897, %v9983
        %v10161 = vadd.f32 %v9898, %v9983
        %v10162 = vadd.f32 %v9899, %v9983
        %v10163 = vadd.f32 %v9900, %v9983
        %v10164 = vadd.f32 %v9901, %v9983
        %v10165 = vadd.f32 %v9902, %v9983
        %v10166 = vadd.f32 %v9903, %v9983
        %v10167 = vadd.f32 %v9904, %v9983
        %v10168 = vadd.f32 %v9905, %v9983
        %v10169 = vadd.f32 %v9906, %v9983
        %v10170 = vadd.f32 %v9907, %v9983
        %v10171 = vadd.f32 %v9908, %v9983
        %v10172 = vadd.f32 %v9909, %v9983
        %v10173 = vadd.f32 %v9910, %v9983
        %v10174 = vadd.f32 %v9911, %v9983
        %v10175 = vadd.f32 %v9912, %v9983
        %v10176 = vadd.f32 %v9913, %v9983
        %v10177 = vadd.f32 %v9914, %v9983
        %v10178 = vadd.f32 %v9915, %v9983
        %v10179 = vadd.f32 %v9916, %v9983
        %v10180 = vadd.f32 %v9917, %v9983
        %v10181 = vadd.f32 %v9918, %v9983
        %v10182 = vadd.f32 %v9919, %v9983
        %v10183 = vadd.f32 %v9920, %v9983
        %v10184 = vadd.f32 %v9921, %v9983
        %v10185 = vadd.f32 %v9922, %v9983
        %v10186 = vadd.f32 %v9923, %v9983
        %v10187 = vadd.f32 %v9924, %v9983
        %v10188 = vadd.f32 %v9925, %v9983
        %v10189 = vadd.f32 %v9926, %v9983
        %v10190 = vadd.f32 %v9927, %v9983
        %v10191 = vadd.f32 %v9928, %v9983
        %v10192 = vadd.f32 %v9929, %v9983
        %v10193 = vadd.f32 %v9930, %v9983
        %v10194 = vadd.f32 %v9931, %v9983
        %v10195 = vadd.f32 %v9932, %v9983
        %v10196 = vadd.f32 %v9933, %v9983
        %v10197 = vadd.f32 %v9934, %v9983
        %v10198 = vadd.f32 %v9935, %v9983
        %v10199 = vadd.f32 %v9936, %v9983
        %v10200 = vadd.f32 %v9937, %v9983
        %v10201 = vadd.f32 %v9938, %v9983
        %v10202 = vadd.f32 %v9939, %v9983
        %v10203 = vadd.f32 %v9940, %v9983
        %v10204 = vadd.f32 %v9941, %v9983
        %v10205 = vadd.f32 %v9942, %v9983
        %v10206 = vadd.f32 %v9943, %v9983
        %v10207 = vadd.f32 %v9944, %v9983
        %v10208 = vadd.f32 %v9945, %v9983
        %v10209 = vadd.f32 %v9946, %v9983
        %v10210 = vadd.f32 %v9947, %v9983
        %v10211 = vadd.f32 %v9948, %v9983
        %v10212 = vadd.f32 %v9949, %v9983
        %v10213 = vadd.f32 %v9950, %v9983
        %v10214 = vadd.f32 %v9951, %v9983
        %v10215 = vadd.f32 %v9952, %v9983
        %v10216 = vadd.f32 %v9953, %v9983
        %v10217 = vadd.f32 %v9954, %v9983
        %v10218 = vadd.f32 %v9955, %v9983
        %v10219 = vadd.f32 %v9956, %v9983
        %v10220 = vadd.f32 %v9957, %v9983
        %v10221 = vadd.f32 %v9958, %v9983
        %v10222 = vadd.f32 %v9959, %v9983
        %v10223 = vadd.f32 %v9960, %v9983
        %v10224 = vadd.f32 %v9961, %v9983
        %v10225 = vadd.f32 %v9962, %v9983
        %v10226 = vadd.f32 %v9963, %v9983
        %v10227 = vadd.f32 %v9964, %v9983
        %v10228 = vadd.f32 %v9965, %v9983
        %v10229 = vadd.f32 %v9966, %v9983
        %v10230 = vadd.f32 %v9967, %v9983
        %v10231 = vadd.f32 %v9968, %v9983
        %v10232 = vadd.f32 %v9969, %v9983
        %v10233 = vadd.f32 %v9970, %v9983
        %v10234 = vadd.f32 %v9971, %v9983
        %v10235 = vadd.f32 %v9972, %v9983
        %v10236 = vadd.f32 %v9973, %v9983
        %v10237 = vadd.f32 %v9974, %v9983
        %v10238 = vadd.f32 %v9975, %v9983
        %v10239 = vadd.f32 %v9976, %v9983
        %v10240 = vadd.f32 %v9977, %v9983
        %v10241 = vmin.f32 %v9985, %v9986
        %v10242 = vmin.f32 %v10241, %v9987
        %v10243 = vmin.f32 %v10242, %v9988
        %v10244 = vmin.f32 %v10243, %v9989
        %v10245 = vmin.f32 %v10244, %v9990
        %v10246 = vmin.f32 %v10245, %v9991
        %v10247 = vmin.f32 %v10246, %v9992
        %v10248 = vmin.f32 %v10247, %v9993
        %v10249 = vmin.f32 %v10248, %v9994
        %v10250 = vmin.f32 %v10249, %v9995
        %v10251 = vmin.f32 %v10250, %v9996
        %v10252 = vmin.f32 %v10251, %v9997
        %v10253 = vmin.f32 %v10252, %v9998
        %v10254 = vmin.f32 %v10253, %v9999
        %v10255 = vmin.f32 %v10254, %v10000
        %v10256 = vmin.f32 %v10255, %v10001
        %v10257 = vmin.f32 %v10256, %v10002
        %v10258 = vmin.f32 %v10257, %v10003
        %v10259 = vmin.f32 %v10258, %v10004
        %v10260 = vmin.f32 %v10259, %v10005
        %v10261 = vmin.f32 %v10260, %v10006
        %v10262 = vmin.f32 %v10261, %v10007
        %v10263 = vmin.f32 %v10262, %v10008
        %v10264 = vmin.f32 %v10263, %v10009
        %v10265 = vmin.f32 %v10264, %v10010
        %v10266 = vmin.f32 %v10265, %v10011
        %v10267 = vmin.f32 %v10266, %v10012
        %v10268 = vmin.f32 %v10267, %v10013
        %v10269 = vmin.f32 %v10268, %v10014
        %v10270 = vmin.f32 %v10269, %v10015
        %v10271 = vmin.f32 %v10270, %v10016
        %v10272 = vrot.slane %v10271, 4
        %v10273 = vmin.f32 %v10271, %v10272
        %v10274 = vrot.slane %v10273, 2
        %v10275 = vmin.f32 %v10273, %v10274
        %v10276 = vrot.slane %v10275, 1
        %v10277 = vmin.f32 %v10275, %v10276
        %v10278 = vmin.f32 %v10017, %v10018
        %v10279 = vmin.f32 %v10278, %v10019
        %v10280 = vmin.f32 %v10279, %v10020
        %v10281 = vmin.f32 %v10280, %v10021
        %v10282 = vmin.f32 %v10281, %v10022
        %v10283 = vmin.f32 %v10282, %v10023
        %v10284 = vmin.f32 %v10283, %v10024
        %v10285 = vmin.f32 %v10284, %v10025
        %v10286 = vmin.f32 %v10285, %v10026
        %v10287 = vmin.f32 %v10286, %v10027
        %v10288 = vmin.f32 %v10287, %v10028
        %v10289 = vmin.f32 %v10288, %v10029
        %v10290 = vmin.f32 %v10289, %v10030
        %v10291 = vmin.f32 %v10290, %v10031
        %v10292 = vmin.f32 %v10291, %v10032
        %v10293 = vmin.f32 %v10292, %v10033
        %v10294 = vmin.f32 %v10293, %v10034
        %v10295 = vmin.f32 %v10294, %v10035
        %v10296 = vmin.f32 %v10295, %v10036
        %v10297 = vmin.f32 %v10296, %v10037
        %v10298 = vmin.f32 %v10297, %v10038
        %v10299 = vmin.f32 %v10298, %v10039
        %v10300 = vmin.f32 %v10299, %v10040
        %v10301 = vmin.f32 %v10300, %v10041
        %v10302 = vmin.f32 %v10301, %v10042
        %v10303 = vmin.f32 %v10302, %v10043
        %v10304 = vmin.f32 %v10303, %v10044
        %v10305 = vmin.f32 %v10304, %v10045
        %v10306 = vmin.f32 %v10305, %v10046
        %v10307 = vmin.f32 %v10306, %v10047
        %v10308 = vmin.f32 %v10307, %v10048
        %v10309 = vrot.slane %v10308, 4
        %v10310 = vmin.f32 %v10308, %v10309
        %v10311 = vrot.slane %v10310, 2
        %v10312 = vmin.f32 %v10310, %v10311
        %v10313 = vrot.slane %v10312, 1
        %v10314 = vmin.f32 %v10312, %v10313
        %v10315 = vmin.f32 %v10049, %v10050
        %v10316 = vmin.f32 %v10315, %v10051
        %v10317 = vmin.f32 %v10316, %v10052
        %v10318 = vmin.f32 %v10317, %v10053
        %v10319 = vmin.f32 %v10318, %v10054
        %v10320 = vmin.f32 %v10319, %v10055
        %v10321 = vmin.f32 %v10320, %v10056
        %v10322 = vmin.f32 %v10321, %v10057
        %v10323 = vmin.f32 %v10322, %v10058
        %v10324 = vmin.f32 %v10323, %v10059
        %v10325 = vmin.f32 %v10324, %v10060
        %v10326 = vmin.f32 %v10325, %v10061
        %v10327 = vmin.f32 %v10326, %v10062
        %v10328 = vmin.f32 %v10327, %v10063
        %v10329 = vmin.f32 %v10328, %v10064
        %v10330 = vmin.f32 %v10329, %v10065
        %v10331 = vmin.f32 %v10330, %v10066
        %v10332 = vmin.f32 %v10331, %v10067
        %v10333 = vmin.f32 %v10332, %v10068
        %v10334 = vmin.f32 %v10333, %v10069
        %v10335 = vmin.f32 %v10334, %v10070
        %v10336 = vmin.f32 %v10335, %v10071
        %v10337 = vmin.f32 %v10336, %v10072
        %v10338 = vmin.f32 %v10337, %v10073
        %v10339 = vmin.f32 %v10338, %v10074
        %v10340 = vmin.f32 %v10339, %v10075
        %v10341 = vmin.f32 %v10340, %v10076
        %v10342 = vmin.f32 %v10341, %v10077
        %v10343 = vmin.f32 %v10342, %v10078
        %v10344 = vmin.f32 %v10343, %v10079
        %v10345 = vmin.f32 %v10344, %v10080
        %v10346 = vrot.slane %v10345, 4
        %v10347 = vmin.f32 %v10345, %v10346
        %v10348 = vrot.slane %v10347, 2
        %v10349 = vmin.f32 %v10347, %v10348
        %v10350 = vrot.slane %v10349, 1
        %v10351 = vmin.f32 %v10349, %v10350
        %v10352 = vmin.f32 %v10081, %v10082
        %v10353 = vmin.f32 %v10352, %v10083
        %v10354 = vmin.f32 %v10353, %v10084
        %v10355 = vmin.f32 %v10354, %v10085
        %v10356 = vmin.f32 %v10355, %v10086
        %v10357 = vmin.f32 %v10356, %v10087
        %v10358 = vmin.f32 %v10357, %v10088
        %v10359 = vmin.f32 %v10358, %v10089
        %v10360 = vmin.f32 %v10359, %v10090
        %v10361 = vmin.f32 %v10360, %v10091
        %v10362 = vmin.f32 %v10361, %v10092
        %v10363 = vmin.f32 %v10362, %v10093
        %v10364 = vmin.f32 %v10363, %v10094
        %v10365 = vmin.f32 %v10364, %v10095
        %v10366 = vmin.f32 %v10365, %v10096
        %v10367 = vmin.f32 %v10366, %v10097
        %v10368 = vmin.f32 %v10367, %v10098
        %v10369 = vmin.f32 %v10368, %v10099
        %v10370 = vmin.f32 %v10369, %v10100
        %v10371 = vmin.f32 %v10370, %v10101
        %v10372 = vmin.f32 %v10371, %v10102
        %v10373 = vmin.f32 %v10372, %v10103
        %v10374 = vmin.f32 %v10373, %v10104
        %v10375 = vmin.f32 %v10374, %v10105
        %v10376 = vmin.f32 %v10375, %v10106
        %v10377 = vmin.f32 %v10376, %v10107
        %v10378 = vmin.f32 %v10377, %v10108
        %v10379 = vmin.f32 %v10378, %v10109
        %v10380 = vmin.f32 %v10379, %v10110
        %v10381 = vmin.f32 %v10380, %v10111
        %v10382 = vmin.f32 %v10381, %v10112
        %v10383 = vrot.slane %v10382, 4
        %v10384 = vmin.f32 %v10382, %v10383
        %v10385 = vrot.slane %v10384, 2
        %v10386 = vmin.f32 %v10384, %v10385
        %v10387 = vrot.slane %v10386, 1
        %v10388 = vmin.f32 %v10386, %v10387
        %v10389 = vmin.f32 %v10113, %v10114
        %v10390 = vmin.f32 %v10389, %v10115
        %v10391 = vmin.f32 %v10390, %v10116
        %v10392 = vmin.f32 %v10391, %v10117
        %v10393 = vmin.f32 %v10392, %v10118
        %v10394 = vmin.f32 %v10393, %v10119
        %v10395 = vmin.f32 %v10394, %v10120
        %v10396 = vmin.f32 %v10395, %v10121
        %v10397 = vmin.f32 %v10396, %v10122
        %v10398 = vmin.f32 %v10397, %v10123
        %v10399 = vmin.f32 %v10398, %v10124
        %v10400 = vmin.f32 %v10399, %v10125
        %v10401 = vmin.f32 %v10400, %v10126
        %v10402 = vmin.f32 %v10401, %v10127
        %v10403 = vmin.f32 %v10402, %v10128
        %v10404 = vmin.f32 %v10403, %v10129
        %v10405 = vmin.f32 %v10404, %v10130
        %v10406 = vmin.f32 %v10405, %v10131
        %v10407 = vmin.f32 %v10406, %v10132
        %v10408 = vmin.f32 %v10407, %v10133
        %v10409 = vmin.f32 %v10408, %v10134
        %v10410 = vmin.f32 %v10409, %v10135
        %v10411 = vmin.f32 %v10410, %v10136
        %v10412 = vmin.f32 %v10411, %v10137
        %v10413 = vmin.f32 %v10412, %v10138
        %v10414 = vmin.f32 %v10413, %v10139
        %v10415 = vmin.f32 %v10414, %v10140
        %v10416 = vmin.f32 %v10415, %v10141
        %v10417 = vmin.f32 %v10416, %v10142
        %v10418 = vmin.f32 %v10417, %v10143
        %v10419 = vmin.f32 %v10418, %v10144
        %v10420 = vrot.slane %v10419, 4
        %v10421 = vmin.f32 %v10419, %v10420
        %v10422 = vrot.slane %v10421, 2
        %v10423 = vmin.f32 %v10421, %v10422
        %v10424 = vrot.slane %v10423, 1
        %v10425 = vmin.f32 %v10423, %v10424
        %v10426 = vmin.f32 %v10145, %v10146
        %v10427 = vmin.f32 %v10426, %v10147
        %v10428 = vmin.f32 %v10427, %v10148
        %v10429 = vmin.f32 %v10428, %v10149
        %v10430 = vmin.f32 %v10429, %v10150
        %v10431 = vmin.f32 %v10430, %v10151
        %v10432 = vmin.f32 %v10431, %v10152
        %v10433 = vmin.f32 %v10432, %v10153
        %v10434 = vmin.f32 %v10433, %v10154
        %v10435 = vmin.f32 %v10434, %v10155
        %v10436 = vmin.f32 %v10435, %v10156
        %v10437 = vmin.f32 %v10436, %v10157
        %v10438 = vmin.f32 %v10437, %v10158
        %v10439 = vmin.f32 %v10438, %v10159
        %v10440 = vmin.f32 %v10439, %v10160
        %v10441 = vmin.f32 %v10440, %v10161
        %v10442 = vmin.f32 %v10441, %v10162
        %v10443 = vmin.f32 %v10442, %v10163
        %v10444 = vmin.f32 %v10443, %v10164
        %v10445 = vmin.f32 %v10444, %v10165
        %v10446 = vmin.f32 %v10445, %v10166
        %v10447 = vmin.f32 %v10446, %v10167
        %v10448 = vmin.f32 %v10447, %v10168
        %v10449 = vmin.f32 %v10448, %v10169
        %v10450 = vmin.f32 %v10449, %v10170
        %v10451 = vmin.f32 %v10450, %v10171
        %v10452 = vmin.f32 %v10451, %v10172
        %v10453 = vmin.f32 %v10452, %v10173
        %v10454 = vmin.f32 %v10453, %v10174
        %v10455 = vmin.f32 %v10454, %v10175
        %v10456 = vmin.f32 %v10455, %v10176
        %v10457 = vrot.slane %v10456, 4
        %v10458 = vmin.f32 %v10456, %v10457
        %v10459 = vrot.slane %v10458, 2
        %v10460 = vmin.f32 %v10458, %v10459
        %v10461 = vrot.slane %v10460, 1
        %v10462 = vmin.f32 %v10460, %v10461
        %v10463 = vmin.f32 %v10177, %v10178
        %v10464 = vmin.f32 %v10463, %v10179
        %v10465 = vmin.f32 %v10464, %v10180
        %v10466 = vmin.f32 %v10465, %v10181
        %v10467 = vmin.f32 %v10466, %v10182
        %v10468 = vmin.f32 %v10467, %v10183
        %v10469 = vmin.f32 %v10468, %v10184
        %v10470 = vmin.f32 %v10469, %v10185
        %v10471 = vmin.f32 %v10470, %v10186
        %v10472 = vmin.f32 %v10471, %v10187
        %v10473 = vmin.f32 %v10472, %v10188
        %v10474 = vmin.f32 %v10473, %v10189
        %v10475 = vmin.f32 %v10474, %v10190
        %v10476 = vmin.f32 %v10475, %v10191
        %v10477 = vmin.f32 %v10476, %v10192
        %v10478 = vmin.f32 %v10477, %v10193
        %v10479 = vmin.f32 %v10478, %v10194
        %v10480 = vmin.f32 %v10479, %v10195
        %v10481 = vmin.f32 %v10480, %v10196
        %v10482 = vmin.f32 %v10481, %v10197
        %v10483 = vmin.f32 %v10482, %v10198
        %v10484 = vmin.f32 %v10483, %v10199
        %v10485 = vmin.f32 %v10484, %v10200
        %v10486 = vmin.f32 %v10485, %v10201
        %v10487 = vmin.f32 %v10486, %v10202
        %v10488 = vmin.f32 %v10487, %v10203
        %v10489 = vmin.f32 %v10488, %v10204
        %v10490 = vmin.f32 %v10489, %v10205
        %v10491 = vmin.f32 %v10490, %v10206
        %v10492 = vmin.f32 %v10491, %v10207
        %v10493 = vmin.f32 %v10492, %v10208
        %v10494 = vrot.slane %v10493, 4
        %v10495 = vmin.f32 %v10493, %v10494
        %v10496 = vrot.slane %v10495, 2
        %v10497 = vmin.f32 %v10495, %v10496
        %v10498 = vrot.slane %v10497, 1
        %v10499 = vmin.f32 %v10497, %v10498
        %v10500 = vmin.f32 %v10209, %v10210
        %v10501 = vmin.f32 %v10500, %v10211
        %v10502 = vmin.f32 %v10501, %v10212
        %v10503 = vmin.f32 %v10502, %v10213
        %v10504 = vmin.f32 %v10503, %v10214
        %v10505 = vmin.f32 %v10504, %v10215
        %v10506 = vmin.f32 %v10505, %v10216
        %v10507 = vmin.f32 %v10506, %v10217
        %v10508 = vmin.f32 %v10507, %v10218
        %v10509 = vmin.f32 %v10508, %v10219
        %v10510 = vmin.f32 %v10509, %v10220
        %v10511 = vmin.f32 %v10510, %v10221
        %v10512 = vmin.f32 %v10511, %v10222
        %v10513 = vmin.f32 %v10512, %v10223
        %v10514 = vmin.f32 %v10513, %v10224
        %v10515 = vmin.f32 %v10514, %v10225
        %v10516 = vmin.f32 %v10515, %v10226
        %v10517 = vmin.f32 %v10516, %v10227
        %v10518 = vmin.f32 %v10517, %v10228
        %v10519 = vmin.f32 %v10518, %v10229
        %v10520 = vmin.f32 %v10519, %v10230
        %v10521 = vmin.f32 %v10520, %v10231
        %v10522 = vmin.f32 %v10521, %v10232
        %v10523 = vmin.f32 %v10522, %v10233
        %v10524 = vmin.f32 %v10523, %v10234
        %v10525 = vmin.f32 %v10524, %v10235
        %v10526 = vmin.f32 %v10525, %v10236
        %v10527 = vmin.f32 %v10526, %v10237
        %v10528 = vmin.f32 %v10527, %v10238
        %v10529 = vmin.f32 %v10528, %v10239
        %v10530 = vmin.f32 %v10529, %v10240
        %v10531 = vrot.slane %v10530, 4
        %v10532 = vmin.f32 %v10530, %v10531
        %v10533 = vrot.slane %v10532, 2
        %v10534 = vmin.f32 %v10532, %v10533
        %v10535 = vrot.slane %v10534, 1
        %v10536 = vmin.f32 %v10534, %v10535
        %v10537 = vmax.f32 %v10277, 0.0
        %v10538 = vmax.f32 %v10314, 0.0
        %v10539 = vmax.f32 %v10351, 0.0
        %v10540 = vmax.f32 %v10388, 0.0
        %v10541 = vmax.f32 %v10425, 0.0
        %v10542 = vmax.f32 %v10462, 0.0
        %v10543 = vmax.f32 %v10499, 0.0
        %v10544 = vmax.f32 %v10536, 0.0
        %vm10553 = vcmask 1041409
        %v10554 = vsel %vm10553, %v10538, %v10537
        %vm10555 = vcmask 1042434
        %v10556 = vsel %vm10555, %v10539, %v10554
        %vm10557 = vcmask 1043459
        %v10558 = vsel %vm10557, %v10540, %v10556
        %vm10559 = vcmask 1044484
        %v10560 = vsel %vm10559, %v10541, %v10558
        %vm10561 = vcmask 1045509
        %v10562 = vsel %vm10561, %v10542, %v10560
        %vm10563 = vcmask 1046534
        %v10564 = vsel %vm10563, %v10543, %v10562
        %vm10565 = vcmask 1047559
        %v10566 = vsel %vm10565, %v10544, %v10564
        %10568 = vst [vmem:[%s333] sm:$0xff] %v10566
        %v10569 = vadd.f32 %v10537, 1.0
        %v10570 = vadd.f32 %v10538, 1.0
        %v10571 = vadd.f32 %v10539, 1.0
        %v10572 = vadd.f32 %v10540, 1.0
        %v10573 = vadd.f32 %v10541, 1.0
        %v10574 = vadd.f32 %v10542, 1.0
        %v10575 = vadd.f32 %v10543, 1.0
        %v10576 = vadd.f32 %v10544, 1.0
        %v10577 = vadd.f32 %v10537, 0.0001
        %v10578 = vadd.f32 %v10538, 0.0001
        %v10579 = vadd.f32 %v10539, 0.0001
        %v10580 = vadd.f32 %v10540, 0.0001
        %v10581 = vadd.f32 %v10541, 0.0001
        %v10582 = vadd.f32 %v10542, 0.0001
        %v10583 = vadd.f32 %v10543, 0.0001
        %v10584 = vadd.f32 %v10544, 0.0001
        %v10585 = vrcp.pop %v10577
        %v10586 = vmul.f32 %v10569, %v10585
        %v10587 = vrcp.pop %v10578
        %v10588 = vmul.f32 %v10570, %v10587
        %v10589 = vrcp.pop %v10579
        %v10590 = vmul.f32 %v10571, %v10589
        %v10591 = vrcp.pop %v10580
        %v10592 = vmul.f32 %v10572, %v10591
        %v10593 = vrcp.pop %v10581
        %v10594 = vmul.f32 %v10573, %v10593
        %v10595 = vrcp.pop %v10582
        %v10596 = vmul.f32 %v10574, %v10595
        %v10597 = vrcp.pop %v10583
        %v10598 = vmul.f32 %v10575, %v10597
        %v10599 = vrcp.pop %v10584
        %v10600 = vmul.f32 %v10576, %v10599
        %v10601 = vlog2.pop %v10586
        %v10602 = vmul.f32 %v10601, 0.6931472
        %v10603 = vlog2.pop %v10588
        %v10604 = vmul.f32 %v10603, 0.6931472
        %v10605 = vlog2.pop %v10590
        %v10606 = vmul.f32 %v10605, 0.6931472
        %v10607 = vlog2.pop %v10592
        %v10608 = vmul.f32 %v10607, 0.6931472
        %v10609 = vlog2.pop %v10594
        %v10610 = vmul.f32 %v10609, 0.6931472
        %v10611 = vlog2.pop %v10596
        %v10612 = vmul.f32 %v10611, 0.6931472
        %v10613 = vlog2.pop %v10598
        %v10614 = vmul.f32 %v10613, 0.6931472
        %v10615 = vlog2.pop %v10600
        %v10616 = vmul.f32 %v10615, 0.6931472
        %v10617 = vld [vmem:[%s326] sm:$0xff]
        %v10618 = vld [vmem:[%s359] sm:$0xff]
        %v10619 = vld [vmem:[%s359 + $0x8] sm:$0xff]
        %v10620 = vld [vmem:[%s359 + $0x10] sm:$0xff]
        %v10621 = vld [vmem:[%s359 + $0x18] sm:$0xff]
        %v10622 = vld [vmem:[%s359 + $0x20] sm:$0xff]
        %v10623 = vld [vmem:[%s359 + $0x28] sm:$0xff]
        %v10624 = vld [vmem:[%s359 + $0x30] sm:$0xff]
        %v10625 = vld [vmem:[%s359 + $0x38] sm:$0xff]
        %v10626 = vld [vmem:[%s359 + $0x40] sm:$0xff]
        %v10627 = vld [vmem:[%s359 + $0x48] sm:$0xff]
        %v10628 = vld [vmem:[%s359 + $0x50] sm:$0xff]
        %v10629 = vld [vmem:[%s359 + $0x58] sm:$0xff]
        %v10630 = vld [vmem:[%s359 + $0x60] sm:$0xff]
        %v10631 = vld [vmem:[%s359 + $0x68] sm:$0xff]
        %v10632 = vld [vmem:[%s359 + $0x70] sm:$0xff]
        %v10633 = vld [vmem:[%s359 + $0x78] sm:$0xff]
        %v10642 = vsel %vm10553, %v10604, %v10602
        %v10643 = vsel %vm10555, %v10606, %v10642
        %v10644 = vsel %vm10557, %v10608, %v10643
        %v10645 = vsel %vm10559, %v10610, %v10644
        %v10646 = vsel %vm10561, %v10612, %v10645
        %v10647 = vsel %vm10563, %v10614, %v10646
        %v10648 = vsel %vm10565, %v10616, %v10647
        %10650 = vmatprep.subr.mxu0 0.0
        %10651 = vmatpush1.msra.mxu0 %v10633
        %10652 = vmatprep.subr.mxu0 0.0
        %10653 = vmatpush1.msra.mxu0 %v10632
        %10654 = vmatprep.subr.mxu0 0.0
        %10655 = vmatpush1.msra.mxu0 %v10631
        %10656 = vmatprep.subr.mxu0 0.0
        %10657 = vmatpush1.msra.mxu0 %v10630
        %10658 = vmatprep.subr.mxu0 0.0
        %10659 = vmatpush1.msra.mxu0 %v10629
        %10660 = vmatprep.subr.mxu0 0.0
        %10661 = vmatpush1.msra.mxu0 %v10628
        %10662 = vmatprep.subr.mxu0 0.0
        %10663 = vmatpush1.msra.mxu0 %v10627
        %10664 = vmatprep.subr.mxu0 0.0
        %10665 = vmatpush1.msra.mxu0 %v10626
        %10666 = vmatprep.subr.mxu0 0.0
        %10667 = vmatpush1.msra.mxu0 %v10625
        %10668 = vmatprep.subr.mxu0 0.0
        %10669 = vmatpush1.msra.mxu0 %v10624
        %10670 = vmatprep.subr.mxu0 0.0
        %10671 = vmatpush1.msra.mxu0 %v10623
        %10672 = vmatprep.subr.mxu0 0.0
        %10673 = vmatpush1.msra.mxu0 %v10622
        %10674 = vmatprep.subr.mxu0 0.0
        %10675 = vmatpush1.msra.mxu0 %v10621
        %10676 = vmatprep.subr.mxu0 0.0
        %10677 = vmatpush1.msra.mxu0 %v10620
        %10678 = vmatprep.subr.mxu0 0.0
        %10679 = vmatpush1.msra.mxu0 %v10619
        %10680 = vmatprep.subr.mxu0 0.0
        %10681 = vmatpush1.msra.mxu0 %v10618
        %10682 = vmatprep.subr.mxu0 0.0
        %10683 = vmatpush2.msra.mxu0 0.0
        %10684 = vmatprep.subr.mxu0 0.0
        %10685 = vmatpush2.msra.mxu0 0.0
        %10686 = vmatprep.subr.mxu0 0.0
        %10687 = vmatpush2.msra.mxu0 0.0
        %10688 = vmatprep.subr.mxu0 0.0
        %10689 = vmatpush2.msra.mxu0 0.0
        %10690 = vmatprep.subr.mxu0 0.0
        %10691 = vmatpush2.msra.mxu0 0.0
        %10692 = vmatprep.subr.mxu0 0.0
        %10693 = vmatpush2.msra.mxu0 0.0
        %10694 = vmatprep.subr.mxu0 0.0
        %10695 = vmatpush2.msra.mxu0 0.0
        %10696 = vmatprep.subr.mxu0 0.0
        %10697 = vmatpush2.msra.mxu0 0.0
        %10698 = vmatprep.subr.mxu0 0.0
        %10699 = vmatpush2.msra.mxu0 0.0
        %10700 = vmatprep.subr.mxu0 0.0
        %10701 = vmatpush2.msra.mxu0 0.0
        %10702 = vmatprep.subr.mxu0 0.0
        %10703 = vmatpush2.msra.mxu0 0.0
        %10704 = vmatprep.subr.mxu0 0.0
        %10705 = vmatpush2.msra.mxu0 0.0
        %10706 = vmatprep.subr.mxu0 0.0
        %10707 = vmatpush2.msra.mxu0 0.0
        %10708 = vmatprep.subr.mxu0 0.0
        %10709 = vmatpush2.msra.mxu0 0.0
        %10710 = vmatprep.subr.mxu0 0.0
        %10711 = vmatpush2.msra.mxu0 0.0
        %10712 = vmatprep.subr.mxu0 0.0
        %10713 = vmatpush2.msra.mxu0 0.0
        %10714 = vmatprep.mubr.f32.mxu0 0.0
        %10715 = vmatmul.mubr.f32.gmra.mxu0 %v10648
        %v10716 = vpop.f32.mrf.mxu0
        %v10717 = vadd.f32 0.0, %v10716
        %v10718 = vpop.f32.mrf.mxu0
        %10719 = vdwg.mxu0
        %v10720 = vadd.f32 %v10617, %v10717
        %10721 = vst [vmem:[%s326] sm:$0xff] %v10720
        %s10722 = sand.u32 %s175, 1
        %s10723 = scalar_lea.sflag [#allocation5], %s10722
        %s10724 = sand.u32 %s175, 1
        %s10725 = smul.addr %s10724, 8
        %s10726 = scalar_lea.vmem [#allocation4], %s10725
        %s10727 = sand.u32 %s203, 1
        %s10728 = scalar_lea.sflag [#allocation7], %s10727
        %s10729 = sand.u32 %s203, 1
        %s10730 = smul.addr %s10729, 8
        %s10731 = scalar_lea.vmem [#allocation6], %s10730
        // Predicated region
        $region45: #{tpu_custom_call.1} parent=39 // pred_check
          %p10732 = pneg %p185
        $region46: #{tpu_custom_call.1} parent=39 // pred_check_branch
          %10734 = sbr.rel (%p10732) target = $region48
        $region47: #{tpu_custom_call.1} parent=39 // pred_region
          %s10736 = ssub.s32 128, 128
          %10737 = vsyncadd %s10723, %s10736
          %s10738 = smul.addr %s28, 128
          %s10739 = scalar_lea.hbm %s5, %s10738
          %s10741 = sshll.u32 %s10726, 4
          %s10742 = int_to_ptr.vmem [resolvable:$true] %s10741
          %10744 = dma.vmem_to_hbm [thread:$0]  %s10742, 128, %s10739, %s10723
        $region48: #{tpu_custom_call.1} parent=39 // pred_fallthru
          _
        // Predicated region
        $region49: #{tpu_custom_call.1} parent=39 // pred_check
          %p10745 = pneg %p213
        $region50: #{tpu_custom_call.1} parent=39 // pred_check_branch
          %10747 = sbr.rel (%p10745) target = $region52
        $region51: #{tpu_custom_call.1} parent=39 // pred_region
          %s10749 = ssub.s32 128, 128
          %10750 = vsyncadd %s10728, %s10749
          %s10751 = sadd.s32 %s29, %s28
          %s10752 = smul.addr %s10751, 128
          %s10753 = scalar_lea.hbm %s6, %s10752
          %s10755 = sshll.u32 %s10731, 4
          %s10756 = int_to_ptr.vmem [resolvable:$true] %s10755
          %10758 = dma.vmem_to_hbm [thread:$0]  %s10756, 128, %s10753, %s10728
        $region52: #{tpu_custom_call.1} parent=39 // pred_fallthru
          _
      $region40: #{tpu_custom_call.1} parent=5 // pred_fallthru
        _
      %p10759 = scmp.le.s32.totalorder 2, %s19
      // Predicated region
      $region53: #{tpu_custom_call.1} parent=5 // pred_check
        %p10760 = pneg %p10759
      $region54: #{tpu_custom_call.1} parent=5 // pred_check_branch
        %10762 = sbr.rel (%p10760) target = $region56
      $region55: #{tpu_custom_call.1} parent=5 // pred_region
        %s10763 = ssub.s32 %s19, 2
        // Predicated region
        $region57: #{tpu_custom_call.1} parent=55 // pred_check
          %p10764 = pneg %p191
        $region58: #{tpu_custom_call.1} parent=55 // pred_check_branch
          %10766 = sbr.rel (%p10764) target = $region60
        $region59: #{tpu_custom_call.1} parent=55 // pred_region
          %s10767 = sand.u32 %s176, 1
          %s10768 = scalar_lea.sflag [#allocation5], %s10767
          %s10769 = sand.u32 %s176, 1
          %s10770 = smul.addr %s10769, 8
          %s10771 = scalar_lea.vmem [#allocation4], %s10770
          %10772 = dma.done %s10768, 128
        $region60: #{tpu_custom_call.1} parent=55 // pred_fallthru
          _
        // Predicated region
        $region61: #{tpu_custom_call.1} parent=55 // pred_check
          %p10773 = pneg %p219
        $region62: #{tpu_custom_call.1} parent=55 // pred_check_branch
          %10775 = sbr.rel (%p10773) target = $region64
        $region63: #{tpu_custom_call.1} parent=55 // pred_region
          %s10776 = sand.u32 %s204, 1
          %s10777 = scalar_lea.sflag [#allocation7], %s10776
          %s10778 = sand.u32 %s204, 1
          %s10779 = smul.addr %s10778, 8
          %s10780 = scalar_lea.vmem [#allocation6], %s10779
          %10781 = dma.done %s10777, 128
        $region64: #{tpu_custom_call.1} parent=55 // pred_fallthru
          _
      $region56: #{tpu_custom_call.1} parent=5 // pred_fallthru
        _
    $region6: #{tpu_custom_call.1} parent=1 // loop_footer
      %s23 = sadd.s32 1, %s19
    $region7: #{tpu_custom_call.1} parent=1 // loop_footer_branch
      %18 = sbr.rel target = $region3
    $region8: #{tpu_custom_call.1} parent=1 // loop_exit
      _
    %10782 = vsyncpa [#allocation5], 1
    %s10783 = scalar_lea.sflag [#allocation5], 1
    %10784 = vsyncpa %s10783, 1
    %10785 = vsyncpa [#allocation7], 1
    %s10786 = scalar_lea.sflag [#allocation7], 1
    %10787 = vsyncpa %s10786, 1

</llo_original>
